<compile_context>
chip_gen: v7x
topology: tpu7x:2x2x1
jax: 0.10.0
libtpu: 0.0.40
codegen_flags: <defaults>
</compile_context>

<pallas_src>
import jax
import jax.numpy as jnp
import numpy as np
from jax import lax
from jax.experimental import pallas as pl
from jax.experimental.pallas import tpu as pltpu

KS = 7
PAD = (KS - 1) // 2  # 3


def _round_up(x, m):
    return (x + m - 1) // m * m


def _toeplitz_weights(conv_w, H, W, HWp):
    """Fold all (kh, kw) taps of the 7x7x7 conv into one matmul RHS.

    Returns t of shape (2*KS*HWp, HWp) with
      t[(c*KS + kd)*HWp + hi*W + wi, ho*W + wo]
        = conv_w[0, c, kd, hi - ho + PAD, wi - wo + PAD]
    (zero when the tap falls outside the 7x7 window or in the lane padding),
    so that out[m, :] = lhs[m, :] @ t, where lhs row m holds the depth-padded
    ZPool plane at depth d(m)+kd for channel c, concatenated over (c, kd).
    """
    w = conv_w[0].astype(jnp.float32)                              # (2, KS, KS, KS)
    kh = jnp.arange(H)[:, None] - jnp.arange(H)[None, :] + PAD     # (hi, ho)
    kw = jnp.arange(W)[:, None] - jnp.arange(W)[None, :] + PAD     # (wi, wo)
    vh = (kh >= 0) & (kh < KS)
    vw = (kw >= 0) & (kw < KS)
    t = w[:, :, jnp.clip(kh, 0, KS - 1)]                           # (2, KS, hi, ho, KS)
    t = t[:, :, :, :, jnp.clip(kw, 0, KS - 1)]                     # (2, KS, hi, ho, wi, wo)
    mask = vh[:, :, None, None] & vw[None, None, :, :]             # (hi, ho, wi, wo)
    t = t * mask[None, None].astype(jnp.float32)
    # -> (c, kd, (hi, wi), (ho, wo)); row-major (h, w) matches the H*W flatten.
    t = t.transpose(0, 1, 2, 4, 3, 5).reshape(2, KS, H * W, H * W)
    hw = H * W
    if HWp != hw:
        t = jnp.pad(t, ((0, 0), (0, 0), (0, HWp - hw), (0, HWp - hw)))
    # bf16 operands: single-pass MXU + half the VMEM; accumulation stays f32.
    return t.reshape(2 * KS * HWp, HWp).astype(jnp.bfloat16)


def fold_spatial_gate_params(conv_w, bn_gamma, bn_beta, bn_mean, bn_var,
                             H, W, HWp, eps=1e-5):
    """Grid-invariant operands, built once (hoist out of the per-step path)."""
    tw = _toeplitz_weights(conv_w, H, W, HWp)                      # (2*KS*HWp, HWp) bf16
    # Folded inference-mode BatchNorm; out_channels == 1 -> only index [0].
    bn_scale = bn_gamma / jnp.sqrt(bn_var + eps)
    bn_shift = bn_beta - bn_mean * bn_scale
    bn_params = jnp.stack([bn_scale[0], bn_shift[0]]).astype(jnp.float32)
    return tw, bn_params


def spatial_gate_kernel(bn_ref, tw_ref, x_ref, o_ref):
    # bn_ref: SMEM (2,)              folded BatchNorm [scale, shift]
    # tw_ref: VMEM (2*KS*HWp, HWp)   Toeplitz conv weights, bf16, one resident copy
    # x_ref / o_ref: VMEM block (NB, C, D, HWp)
    NB, C, D, HWp = x_ref.shape

    # ---- ZPool: channel-wise max & mean.  Per-channel reads keep only one
    # (NB, D, HWp) activation tile live at a time. ----------------------------
    x0 = x_ref[:, 0].astype(jnp.float32)                 # (NB, D, HWp)
    zmax, zsum = x0, x0
    for c in range(1, C):
        xc = x_ref[:, c].astype(jnp.float32)
        zmax = jnp.maximum(zmax, xc)
        zsum = zsum + xc
    zmax = zmax.astype(jnp.bfloat16)
    zmean = (zsum * (1.0 / C)).astype(jnp.bfloat16)

    # ---- Build the K-fused LHS: depth-pad per batch element, shift by kd,
    # and concatenate the (channel, kd) taps along the contraction dim. -------
    halo = jnp.zeros((NB, PAD, HWp), jnp.bfloat16)
    parts = []
    for z in (zmax, zmean):                              # channel order matches tw
        zp = jnp.concatenate([halo, z, halo], axis=1)    # (NB, D + 2*PAD, HWp)
        for kd in range(KS):
            parts.append(zp[:, kd:kd + D, :])            # (NB, D, HWp)
    lhs = jnp.concatenate(parts, axis=-1)                # (NB, D, 2*KS*HWp)
    lhs = lhs.reshape(NB * D, 2 * KS * HWp)

    # ---- 7x7x7 conv == ONE MXU matmul (bf16 operands, f32 accumulation) -----
    y = jnp.dot(lhs, tw_ref[...], preferred_element_type=jnp.float32)
    y = y.reshape(NB, D, HWp)

    # ---- BatchNorm (folded) + sigmoid gate + broadcast multiply -------------
    gate = jax.nn.sigmoid(y * bn_ref[0] + bn_ref[1])     # (NB, D, HWp) f32
    for c in range(C):                                   # re-read x per channel
        o_ref[:, c] = (x_ref[:, c].astype(jnp.float32) * gate).astype(o_ref.dtype)


def spatial_gate(x, conv_w, bn_gamma, bn_beta, bn_mean, bn_var, eps=1e-5,
                 target_m=256):
    N, C, D, H, W = x.shape
    HW = H * W
    HWp = _round_up(HW, 128)                 # lane-dense, unmasked stores

    # NOTE: in a real model, hoist/cache this so the Toeplitz weights are built
    # once per parameter set, not once per forward call.
    tw, bn_params = fold_spatial_gate_params(
        conv_w, bn_gamma, bn_beta, bn_mean, bn_var, H, W, HWp, eps)

    # Batch-block size: make M = NB*D reach ~target_m rows (128 suffices on
    # v5e, 256 on v6e/v7x) while keeping the double-buffered x/out blocks
    # within a VMEM budget.  (On v7x, prefer N/NB >= 2 so both TensorCores get
    # grid steps when N is large enough.)
    blk_budget = 16 << 20
    nb_cap = max(1, blk_budget // (4 * C * D * HWp * x.dtype.itemsize))
    nb = max(1, min(N, (target_m + D - 1) // D, nb_cap))
    n_pad = _round_up(N, nb)

    x2 = x.reshape(N, C, D, HW)
    if HWp != HW or n_pad != N:
        x2 = jnp.pad(x2, ((0, n_pad - N), (0, 0), (0, 0), (0, HWp - HW)))

    # Scoped-VMEM budget from the actual footprint (weights are single-buffered,
    # x/out blocks double-buffered), floored at 32 MiB, capped at v7x's 64 MiB.
    xblk = nb * C * D * HWp * x.dtype.itemsize
    lhs_bytes = nb * D * 2 * KS * HWp * 2
    vmem_limit = int(tw.size * tw.dtype.itemsize + 4 * xblk + 4 * lhs_bytes + (8 << 20))
    vmem_limit = min(64 << 20, max(vmem_limit, 32 << 20))

    def run(tw_spec):
        return pl.pallas_call(
            spatial_gate_kernel,
            out_shape=jax.ShapeDtypeStruct((n_pad, C, D, HWp), x.dtype),
            grid=(n_pad // nb,),
            in_specs=[
                pl.BlockSpec(memory_space=pltpu.MemorySpace.SMEM),   # folded BN scalars
                tw_spec,                                             # Toeplitz weights
                pl.BlockSpec((nb, C, D, HWp), lambda n: (n, 0, 0, 0)),
            ],
            out_specs=pl.BlockSpec((nb, C, D, HWp), lambda n: (n, 0, 0, 0)),
            compiler_params=pltpu.CompilerParams(
                dimension_semantics=("parallel",),   # batch blocks independent
                vmem_limit_bytes=vmem_limit),
        )(bn_params, tw, x2)

    try:
        # Grid-invariant weights: whole-array VMEM residency -> one copy,
        # no double-buffering (key at large HW where 2x tw would blow VMEM).
        out = run(pl.BlockSpec(memory_space=pltpu.MemorySpace.VMEM))
    except Exception:
        # Fallback: blocked spec with constant index map (Pallas only re-DMAs
        # on block change, but allocates a second buffer).
        out = run(pl.BlockSpec(tw.shape, lambda n: (0, 0)))

    return out[:N, :, :, :HW].reshape(N, C, D, H, W)


def spatial_gate_reference(x, conv_w, bn_gamma, bn_beta, bn_mean, bn_var, eps=1e-5):
    zmax = jnp.max(x, axis=1, keepdims=True)
    zmean = jnp.mean(x, axis=1, keepdims=True)
    z = jnp.concatenate([zmax, zmean], axis=1)                  # (N, 2, D, H, W)
    y = lax.conv_general_dilated(
        z, conv_w, window_strides=(1, 1, 1), padding=[(PAD, PAD)] * 3,
        dimension_numbers=("NCDHW", "OIDHW", "NCDHW"),
        precision=lax.Precision.HIGHEST)
    r = lambda v: v.reshape(1, -1, 1, 1, 1)
    y = (y - r(bn_mean)) / jnp.sqrt(r(bn_var) + eps) * r(bn_gamma) + r(bn_beta)
    return x * jax.nn.sigmoid(y)


if __name__ == "__main__":
    key = jax.random.PRNGKey(0)
    kx, kw = jax.random.split(key)

    N, C, D, H, W = 2, 4, 8, 16, 16
    x = jax.random.normal(kx, (N, C, D, H, W), jnp.float32)

    # Deterministic synthetic parameters (Conv3d(2,1,7,7,7) no bias; BatchNorm3d(1)).
    conv_w = 0.05 * jax.random.normal(kw, (1, 2, KS, KS, KS), jnp.float32)
    bn_gamma = jnp.array([0.9], jnp.float32)
    bn_beta = jnp.array([0.1], jnp.float32)
    bn_mean = jnp.array([0.05], jnp.float32)
    bn_var = jnp.array([1.2], jnp.float32)

    out = spatial_gate(x, conv_w, bn_gamma, bn_beta, bn_mean, bn_var)
    out = jax.block_until_ready(out)

    ref = spatial_gate_reference(x, conv_w, bn_gamma, bn_beta, bn_mean, bn_var)
    assert out.shape == x.shape and out.dtype == x.dtype
    # Tolerance covers bf16 MXU operands (f32 accumulation) and the fused-K
    # accumulation order vs XLA's f32 HIGHEST-precision direct 686-tap conv.
    np.testing.assert_allclose(np.asarray(out), np.asarray(ref), atol=2e-2, rtol=1e-2)
    print("KERNEL_OK")
</pallas_src>

<mosaic_0001>
module attributes {stable_mosaic.version = 11 : i64} {
  func.func @spatial_gate_kernel(%arg0: i32, %arg1: memref<2xf32, #tpu.memory_space<smem>>, %arg2: memref<3584x256xbf16, #tpu.memory_space<vmem>>, %arg3: memref<2x4x8x256xf32, #tpu.memory_space<vmem>>, %arg4: memref<2x4x8x256xf32, #tpu.memory_space<vmem>>) attributes {dimension_semantics = [#tpu.dimension_semantics<parallel>], iteration_bounds = array<i64: 1>, scalar_prefetch = 0 : i64, scratch_operands = 0 : i64, tpu.core_type = #tpu.core_type<tc>, window_params = [{transform_indices = @transform_0, window_bounds = array<i64: 2>}, {pipeline_mode = #tpu.pipeline_mode<synchronous>, transform_indices = @transform_1, window_bounds = array<i64: 3584, 256>}, {transform_indices = @transform_2, window_bounds = array<i64: 2, 4, 8, 256>}, {transform_indices = @transform_3, window_bounds = array<i64: 2, 4, 8, 256>}]} {
    %c0 = arith.constant 0 : index
    %c0_0 = arith.constant 0 : index
    %c0_1 = arith.constant 0 : index
    %c0_2 = arith.constant 0 : index
    %0 = vector.load %arg3[%c0, %c0_0, %c0_1, %c0_2] : memref<2x4x8x256xf32, #tpu.memory_space<vmem>>, vector<2x1x8x256xf32>
    %1 = vector.shape_cast %0 : vector<2x1x8x256xf32> to vector<2x8x256xf32>
    %c0_3 = arith.constant 0 : index
    %c1 = arith.constant 1 : index
    %c0_4 = arith.constant 0 : index
    %c0_5 = arith.constant 0 : index
    %2 = vector.load %arg3[%c0_3, %c1, %c0_4, %c0_5] : memref<2x4x8x256xf32, #tpu.memory_space<vmem>>, vector<2x1x8x256xf32>
    %3 = vector.shape_cast %2 : vector<2x1x8x256xf32> to vector<2x8x256xf32>
    %4 = arith.maximumf %1, %3 : vector<2x8x256xf32>
    %5 = arith.addf %1, %3 : vector<2x8x256xf32>
    %c0_6 = arith.constant 0 : index
    %c2 = arith.constant 2 : index
    %c0_7 = arith.constant 0 : index
    %c0_8 = arith.constant 0 : index
    %6 = vector.load %arg3[%c0_6, %c2, %c0_7, %c0_8] : memref<2x4x8x256xf32, #tpu.memory_space<vmem>>, vector<2x1x8x256xf32>
    %7 = vector.shape_cast %6 : vector<2x1x8x256xf32> to vector<2x8x256xf32>
    %8 = arith.maximumf %4, %7 : vector<2x8x256xf32>
    %9 = arith.addf %5, %7 : vector<2x8x256xf32>
    %c0_9 = arith.constant 0 : index
    %c3 = arith.constant 3 : index
    %c0_10 = arith.constant 0 : index
    %c0_11 = arith.constant 0 : index
    %10 = vector.load %arg3[%c0_9, %c3, %c0_10, %c0_11] : memref<2x4x8x256xf32, #tpu.memory_space<vmem>>, vector<2x1x8x256xf32>
    %11 = vector.shape_cast %10 : vector<2x1x8x256xf32> to vector<2x8x256xf32>
    %12 = arith.maximumf %8, %11 : vector<2x8x256xf32>
    %13 = arith.addf %9, %11 : vector<2x8x256xf32>
    %14 = arith.truncf %12 : vector<2x8x256xf32> to vector<2x8x256xbf16>
    %cst = arith.constant 2.500000e-01 : f32
    %15 = vector.broadcast %cst : f32 to vector<2x8x256xf32>
    %16 = arith.mulf %13, %15 : vector<2x8x256xf32>
    %17 = arith.truncf %16 : vector<2x8x256xf32> to vector<2x8x256xbf16>
    %cst_12 = arith.constant 0.000000e+00 : bf16
    %18 = vector.broadcast %cst_12 : bf16 to vector<2x3x256xbf16>
    %19 = tpu.concatenate %18, %14, %18 in 1 : vector<2x3x256xbf16>, vector<2x8x256xbf16>, vector<2x3x256xbf16> -> vector<2x14x256xbf16>
    %20 = vector.extract_strided_slice %19 {offsets = [0, 0, 0], sizes = [2, 8, 256], strides = [1, 1, 1]} : vector<2x14x256xbf16> to vector<2x8x256xbf16>
    %21 = vector.extract_strided_slice %19 {offsets = [0, 1, 0], sizes = [2, 8, 256], strides = [1, 1, 1]} : vector<2x14x256xbf16> to vector<2x8x256xbf16>
    %22 = vector.extract_strided_slice %19 {offsets = [0, 2, 0], sizes = [2, 8, 256], strides = [1, 1, 1]} : vector<2x14x256xbf16> to vector<2x8x256xbf16>
    %23 = vector.extract_strided_slice %19 {offsets = [0, 3, 0], sizes = [2, 8, 256], strides = [1, 1, 1]} : vector<2x14x256xbf16> to vector<2x8x256xbf16>
    %24 = vector.extract_strided_slice %19 {offsets = [0, 4, 0], sizes = [2, 8, 256], strides = [1, 1, 1]} : vector<2x14x256xbf16> to vector<2x8x256xbf16>
    %25 = vector.extract_strided_slice %19 {offsets = [0, 5, 0], sizes = [2, 8, 256], strides = [1, 1, 1]} : vector<2x14x256xbf16> to vector<2x8x256xbf16>
    %26 = vector.extract_strided_slice %19 {offsets = [0, 6, 0], sizes = [2, 8, 256], strides = [1, 1, 1]} : vector<2x14x256xbf16> to vector<2x8x256xbf16>
    %27 = tpu.concatenate %18, %17, %18 in 1 : vector<2x3x256xbf16>, vector<2x8x256xbf16>, vector<2x3x256xbf16> -> vector<2x14x256xbf16>
    %28 = vector.extract_strided_slice %27 {offsets = [0, 0, 0], sizes = [2, 8, 256], strides = [1, 1, 1]} : vector<2x14x256xbf16> to vector<2x8x256xbf16>
    %29 = vector.extract_strided_slice %27 {offsets = [0, 1, 0], sizes = [2, 8, 256], strides = [1, 1, 1]} : vector<2x14x256xbf16> to vector<2x8x256xbf16>
    %30 = vector.extract_strided_slice %27 {offsets = [0, 2, 0], sizes = [2, 8, 256], strides = [1, 1, 1]} : vector<2x14x256xbf16> to vector<2x8x256xbf16>
    %31 = vector.extract_strided_slice %27 {offsets = [0, 3, 0], sizes = [2, 8, 256], strides = [1, 1, 1]} : vector<2x14x256xbf16> to vector<2x8x256xbf16>
    %32 = vector.extract_strided_slice %27 {offsets = [0, 4, 0], sizes = [2, 8, 256], strides = [1, 1, 1]} : vector<2x14x256xbf16> to vector<2x8x256xbf16>
    %33 = vector.extract_strided_slice %27 {offsets = [0, 5, 0], sizes = [2, 8, 256], strides = [1, 1, 1]} : vector<2x14x256xbf16> to vector<2x8x256xbf16>
    %34 = vector.extract_strided_slice %27 {offsets = [0, 6, 0], sizes = [2, 8, 256], strides = [1, 1, 1]} : vector<2x14x256xbf16> to vector<2x8x256xbf16>
    %35 = tpu.concatenate %20, %21, %22, %23, %24, %25, %26, %28, %29, %30, %31, %32, %33, %34 in 2 : vector<2x8x256xbf16>, vector<2x8x256xbf16>, vector<2x8x256xbf16>, vector<2x8x256xbf16>, vector<2x8x256xbf16>, vector<2x8x256xbf16>, vector<2x8x256xbf16>, vector<2x8x256xbf16>, vector<2x8x256xbf16>, vector<2x8x256xbf16>, vector<2x8x256xbf16>, vector<2x8x256xbf16>, vector<2x8x256xbf16>, vector<2x8x256xbf16> -> vector<2x8x3584xbf16>
    %36 = vector.shape_cast %35 : vector<2x8x3584xbf16> to vector<16x3584xbf16>
    %c0_13 = arith.constant 0 : index
    %c0_14 = arith.constant 0 : index
    %37 = vector.load %arg2[%c0_13, %c0_14] : memref<3584x256xbf16, #tpu.memory_space<vmem>>, vector<3584x256xbf16>
    %cst_15 = arith.constant dense<0.000000e+00> : vector<16x256xf32>
    %38 = tpu.matmul %36, %37, %cst_15 {dimension_numbers = #tpu.dot_dimension_numbers<[1], [0], [0], [1], [0, 0, 1, 1], [], []>} : vector<16x3584xbf16>, vector<3584x256xbf16>, vector<16x256xf32> -> vector<16x256xf32>
    %39 = vector.shape_cast %38 : vector<16x256xf32> to vector<2x8x256xf32>
    %c0_16 = arith.constant 0 : index
    %40 = memref.load %arg1[%c0_16] : memref<2xf32, #tpu.memory_space<smem>>
    %41 = vector.broadcast %40 : f32 to vector<2x8x256xf32>
    %42 = arith.mulf %39, %41 : vector<2x8x256xf32>
    %c1_17 = arith.constant 1 : index
    %43 = memref.load %arg1[%c1_17] : memref<2xf32, #tpu.memory_space<smem>>
    %44 = vector.broadcast %43 : f32 to vector<2x8x256xf32>
    %45 = arith.addf %42, %44 : vector<2x8x256xf32>
    %46 = arith.negf %45 : vector<2x8x256xf32>
    %47 = math.exp %46 : vector<2x8x256xf32>
    %cst_18 = arith.constant 1.000000e+00 : f32
    %48 = vector.broadcast %cst_18 : f32 to vector<2x8x256xf32>
    %49 = arith.addf %48, %47 : vector<2x8x256xf32>
    %50 = arith.divf %48, %49 : vector<2x8x256xf32>
    %c0_19 = arith.constant 0 : index
    %c0_20 = arith.constant 0 : index
    %c0_21 = arith.constant 0 : index
    %c0_22 = arith.constant 0 : index
    %51 = vector.load %arg3[%c0_19, %c0_20, %c0_21, %c0_22] : memref<2x4x8x256xf32, #tpu.memory_space<vmem>>, vector<2x1x8x256xf32>
    %52 = vector.shape_cast %51 : vector<2x1x8x256xf32> to vector<2x8x256xf32>
    %53 = arith.mulf %52, %50 : vector<2x8x256xf32>
    %c0_23 = arith.constant 0 : index
    %c0_24 = arith.constant 0 : index
    %c0_25 = arith.constant 0 : index
    %c0_26 = arith.constant 0 : index
    %54 = vector.load %arg4[%c0_23, %c0_24, %c0_25, %c0_26] : memref<2x4x8x256xf32, #tpu.memory_space<vmem>>, vector<2x1x8x256xf32>
    %55 = vector.shape_cast %54 : vector<2x1x8x256xf32> to vector<2x8x256xf32>
    %56 = vector.shape_cast %53 : vector<2x8x256xf32> to vector<2x1x8x256xf32>
    tpu.vector_store %arg4[%c0_23, %c0_24, %c0_25, %c0_26], %56 {strides = array<i32>} : memref<2x4x8x256xf32, #tpu.memory_space<vmem>>, vector<2x1x8x256xf32>,
    %c0_27 = arith.constant 0 : index
    %c1_28 = arith.constant 1 : index
    %c0_29 = arith.constant 0 : index
    %c0_30 = arith.constant 0 : index
    %57 = vector.load %arg3[%c0_27, %c1_28, %c0_29, %c0_30] : memref<2x4x8x256xf32, #tpu.memory_space<vmem>>, vector<2x1x8x256xf32>
    %58 = vector.shape_cast %57 : vector<2x1x8x256xf32> to vector<2x8x256xf32>
    %59 = arith.mulf %58, %50 : vector<2x8x256xf32>
    %c0_31 = arith.constant 0 : index
    %c1_32 = arith.constant 1 : index
    %c0_33 = arith.constant 0 : index
    %c0_34 = arith.constant 0 : index
    %60 = vector.load %arg4[%c0_31, %c1_32, %c0_33, %c0_34] : memref<2x4x8x256xf32, #tpu.memory_space<vmem>>, vector<2x1x8x256xf32>
    %61 = vector.shape_cast %60 : vector<2x1x8x256xf32> to vector<2x8x256xf32>
    %62 = vector.shape_cast %59 : vector<2x8x256xf32> to vector<2x1x8x256xf32>
    tpu.vector_store %arg4[%c0_31, %c1_32, %c0_33, %c0_34], %62 {strides = array<i32>} : memref<2x4x8x256xf32, #tpu.memory_space<vmem>>, vector<2x1x8x256xf32>,
    %c0_35 = arith.constant 0 : index
    %c2_36 = arith.constant 2 : index
    %c0_37 = arith.constant 0 : index
    %c0_38 = arith.constant 0 : index
    %63 = vector.load %arg3[%c0_35, %c2_36, %c0_37, %c0_38] : memref<2x4x8x256xf32, #tpu.memory_space<vmem>>, vector<2x1x8x256xf32>
    %64 = vector.shape_cast %63 : vector<2x1x8x256xf32> to vector<2x8x256xf32>
    %65 = arith.mulf %64, %50 : vector<2x8x256xf32>
    %c0_39 = arith.constant 0 : index
    %c2_40 = arith.constant 2 : index
    %c0_41 = arith.constant 0 : index
    %c0_42 = arith.constant 0 : index
    %66 = vector.load %arg4[%c0_39, %c2_40, %c0_41, %c0_42] : memref<2x4x8x256xf32, #tpu.memory_space<vmem>>, vector<2x1x8x256xf32>
    %67 = vector.shape_cast %66 : vector<2x1x8x256xf32> to vector<2x8x256xf32>
    %68 = vector.shape_cast %65 : vector<2x8x256xf32> to vector<2x1x8x256xf32>
    tpu.vector_store %arg4[%c0_39, %c2_40, %c0_41, %c0_42], %68 {strides = array<i32>} : memref<2x4x8x256xf32, #tpu.memory_space<vmem>>, vector<2x1x8x256xf32>,
    %c0_43 = arith.constant 0 : index
    %c3_44 = arith.constant 3 : index
    %c0_45 = arith.constant 0 : index
    %c0_46 = arith.constant 0 : index
    %69 = vector.load %arg3[%c0_43, %c3_44, %c0_45, %c0_46] : memref<2x4x8x256xf32, #tpu.memory_space<vmem>>, vector<2x1x8x256xf32>
    %70 = vector.shape_cast %69 : vector<2x1x8x256xf32> to vector<2x8x256xf32>
    %71 = arith.mulf %70, %50 : vector<2x8x256xf32>
    %c0_47 = arith.constant 0 : index
    %c3_48 = arith.constant 3 : index
    %c0_49 = arith.constant 0 : index
    %c0_50 = arith.constant 0 : index
    %72 = vector.load %arg4[%c0_47, %c3_48, %c0_49, %c0_50] : memref<2x4x8x256xf32, #tpu.memory_space<vmem>>, vector<2x1x8x256xf32>
    %73 = vector.shape_cast %72 : vector<2x1x8x256xf32> to vector<2x8x256xf32>
    %74 = vector.shape_cast %71 : vector<2x8x256xf32> to vector<2x1x8x256xf32>
    tpu.vector_store %arg4[%c0_47, %c3_48, %c0_49, %c0_50], %74 {strides = array<i32>} : memref<2x4x8x256xf32, #tpu.memory_space<vmem>>, vector<2x1x8x256xf32>,
    return
  }
  func.func @transform_0(%arg0: i32) -> i32 {
    %c0_i32 = arith.constant 0 : i32
    %c0_i32_0 = arith.constant 0 : i32
    return %c0_i32 : i32
  }
  func.func @transform_1(%arg0: i32) -> (i32, i32) {
    %c0_i32 = arith.constant 0 : i32
    %c0_i32_0 = arith.constant 0 : i32
    %c0_i32_1 = arith.constant 0 : i32
    return %c0_i32, %c0_i32_0 : i32, i32
  }
  func.func @transform_2(%arg0: i32) -> (i32, i32, i32, i32) {
    %c0_i32 = arith.constant 0 : i32
    %c0_i32_0 = arith.constant 0 : i32
    %c0_i32_1 = arith.constant 0 : i32
    %c0_i32_2 = arith.constant 0 : i32
    return %arg0, %c0_i32, %c0_i32_0, %c0_i32_1 : i32, i32, i32, i32
  }
  func.func @transform_3(%arg0: i32) -> (i32, i32, i32, i32) {
    %c0_i32 = arith.constant 0 : i32
    %c0_i32_0 = arith.constant 0 : i32
    %c0_i32_1 = arith.constant 0 : i32
    %c0_i32_2 = arith.constant 0 : i32
    return %arg0, %c0_i32, %c0_i32_0, %c0_i32_1 : i32, i32, i32, i32
  }
}

module attributes {stable_mosaic.version = 11 : i64} {
  func.func @spatial_gate_kernel(%arg0: i32, %arg1: memref<2xf32, #tpu.memory_space<smem>>, %arg2: memref<3584x256xbf16, #tpu.memory_space<vmem>>, %arg3: memref<2x4x8x256xf32, #tpu.memory_space<vmem>>, %arg4: memref<2x4x8x256xf32, #tpu.memory_space<vmem>>) attributes {dimension_semantics = [#tpu.dimension_semantics<parallel>], iteration_bounds = array<i64: 1>, scalar_prefetch = 0 : i64, scratch_operands = 0 : i64, tpu.core_type = #tpu.core_type<tc>, window_params = [{transform_indices = @transform_0, window_bounds = array<i64: 2>}, {pipeline_mode = #tpu.pipeline_mode<synchronous>, transform_indices = @transform_1, window_bounds = array<i64: 3584, 256>}, {transform_indices = @transform_2, window_bounds = array<i64: 2, 4, 8, 256>}, {transform_indices = @transform_3, window_bounds = array<i64: 2, 4, 8, 256>}]} {
    %c0 = arith.constant 0 : index
    %c0_0 = arith.constant 0 : index
    %c0_1 = arith.constant 0 : index
    %c0_2 = arith.constant 0 : index
    %0 = vector.load %arg3[%c0, %c0_0, %c0_1, %c0_2] : memref<2x4x8x256xf32, #tpu.memory_space<vmem>>, vector<2x1x8x256xf32>
    %1 = vector.shape_cast %0 : vector<2x1x8x256xf32> to vector<2x8x256xf32>
    %c0_3 = arith.constant 0 : index
    %c1 = arith.constant 1 : index
    %c0_4 = arith.constant 0 : index
    %c0_5 = arith.constant 0 : index
    %2 = vector.load %arg3[%c0_3, %c1, %c0_4, %c0_5] : memref<2x4x8x256xf32, #tpu.memory_space<vmem>>, vector<2x1x8x256xf32>
    %3 = vector.shape_cast %2 : vector<2x1x8x256xf32> to vector<2x8x256xf32>
    %4 = arith.maximumf %1, %3 : vector<2x8x256xf32>
    %5 = arith.addf %1, %3 : vector<2x8x256xf32>
    %c0_6 = arith.constant 0 : index
    %c2 = arith.constant 2 : index
    %c0_7 = arith.constant 0 : index
    %c0_8 = arith.constant 0 : index
    %6 = vector.load %arg3[%c0_6, %c2, %c0_7, %c0_8] : memref<2x4x8x256xf32, #tpu.memory_space<vmem>>, vector<2x1x8x256xf32>
    %7 = vector.shape_cast %6 : vector<2x1x8x256xf32> to vector<2x8x256xf32>
    %8 = arith.maximumf %4, %7 : vector<2x8x256xf32>
    %9 = arith.addf %5, %7 : vector<2x8x256xf32>
    %c0_9 = arith.constant 0 : index
    %c3 = arith.constant 3 : index
    %c0_10 = arith.constant 0 : index
    %c0_11 = arith.constant 0 : index
    %10 = vector.load %arg3[%c0_9, %c3, %c0_10, %c0_11] : memref<2x4x8x256xf32, #tpu.memory_space<vmem>>, vector<2x1x8x256xf32>
    %11 = vector.shape_cast %10 : vector<2x1x8x256xf32> to vector<2x8x256xf32>
    %12 = arith.maximumf %8, %11 : vector<2x8x256xf32>
    %13 = arith.addf %9, %11 : vector<2x8x256xf32>
    %14 = arith.truncf %12 : vector<2x8x256xf32> to vector<2x8x256xbf16>
    %cst = arith.constant 2.500000e-01 : f32
    %15 = vector.broadcast %cst : f32 to vector<2x8x256xf32>
    %16 = arith.mulf %13, %15 : vector<2x8x256xf32>
    %17 = arith.truncf %16 : vector<2x8x256xf32> to vector<2x8x256xbf16>
    %cst_12 = arith.constant 0.000000e+00 : bf16
    %18 = vector.broadcast %cst_12 : bf16 to vector<2x3x256xbf16>
    %19 = tpu.concatenate %18, %14, %18 in 1 : vector<2x3x256xbf16>, vector<2x8x256xbf16>, vector<2x3x256xbf16> -> vector<2x14x256xbf16>
    %20 = vector.extract_strided_slice %19 {offsets = [0, 0, 0], sizes = [2, 8, 256], strides = [1, 1, 1]} : vector<2x14x256xbf16> to vector<2x8x256xbf16>
    %21 = vector.extract_strided_slice %19 {offsets = [0, 1, 0], sizes = [2, 8, 256], strides = [1, 1, 1]} : vector<2x14x256xbf16> to vector<2x8x256xbf16>
    %22 = vector.extract_strided_slice %19 {offsets = [0, 2, 0], sizes = [2, 8, 256], strides = [1, 1, 1]} : vector<2x14x256xbf16> to vector<2x8x256xbf16>
    %23 = vector.extract_strided_slice %19 {offsets = [0, 3, 0], sizes = [2, 8, 256], strides = [1, 1, 1]} : vector<2x14x256xbf16> to vector<2x8x256xbf16>
    %24 = vector.extract_strided_slice %19 {offsets = [0, 4, 0], sizes = [2, 8, 256], strides = [1, 1, 1]} : vector<2x14x256xbf16> to vector<2x8x256xbf16>
    %25 = vector.extract_strided_slice %19 {offsets = [0, 5, 0], sizes = [2, 8, 256], strides = [1, 1, 1]} : vector<2x14x256xbf16> to vector<2x8x256xbf16>
    %26 = vector.extract_strided_slice %19 {offsets = [0, 6, 0], sizes = [2, 8, 256], strides = [1, 1, 1]} : vector<2x14x256xbf16> to vector<2x8x256xbf16>
    %27 = tpu.concatenate %18, %17, %18 in 1 : vector<2x3x256xbf16>, vector<2x8x256xbf16>, vector<2x3x256xbf16> -> vector<2x14x256xbf16>
    %28 = vector.extract_strided_slice %27 {offsets = [0, 0, 0], sizes = [2, 8, 256], strides = [1, 1, 1]} : vector<2x14x256xbf16> to vector<2x8x256xbf16>
    %29 = vector.extract_strided_slice %27 {offsets = [0, 1, 0], sizes = [2, 8, 256], strides = [1, 1, 1]} : vector<2x14x256xbf16> to vector<2x8x256xbf16>
    %30 = vector.extract_strided_slice %27 {offsets = [0, 2, 0], sizes = [2, 8, 256], strides = [1, 1, 1]} : vector<2x14x256xbf16> to vector<2x8x256xbf16>
    %31 = vector.extract_strided_slice %27 {offsets = [0, 3, 0], sizes = [2, 8, 256], strides = [1, 1, 1]} : vector<2x14x256xbf16> to vector<2x8x256xbf16>
    %32 = vector.extract_strided_slice %27 {offsets = [0, 4, 0], sizes = [2, 8, 256], strides = [1, 1, 1]} : vector<2x14x256xbf16> to vector<2x8x256xbf16>
    %33 = vector.extract_strided_slice %27 {offsets = [0, 5, 0], sizes = [2, 8, 256], strides = [1, 1, 1]} : vector<2x14x256xbf16> to vector<2x8x256xbf16>
    %34 = vector.extract_strided_slice %27 {offsets = [0, 6, 0], sizes = [2, 8, 256], strides = [1, 1, 1]} : vector<2x14x256xbf16> to vector<2x8x256xbf16>
    %35 = tpu.concatenate %20, %21, %22, %23, %24, %25, %26, %28, %29, %30, %31, %32, %33, %34 in 2 : vector<2x8x256xbf16>, vector<2x8x256xbf16>, vector<2x8x256xbf16>, vector<2x8x256xbf16>, vector<2x8x256xbf16>, vector<2x8x256xbf16>, vector<2x8x256xbf16>, vector<2x8x256xbf16>, vector<2x8x256xbf16>, vector<2x8x256xbf16>, vector<2x8x256xbf16>, vector<2x8x256xbf16>, vector<2x8x256xbf16>, vector<2x8x256xbf16> -> vector<2x8x3584xbf16>
    %36 = vector.shape_cast %35 : vector<2x8x3584xbf16> to vector<16x3584xbf16>
    %c0_13 = arith.constant 0 : index
    %c0_14 = arith.constant 0 : index
    %37 = vector.load %arg2[%c0_13, %c0_14] : memref<3584x256xbf16, #tpu.memory_space<vmem>>, vector<3584x256xbf16>
    %cst_15 = arith.constant dense<0.000000e+00> : vector<16x256xf32>
    %38 = tpu.matmul %36, %37, %cst_15 {dimension_numbers = #tpu.dot_dimension_numbers<[1], [0], [0], [1], [0, 0, 1, 1], [], []>} : vector<16x3584xbf16>, vector<3584x256xbf16>, vector<16x256xf32> -> vector<16x256xf32>
    %39 = vector.shape_cast %38 : vector<16x256xf32> to vector<2x8x256xf32>
    %c0_16 = arith.constant 0 : index
    %40 = memref.load %arg1[%c0_16] : memref<2xf32, #tpu.memory_space<smem>>
    %41 = vector.broadcast %40 : f32 to vector<2x8x256xf32>
    %42 = arith.mulf %39, %41 : vector<2x8x256xf32>
    %c1_17 = arith.constant 1 : index
    %43 = memref.load %arg1[%c1_17] : memref<2xf32, #tpu.memory_space<smem>>
    %44 = vector.broadcast %43 : f32 to vector<2x8x256xf32>
    %45 = arith.addf %42, %44 : vector<2x8x256xf32>
    %46 = arith.negf %45 : vector<2x8x256xf32>
    %47 = math.exp %46 : vector<2x8x256xf32>
    %cst_18 = arith.constant 1.000000e+00 : f32
    %48 = vector.broadcast %cst_18 : f32 to vector<2x8x256xf32>
    %49 = arith.addf %48, %47 : vector<2x8x256xf32>
    %50 = arith.divf %48, %49 : vector<2x8x256xf32>
    %c0_19 = arith.constant 0 : index
    %c0_20 = arith.constant 0 : index
    %c0_21 = arith.constant 0 : index
    %c0_22 = arith.constant 0 : index
    %51 = vector.load %arg3[%c0_19, %c0_20, %c0_21, %c0_22] : memref<2x4x8x256xf32, #tpu.memory_space<vmem>>, vector<2x1x8x256xf32>
    %52 = vector.shape_cast %51 : vector<2x1x8x256xf32> to vector<2x8x256xf32>
    %53 = arith.mulf %52, %50 : vector<2x8x256xf32>
    %c0_23 = arith.constant 0 : index
    %c0_24 = arith.constant 0 : index
    %c0_25 = arith.constant 0 : index
    %c0_26 = arith.constant 0 : index
    %54 = vector.load %arg4[%c0_23, %c0_24, %c0_25, %c0_26] : memref<2x4x8x256xf32, #tpu.memory_space<vmem>>, vector<2x1x8x256xf32>
    %55 = vector.shape_cast %54 : vector<2x1x8x256xf32> to vector<2x8x256xf32>
    %56 = vector.shape_cast %53 : vector<2x8x256xf32> to vector<2x1x8x256xf32>
    tpu.vector_store %arg4[%c0_23, %c0_24, %c0_25, %c0_26], %56 {strides = array<i32>} : memref<2x4x8x256xf32, #tpu.memory_space<vmem>>, vector<2x1x8x256xf32>,
    %c0_27 = arith.constant 0 : index
    %c1_28 = arith.constant 1 : index
    %c0_29 = arith.constant 0 : index
    %c0_30 = arith.constant 0 : index
    %57 = vector.load %arg3[%c0_27, %c1_28, %c0_29, %c0_30] : memref<2x4x8x256xf32, #tpu.memory_space<vmem>>, vector<2x1x8x256xf32>
    %58 = vector.shape_cast %57 : vector<2x1x8x256xf32> to vector<2x8x256xf32>
    %59 = arith.mulf %58, %50 : vector<2x8x256xf32>
    %c0_31 = arith.constant 0 : index
    %c1_32 = arith.constant 1 : index
    %c0_33 = arith.constant 0 : index
    %c0_34 = arith.constant 0 : index
    %60 = vector.load %arg4[%c0_31, %c1_32, %c0_33, %c0_34] : memref<2x4x8x256xf32, #tpu.memory_space<vmem>>, vector<2x1x8x256xf32>
    %61 = vector.shape_cast %60 : vector<2x1x8x256xf32> to vector<2x8x256xf32>
    %62 = vector.shape_cast %59 : vector<2x8x256xf32> to vector<2x1x8x256xf32>
    tpu.vector_store %arg4[%c0_31, %c1_32, %c0_33, %c0_34], %62 {strides = array<i32>} : memref<2x4x8x256xf32, #tpu.memory_space<vmem>>, vector<2x1x8x256xf32>,
    %c0_35 = arith.constant 0 : index
    %c2_36 = arith.constant 2 : index
    %c0_37 = arith.constant 0 : index
    %c0_38 = arith.constant 0 : index
    %63 = vector.load %arg3[%c0_35, %c2_36, %c0_37, %c0_38] : memref<2x4x8x256xf32, #tpu.memory_space<vmem>>, vector<2x1x8x256xf32>
    %64 = vector.shape_cast %63 : vector<2x1x8x256xf32> to vector<2x8x256xf32>
    %65 = arith.mulf %64, %50 : vector<2x8x256xf32>
    %c0_39 = arith.constant 0 : index
    %c2_40 = arith.constant 2 : index
    %c0_41 = arith.constant 0 : index
    %c0_42 = arith.constant 0 : index
    %66 = vector.load %arg4[%c0_39, %c2_40, %c0_41, %c0_42] : memref<2x4x8x256xf32, #tpu.memory_space<vmem>>, vector<2x1x8x256xf32>
    %67 = vector.shape_cast %66 : vector<2x1x8x256xf32> to vector<2x8x256xf32>
    %68 = vector.shape_cast %65 : vector<2x8x256xf32> to vector<2x1x8x256xf32>
    tpu.vector_store %arg4[%c0_39, %c2_40, %c0_41, %c0_42], %68 {strides = array<i32>} : memref<2x4x8x256xf32, #tpu.memory_space<vmem>>, vector<2x1x8x256xf32>,
    %c0_43 = arith.constant 0 : index
    %c3_44 = arith.constant 3 : index
    %c0_45 = arith.constant 0 : index
    %c0_46 = arith.constant 0 : index
    %69 = vector.load %arg3[%c0_43, %c3_44, %c0_45, %c0_46] : memref<2x4x8x256xf32, #tpu.memory_space<vmem>>, vector<2x1x8x256xf32>
    %70 = vector.shape_cast %69 : vector<2x1x8x256xf32> to vector<2x8x256xf32>
    %71 = arith.mulf %70, %50 : vector<2x8x256xf32>
    %c0_47 = arith.constant 0 : index
    %c3_48 = arith.constant 3 : index
    %c0_49 = arith.constant 0 : index
    %c0_50 = arith.constant 0 : index
    %72 = vector.load %arg4[%c0_47, %c3_48, %c0_49, %c0_50] : memref<2x4x8x256xf32, #tpu.memory_space<vmem>>, vector<2x1x8x256xf32>
    %73 = vector.shape_cast %72 : vector<2x1x8x256xf32> to vector<2x8x256xf32>
    %74 = vector.shape_cast %71 : vector<2x8x256xf32> to vector<2x1x8x256xf32>
    tpu.vector_store %arg4[%c0_47, %c3_48, %c0_49, %c0_50], %74 {strides = array<i32>} : memref<2x4x8x256xf32, #tpu.memory_space<vmem>>, vector<2x1x8x256xf32>,
    return
  }
  func.func @transform_0(%arg0: i32) -> i32 {
    %c0_i32 = arith.constant 0 : i32
    %c0_i32_0 = arith.constant 0 : i32
    return %c0_i32 : i32
  }
  func.func @transform_1(%arg0: i32) -> (i32, i32) {
    %c0_i32 = arith.constant 0 : i32
    %c0_i32_0 = arith.constant 0 : i32
    %c0_i32_1 = arith.constant 0 : i32
    return %c0_i32, %c0_i32_0 : i32, i32
  }
  func.func @transform_2(%arg0: i32) -> (i32, i32, i32, i32) {
    %c0_i32 = arith.constant 0 : i32
    %c0_i32_0 = arith.constant 0 : i32
    %c0_i32_1 = arith.constant 0 : i32
    %c0_i32_2 = arith.constant 0 : i32
    return %arg0, %c0_i32, %c0_i32_0, %c0_i32_1 : i32, i32, i32, i32
  }
  func.func @transform_3(%arg0: i32) -> (i32, i32, i32, i32) {
    %c0_i32 = arith.constant 0 : i32
    %c0_i32_0 = arith.constant 0 : i32
    %c0_i32_1 = arith.constant 0 : i32
    %c0_i32_2 = arith.constant 0 : i32
    return %arg0, %c0_i32, %c0_i32_0, %c0_i32_1 : i32, i32, i32, i32
  }
}

</mosaic_0001>

<llo_original>
// kernel: tpu_custom_call.1
$region0: #{tpu_custom_call.1}
  #allocation0 [shape = 'u32[]', space=smem, size = 0x4, offset = 0x4, fixed_abs, tag = 'smem constant byte address 0x4 - core index']
  #allocation1 [shape = 'u32[144,128]{1,0:T(1,128)}', space=vmem, size = 0x12000, scoped, tag = 'internal scratch']
  %s0 = inlined_call_operand.hbm [shape: f32[2], index: 0, kind: input, shape index: {}]
  %s1 = inlined_call_operand.hbm [shape: bf16[3584,256], index: 1, kind: input, shape index: {}]
  %s2 = inlined_call_operand.hbm [shape: f32[2,4,8,256], index: 2, kind: input, shape index: {}]
  %s3 = inlined_call_operand.hbm [shape: f32[2,4,8,256], index: 3, kind: output, shape index: {}]
  %s4 = sld [smem:[#allocation0]]
  $region34: #{tpu_custom_call.1} parent=0
    _
  %s6 = ssub.s32 1, %s4
  %s7 = scalar_select 0, %s6, %s4
  $region1: #{tpu_custom_call.1} parent=0
    #allocation2 [shape = 'u8[512]{0}', space=smem, size = 0x200, scoped, tag = 'input window, operand 0, single buffered']
    #allocation3 [shape = 's32[1]{0}', space=sflag, size = 0x4, scoped, tag = 'scoped memory for tpu_custom_call.1']
    #allocation4 [shape = 's32[1]{0}', space=sflag, size = 0x4, scoped, tag = 'scoped memory for tpu_custom_call.1']
    #allocation5 [shape = 's32[1]{0}', space=sflag, size = 0x4, scoped, tag = 'scoped memory for tpu_custom_call.1']
    #allocation6 [shape = 'u8[1835008]{0}', space=vmem, size = 0x1c0000, scoped, tag = 'input window, operand 1, single buffered']
    #allocation7 [shape = 'u8[65536]{0}', space=vmem, size = 0x10000, scoped, tag = 'input window, operand 2, single buffered']
    #allocation8 [shape = 's32[1]{0}', space=sflag, size = 0x4, scoped, tag = 'scoped memory for tpu_custom_call.1']
    #allocation9 [shape = 'u8[65536]{0}', space=vmem, size = 0x10000, scoped, tag = 'output window, operand 0, single buffered']
    %8 = vsyncpa [#allocation5], 0
    %9 = vsyncpa [#allocation3], 0
    %10 = vsyncpa [#allocation8], 0
    %11 = vsyncpa [#allocation4], 0
    // Predicated region
    $region2: #{tpu_custom_call.1} parent=1 // pred_check
      _
    $region3: #{tpu_custom_call.1} parent=1 // pred_check_branch
      %13 = sbr.rel (0) target = $region5
    $region4: #{tpu_custom_call.1} parent=1 // pred_region
      %s15 = ssub.s32 16, 16
      %16 = vsyncadd [#allocation5], %s15
      %19 = dma.hbm_to_smem %s0, 16, [#allocation2], [#allocation5]
    $region5: #{tpu_custom_call.1} parent=1 // pred_fallthru
      _
    // Predicated region
    $region6: #{tpu_custom_call.1} parent=1 // pred_check
      _
    $region7: #{tpu_custom_call.1} parent=1 // pred_check_branch
      %21 = sbr.rel (0) target = $region9
    $region8: #{tpu_custom_call.1} parent=1 // pred_region
      %s23 = ssub.s32 57344, 57344
      %24 = vsyncadd [#allocation3], %s23
      %s25 = sshll.u32 [#allocation6], 4
      %s26 = int_to_ptr.vmem [resolvable:$true] %s25
      %31 = dma.hbm_to_vmem [thread:$0]  %s1, 57344, %s26, [#allocation3], 128, 128, 8
    $region9: #{tpu_custom_call.1} parent=1 // pred_fallthru
      _
    // Predicated region
    $region10: #{tpu_custom_call.1} parent=1 // pred_check
      _
    $region11: #{tpu_custom_call.1} parent=1 // pred_check_branch
      %33 = sbr.rel (0) target = $region13
    $region12: #{tpu_custom_call.1} parent=1 // pred_region
      %s35 = ssub.s32 2048, 2048
      %36 = vsyncadd [#allocation8], %s35
      %s37 = sshll.u32 [#allocation7], 4
      %s38 = int_to_ptr.vmem [resolvable:$true] %s37
      %43 = dma.hbm_to_vmem [thread:$0]  %s2, 2048, %s38, [#allocation8], 256, 256, 16
    $region13: #{tpu_custom_call.1} parent=1 // pred_fallthru
      _
    // Predicated region
    $region14: #{tpu_custom_call.1} parent=1 // pred_check
      _
    $region15: #{tpu_custom_call.1} parent=1 // pred_check_branch
      %45 = sbr.rel (0) target = $region17
    $region16: #{tpu_custom_call.1} parent=1 // pred_region
      %46 = dma.done [#allocation5], 16
    $region17: #{tpu_custom_call.1} parent=1 // pred_fallthru
      _
    // Predicated region
    $region18: #{tpu_custom_call.1} parent=1 // pred_check
      _
    $region19: #{tpu_custom_call.1} parent=1 // pred_check_branch
      %48 = sbr.rel (0) target = $region21
    $region20: #{tpu_custom_call.1} parent=1 // pred_region
      %49 = dma.done [#allocation3], 57344
    $region21: #{tpu_custom_call.1} parent=1 // pred_fallthru
      _
    // Predicated region
    $region22: #{tpu_custom_call.1} parent=1 // pred_check
      _
    $region23: #{tpu_custom_call.1} parent=1 // pred_check_branch
      %51 = sbr.rel (0) target = $region25
    $region24: #{tpu_custom_call.1} parent=1 // pred_region
      %52 = dma.done [#allocation8], 2048
    $region25: #{tpu_custom_call.1} parent=1 // pred_fallthru
      _
    %53 = sfence
    %v55 = vld [vmem:[#allocation7] sm:$0xff]
    %v56 = vld [vmem:[#allocation7 + $0x8] sm:$0xff]
    %v57 = vld [vmem:[#allocation7 + $0x40] sm:$0xff]
    %v58 = vld [vmem:[#allocation7 + $0x48] sm:$0xff]
    %s59 = scalar_lea.vmem [#allocation7], 16
    %v60 = vld [vmem:[%s59] sm:$0xff]
    %v61 = vld [vmem:[%s59 + $0x8] sm:$0xff]
    %v62 = vld [vmem:[%s59 + $0x40] sm:$0xff]
    %v63 = vld [vmem:[%s59 + $0x48] sm:$0xff]
    %v64 = vmax.f32 %v55, %v60
    %v65 = vmax.f32 %v56, %v61
    %v66 = vmax.f32 %v57, %v62
    %v67 = vmax.f32 %v58, %v63
    %v68 = vadd.f32 %v55, %v60
    %v69 = vadd.f32 %v56, %v61
    %v70 = vadd.f32 %v57, %v62
    %v71 = vadd.f32 %v58, %v63
    %s72 = scalar_lea.vmem [#allocation7], 32
    %v73 = vld [vmem:[%s72] sm:$0xff]
    %v74 = vld [vmem:[%s72 + $0x8] sm:$0xff]
    %v75 = vld [vmem:[%s72 + $0x40] sm:$0xff]
    %v76 = vld [vmem:[%s72 + $0x48] sm:$0xff]
    %v77 = vmax.f32 %v64, %v73
    %v78 = vmax.f32 %v65, %v74
    %v79 = vmax.f32 %v66, %v75
    %v80 = vmax.f32 %v67, %v76
    %v81 = vadd.f32 %v68, %v73
    %v82 = vadd.f32 %v69, %v74
    %v83 = vadd.f32 %v70, %v75
    %v84 = vadd.f32 %v71, %v76
    %s85 = scalar_lea.vmem [#allocation7], 48
    %v86 = vld [vmem:[%s85] sm:$0xff]
    %v87 = vld [vmem:[%s85 + $0x8] sm:$0xff]
    %v88 = vld [vmem:[%s85 + $0x40] sm:$0xff]
    %v89 = vld [vmem:[%s85 + $0x48] sm:$0xff]
    %v90 = vmax.f32 %v77, %v86
    %v91 = vmax.f32 %v78, %v87
    %v92 = vmax.f32 %v79, %v88
    %v93 = vmax.f32 %v80, %v89
    %v94 = vadd.f32 %v81, %v86
    %v95 = vadd.f32 %v82, %v87
    %v96 = vadd.f32 %v83, %v88
    %v97 = vadd.f32 %v84, %v89
    %v98 = vpack.c.bf16 %v90, %v90
    %v99 = vpack.c.bf16 %v91, %v91
    %v100 = vpack.c.bf16 %v92, %v92
    %v101 = vpack.c.bf16 %v93, %v93
    %v102 = vmul.f32 %v94, 0.25
    %v103 = vmul.f32 %v95, 0.25
    %v104 = vmul.f32 %v96, 0.25
    %v105 = vmul.f32 %v97, 0.25
    %v106 = vpack.c.bf16 %v102, %v102
    %v107 = vpack.c.bf16 %v103, %v103
    %v108 = vpack.c.bf16 %v104, %v104
    %v109 = vpack.c.bf16 %v105, %v105
    %v111 = vshrl.u32 %v98, 16
    %v113 = vrot.slane %v111, 6
    %v114 = vshll.u32 %v98, 16
    %v116 = vrot.slane %v114, 7
    %v117 = vor.u32 %v113, %v116
    %v119 = vshrl.u32 %v99, 16
    %v121 = vrot.slane %v119, 6
    %v122 = vshll.u32 %v99, 16
    %v124 = vrot.slane %v122, 7
    %v125 = vor.u32 %v121, %v124
    %v127 = vshrl.u32 %v100, 16
    %v129 = vrot.slane %v127, 6
    %v130 = vshll.u32 %v100, 16
    %v132 = vrot.slane %v130, 7
    %v133 = vor.u32 %v129, %v132
    %v135 = vshrl.u32 %v101, 16
    %v137 = vrot.slane %v135, 6
    %v138 = vshll.u32 %v101, 16
    %v140 = vrot.slane %v138, 7
    %v141 = vor.u32 %v137, %v140
    %vm146 = vcmask 1041408
    %vm147 = vsmask.f32 1280
    %vm148 = vmand %vm146, %vm147
    %v149 = vsel %vm148, 0, %v117
    %v150 = vsel %vm148, 0, %v125
    %v151 = vsel %vm148, 0, %v133
    %v152 = vsel %vm148, 0, %v141
    %vm153 = vcmask 1045504
    %vm154 = vsmask.f32 5376
    %vm155 = vmand %vm153, %vm154
    %v156 = vsel %vm155, %v149, 0
    %v157 = vsel %vm155, %v150, 0
    %v158 = vsel %vm155, %v151, 0
    %v159 = vsel %vm155, %v152, 0
    %v161 = vshrl.u32 %v106, 16
    %v163 = vrot.slane %v161, 6
    %v164 = vshll.u32 %v106, 16
    %v166 = vrot.slane %v164, 7
    %v167 = vor.u32 %v163, %v166
    %v169 = vshrl.u32 %v107, 16
    %v171 = vrot.slane %v169, 6
    %v172 = vshll.u32 %v107, 16
    %v174 = vrot.slane %v172, 7
    %v175 = vor.u32 %v171, %v174
    %v177 = vshrl.u32 %v108, 16
    %v179 = vrot.slane %v177, 6
    %v180 = vshll.u32 %v108, 16
    %v182 = vrot.slane %v180, 7
    %v183 = vor.u32 %v179, %v182
    %v185 = vshrl.u32 %v109, 16
    %v187 = vrot.slane %v185, 6
    %v188 = vshll.u32 %v109, 16
    %v190 = vrot.slane %v188, 7
    %v191 = vor.u32 %v187, %v190
    %v196 = vsel %vm148, 0, %v167
    %v197 = vsel %vm148, 0, %v175
    %v198 = vsel %vm148, 0, %v183
    %v199 = vsel %vm148, 0, %v191
    %v200 = vsel %vm155, %v196, 0
    %v201 = vsel %vm155, %v197, 0
    %v202 = vsel %vm155, %v198, 0
    %v203 = vsel %vm155, %v199, 0
    %v205 = vshrl.u32 %v156, 16
    %v207 = vshll.u32 %v156, 16
    %v209 = vrot.slane %v207, 1
    %v210 = vor.u32 %v205, %v209
    %v212 = vshrl.u32 %v157, 16
    %v214 = vshll.u32 %v157, 16
    %v216 = vrot.slane %v214, 1
    %v217 = vor.u32 %v212, %v216
    %v219 = vshrl.u32 %v158, 16
    %v221 = vshll.u32 %v158, 16
    %v223 = vrot.slane %v221, 1
    %v224 = vor.u32 %v219, %v223
    %v226 = vshrl.u32 %v159, 16
    %v228 = vshll.u32 %v159, 16
    %v230 = vrot.slane %v228, 1
    %v231 = vor.u32 %v226, %v230
    %v236 = vrot.slane %v156, 1
    %v237 = vrot.slane %v157, 1
    %v238 = vrot.slane %v158, 1
    %v239 = vrot.slane %v159, 1
    %v240 = vrot.slane %v205, 1
    %v241 = vrot.slane %v207, 2
    %v242 = vor.u32 %v240, %v241
    %v243 = vrot.slane %v212, 1
    %v244 = vrot.slane %v214, 2
    %v245 = vor.u32 %v243, %v244
    %v246 = vrot.slane %v219, 1
    %v247 = vrot.slane %v221, 2
    %v248 = vor.u32 %v246, %v247
    %v249 = vrot.slane %v226, 1
    %v250 = vrot.slane %v228, 2
    %v251 = vor.u32 %v249, %v250
    %v252 = vrot.slane %v156, 2
    %v253 = vrot.slane %v157, 2
    %v254 = vrot.slane %v158, 2
    %v255 = vrot.slane %v159, 2
    %v256 = vrot.slane %v205, 2
    %v257 = vrot.slane %v207, 3
    %v258 = vor.u32 %v256, %v257
    %v259 = vrot.slane %v212, 2
    %v260 = vrot.slane %v214, 3
    %v261 = vor.u32 %v259, %v260
    %v262 = vrot.slane %v219, 2
    %v263 = vrot.slane %v221, 3
    %v264 = vor.u32 %v262, %v263
    %v265 = vrot.slane %v226, 2
    %v266 = vrot.slane %v228, 3
    %v267 = vor.u32 %v265, %v266
    %v268 = vrot.slane %v156, 3
    %v269 = vrot.slane %v157, 3
    %v270 = vrot.slane %v158, 3
    %v271 = vrot.slane %v159, 3
    %v273 = vshrl.u32 %v200, 16
    %v275 = vshll.u32 %v200, 16
    %v277 = vrot.slane %v275, 1
    %v278 = vor.u32 %v273, %v277
    %v280 = vshrl.u32 %v201, 16
    %v282 = vshll.u32 %v201, 16
    %v284 = vrot.slane %v282, 1
    %v285 = vor.u32 %v280, %v284
    %v287 = vshrl.u32 %v202, 16
    %v289 = vshll.u32 %v202, 16
    %v291 = vrot.slane %v289, 1
    %v292 = vor.u32 %v287, %v291
    %v294 = vshrl.u32 %v203, 16
    %v296 = vshll.u32 %v203, 16
    %v298 = vrot.slane %v296, 1
    %v299 = vor.u32 %v294, %v298
    %v304 = vrot.slane %v200, 1
    %v305 = vrot.slane %v201, 1
    %v306 = vrot.slane %v202, 1
    %v307 = vrot.slane %v203, 1
    %v308 = vrot.slane %v273, 1
    %v309 = vrot.slane %v275, 2
    %v310 = vor.u32 %v308, %v309
    %v311 = vrot.slane %v280, 1
    %v312 = vrot.slane %v282, 2
    %v313 = vor.u32 %v311, %v312
    %v314 = vrot.slane %v287, 1
    %v315 = vrot.slane %v289, 2
    %v316 = vor.u32 %v314, %v315
    %v317 = vrot.slane %v294, 1
    %v318 = vrot.slane %v296, 2
    %v319 = vor.u32 %v317, %v318
    %v320 = vrot.slane %v200, 2
    %v321 = vrot.slane %v201, 2
    %v322 = vrot.slane %v202, 2
    %v323 = vrot.slane %v203, 2
    %v324 = vrot.slane %v273, 2
    %v325 = vrot.slane %v275, 3
    %v326 = vor.u32 %v324, %v325
    %v327 = vrot.slane %v280, 2
    %v328 = vrot.slane %v282, 3
    %v329 = vor.u32 %v327, %v328
    %v330 = vrot.slane %v287, 2
    %v331 = vrot.slane %v289, 3
    %v332 = vor.u32 %v330, %v331
    %v333 = vrot.slane %v294, 2
    %v334 = vrot.slane %v296, 3
    %v335 = vor.u32 %v333, %v334
    %v336 = vrot.slane %v200, 3
    %v337 = vrot.slane %v201, 3
    %v338 = vrot.slane %v202, 3
    %v339 = vrot.slane %v203, 3
    %v340 = vunpack.c.l.b16 %v156
    %v341 = vunpack.c.l.b16 %v157
    %v342 = vunpack.c.l.b16 %v210
    %v343 = vunpack.c.l.b16 %v217
    %v344 = vunpack.c.l.b16 %v236
    %v345 = vunpack.c.l.b16 %v237
    %v346 = vunpack.c.l.b16 %v242
    %v347 = vunpack.c.l.b16 %v245
    %v348 = vunpack.c.l.b16 %v252
    %v349 = vunpack.c.l.b16 %v253
    %v350 = vunpack.c.l.b16 %v258
    %v351 = vunpack.c.l.b16 %v261
    %v352 = vunpack.c.l.b16 %v268
    %v353 = vunpack.c.l.b16 %v269
    %v354 = vunpack.c.l.b16 %v200
    %v355 = vunpack.c.l.b16 %v201
    %v356 = vunpack.c.l.b16 %v278
    %v357 = vunpack.c.l.b16 %v285
    %v358 = vunpack.c.l.b16 %v304
    %v359 = vunpack.c.l.b16 %v305
    %v360 = vunpack.c.l.b16 %v310
    %v361 = vunpack.c.l.b16 %v313
    %v362 = vunpack.c.l.b16 %v320
    %v363 = vunpack.c.l.b16 %v321
    %v364 = vunpack.c.l.b16 %v326
    %v365 = vunpack.c.l.b16 %v329
    %v366 = vunpack.c.l.b16 %v336
    %v367 = vunpack.c.l.b16 %v337
    %v368 = vunpack.c.l.b16 %v158
    %v369 = vunpack.c.l.b16 %v159
    %v370 = vunpack.c.l.b16 %v224
    %v371 = vunpack.c.l.b16 %v231
    %v372 = vunpack.c.l.b16 %v238
    %v373 = vunpack.c.l.b16 %v239
    %v374 = vunpack.c.l.b16 %v248
    %v375 = vunpack.c.l.b16 %v251
    %v376 = vunpack.c.l.b16 %v254
    %v377 = vunpack.c.l.b16 %v255
    %v378 = vunpack.c.l.b16 %v264
    %v379 = vunpack.c.l.b16 %v267
    %v380 = vunpack.c.l.b16 %v270
    %v381 = vunpack.c.l.b16 %v271
    %v382 = vunpack.c.l.b16 %v202
    %v383 = vunpack.c.l.b16 %v203
    %v384 = vunpack.c.l.b16 %v292
    %v385 = vunpack.c.l.b16 %v299
    %v386 = vunpack.c.l.b16 %v306
    %v387 = vunpack.c.l.b16 %v307
    %v388 = vunpack.c.l.b16 %v316
    %v389 = vunpack.c.l.b16 %v319
    %v390 = vunpack.c.l.b16 %v322
    %v391 = vunpack.c.l.b16 %v323
    %v392 = vunpack.c.l.b16 %v332
    %v393 = vunpack.c.l.b16 %v335
    %v394 = vunpack.c.l.b16 %v338
    %v395 = vunpack.c.l.b16 %v339
    %v396 = vld [vmem:[#allocation6] sm:$0xff]
    %v397 = vld [vmem:[#allocation6 + $0x8] sm:$0xff]
    %v398 = vld [vmem:[#allocation6 + $0x10] sm:$0xff]
    %v399 = vld [vmem:[#allocation6 + $0x18] sm:$0xff]
    %v400 = vld [vmem:[#allocation6 + $0x20] sm:$0xff]
    %v401 = vld [vmem:[#allocation6 + $0x28] sm:$0xff]
    %v402 = vld [vmem:[#allocation6 + $0x30] sm:$0xff]
    %v403 = vld [vmem:[#allocation6 + $0x38] sm:$0xff]
    %v404 = vld [vmem:[#allocation6 + $0x40] sm:$0xff]
    %v405 = vld [vmem:[#allocation6 + $0x48] sm:$0xff]
    %v406 = vld [vmem:[#allocation6 + $0x50] sm:$0xff]
    %v407 = vld [vmem:[#allocation6 + $0x58] sm:$0xff]
    %v408 = vld [vmem:[#allocation6 + $0x60] sm:$0xff]
    %v409 = vld [vmem:[#allocation6 + $0x68] sm:$0xff]
    %v410 = vld [vmem:[#allocation6 + $0x70] sm:$0xff]
    %v411 = vld [vmem:[#allocation6 + $0x78] sm:$0xff]
    %v412 = vld [vmem:[#allocation6 + $0x80] sm:$0xff]
    %v413 = vld [vmem:[#allocation6 + $0x88] sm:$0xff]
    %v414 = vld [vmem:[#allocation6 + $0x90] sm:$0xff]
    %v415 = vld [vmem:[#allocation6 + $0x98] sm:$0xff]
    %v416 = vld [vmem:[#allocation6 + $0xa0] sm:$0xff]
    %v417 = vld [vmem:[#allocation6 + $0xa8] sm:$0xff]
    %v418 = vld [vmem:[#allocation6 + $0xb0] sm:$0xff]
    %v419 = vld [vmem:[#allocation6 + $0xb8] sm:$0xff]
    %v420 = vld [vmem:[#allocation6 + $0xc0] sm:$0xff]
    %v421 = vld [vmem:[#allocation6 + $0xc8] sm:$0xff]
    %v422 = vld [vmem:[#allocation6 + $0xd0] sm:$0xff]
    %v423 = vld [vmem:[#allocation6 + $0xd8] sm:$0xff]
    %v424 = vld [vmem:[#allocation6 + $0xe0] sm:$0xff]
    %v425 = vld [vmem:[#allocation6 + $0xe8] sm:$0xff]
    %v426 = vld [vmem:[#allocation6 + $0xf0] sm:$0xff]
    %v427 = vld [vmem:[#allocation6 + $0xf8] sm:$0xff]
    %v428 = vld [vmem:[#allocation6 + $0x100] sm:$0xff]
    %v429 = vld [vmem:[#allocation6 + $0x108] sm:$0xff]
    %v430 = vld [vmem:[#allocation6 + $0x110] sm:$0xff]
    %v431 = vld [vmem:[#allocation6 + $0x118] sm:$0xff]
    %v432 = vld [vmem:[#allocation6 + $0x120] sm:$0xff]
    %v433 = vld [vmem:[#allocation6 + $0x128] sm:$0xff]
    %v434 = vld [vmem:[#allocation6 + $0x130] sm:$0xff]
    %v435 = vld [vmem:[#allocation6 + $0x138] sm:$0xff]
    %v436 = vld [vmem:[#allocation6 + $0x140] sm:$0xff]
    %v437 = vld [vmem:[#allocation6 + $0x148] sm:$0xff]
    %v438 = vld [vmem:[#allocation6 + $0x150] sm:$0xff]
    %v439 = vld [vmem:[#allocation6 + $0x158] sm:$0xff]
    %v440 = vld [vmem:[#allocation6 + $0x160] sm:$0xff]
    %v441 = vld [vmem:[#allocation6 + $0x168] sm:$0xff]
    %v442 = vld [vmem:[#allocation6 + $0x170] sm:$0xff]
    %v443 = vld [vmem:[#allocation6 + $0x178] sm:$0xff]
    %v444 = vld [vmem:[#allocation6 + $0x180] sm:$0xff]
    %v445 = vld [vmem:[#allocation6 + $0x188] sm:$0xff]
    %v446 = vld [vmem:[#allocation6 + $0x190] sm:$0xff]
    %v447 = vld [vmem:[#allocation6 + $0x198] sm:$0xff]
    %v448 = vld [vmem:[#allocation6 + $0x1a0] sm:$0xff]
    %v449 = vld [vmem:[#allocation6 + $0x1a8] sm:$0xff]
    %v450 = vld [vmem:[#allocation6 + $0x1b0] sm:$0xff]
    %v451 = vld [vmem:[#allocation6 + $0x1b8] sm:$0xff]
    %v452 = vld [vmem:[#allocation6 + $0x1c0] sm:$0xff]
    %v453 = vld [vmem:[#allocation6 + $0x1c8] sm:$0xff]
    %v454 = vld [vmem:[#allocation6 + $0x1d0] sm:$0xff]
    %v455 = vld [vmem:[#allocation6 + $0x1d8] sm:$0xff]
    %v456 = vld [vmem:[#allocation6 + $0x1e0] sm:$0xff]
    %v457 = vld [vmem:[#allocation6 + $0x1e8] sm:$0xff]
    %v458 = vld [vmem:[#allocation6 + $0x1f0] sm:$0xff]
    %v459 = vld [vmem:[#allocation6 + $0x1f8] sm:$0xff]
    %v460 = vld [vmem:[#allocation6 + $0x200] sm:$0xff]
    %v461 = vld [vmem:[#allocation6 + $0x208] sm:$0xff]
    %v462 = vld [vmem:[#allocation6 + $0x210] sm:$0xff]
    %v463 = vld [vmem:[#allocation6 + $0x218] sm:$0xff]
    %v464 = vld [vmem:[#allocation6 + $0x220] sm:$0xff]
    %v465 = vld [vmem:[#allocation6 + $0x228] sm:$0xff]
    %v466 = vld [vmem:[#allocation6 + $0x230] sm:$0xff]
    %v467 = vld [vmem:[#allocation6 + $0x238] sm:$0xff]
    %v468 = vld [vmem:[#allocation6 + $0x240] sm:$0xff]
    %v469 = vld [vmem:[#allocation6 + $0x248] sm:$0xff]
    %v470 = vld [vmem:[#allocation6 + $0x250] sm:$0xff]
    %v471 = vld [vmem:[#allocation6 + $0x258] sm:$0xff]
    %v472 = vld [vmem:[#allocation6 + $0x260] sm:$0xff]
    %v473 = vld [vmem:[#allocation6 + $0x268] sm:$0xff]
    %v474 = vld [vmem:[#allocation6 + $0x270] sm:$0xff]
    %v475 = vld [vmem:[#allocation6 + $0x278] sm:$0xff]
    %v476 = vld [vmem:[#allocation6 + $0x280] sm:$0xff]
    %v477 = vld [vmem:[#allocation6 + $0x288] sm:$0xff]
    %v478 = vld [vmem:[#allocation6 + $0x290] sm:$0xff]
    %v479 = vld [vmem:[#allocation6 + $0x298] sm:$0xff]
    %v480 = vld [vmem:[#allocation6 + $0x2a0] sm:$0xff]
    %v481 = vld [vmem:[#allocation6 + $0x2a8] sm:$0xff]
    %v482 = vld [vmem:[#allocation6 + $0x2b0] sm:$0xff]
    %v483 = vld [vmem:[#allocation6 + $0x2b8] sm:$0xff]
    %v484 = vld [vmem:[#allocation6 + $0x2c0] sm:$0xff]
    %v485 = vld [vmem:[#allocation6 + $0x2c8] sm:$0xff]
    %v486 = vld [vmem:[#allocation6 + $0x2d0] sm:$0xff]
    %v487 = vld [vmem:[#allocation6 + $0x2d8] sm:$0xff]
    %v488 = vld [vmem:[#allocation6 + $0x2e0] sm:$0xff]
    %v489 = vld [vmem:[#allocation6 + $0x2e8] sm:$0xff]
    %v490 = vld [vmem:[#allocation6 + $0x2f0] sm:$0xff]
    %v491 = vld [vmem:[#allocation6 + $0x2f8] sm:$0xff]
    %v492 = vld [vmem:[#allocation6 + $0x300] sm:$0xff]
    %v493 = vld [vmem:[#allocation6 + $0x308] sm:$0xff]
    %v494 = vld [vmem:[#allocation6 + $0x310] sm:$0xff]
    %v495 = vld [vmem:[#allocation6 + $0x318] sm:$0xff]
    %v496 = vld [vmem:[#allocation6 + $0x320] sm:$0xff]
    %v497 = vld [vmem:[#allocation6 + $0x328] sm:$0xff]
    %v498 = vld [vmem:[#allocation6 + $0x330] sm:$0xff]
    %v499 = vld [vmem:[#allocation6 + $0x338] sm:$0xff]
    %v500 = vld [vmem:[#allocation6 + $0x340] sm:$0xff]
    %v501 = vld [vmem:[#allocation6 + $0x348] sm:$0xff]
    %v502 = vld [vmem:[#allocation6 + $0x350] sm:$0xff]
    %v503 = vld [vmem:[#allocation6 + $0x358] sm:$0xff]
    %v504 = vld [vmem:[#allocation6 + $0x360] sm:$0xff]
    %v505 = vld [vmem:[#allocation6 + $0x368] sm:$0xff]
    %v506 = vld [vmem:[#allocation6 + $0x370] sm:$0xff]
    %v507 = vld [vmem:[#allocation6 + $0x378] sm:$0xff]
    %v508 = vld [vmem:[#allocation6 + $0x380] sm:$0xff]
    %v509 = vld [vmem:[#allocation6 + $0x388] sm:$0xff]
    %v510 = vld [vmem:[#allocation6 + $0x390] sm:$0xff]
    %v511 = vld [vmem:[#allocation6 + $0x398] sm:$0xff]
    %v512 = vld [vmem:[#allocation6 + $0x3a0] sm:$0xff]
    %v513 = vld [vmem:[#allocation6 + $0x3a8] sm:$0xff]
    %v514 = vld [vmem:[#allocation6 + $0x3b0] sm:$0xff]
    %v515 = vld [vmem:[#allocation6 + $0x3b8] sm:$0xff]
    %v516 = vld [vmem:[#allocation6 + $0x3c0] sm:$0xff]
    %v517 = vld [vmem:[#allocation6 + $0x3c8] sm:$0xff]
    %v518 = vld [vmem:[#allocation6 + $0x3d0] sm:$0xff]
    %v519 = vld [vmem:[#allocation6 + $0x3d8] sm:$0xff]
    %v520 = vld [vmem:[#allocation6 + $0x3e0] sm:$0xff]
    %v521 = vld [vmem:[#allocation6 + $0x3e8] sm:$0xff]
    %v522 = vld [vmem:[#allocation6 + $0x3f0] sm:$0xff]
    %v523 = vld [vmem:[#allocation6 + $0x3f8] sm:$0xff]
    %v524 = vld [vmem:[#allocation6 + $0x400] sm:$0xff]
    %v525 = vld [vmem:[#allocation6 + $0x408] sm:$0xff]
    %v526 = vld [vmem:[#allocation6 + $0x410] sm:$0xff]
    %v527 = vld [vmem:[#allocation6 + $0x418] sm:$0xff]
    %v528 = vld [vmem:[#allocation6 + $0x420] sm:$0xff]
    %v529 = vld [vmem:[#allocation6 + $0x428] sm:$0xff]
    %v530 = vld [vmem:[#allocation6 + $0x430] sm:$0xff]
    %v531 = vld [vmem:[#allocation6 + $0x438] sm:$0xff]
    %v532 = vld [vmem:[#allocation6 + $0x440] sm:$0xff]
    %v533 = vld [vmem:[#allocation6 + $0x448] sm:$0xff]
    %v534 = vld [vmem:[#allocation6 + $0x450] sm:$0xff]
    %v535 = vld [vmem:[#allocation6 + $0x458] sm:$0xff]
    %v536 = vld [vmem:[#allocation6 + $0x460] sm:$0xff]
    %v537 = vld [vmem:[#allocation6 + $0x468] sm:$0xff]
    %v538 = vld [vmem:[#allocation6 + $0x470] sm:$0xff]
    %v539 = vld [vmem:[#allocation6 + $0x478] sm:$0xff]
    %v540 = vld [vmem:[#allocation6 + $0x480] sm:$0xff]
    %v541 = vld [vmem:[#allocation6 + $0x488] sm:$0xff]
    %v542 = vld [vmem:[#allocation6 + $0x490] sm:$0xff]
    %v543 = vld [vmem:[#allocation6 + $0x498] sm:$0xff]
    %v544 = vld [vmem:[#allocation6 + $0x4a0] sm:$0xff]
    %v545 = vld [vmem:[#allocation6 + $0x4a8] sm:$0xff]
    %v546 = vld [vmem:[#allocation6 + $0x4b0] sm:$0xff]
    %v547 = vld [vmem:[#allocation6 + $0x4b8] sm:$0xff]
    %v548 = vld [vmem:[#allocation6 + $0x4c0] sm:$0xff]
    %v549 = vld [vmem:[#allocation6 + $0x4c8] sm:$0xff]
    %v550 = vld [vmem:[#allocation6 + $0x4d0] sm:$0xff]
    %v551 = vld [vmem:[#allocation6 + $0x4d8] sm:$0xff]
    %v552 = vld [vmem:[#allocation6 + $0x4e0] sm:$0xff]
    %v553 = vld [vmem:[#allocation6 + $0x4e8] sm:$0xff]
    %v554 = vld [vmem:[#allocation6 + $0x4f0] sm:$0xff]
    %v555 = vld [vmem:[#allocation6 + $0x4f8] sm:$0xff]
    %v556 = vld [vmem:[#allocation6 + $0x500] sm:$0xff]
    %v557 = vld [vmem:[#allocation6 + $0x508] sm:$0xff]
    %v558 = vld [vmem:[#allocation6 + $0x510] sm:$0xff]
    %v559 = vld [vmem:[#allocation6 + $0x518] sm:$0xff]
    %v560 = vld [vmem:[#allocation6 + $0x520] sm:$0xff]
    %v561 = vld [vmem:[#allocation6 + $0x528] sm:$0xff]
    %v562 = vld [vmem:[#allocation6 + $0x530] sm:$0xff]
    %v563 = vld [vmem:[#allocation6 + $0x538] sm:$0xff]
    %v564 = vld [vmem:[#allocation6 + $0x540] sm:$0xff]
    %v565 = vld [vmem:[#allocation6 + $0x548] sm:$0xff]
    %v566 = vld [vmem:[#allocation6 + $0x550] sm:$0xff]
    %v567 = vld [vmem:[#allocation6 + $0x558] sm:$0xff]
    %v568 = vld [vmem:[#allocation6 + $0x560] sm:$0xff]
    %v569 = vld [vmem:[#allocation6 + $0x568] sm:$0xff]
    %v570 = vld [vmem:[#allocation6 + $0x570] sm:$0xff]
    %v571 = vld [vmem:[#allocation6 + $0x578] sm:$0xff]
    %v572 = vld [vmem:[#allocation6 + $0x580] sm:$0xff]
    %v573 = vld [vmem:[#allocation6 + $0x588] sm:$0xff]
    %v574 = vld [vmem:[#allocation6 + $0x590] sm:$0xff]
    %v575 = vld [vmem:[#allocation6 + $0x598] sm:$0xff]
    %v576 = vld [vmem:[#allocation6 + $0x5a0] sm:$0xff]
    %v577 = vld [vmem:[#allocation6 + $0x5a8] sm:$0xff]
    %v578 = vld [vmem:[#allocation6 + $0x5b0] sm:$0xff]
    %v579 = vld [vmem:[#allocation6 + $0x5b8] sm:$0xff]
    %v580 = vld [vmem:[#allocation6 + $0x5c0] sm:$0xff]
    %v581 = vld [vmem:[#allocation6 + $0x5c8] sm:$0xff]
    %v582 = vld [vmem:[#allocation6 + $0x5d0] sm:$0xff]
    %v583 = vld [vmem:[#allocation6 + $0x5d8] sm:$0xff]
    %v584 = vld [vmem:[#allocation6 + $0x5e0] sm:$0xff]
    %v585 = vld [vmem:[#allocation6 + $0x5e8] sm:$0xff]
    %v586 = vld [vmem:[#allocation6 + $0x5f0] sm:$0xff]
    %v587 = vld [vmem:[#allocation6 + $0x5f8] sm:$0xff]
    %v588 = vld [vmem:[#allocation6 + $0x600] sm:$0xff]
    %v589 = vld [vmem:[#allocation6 + $0x608] sm:$0xff]
    %v590 = vld [vmem:[#allocation6 + $0x610] sm:$0xff]
    %v591 = vld [vmem:[#allocation6 + $0x618] sm:$0xff]
    %v592 = vld [vmem:[#allocation6 + $0x620] sm:$0xff]
    %v593 = vld [vmem:[#allocation6 + $0x628] sm:$0xff]
    %v594 = vld [vmem:[#allocation6 + $0x630] sm:$0xff]
    %v595 = vld [vmem:[#allocation6 + $0x638] sm:$0xff]
    %v596 = vld [vmem:[#allocation6 + $0x640] sm:$0xff]
    %v597 = vld [vmem:[#allocation6 + $0x648] sm:$0xff]
    %v598 = vld [vmem:[#allocation6 + $0x650] sm:$0xff]
    %v599 = vld [vmem:[#allocation6 + $0x658] sm:$0xff]
    %v600 = vld [vmem:[#allocation6 + $0x660] sm:$0xff]
    %v601 = vld [vmem:[#allocation6 + $0x668] sm:$0xff]
    %v602 = vld [vmem:[#allocation6 + $0x670] sm:$0xff]
    %v603 = vld [vmem:[#allocation6 + $0x678] sm:$0xff]
    %v604 = vld [vmem:[#allocation6 + $0x680] sm:$0xff]
    %v605 = vld [vmem:[#allocation6 + $0x688] sm:$0xff]
    %v606 = vld [vmem:[#allocation6 + $0x690] sm:$0xff]
    %v607 = vld [vmem:[#allocation6 + $0x698] sm:$0xff]
    %v608 = vld [vmem:[#allocation6 + $0x6a0] sm:$0xff]
    %v609 = vld [vmem:[#allocation6 + $0x6a8] sm:$0xff]
    %v610 = vld [vmem:[#allocation6 + $0x6b0] sm:$0xff]
    %v611 = vld [vmem:[#allocation6 + $0x6b8] sm:$0xff]
    %v612 = vld [vmem:[#allocation6 + $0x6c0] sm:$0xff]
    %v613 = vld [vmem:[#allocation6 + $0x6c8] sm:$0xff]
    %v614 = vld [vmem:[#allocation6 + $0x6d0] sm:$0xff]
    %v615 = vld [vmem:[#allocation6 + $0x6d8] sm:$0xff]
    %v616 = vld [vmem:[#allocation6 + $0x6e0] sm:$0xff]
    %v617 = vld [vmem:[#allocation6 + $0x6e8] sm:$0xff]
    %v618 = vld [vmem:[#allocation6 + $0x6f0] sm:$0xff]
    %v619 = vld [vmem:[#allocation6 + $0x6f8] sm:$0xff]
    %v620 = vld [vmem:[#allocation6 + $0x700] sm:$0xff]
    %v621 = vld [vmem:[#allocation6 + $0x708] sm:$0xff]
    %v622 = vld [vmem:[#allocation6 + $0x710] sm:$0xff]
    %v623 = vld [vmem:[#allocation6 + $0x718] sm:$0xff]
    %v624 = vld [vmem:[#allocation6 + $0x720] sm:$0xff]
    %v625 = vld [vmem:[#allocation6 + $0x728] sm:$0xff]
    %v626 = vld [vmem:[#allocation6 + $0x730] sm:$0xff]
    %v627 = vld [vmem:[#allocation6 + $0x738] sm:$0xff]
    %v628 = vld [vmem:[#allocation6 + $0x740] sm:$0xff]
    %v629 = vld [vmem:[#allocation6 + $0x748] sm:$0xff]
    %v630 = vld [vmem:[#allocation6 + $0x750] sm:$0xff]
    %v631 = vld [vmem:[#allocation6 + $0x758] sm:$0xff]
    %v632 = vld [vmem:[#allocation6 + $0x760] sm:$0xff]
    %v633 = vld [vmem:[#allocation6 + $0x768] sm:$0xff]
    %v634 = vld [vmem:[#allocation6 + $0x770] sm:$0xff]
    %v635 = vld [vmem:[#allocation6 + $0x778] sm:$0xff]
    %v636 = vld [vmem:[#allocation6 + $0x780] sm:$0xff]
    %v637 = vld [vmem:[#allocation6 + $0x788] sm:$0xff]
    %v638 = vld [vmem:[#allocation6 + $0x790] sm:$0xff]
    %v639 = vld [vmem:[#allocation6 + $0x798] sm:$0xff]
    %v640 = vld [vmem:[#allocation6 + $0x7a0] sm:$0xff]
    %v641 = vld [vmem:[#allocation6 + $0x7a8] sm:$0xff]
    %v642 = vld [vmem:[#allocation6 + $0x7b0] sm:$0xff]
    %v643 = vld [vmem:[#allocation6 + $0x7b8] sm:$0xff]
    %v644 = vld [vmem:[#allocation6 + $0x7c0] sm:$0xff]
    %v645 = vld [vmem:[#allocation6 + $0x7c8] sm:$0xff]
    %v646 = vld [vmem:[#allocation6 + $0x7d0] sm:$0xff]
    %v647 = vld [vmem:[#allocation6 + $0x7d8] sm:$0xff]
    %v648 = vld [vmem:[#allocation6 + $0x7e0] sm:$0xff]
    %v649 = vld [vmem:[#allocation6 + $0x7e8] sm:$0xff]
    %v650 = vld [vmem:[#allocation6 + $0x7f0] sm:$0xff]
    %v651 = vld [vmem:[#allocation6 + $0x7f8] sm:$0xff]
    %v652 = vld [vmem:[#allocation6 + $0x800] sm:$0xff]
    %v653 = vld [vmem:[#allocation6 + $0x808] sm:$0xff]
    %v654 = vld [vmem:[#allocation6 + $0x810] sm:$0xff]
    %v655 = vld [vmem:[#allocation6 + $0x818] sm:$0xff]
    %v656 = vld [vmem:[#allocation6 + $0x820] sm:$0xff]
    %v657 = vld [vmem:[#allocation6 + $0x828] sm:$0xff]
    %v658 = vld [vmem:[#allocation6 + $0x830] sm:$0xff]
    %v659 = vld [vmem:[#allocation6 + $0x838] sm:$0xff]
    %v660 = vld [vmem:[#allocation6 + $0x840] sm:$0xff]
    %v661 = vld [vmem:[#allocation6 + $0x848] sm:$0xff]
    %v662 = vld [vmem:[#allocation6 + $0x850] sm:$0xff]
    %v663 = vld [vmem:[#allocation6 + $0x858] sm:$0xff]
    %v664 = vld [vmem:[#allocation6 + $0x860] sm:$0xff]
    %v665 = vld [vmem:[#allocation6 + $0x868] sm:$0xff]
    %v666 = vld [vmem:[#allocation6 + $0x870] sm:$0xff]
    %v667 = vld [vmem:[#allocation6 + $0x878] sm:$0xff]
    %v668 = vld [vmem:[#allocation6 + $0x880] sm:$0xff]
    %v669 = vld [vmem:[#allocation6 + $0x888] sm:$0xff]
    %v670 = vld [vmem:[#allocation6 + $0x890] sm:$0xff]
    %v671 = vld [vmem:[#allocation6 + $0x898] sm:$0xff]
    %v672 = vld [vmem:[#allocation6 + $0x8a0] sm:$0xff]
    %v673 = vld [vmem:[#allocation6 + $0x8a8] sm:$0xff]
    %v674 = vld [vmem:[#allocation6 + $0x8b0] sm:$0xff]
    %v675 = vld [vmem:[#allocation6 + $0x8b8] sm:$0xff]
    %v676 = vld [vmem:[#allocation6 + $0x8c0] sm:$0xff]
    %v677 = vld [vmem:[#allocation6 + $0x8c8] sm:$0xff]
    %v678 = vld [vmem:[#allocation6 + $0x8d0] sm:$0xff]
    %v679 = vld [vmem:[#allocation6 + $0x8d8] sm:$0xff]
    %v680 = vld [vmem:[#allocation6 + $0x8e0] sm:$0xff]
    %v681 = vld [vmem:[#allocation6 + $0x8e8] sm:$0xff]
    %v682 = vld [vmem:[#allocation6 + $0x8f0] sm:$0xff]
    %v683 = vld [vmem:[#allocation6 + $0x8f8] sm:$0xff]
    %v684 = vld [vmem:[#allocation6 + $0x900] sm:$0xff]
    %v685 = vld [vmem:[#allocation6 + $0x908] sm:$0xff]
    %v686 = vld [vmem:[#allocation6 + $0x910] sm:$0xff]
    %v687 = vld [vmem:[#allocation6 + $0x918] sm:$0xff]
    %v688 = vld [vmem:[#allocation6 + $0x920] sm:$0xff]
    %v689 = vld [vmem:[#allocation6 + $0x928] sm:$0xff]
    %v690 = vld [vmem:[#allocation6 + $0x930] sm:$0xff]
    %v691 = vld [vmem:[#allocation6 + $0x938] sm:$0xff]
    %v692 = vld [vmem:[#allocation6 + $0x940] sm:$0xff]
    %v693 = vld [vmem:[#allocation6 + $0x948] sm:$0xff]
    %v694 = vld [vmem:[#allocation6 + $0x950] sm:$0xff]
    %v695 = vld [vmem:[#allocation6 + $0x958] sm:$0xff]
    %v696 = vld [vmem:[#allocation6 + $0x960] sm:$0xff]
    %v697 = vld [vmem:[#allocation6 + $0x968] sm:$0xff]
    %v698 = vld [vmem:[#allocation6 + $0x970] sm:$0xff]
    %v699 = vld [vmem:[#allocation6 + $0x978] sm:$0xff]
    %v700 = vld [vmem:[#allocation6 + $0x980] sm:$0xff]
    %v701 = vld [vmem:[#allocation6 + $0x988] sm:$0xff]
    %v702 = vld [vmem:[#allocation6 + $0x990] sm:$0xff]
    %v703 = vld [vmem:[#allocation6 + $0x998] sm:$0xff]
    %v704 = vld [vmem:[#allocation6 + $0x9a0] sm:$0xff]
    %v705 = vld [vmem:[#allocation6 + $0x9a8] sm:$0xff]
    %v706 = vld [vmem:[#allocation6 + $0x9b0] sm:$0xff]
    %v707 = vld [vmem:[#allocation6 + $0x9b8] sm:$0xff]
    %v708 = vld [vmem:[#allocation6 + $0x9c0] sm:$0xff]
    %v709 = vld [vmem:[#allocation6 + $0x9c8] sm:$0xff]
    %v710 = vld [vmem:[#allocation6 + $0x9d0] sm:$0xff]
    %v711 = vld [vmem:[#allocation6 + $0x9d8] sm:$0xff]
    %v712 = vld [vmem:[#allocation6 + $0x9e0] sm:$0xff]
    %v713 = vld [vmem:[#allocation6 + $0x9e8] sm:$0xff]
    %v714 = vld [vmem:[#allocation6 + $0x9f0] sm:$0xff]
    %v715 = vld [vmem:[#allocation6 + $0x9f8] sm:$0xff]
    %v716 = vld [vmem:[#allocation6 + $0xa00] sm:$0xff]
    %v717 = vld [vmem:[#allocation6 + $0xa08] sm:$0xff]
    %v718 = vld [vmem:[#allocation6 + $0xa10] sm:$0xff]
    %v719 = vld [vmem:[#allocation6 + $0xa18] sm:$0xff]
    %v720 = vld [vmem:[#allocation6 + $0xa20] sm:$0xff]
    %v721 = vld [vmem:[#allocation6 + $0xa28] sm:$0xff]
    %v722 = vld [vmem:[#allocation6 + $0xa30] sm:$0xff]
    %v723 = vld [vmem:[#allocation6 + $0xa38] sm:$0xff]
    %v724 = vld [vmem:[#allocation6 + $0xa40] sm:$0xff]
    %v725 = vld [vmem:[#allocation6 + $0xa48] sm:$0xff]
    %v726 = vld [vmem:[#allocation6 + $0xa50] sm:$0xff]
    %v727 = vld [vmem:[#allocation6 + $0xa58] sm:$0xff]
    %v728 = vld [vmem:[#allocation6 + $0xa60] sm:$0xff]
    %v729 = vld [vmem:[#allocation6 + $0xa68] sm:$0xff]
    %v730 = vld [vmem:[#allocation6 + $0xa70] sm:$0xff]
    %v731 = vld [vmem:[#allocation6 + $0xa78] sm:$0xff]
    %v732 = vld [vmem:[#allocation6 + $0xa80] sm:$0xff]
    %v733 = vld [vmem:[#allocation6 + $0xa88] sm:$0xff]
    %v734 = vld [vmem:[#allocation6 + $0xa90] sm:$0xff]
    %v735 = vld [vmem:[#allocation6 + $0xa98] sm:$0xff]
    %v736 = vld [vmem:[#allocation6 + $0xaa0] sm:$0xff]
    %v737 = vld [vmem:[#allocation6 + $0xaa8] sm:$0xff]
    %v738 = vld [vmem:[#allocation6 + $0xab0] sm:$0xff]
    %v739 = vld [vmem:[#allocation6 + $0xab8] sm:$0xff]
    %v740 = vld [vmem:[#allocation6 + $0xac0] sm:$0xff]
    %v741 = vld [vmem:[#allocation6 + $0xac8] sm:$0xff]
    %v742 = vld [vmem:[#allocation6 + $0xad0] sm:$0xff]
    %v743 = vld [vmem:[#allocation6 + $0xad8] sm:$0xff]
    %v744 = vld [vmem:[#allocation6 + $0xae0] sm:$0xff]
    %v745 = vld [vmem:[#allocation6 + $0xae8] sm:$0xff]
    %v746 = vld [vmem:[#allocation6 + $0xaf0] sm:$0xff]
    %v747 = vld [vmem:[#allocation6 + $0xaf8] sm:$0xff]
    %v748 = vld [vmem:[#allocation6 + $0xb00] sm:$0xff]
    %v749 = vld [vmem:[#allocation6 + $0xb08] sm:$0xff]
    %v750 = vld [vmem:[#allocation6 + $0xb10] sm:$0xff]
    %v751 = vld [vmem:[#allocation6 + $0xb18] sm:$0xff]
    %v752 = vld [vmem:[#allocation6 + $0xb20] sm:$0xff]
    %v753 = vld [vmem:[#allocation6 + $0xb28] sm:$0xff]
    %v754 = vld [vmem:[#allocation6 + $0xb30] sm:$0xff]
    %v755 = vld [vmem:[#allocation6 + $0xb38] sm:$0xff]
    %v756 = vld [vmem:[#allocation6 + $0xb40] sm:$0xff]
    %v757 = vld [vmem:[#allocation6 + $0xb48] sm:$0xff]
    %v758 = vld [vmem:[#allocation6 + $0xb50] sm:$0xff]
    %v759 = vld [vmem:[#allocation6 + $0xb58] sm:$0xff]
    %v760 = vld [vmem:[#allocation6 + $0xb60] sm:$0xff]
    %v761 = vld [vmem:[#allocation6 + $0xb68] sm:$0xff]
    %v762 = vld [vmem:[#allocation6 + $0xb70] sm:$0xff]
    %v763 = vld [vmem:[#allocation6 + $0xb78] sm:$0xff]
    %v764 = vld [vmem:[#allocation6 + $0xb80] sm:$0xff]
    %v765 = vld [vmem:[#allocation6 + $0xb88] sm:$0xff]
    %v766 = vld [vmem:[#allocation6 + $0xb90] sm:$0xff]
    %v767 = vld [vmem:[#allocation6 + $0xb98] sm:$0xff]
    %v768 = vld [vmem:[#allocation6 + $0xba0] sm:$0xff]
    %v769 = vld [vmem:[#allocation6 + $0xba8] sm:$0xff]
    %v770 = vld [vmem:[#allocation6 + $0xbb0] sm:$0xff]
    %v771 = vld [vmem:[#allocation6 + $0xbb8] sm:$0xff]
    %v772 = vld [vmem:[#allocation6 + $0xbc0] sm:$0xff]
    %v773 = vld [vmem:[#allocation6 + $0xbc8] sm:$0xff]
    %v774 = vld [vmem:[#allocation6 + $0xbd0] sm:$0xff]
    %v775 = vld [vmem:[#allocation6 + $0xbd8] sm:$0xff]
    %v776 = vld [vmem:[#allocation6 + $0xbe0] sm:$0xff]
    %v777 = vld [vmem:[#allocation6 + $0xbe8] sm:$0xff]
    %v778 = vld [vmem:[#allocation6 + $0xbf0] sm:$0xff]
    %v779 = vld [vmem:[#allocation6 + $0xbf8] sm:$0xff]
    %v780 = vld [vmem:[#allocation6 + $0xc00] sm:$0xff]
    %v781 = vld [vmem:[#allocation6 + $0xc08] sm:$0xff]
    %v782 = vld [vmem:[#allocation6 + $0xc10] sm:$0xff]
    %v783 = vld [vmem:[#allocation6 + $0xc18] sm:$0xff]
    %v784 = vld [vmem:[#allocation6 + $0xc20] sm:$0xff]
    %v785 = vld [vmem:[#allocation6 + $0xc28] sm:$0xff]
    %v786 = vld [vmem:[#allocation6 + $0xc30] sm:$0xff]
    %v787 = vld [vmem:[#allocation6 + $0xc38] sm:$0xff]
    %v788 = vld [vmem:[#allocation6 + $0xc40] sm:$0xff]
    %v789 = vld [vmem:[#allocation6 + $0xc48] sm:$0xff]
    %v790 = vld [vmem:[#allocation6 + $0xc50] sm:$0xff]
    %v791 = vld [vmem:[#allocation6 + $0xc58] sm:$0xff]
    %v792 = vld [vmem:[#allocation6 + $0xc60] sm:$0xff]
    %v793 = vld [vmem:[#allocation6 + $0xc68] sm:$0xff]
    %v794 = vld [vmem:[#allocation6 + $0xc70] sm:$0xff]
    %v795 = vld [vmem:[#allocation6 + $0xc78] sm:$0xff]
    %v796 = vld [vmem:[#allocation6 + $0xc80] sm:$0xff]
    %v797 = vld [vmem:[#allocation6 + $0xc88] sm:$0xff]
    %v798 = vld [vmem:[#allocation6 + $0xc90] sm:$0xff]
    %v799 = vld [vmem:[#allocation6 + $0xc98] sm:$0xff]
    %v800 = vld [vmem:[#allocation6 + $0xca0] sm:$0xff]
    %v801 = vld [vmem:[#allocation6 + $0xca8] sm:$0xff]
    %v802 = vld [vmem:[#allocation6 + $0xcb0] sm:$0xff]
    %v803 = vld [vmem:[#allocation6 + $0xcb8] sm:$0xff]
    %v804 = vld [vmem:[#allocation6 + $0xcc0] sm:$0xff]
    %v805 = vld [vmem:[#allocation6 + $0xcc8] sm:$0xff]
    %v806 = vld [vmem:[#allocation6 + $0xcd0] sm:$0xff]
    %v807 = vld [vmem:[#allocation6 + $0xcd8] sm:$0xff]
    %v808 = vld [vmem:[#allocation6 + $0xce0] sm:$0xff]
    %v809 = vld [vmem:[#allocation6 + $0xce8] sm:$0xff]
    %v810 = vld [vmem:[#allocation6 + $0xcf0] sm:$0xff]
    %v811 = vld [vmem:[#allocation6 + $0xcf8] sm:$0xff]
    %v812 = vld [vmem:[#allocation6 + $0xd00] sm:$0xff]
    %v813 = vld [vmem:[#allocation6 + $0xd08] sm:$0xff]
    %v814 = vld [vmem:[#allocation6 + $0xd10] sm:$0xff]
    %v815 = vld [vmem:[#allocation6 + $0xd18] sm:$0xff]
    %v816 = vld [vmem:[#allocation6 + $0xd20] sm:$0xff]
    %v817 = vld [vmem:[#allocation6 + $0xd28] sm:$0xff]
    %v818 = vld [vmem:[#allocation6 + $0xd30] sm:$0xff]
    %v819 = vld [vmem:[#allocation6 + $0xd38] sm:$0xff]
    %v820 = vld [vmem:[#allocation6 + $0xd40] sm:$0xff]
    %v821 = vld [vmem:[#allocation6 + $0xd48] sm:$0xff]
    %v822 = vld [vmem:[#allocation6 + $0xd50] sm:$0xff]
    %v823 = vld [vmem:[#allocation6 + $0xd58] sm:$0xff]
    %v824 = vld [vmem:[#allocation6 + $0xd60] sm:$0xff]
    %v825 = vld [vmem:[#allocation6 + $0xd68] sm:$0xff]
    %v826 = vld [vmem:[#allocation6 + $0xd70] sm:$0xff]
    %v827 = vld [vmem:[#allocation6 + $0xd78] sm:$0xff]
    %v828 = vld [vmem:[#allocation6 + $0xd80] sm:$0xff]
    %v829 = vld [vmem:[#allocation6 + $0xd88] sm:$0xff]
    %v830 = vld [vmem:[#allocation6 + $0xd90] sm:$0xff]
    %v831 = vld [vmem:[#allocation6 + $0xd98] sm:$0xff]
    %v832 = vld [vmem:[#allocation6 + $0xda0] sm:$0xff]
    %v833 = vld [vmem:[#allocation6 + $0xda8] sm:$0xff]
    %v834 = vld [vmem:[#allocation6 + $0xdb0] sm:$0xff]
    %v835 = vld [vmem:[#allocation6 + $0xdb8] sm:$0xff]
    %v836 = vld [vmem:[#allocation6 + $0xdc0] sm:$0xff]
    %v837 = vld [vmem:[#allocation6 + $0xdc8] sm:$0xff]
    %v838 = vld [vmem:[#allocation6 + $0xdd0] sm:$0xff]
    %v839 = vld [vmem:[#allocation6 + $0xdd8] sm:$0xff]
    %v840 = vld [vmem:[#allocation6 + $0xde0] sm:$0xff]
    %v841 = vld [vmem:[#allocation6 + $0xde8] sm:$0xff]
    %v842 = vld [vmem:[#allocation6 + $0xdf0] sm:$0xff]
    %v843 = vld [vmem:[#allocation6 + $0xdf8] sm:$0xff]
    %v844 = vpack.c.b16 %v368, %v340
    %v845 = vpack.c.b16 %v369, %v341
    %v846 = vpack.c.b16 %v370, %v342
    %v847 = vpack.c.b16 %v371, %v343
    %v848 = vpack.c.b16 %v372, %v344
    %v849 = vpack.c.b16 %v373, %v345
    %v850 = vpack.c.b16 %v374, %v346
    %v851 = vpack.c.b16 %v375, %v347
    %v852 = vpack.c.b16 %v376, %v348
    %v853 = vpack.c.b16 %v377, %v349
    %v854 = vpack.c.b16 %v378, %v350
    %v855 = vpack.c.b16 %v379, %v351
    %v856 = vpack.c.b16 %v380, %v352
    %v857 = vpack.c.b16 %v381, %v353
    %v858 = vpack.c.b16 %v382, %v354
    %v859 = vpack.c.b16 %v383, %v355
    %v860 = vpack.c.b16 %v384, %v356
    %v861 = vpack.c.b16 %v385, %v357
    %v862 = vpack.c.b16 %v386, %v358
    %v863 = vpack.c.b16 %v387, %v359
    %v864 = vpack.c.b16 %v388, %v360
    %v865 = vpack.c.b16 %v389, %v361
    %v866 = vpack.c.b16 %v390, %v362
    %v867 = vpack.c.b16 %v391, %v363
    %v868 = vpack.c.b16 %v392, %v364
    %v869 = vpack.c.b16 %v393, %v365
    %v870 = vpack.c.b16 %v394, %v366
    %v871 = vpack.c.b16 %v395, %v367
    %v1348 = vunpack.c.l.b16 %v396
    %v1349 = vunpack.c.h.b16 %v396
    %v1350 = vunpack.c.l.b16 %v397
    %v1351 = vunpack.c.h.b16 %v397
    %v1352 = vunpack.c.l.b16 %v398
    %v1353 = vunpack.c.h.b16 %v398
    %v1354 = vunpack.c.l.b16 %v399
    %v1355 = vunpack.c.h.b16 %v399
    %v1356 = vunpack.c.l.b16 %v400
    %v1357 = vunpack.c.h.b16 %v400
    %v1358 = vunpack.c.l.b16 %v401
    %v1359 = vunpack.c.h.b16 %v401
    %v1360 = vunpack.c.l.b16 %v402
    %v1361 = vunpack.c.h.b16 %v402
    %v1362 = vunpack.c.l.b16 %v403
    %v1363 = vunpack.c.h.b16 %v403
    %v1364 = vunpack.c.l.b16 %v404
    %v1365 = vunpack.c.h.b16 %v404
    %v1366 = vunpack.c.l.b16 %v405
    %v1367 = vunpack.c.h.b16 %v405
    %v1368 = vunpack.c.l.b16 %v406
    %v1369 = vunpack.c.h.b16 %v406
    %v1370 = vunpack.c.l.b16 %v407
    %v1371 = vunpack.c.h.b16 %v407
    %v1372 = vunpack.c.l.b16 %v408
    %v1373 = vunpack.c.h.b16 %v408
    %v1374 = vunpack.c.l.b16 %v409
    %v1375 = vunpack.c.h.b16 %v409
    %v1376 = vunpack.c.l.b16 %v410
    %v1377 = vunpack.c.h.b16 %v410
    %v1378 = vunpack.c.l.b16 %v411
    %v1379 = vunpack.c.h.b16 %v411
    %v1380 = vunpack.c.l.b16 %v412
    %v1381 = vunpack.c.h.b16 %v412
    %v1382 = vunpack.c.l.b16 %v413
    %v1383 = vunpack.c.h.b16 %v413
    %v1384 = vunpack.c.l.b16 %v414
    %v1385 = vunpack.c.h.b16 %v414
    %v1386 = vunpack.c.l.b16 %v415
    %v1387 = vunpack.c.h.b16 %v415
    %v1388 = vunpack.c.l.b16 %v416
    %v1389 = vunpack.c.h.b16 %v416
    %v1390 = vunpack.c.l.b16 %v417
    %v1391 = vunpack.c.h.b16 %v417
    %v1392 = vunpack.c.l.b16 %v418
    %v1393 = vunpack.c.h.b16 %v418
    %v1394 = vunpack.c.l.b16 %v419
    %v1395 = vunpack.c.h.b16 %v419
    %v1396 = vunpack.c.l.b16 %v420
    %v1397 = vunpack.c.h.b16 %v420
    %v1398 = vunpack.c.l.b16 %v421
    %v1399 = vunpack.c.h.b16 %v421
    %v1400 = vunpack.c.l.b16 %v422
    %v1401 = vunpack.c.h.b16 %v422
    %v1402 = vunpack.c.l.b16 %v423
    %v1403 = vunpack.c.h.b16 %v423
    %v1404 = vunpack.c.l.b16 %v424
    %v1405 = vunpack.c.h.b16 %v424
    %v1406 = vunpack.c.l.b16 %v425
    %v1407 = vunpack.c.h.b16 %v425
    %v1408 = vunpack.c.l.b16 %v426
    %v1409 = vunpack.c.h.b16 %v426
    %v1410 = vunpack.c.l.b16 %v427
    %v1411 = vunpack.c.h.b16 %v427
    %v1412 = vunpack.c.l.b16 %v428
    %v1413 = vunpack.c.h.b16 %v428
    %v1414 = vunpack.c.l.b16 %v429
    %v1415 = vunpack.c.h.b16 %v429
    %v1416 = vunpack.c.l.b16 %v430
    %v1417 = vunpack.c.h.b16 %v430
    %v1418 = vunpack.c.l.b16 %v431
    %v1419 = vunpack.c.h.b16 %v431
    %v1420 = vunpack.c.l.b16 %v432
    %v1421 = vunpack.c.h.b16 %v432
    %v1422 = vunpack.c.l.b16 %v433
    %v1423 = vunpack.c.h.b16 %v433
    %v1424 = vunpack.c.l.b16 %v434
    %v1425 = vunpack.c.h.b16 %v434
    %v1426 = vunpack.c.l.b16 %v435
    %v1427 = vunpack.c.h.b16 %v435
    %v1428 = vunpack.c.l.b16 %v436
    %v1429 = vunpack.c.h.b16 %v436
    %v1430 = vunpack.c.l.b16 %v437
    %v1431 = vunpack.c.h.b16 %v437
    %v1432 = vunpack.c.l.b16 %v438
    %v1433 = vunpack.c.h.b16 %v438
    %v1434 = vunpack.c.l.b16 %v439
    %v1435 = vunpack.c.h.b16 %v439
    %v1436 = vunpack.c.l.b16 %v440
    %v1437 = vunpack.c.h.b16 %v440
    %v1438 = vunpack.c.l.b16 %v441
    %v1439 = vunpack.c.h.b16 %v441
    %v1440 = vunpack.c.l.b16 %v442
    %v1441 = vunpack.c.h.b16 %v442
    %v1442 = vunpack.c.l.b16 %v443
    %v1443 = vunpack.c.h.b16 %v443
    %v1444 = vunpack.c.l.b16 %v444
    %v1445 = vunpack.c.h.b16 %v444
    %v1446 = vunpack.c.l.b16 %v445
    %v1447 = vunpack.c.h.b16 %v445
    %v1448 = vunpack.c.l.b16 %v446
    %v1449 = vunpack.c.h.b16 %v446
    %v1450 = vunpack.c.l.b16 %v447
    %v1451 = vunpack.c.h.b16 %v447
    %v1452 = vunpack.c.l.b16 %v448
    %v1453 = vunpack.c.h.b16 %v448
    %v1454 = vunpack.c.l.b16 %v449
    %v1455 = vunpack.c.h.b16 %v449
    %v1456 = vunpack.c.l.b16 %v450
    %v1457 = vunpack.c.h.b16 %v450
    %v1458 = vunpack.c.l.b16 %v451
    %v1459 = vunpack.c.h.b16 %v451
    %v1460 = vunpack.c.l.b16 %v452
    %v1461 = vunpack.c.h.b16 %v452
    %v1462 = vunpack.c.l.b16 %v453
    %v1463 = vunpack.c.h.b16 %v453
    %v1464 = vunpack.c.l.b16 %v454
    %v1465 = vunpack.c.h.b16 %v454
    %v1466 = vunpack.c.l.b16 %v455
    %v1467 = vunpack.c.h.b16 %v455
    %v1468 = vunpack.c.l.b16 %v456
    %v1469 = vunpack.c.h.b16 %v456
    %v1470 = vunpack.c.l.b16 %v457
    %v1471 = vunpack.c.h.b16 %v457
    %v1472 = vunpack.c.l.b16 %v458
    %v1473 = vunpack.c.h.b16 %v458
    %v1474 = vunpack.c.l.b16 %v459
    %v1475 = vunpack.c.h.b16 %v459
    %v1476 = vunpack.c.l.b16 %v460
    %v1477 = vunpack.c.h.b16 %v460
    %v1478 = vunpack.c.l.b16 %v461
    %v1479 = vunpack.c.h.b16 %v461
    %v1480 = vunpack.c.l.b16 %v462
    %v1481 = vunpack.c.h.b16 %v462
    %v1482 = vunpack.c.l.b16 %v463
    %v1483 = vunpack.c.h.b16 %v463
    %v1484 = vunpack.c.l.b16 %v464
    %v1485 = vunpack.c.h.b16 %v464
    %v1486 = vunpack.c.l.b16 %v465
    %v1487 = vunpack.c.h.b16 %v465
    %v1488 = vunpack.c.l.b16 %v466
    %v1489 = vunpack.c.h.b16 %v466
    %v1490 = vunpack.c.l.b16 %v467
    %v1491 = vunpack.c.h.b16 %v467
    %v1492 = vunpack.c.l.b16 %v468
    %v1493 = vunpack.c.h.b16 %v468
    %v1494 = vunpack.c.l.b16 %v469
    %v1495 = vunpack.c.h.b16 %v469
    %v1496 = vunpack.c.l.b16 %v470
    %v1497 = vunpack.c.h.b16 %v470
    %v1498 = vunpack.c.l.b16 %v471
    %v1499 = vunpack.c.h.b16 %v471
    %v1500 = vunpack.c.l.b16 %v472
    %v1501 = vunpack.c.h.b16 %v472
    %v1502 = vunpack.c.l.b16 %v473
    %v1503 = vunpack.c.h.b16 %v473
    %v1504 = vunpack.c.l.b16 %v474
    %v1505 = vunpack.c.h.b16 %v474
    %v1506 = vunpack.c.l.b16 %v475
    %v1507 = vunpack.c.h.b16 %v475
    %v1508 = vunpack.c.l.b16 %v476
    %v1509 = vunpack.c.h.b16 %v476
    %v1510 = vunpack.c.l.b16 %v477
    %v1511 = vunpack.c.h.b16 %v477
    %v1512 = vunpack.c.l.b16 %v478
    %v1513 = vunpack.c.h.b16 %v478
    %v1514 = vunpack.c.l.b16 %v479
    %v1515 = vunpack.c.h.b16 %v479
    %v1516 = vunpack.c.l.b16 %v480
    %v1517 = vunpack.c.h.b16 %v480
    %v1518 = vunpack.c.l.b16 %v481
    %v1519 = vunpack.c.h.b16 %v481
    %v1520 = vunpack.c.l.b16 %v482
    %v1521 = vunpack.c.h.b16 %v482
    %v1522 = vunpack.c.l.b16 %v483
    %v1523 = vunpack.c.h.b16 %v483
    %v1524 = vunpack.c.l.b16 %v484
    %v1525 = vunpack.c.h.b16 %v484
    %v1526 = vunpack.c.l.b16 %v485
    %v1527 = vunpack.c.h.b16 %v485
    %v1528 = vunpack.c.l.b16 %v486
    %v1529 = vunpack.c.h.b16 %v486
    %v1530 = vunpack.c.l.b16 %v487
    %v1531 = vunpack.c.h.b16 %v487
    %v1532 = vunpack.c.l.b16 %v488
    %v1533 = vunpack.c.h.b16 %v488
    %v1534 = vunpack.c.l.b16 %v489
    %v1535 = vunpack.c.h.b16 %v489
    %v1536 = vunpack.c.l.b16 %v490
    %v1537 = vunpack.c.h.b16 %v490
    %v1538 = vunpack.c.l.b16 %v491
    %v1539 = vunpack.c.h.b16 %v491
    %v1540 = vunpack.c.l.b16 %v492
    %v1541 = vunpack.c.h.b16 %v492
    %v1542 = vunpack.c.l.b16 %v493
    %v1543 = vunpack.c.h.b16 %v493
    %v1544 = vunpack.c.l.b16 %v494
    %v1545 = vunpack.c.h.b16 %v494
    %v1546 = vunpack.c.l.b16 %v495
    %v1547 = vunpack.c.h.b16 %v495
    %v1548 = vunpack.c.l.b16 %v496
    %v1549 = vunpack.c.h.b16 %v496
    %v1550 = vunpack.c.l.b16 %v497
    %v1551 = vunpack.c.h.b16 %v497
    %v1552 = vunpack.c.l.b16 %v498
    %v1553 = vunpack.c.h.b16 %v498
    %v1554 = vunpack.c.l.b16 %v499
    %v1555 = vunpack.c.h.b16 %v499
    %v1556 = vunpack.c.l.b16 %v500
    %v1557 = vunpack.c.h.b16 %v500
    %v1558 = vunpack.c.l.b16 %v501
    %v1559 = vunpack.c.h.b16 %v501
    %v1560 = vunpack.c.l.b16 %v502
    %v1561 = vunpack.c.h.b16 %v502
    %v1562 = vunpack.c.l.b16 %v503
    %v1563 = vunpack.c.h.b16 %v503
    %v1564 = vunpack.c.l.b16 %v504
    %v1565 = vunpack.c.h.b16 %v504
    %v1566 = vunpack.c.l.b16 %v505
    %v1567 = vunpack.c.h.b16 %v505
    %v1568 = vunpack.c.l.b16 %v506
    %v1569 = vunpack.c.h.b16 %v506
    %v1570 = vunpack.c.l.b16 %v507
    %v1571 = vunpack.c.h.b16 %v507
    %v1572 = vunpack.c.l.b16 %v508
    %v1573 = vunpack.c.h.b16 %v508
    %v1574 = vunpack.c.l.b16 %v509
    %v1575 = vunpack.c.h.b16 %v509
    %v1576 = vunpack.c.l.b16 %v510
    %v1577 = vunpack.c.h.b16 %v510
    %v1578 = vunpack.c.l.b16 %v511
    %v1579 = vunpack.c.h.b16 %v511
    %v1580 = vunpack.c.l.b16 %v512
    %v1581 = vunpack.c.h.b16 %v512
    %v1582 = vunpack.c.l.b16 %v513
    %v1583 = vunpack.c.h.b16 %v513
    %v1584 = vunpack.c.l.b16 %v514
    %v1585 = vunpack.c.h.b16 %v514
    %v1586 = vunpack.c.l.b16 %v515
    %v1587 = vunpack.c.h.b16 %v515
    %v1588 = vunpack.c.l.b16 %v516
    %v1589 = vunpack.c.h.b16 %v516
    %v1590 = vunpack.c.l.b16 %v517
    %v1591 = vunpack.c.h.b16 %v517
    %v1592 = vunpack.c.l.b16 %v518
    %v1593 = vunpack.c.h.b16 %v518
    %v1594 = vunpack.c.l.b16 %v519
    %v1595 = vunpack.c.h.b16 %v519
    %v1596 = vunpack.c.l.b16 %v520
    %v1597 = vunpack.c.h.b16 %v520
    %v1598 = vunpack.c.l.b16 %v521
    %v1599 = vunpack.c.h.b16 %v521
    %v1600 = vunpack.c.l.b16 %v522
    %v1601 = vunpack.c.h.b16 %v522
    %v1602 = vunpack.c.l.b16 %v523
    %v1603 = vunpack.c.h.b16 %v523
    %v1604 = vunpack.c.l.b16 %v524
    %v1605 = vunpack.c.h.b16 %v524
    %v1606 = vunpack.c.l.b16 %v525
    %v1607 = vunpack.c.h.b16 %v525
    %v1608 = vunpack.c.l.b16 %v526
    %v1609 = vunpack.c.h.b16 %v526
    %v1610 = vunpack.c.l.b16 %v527
    %v1611 = vunpack.c.h.b16 %v527
    %v1612 = vunpack.c.l.b16 %v528
    %v1613 = vunpack.c.h.b16 %v528
    %v1614 = vunpack.c.l.b16 %v529
    %v1615 = vunpack.c.h.b16 %v529
    %v1616 = vunpack.c.l.b16 %v530
    %v1617 = vunpack.c.h.b16 %v530
    %v1618 = vunpack.c.l.b16 %v531
    %v1619 = vunpack.c.h.b16 %v531
    %v1620 = vunpack.c.l.b16 %v532
    %v1621 = vunpack.c.h.b16 %v532
    %v1622 = vunpack.c.l.b16 %v533
    %v1623 = vunpack.c.h.b16 %v533
    %v1624 = vunpack.c.l.b16 %v534
    %v1625 = vunpack.c.h.b16 %v534
    %v1626 = vunpack.c.l.b16 %v535
    %v1627 = vunpack.c.h.b16 %v535
    %v1628 = vunpack.c.l.b16 %v536
    %v1629 = vunpack.c.h.b16 %v536
    %v1630 = vunpack.c.l.b16 %v537
    %v1631 = vunpack.c.h.b16 %v537
    %v1632 = vunpack.c.l.b16 %v538
    %v1633 = vunpack.c.h.b16 %v538
    %v1634 = vunpack.c.l.b16 %v539
    %v1635 = vunpack.c.h.b16 %v539
    %v1636 = vunpack.c.l.b16 %v540
    %v1637 = vunpack.c.h.b16 %v540
    %v1638 = vunpack.c.l.b16 %v541
    %v1639 = vunpack.c.h.b16 %v541
    %v1640 = vunpack.c.l.b16 %v542
    %v1641 = vunpack.c.h.b16 %v542
    %v1642 = vunpack.c.l.b16 %v543
    %v1643 = vunpack.c.h.b16 %v543
    %v1644 = vunpack.c.l.b16 %v544
    %v1645 = vunpack.c.h.b16 %v544
    %v1646 = vunpack.c.l.b16 %v545
    %v1647 = vunpack.c.h.b16 %v545
    %v1648 = vunpack.c.l.b16 %v546
    %v1649 = vunpack.c.h.b16 %v546
    %v1650 = vunpack.c.l.b16 %v547
    %v1651 = vunpack.c.h.b16 %v547
    %v1652 = vunpack.c.l.b16 %v548
    %v1653 = vunpack.c.h.b16 %v548
    %v1654 = vunpack.c.l.b16 %v549
    %v1655 = vunpack.c.h.b16 %v549
    %v1656 = vunpack.c.l.b16 %v550
    %v1657 = vunpack.c.h.b16 %v550
    %v1658 = vunpack.c.l.b16 %v551
    %v1659 = vunpack.c.h.b16 %v551
    %v1660 = vunpack.c.l.b16 %v552
    %v1661 = vunpack.c.h.b16 %v552
    %v1662 = vunpack.c.l.b16 %v553
    %v1663 = vunpack.c.h.b16 %v553
    %v1664 = vunpack.c.l.b16 %v554
    %v1665 = vunpack.c.h.b16 %v554
    %v1666 = vunpack.c.l.b16 %v555
    %v1667 = vunpack.c.h.b16 %v555
    %v1668 = vunpack.c.l.b16 %v556
    %v1669 = vunpack.c.h.b16 %v556
    %v1670 = vunpack.c.l.b16 %v557
    %v1671 = vunpack.c.h.b16 %v557
    %v1672 = vunpack.c.l.b16 %v558
    %v1673 = vunpack.c.h.b16 %v558
    %v1674 = vunpack.c.l.b16 %v559
    %v1675 = vunpack.c.h.b16 %v559
    %v1676 = vunpack.c.l.b16 %v560
    %v1677 = vunpack.c.h.b16 %v560
    %v1678 = vunpack.c.l.b16 %v561
    %v1679 = vunpack.c.h.b16 %v561
    %v1680 = vunpack.c.l.b16 %v562
    %v1681 = vunpack.c.h.b16 %v562
    %v1682 = vunpack.c.l.b16 %v563
    %v1683 = vunpack.c.h.b16 %v563
    %v1684 = vunpack.c.l.b16 %v564
    %v1685 = vunpack.c.h.b16 %v564
    %v1686 = vunpack.c.l.b16 %v565
    %v1687 = vunpack.c.h.b16 %v565
    %v1688 = vunpack.c.l.b16 %v566
    %v1689 = vunpack.c.h.b16 %v566
    %v1690 = vunpack.c.l.b16 %v567
    %v1691 = vunpack.c.h.b16 %v567
    %v1692 = vunpack.c.l.b16 %v568
    %v1693 = vunpack.c.h.b16 %v568
    %v1694 = vunpack.c.l.b16 %v569
    %v1695 = vunpack.c.h.b16 %v569
    %v1696 = vunpack.c.l.b16 %v570
    %v1697 = vunpack.c.h.b16 %v570
    %v1698 = vunpack.c.l.b16 %v571
    %v1699 = vunpack.c.h.b16 %v571
    %v1700 = vunpack.c.l.b16 %v572
    %v1701 = vunpack.c.h.b16 %v572
    %v1702 = vunpack.c.l.b16 %v573
    %v1703 = vunpack.c.h.b16 %v573
    %v1704 = vunpack.c.l.b16 %v574
    %v1705 = vunpack.c.h.b16 %v574
    %v1706 = vunpack.c.l.b16 %v575
    %v1707 = vunpack.c.h.b16 %v575
    %v1708 = vunpack.c.l.b16 %v576
    %v1709 = vunpack.c.h.b16 %v576
    %v1710 = vunpack.c.l.b16 %v577
    %v1711 = vunpack.c.h.b16 %v577
    %v1712 = vunpack.c.l.b16 %v578
    %v1713 = vunpack.c.h.b16 %v578
    %v1714 = vunpack.c.l.b16 %v579
    %v1715 = vunpack.c.h.b16 %v579
    %v1716 = vunpack.c.l.b16 %v580
    %v1717 = vunpack.c.h.b16 %v580
    %v1718 = vunpack.c.l.b16 %v581
    %v1719 = vunpack.c.h.b16 %v581
    %v1720 = vunpack.c.l.b16 %v582
    %v1721 = vunpack.c.h.b16 %v582
    %v1722 = vunpack.c.l.b16 %v583
    %v1723 = vunpack.c.h.b16 %v583
    %v1724 = vunpack.c.l.b16 %v584
    %v1725 = vunpack.c.h.b16 %v584
    %v1726 = vunpack.c.l.b16 %v585
    %v1727 = vunpack.c.h.b16 %v585
    %v1728 = vunpack.c.l.b16 %v586
    %v1729 = vunpack.c.h.b16 %v586
    %v1730 = vunpack.c.l.b16 %v587
    %v1731 = vunpack.c.h.b16 %v587
    %v1732 = vunpack.c.l.b16 %v588
    %v1733 = vunpack.c.h.b16 %v588
    %v1734 = vunpack.c.l.b16 %v589
    %v1735 = vunpack.c.h.b16 %v589
    %v1736 = vunpack.c.l.b16 %v590
    %v1737 = vunpack.c.h.b16 %v590
    %v1738 = vunpack.c.l.b16 %v591
    %v1739 = vunpack.c.h.b16 %v591
    %v1740 = vunpack.c.l.b16 %v592
    %v1741 = vunpack.c.h.b16 %v592
    %v1742 = vunpack.c.l.b16 %v593
    %v1743 = vunpack.c.h.b16 %v593
    %v1744 = vunpack.c.l.b16 %v594
    %v1745 = vunpack.c.h.b16 %v594
    %v1746 = vunpack.c.l.b16 %v595
    %v1747 = vunpack.c.h.b16 %v595
    %v1748 = vunpack.c.l.b16 %v596
    %v1749 = vunpack.c.h.b16 %v596
    %v1750 = vunpack.c.l.b16 %v597
    %v1751 = vunpack.c.h.b16 %v597
    %v1752 = vunpack.c.l.b16 %v598
    %v1753 = vunpack.c.h.b16 %v598
    %v1754 = vunpack.c.l.b16 %v599
    %v1755 = vunpack.c.h.b16 %v599
    %v1756 = vunpack.c.l.b16 %v600
    %v1757 = vunpack.c.h.b16 %v600
    %v1758 = vunpack.c.l.b16 %v601
    %v1759 = vunpack.c.h.b16 %v601
    %v1760 = vunpack.c.l.b16 %v602
    %v1761 = vunpack.c.h.b16 %v602
    %v1762 = vunpack.c.l.b16 %v603
    %v1763 = vunpack.c.h.b16 %v603
    %v1764 = vunpack.c.l.b16 %v604
    %v1765 = vunpack.c.h.b16 %v604
    %v1766 = vunpack.c.l.b16 %v605
    %v1767 = vunpack.c.h.b16 %v605
    %v1768 = vunpack.c.l.b16 %v606
    %v1769 = vunpack.c.h.b16 %v606
    %v1770 = vunpack.c.l.b16 %v607
    %v1771 = vunpack.c.h.b16 %v607
    %v1772 = vunpack.c.l.b16 %v608
    %v1773 = vunpack.c.h.b16 %v608
    %v1774 = vunpack.c.l.b16 %v609
    %v1775 = vunpack.c.h.b16 %v609
    %v1776 = vunpack.c.l.b16 %v610
    %v1777 = vunpack.c.h.b16 %v610
    %v1778 = vunpack.c.l.b16 %v611
    %v1779 = vunpack.c.h.b16 %v611
    %v1780 = vunpack.c.l.b16 %v612
    %v1781 = vunpack.c.h.b16 %v612
    %v1782 = vunpack.c.l.b16 %v613
    %v1783 = vunpack.c.h.b16 %v613
    %v1784 = vunpack.c.l.b16 %v614
    %v1785 = vunpack.c.h.b16 %v614
    %v1786 = vunpack.c.l.b16 %v615
    %v1787 = vunpack.c.h.b16 %v615
    %v1788 = vunpack.c.l.b16 %v616
    %v1789 = vunpack.c.h.b16 %v616
    %v1790 = vunpack.c.l.b16 %v617
    %v1791 = vunpack.c.h.b16 %v617
    %v1792 = vunpack.c.l.b16 %v618
    %v1793 = vunpack.c.h.b16 %v618
    %v1794 = vunpack.c.l.b16 %v619
    %v1795 = vunpack.c.h.b16 %v619
    %v1796 = vunpack.c.l.b16 %v620
    %v1797 = vunpack.c.h.b16 %v620
    %v1798 = vunpack.c.l.b16 %v621
    %v1799 = vunpack.c.h.b16 %v621
    %v1800 = vunpack.c.l.b16 %v622
    %v1801 = vunpack.c.h.b16 %v622
    %v1802 = vunpack.c.l.b16 %v623
    %v1803 = vunpack.c.h.b16 %v623
    %v1804 = vunpack.c.l.b16 %v624
    %v1805 = vunpack.c.h.b16 %v624
    %v1806 = vunpack.c.l.b16 %v625
    %v1807 = vunpack.c.h.b16 %v625
    %v1808 = vunpack.c.l.b16 %v626
    %v1809 = vunpack.c.h.b16 %v626
    %v1810 = vunpack.c.l.b16 %v627
    %v1811 = vunpack.c.h.b16 %v627
    %v1812 = vunpack.c.l.b16 %v628
    %v1813 = vunpack.c.h.b16 %v628
    %v1814 = vunpack.c.l.b16 %v629
    %v1815 = vunpack.c.h.b16 %v629
    %v1816 = vunpack.c.l.b16 %v630
    %v1817 = vunpack.c.h.b16 %v630
    %v1818 = vunpack.c.l.b16 %v631
    %v1819 = vunpack.c.h.b16 %v631
    %v1820 = vunpack.c.l.b16 %v632
    %v1821 = vunpack.c.h.b16 %v632
    %v1822 = vunpack.c.l.b16 %v633
    %v1823 = vunpack.c.h.b16 %v633
    %v1824 = vunpack.c.l.b16 %v634
    %v1825 = vunpack.c.h.b16 %v634
    %v1826 = vunpack.c.l.b16 %v635
    %v1827 = vunpack.c.h.b16 %v635
    %v1828 = vunpack.c.l.b16 %v636
    %v1829 = vunpack.c.h.b16 %v636
    %v1830 = vunpack.c.l.b16 %v637
    %v1831 = vunpack.c.h.b16 %v637
    %v1832 = vunpack.c.l.b16 %v638
    %v1833 = vunpack.c.h.b16 %v638
    %v1834 = vunpack.c.l.b16 %v639
    %v1835 = vunpack.c.h.b16 %v639
    %v1836 = vunpack.c.l.b16 %v640
    %v1837 = vunpack.c.h.b16 %v640
    %v1838 = vunpack.c.l.b16 %v641
    %v1839 = vunpack.c.h.b16 %v641
    %v1840 = vunpack.c.l.b16 %v642
    %v1841 = vunpack.c.h.b16 %v642
    %v1842 = vunpack.c.l.b16 %v643
    %v1843 = vunpack.c.h.b16 %v643
    %v1844 = vunpack.c.l.b16 %v644
    %v1845 = vunpack.c.h.b16 %v644
    %v1846 = vunpack.c.l.b16 %v645
    %v1847 = vunpack.c.h.b16 %v645
    %v1848 = vunpack.c.l.b16 %v646
    %v1849 = vunpack.c.h.b16 %v646
    %v1850 = vunpack.c.l.b16 %v647
    %v1851 = vunpack.c.h.b16 %v647
    %v1852 = vunpack.c.l.b16 %v648
    %v1853 = vunpack.c.h.b16 %v648
    %v1854 = vunpack.c.l.b16 %v649
    %v1855 = vunpack.c.h.b16 %v649
    %v1856 = vunpack.c.l.b16 %v650
    %v1857 = vunpack.c.h.b16 %v650
    %v1858 = vunpack.c.l.b16 %v651
    %v1859 = vunpack.c.h.b16 %v651
    %v1860 = vunpack.c.l.b16 %v652
    %v1861 = vunpack.c.h.b16 %v652
    %v1862 = vunpack.c.l.b16 %v653
    %v1863 = vunpack.c.h.b16 %v653
    %v1864 = vunpack.c.l.b16 %v654
    %v1865 = vunpack.c.h.b16 %v654
    %v1866 = vunpack.c.l.b16 %v655
    %v1867 = vunpack.c.h.b16 %v655
    %v1868 = vunpack.c.l.b16 %v656
    %v1869 = vunpack.c.h.b16 %v656
    %v1870 = vunpack.c.l.b16 %v657
    %v1871 = vunpack.c.h.b16 %v657
    %v1872 = vunpack.c.l.b16 %v658
    %v1873 = vunpack.c.h.b16 %v658
    %v1874 = vunpack.c.l.b16 %v659
    %v1875 = vunpack.c.h.b16 %v659
    %v1876 = vunpack.c.l.b16 %v660
    %v1877 = vunpack.c.h.b16 %v660
    %v1878 = vunpack.c.l.b16 %v661
    %v1879 = vunpack.c.h.b16 %v661
    %v1880 = vunpack.c.l.b16 %v662
    %v1881 = vunpack.c.h.b16 %v662
    %v1882 = vunpack.c.l.b16 %v663
    %v1883 = vunpack.c.h.b16 %v663
    %v1884 = vunpack.c.l.b16 %v664
    %v1885 = vunpack.c.h.b16 %v664
    %v1886 = vunpack.c.l.b16 %v665
    %v1887 = vunpack.c.h.b16 %v665
    %v1888 = vunpack.c.l.b16 %v666
    %v1889 = vunpack.c.h.b16 %v666
    %v1890 = vunpack.c.l.b16 %v667
    %v1891 = vunpack.c.h.b16 %v667
    %v1892 = vunpack.c.l.b16 %v668
    %v1893 = vunpack.c.h.b16 %v668
    %v1894 = vunpack.c.l.b16 %v669
    %v1895 = vunpack.c.h.b16 %v669
    %v1896 = vunpack.c.l.b16 %v670
    %v1897 = vunpack.c.h.b16 %v670
    %v1898 = vunpack.c.l.b16 %v671
    %v1899 = vunpack.c.h.b16 %v671
    %v1900 = vunpack.c.l.b16 %v672
    %v1901 = vunpack.c.h.b16 %v672
    %v1902 = vunpack.c.l.b16 %v673
    %v1903 = vunpack.c.h.b16 %v673
    %v1904 = vunpack.c.l.b16 %v674
    %v1905 = vunpack.c.h.b16 %v674
    %v1906 = vunpack.c.l.b16 %v675
    %v1907 = vunpack.c.h.b16 %v675
    %v1908 = vunpack.c.l.b16 %v676
    %v1909 = vunpack.c.h.b16 %v676
    %v1910 = vunpack.c.l.b16 %v677
    %v1911 = vunpack.c.h.b16 %v677
    %v1912 = vunpack.c.l.b16 %v678
    %v1913 = vunpack.c.h.b16 %v678
    %v1914 = vunpack.c.l.b16 %v679
    %v1915 = vunpack.c.h.b16 %v679
    %v1916 = vunpack.c.l.b16 %v680
    %v1917 = vunpack.c.h.b16 %v680
    %v1918 = vunpack.c.l.b16 %v681
    %v1919 = vunpack.c.h.b16 %v681
    %v1920 = vunpack.c.l.b16 %v682
    %v1921 = vunpack.c.h.b16 %v682
    %v1922 = vunpack.c.l.b16 %v683
    %v1923 = vunpack.c.h.b16 %v683
    %v1924 = vunpack.c.l.b16 %v684
    %v1925 = vunpack.c.h.b16 %v684
    %v1926 = vunpack.c.l.b16 %v685
    %v1927 = vunpack.c.h.b16 %v685
    %v1928 = vunpack.c.l.b16 %v686
    %v1929 = vunpack.c.h.b16 %v686
    %v1930 = vunpack.c.l.b16 %v687
    %v1931 = vunpack.c.h.b16 %v687
    %v1932 = vunpack.c.l.b16 %v688
    %v1933 = vunpack.c.h.b16 %v688
    %v1934 = vunpack.c.l.b16 %v689
    %v1935 = vunpack.c.h.b16 %v689
    %v1936 = vunpack.c.l.b16 %v690
    %v1937 = vunpack.c.h.b16 %v690
    %v1938 = vunpack.c.l.b16 %v691
    %v1939 = vunpack.c.h.b16 %v691
    %v1940 = vunpack.c.l.b16 %v692
    %v1941 = vunpack.c.h.b16 %v692
    %v1942 = vunpack.c.l.b16 %v693
    %v1943 = vunpack.c.h.b16 %v693
    %v1944 = vunpack.c.l.b16 %v694
    %v1945 = vunpack.c.h.b16 %v694
    %v1946 = vunpack.c.l.b16 %v695
    %v1947 = vunpack.c.h.b16 %v695
    %v1948 = vunpack.c.l.b16 %v696
    %v1949 = vunpack.c.h.b16 %v696
    %v1950 = vunpack.c.l.b16 %v697
    %v1951 = vunpack.c.h.b16 %v697
    %v1952 = vunpack.c.l.b16 %v698
    %v1953 = vunpack.c.h.b16 %v698
    %v1954 = vunpack.c.l.b16 %v699
    %v1955 = vunpack.c.h.b16 %v699
    %v1956 = vunpack.c.l.b16 %v700
    %v1957 = vunpack.c.h.b16 %v700
    %v1958 = vunpack.c.l.b16 %v701
    %v1959 = vunpack.c.h.b16 %v701
    %v1960 = vunpack.c.l.b16 %v702
    %v1961 = vunpack.c.h.b16 %v702
    %v1962 = vunpack.c.l.b16 %v703
    %v1963 = vunpack.c.h.b16 %v703
    %v1964 = vunpack.c.l.b16 %v704
    %v1965 = vunpack.c.h.b16 %v704
    %v1966 = vunpack.c.l.b16 %v705
    %v1967 = vunpack.c.h.b16 %v705
    %v1968 = vunpack.c.l.b16 %v706
    %v1969 = vunpack.c.h.b16 %v706
    %v1970 = vunpack.c.l.b16 %v707
    %v1971 = vunpack.c.h.b16 %v707
    %v1972 = vunpack.c.l.b16 %v708
    %v1973 = vunpack.c.h.b16 %v708
    %v1974 = vunpack.c.l.b16 %v709
    %v1975 = vunpack.c.h.b16 %v709
    %v1976 = vunpack.c.l.b16 %v710
    %v1977 = vunpack.c.h.b16 %v710
    %v1978 = vunpack.c.l.b16 %v711
    %v1979 = vunpack.c.h.b16 %v711
    %v1980 = vunpack.c.l.b16 %v712
    %v1981 = vunpack.c.h.b16 %v712
    %v1982 = vunpack.c.l.b16 %v713
    %v1983 = vunpack.c.h.b16 %v713
    %v1984 = vunpack.c.l.b16 %v714
    %v1985 = vunpack.c.h.b16 %v714
    %v1986 = vunpack.c.l.b16 %v715
    %v1987 = vunpack.c.h.b16 %v715
    %v1988 = vunpack.c.l.b16 %v716
    %v1989 = vunpack.c.h.b16 %v716
    %v1990 = vunpack.c.l.b16 %v717
    %v1991 = vunpack.c.h.b16 %v717
    %v1992 = vunpack.c.l.b16 %v718
    %v1993 = vunpack.c.h.b16 %v718
    %v1994 = vunpack.c.l.b16 %v719
    %v1995 = vunpack.c.h.b16 %v719
    %v1996 = vunpack.c.l.b16 %v720
    %v1997 = vunpack.c.h.b16 %v720
    %v1998 = vunpack.c.l.b16 %v721
    %v1999 = vunpack.c.h.b16 %v721
    %v2000 = vunpack.c.l.b16 %v722
    %v2001 = vunpack.c.h.b16 %v722
    %v2002 = vunpack.c.l.b16 %v723
    %v2003 = vunpack.c.h.b16 %v723
    %v2004 = vunpack.c.l.b16 %v724
    %v2005 = vunpack.c.h.b16 %v724
    %v2006 = vunpack.c.l.b16 %v725
    %v2007 = vunpack.c.h.b16 %v725
    %v2008 = vunpack.c.l.b16 %v726
    %v2009 = vunpack.c.h.b16 %v726
    %v2010 = vunpack.c.l.b16 %v727
    %v2011 = vunpack.c.h.b16 %v727
    %v2012 = vunpack.c.l.b16 %v728
    %v2013 = vunpack.c.h.b16 %v728
    %v2014 = vunpack.c.l.b16 %v729
    %v2015 = vunpack.c.h.b16 %v729
    %v2016 = vunpack.c.l.b16 %v730
    %v2017 = vunpack.c.h.b16 %v730
    %v2018 = vunpack.c.l.b16 %v731
    %v2019 = vunpack.c.h.b16 %v731
    %v2020 = vunpack.c.l.b16 %v732
    %v2021 = vunpack.c.h.b16 %v732
    %v2022 = vunpack.c.l.b16 %v733
    %v2023 = vunpack.c.h.b16 %v733
    %v2024 = vunpack.c.l.b16 %v734
    %v2025 = vunpack.c.h.b16 %v734
    %v2026 = vunpack.c.l.b16 %v735
    %v2027 = vunpack.c.h.b16 %v735
    %v2028 = vunpack.c.l.b16 %v736
    %v2029 = vunpack.c.h.b16 %v736
    %v2030 = vunpack.c.l.b16 %v737
    %v2031 = vunpack.c.h.b16 %v737
    %v2032 = vunpack.c.l.b16 %v738
    %v2033 = vunpack.c.h.b16 %v738
    %v2034 = vunpack.c.l.b16 %v739
    %v2035 = vunpack.c.h.b16 %v739
    %v2036 = vunpack.c.l.b16 %v740
    %v2037 = vunpack.c.h.b16 %v740
    %v2038 = vunpack.c.l.b16 %v741
    %v2039 = vunpack.c.h.b16 %v741
    %v2040 = vunpack.c.l.b16 %v742
    %v2041 = vunpack.c.h.b16 %v742
    %v2042 = vunpack.c.l.b16 %v743
    %v2043 = vunpack.c.h.b16 %v743
    %v2044 = vunpack.c.l.b16 %v744
    %v2045 = vunpack.c.h.b16 %v744
    %v2046 = vunpack.c.l.b16 %v745
    %v2047 = vunpack.c.h.b16 %v745
    %v2048 = vunpack.c.l.b16 %v746
    %v2049 = vunpack.c.h.b16 %v746
    %v2050 = vunpack.c.l.b16 %v747
    %v2051 = vunpack.c.h.b16 %v747
    %v2052 = vunpack.c.l.b16 %v748
    %v2053 = vunpack.c.h.b16 %v748
    %v2054 = vunpack.c.l.b16 %v749
    %v2055 = vunpack.c.h.b16 %v749
    %v2056 = vunpack.c.l.b16 %v750
    %v2057 = vunpack.c.h.b16 %v750
    %v2058 = vunpack.c.l.b16 %v751
    %v2059 = vunpack.c.h.b16 %v751
    %v2060 = vunpack.c.l.b16 %v752
    %v2061 = vunpack.c.h.b16 %v752
    %v2062 = vunpack.c.l.b16 %v753
    %v2063 = vunpack.c.h.b16 %v753
    %v2064 = vunpack.c.l.b16 %v754
    %v2065 = vunpack.c.h.b16 %v754
    %v2066 = vunpack.c.l.b16 %v755
    %v2067 = vunpack.c.h.b16 %v755
    %v2068 = vunpack.c.l.b16 %v756
    %v2069 = vunpack.c.h.b16 %v756
    %v2070 = vunpack.c.l.b16 %v757
    %v2071 = vunpack.c.h.b16 %v757
    %v2072 = vunpack.c.l.b16 %v758
    %v2073 = vunpack.c.h.b16 %v758
    %v2074 = vunpack.c.l.b16 %v759
    %v2075 = vunpack.c.h.b16 %v759
    %v2076 = vunpack.c.l.b16 %v760
    %v2077 = vunpack.c.h.b16 %v760
    %v2078 = vunpack.c.l.b16 %v761
    %v2079 = vunpack.c.h.b16 %v761
    %v2080 = vunpack.c.l.b16 %v762
    %v2081 = vunpack.c.h.b16 %v762
    %v2082 = vunpack.c.l.b16 %v763
    %v2083 = vunpack.c.h.b16 %v763
    %v2084 = vunpack.c.l.b16 %v764
    %v2085 = vunpack.c.h.b16 %v764
    %v2086 = vunpack.c.l.b16 %v765
    %v2087 = vunpack.c.h.b16 %v765
    %v2088 = vunpack.c.l.b16 %v766
    %v2089 = vunpack.c.h.b16 %v766
    %v2090 = vunpack.c.l.b16 %v767
    %v2091 = vunpack.c.h.b16 %v767
    %v2092 = vunpack.c.l.b16 %v768
    %v2093 = vunpack.c.h.b16 %v768
    %v2094 = vunpack.c.l.b16 %v769
    %v2095 = vunpack.c.h.b16 %v769
    %v2096 = vunpack.c.l.b16 %v770
    %v2097 = vunpack.c.h.b16 %v770
    %v2098 = vunpack.c.l.b16 %v771
    %v2099 = vunpack.c.h.b16 %v771
    %v2100 = vunpack.c.l.b16 %v772
    %v2101 = vunpack.c.h.b16 %v772
    %v2102 = vunpack.c.l.b16 %v773
    %v2103 = vunpack.c.h.b16 %v773
    %v2104 = vunpack.c.l.b16 %v774
    %v2105 = vunpack.c.h.b16 %v774
    %v2106 = vunpack.c.l.b16 %v775
    %v2107 = vunpack.c.h.b16 %v775
    %v2108 = vunpack.c.l.b16 %v776
    %v2109 = vunpack.c.h.b16 %v776
    %v2110 = vunpack.c.l.b16 %v777
    %v2111 = vunpack.c.h.b16 %v777
    %v2112 = vunpack.c.l.b16 %v778
    %v2113 = vunpack.c.h.b16 %v778
    %v2114 = vunpack.c.l.b16 %v779
    %v2115 = vunpack.c.h.b16 %v779
    %v2116 = vunpack.c.l.b16 %v780
    %v2117 = vunpack.c.h.b16 %v780
    %v2118 = vunpack.c.l.b16 %v781
    %v2119 = vunpack.c.h.b16 %v781
    %v2120 = vunpack.c.l.b16 %v782
    %v2121 = vunpack.c.h.b16 %v782
    %v2122 = vunpack.c.l.b16 %v783
    %v2123 = vunpack.c.h.b16 %v783
    %v2124 = vunpack.c.l.b16 %v784
    %v2125 = vunpack.c.h.b16 %v784
    %v2126 = vunpack.c.l.b16 %v785
    %v2127 = vunpack.c.h.b16 %v785
    %v2128 = vunpack.c.l.b16 %v786
    %v2129 = vunpack.c.h.b16 %v786
    %v2130 = vunpack.c.l.b16 %v787
    %v2131 = vunpack.c.h.b16 %v787
    %v2132 = vunpack.c.l.b16 %v788
    %v2133 = vunpack.c.h.b16 %v788
    %v2134 = vunpack.c.l.b16 %v789
    %v2135 = vunpack.c.h.b16 %v789
    %v2136 = vunpack.c.l.b16 %v790
    %v2137 = vunpack.c.h.b16 %v790
    %v2138 = vunpack.c.l.b16 %v791
    %v2139 = vunpack.c.h.b16 %v791
    %v2140 = vunpack.c.l.b16 %v792
    %v2141 = vunpack.c.h.b16 %v792
    %v2142 = vunpack.c.l.b16 %v793
    %v2143 = vunpack.c.h.b16 %v793
    %v2144 = vunpack.c.l.b16 %v794
    %v2145 = vunpack.c.h.b16 %v794
    %v2146 = vunpack.c.l.b16 %v795
    %v2147 = vunpack.c.h.b16 %v795
    %v2148 = vunpack.c.l.b16 %v796
    %v2149 = vunpack.c.h.b16 %v796
    %v2150 = vunpack.c.l.b16 %v797
    %v2151 = vunpack.c.h.b16 %v797
    %v2152 = vunpack.c.l.b16 %v798
    %v2153 = vunpack.c.h.b16 %v798
    %v2154 = vunpack.c.l.b16 %v799
    %v2155 = vunpack.c.h.b16 %v799
    %v2156 = vunpack.c.l.b16 %v800
    %v2157 = vunpack.c.h.b16 %v800
    %v2158 = vunpack.c.l.b16 %v801
    %v2159 = vunpack.c.h.b16 %v801
    %v2160 = vunpack.c.l.b16 %v802
    %v2161 = vunpack.c.h.b16 %v802
    %v2162 = vunpack.c.l.b16 %v803
    %v2163 = vunpack.c.h.b16 %v803
    %v2164 = vunpack.c.l.b16 %v804
    %v2165 = vunpack.c.h.b16 %v804
    %v2166 = vunpack.c.l.b16 %v805
    %v2167 = vunpack.c.h.b16 %v805
    %v2168 = vunpack.c.l.b16 %v806
    %v2169 = vunpack.c.h.b16 %v806
    %v2170 = vunpack.c.l.b16 %v807
    %v2171 = vunpack.c.h.b16 %v807
    %v2172 = vunpack.c.l.b16 %v808
    %v2173 = vunpack.c.h.b16 %v808
    %v2174 = vunpack.c.l.b16 %v809
    %v2175 = vunpack.c.h.b16 %v809
    %v2176 = vunpack.c.l.b16 %v810
    %v2177 = vunpack.c.h.b16 %v810
    %v2178 = vunpack.c.l.b16 %v811
    %v2179 = vunpack.c.h.b16 %v811
    %v2180 = vunpack.c.l.b16 %v812
    %v2181 = vunpack.c.h.b16 %v812
    %v2182 = vunpack.c.l.b16 %v813
    %v2183 = vunpack.c.h.b16 %v813
    %v2184 = vunpack.c.l.b16 %v814
    %v2185 = vunpack.c.h.b16 %v814
    %v2186 = vunpack.c.l.b16 %v815
    %v2187 = vunpack.c.h.b16 %v815
    %v2188 = vunpack.c.l.b16 %v816
    %v2189 = vunpack.c.h.b16 %v816
    %v2190 = vunpack.c.l.b16 %v817
    %v2191 = vunpack.c.h.b16 %v817
    %v2192 = vunpack.c.l.b16 %v818
    %v2193 = vunpack.c.h.b16 %v818
    %v2194 = vunpack.c.l.b16 %v819
    %v2195 = vunpack.c.h.b16 %v819
    %v2196 = vunpack.c.l.b16 %v820
    %v2197 = vunpack.c.h.b16 %v820
    %v2198 = vunpack.c.l.b16 %v821
    %v2199 = vunpack.c.h.b16 %v821
    %v2200 = vunpack.c.l.b16 %v822
    %v2201 = vunpack.c.h.b16 %v822
    %v2202 = vunpack.c.l.b16 %v823
    %v2203 = vunpack.c.h.b16 %v823
    %v2204 = vunpack.c.l.b16 %v824
    %v2205 = vunpack.c.h.b16 %v824
    %v2206 = vunpack.c.l.b16 %v825
    %v2207 = vunpack.c.h.b16 %v825
    %v2208 = vunpack.c.l.b16 %v826
    %v2209 = vunpack.c.h.b16 %v826
    %v2210 = vunpack.c.l.b16 %v827
    %v2211 = vunpack.c.h.b16 %v827
    %v2212 = vunpack.c.l.b16 %v828
    %v2213 = vunpack.c.h.b16 %v828
    %v2214 = vunpack.c.l.b16 %v829
    %v2215 = vunpack.c.h.b16 %v829
    %v2216 = vunpack.c.l.b16 %v830
    %v2217 = vunpack.c.h.b16 %v830
    %v2218 = vunpack.c.l.b16 %v831
    %v2219 = vunpack.c.h.b16 %v831
    %v2220 = vunpack.c.l.b16 %v832
    %v2221 = vunpack.c.h.b16 %v832
    %v2222 = vunpack.c.l.b16 %v833
    %v2223 = vunpack.c.h.b16 %v833
    %v2224 = vunpack.c.l.b16 %v834
    %v2225 = vunpack.c.h.b16 %v834
    %v2226 = vunpack.c.l.b16 %v835
    %v2227 = vunpack.c.h.b16 %v835
    %v2228 = vunpack.c.l.b16 %v836
    %v2229 = vunpack.c.h.b16 %v836
    %v2230 = vunpack.c.l.b16 %v837
    %v2231 = vunpack.c.h.b16 %v837
    %v2232 = vunpack.c.l.b16 %v838
    %v2233 = vunpack.c.h.b16 %v838
    %v2234 = vunpack.c.l.b16 %v839
    %v2235 = vunpack.c.h.b16 %v839
    %v2236 = vunpack.c.l.b16 %v840
    %v2237 = vunpack.c.h.b16 %v840
    %v2238 = vunpack.c.l.b16 %v841
    %v2239 = vunpack.c.h.b16 %v841
    %v2240 = vunpack.c.l.b16 %v842
    %v2241 = vunpack.c.h.b16 %v842
    %v2242 = vunpack.c.l.b16 %v843
    %v2243 = vunpack.c.h.b16 %v843
    %v2244 = vpack.c.b16 %v1350, %v1348
    %v2245 = vpack.c.b16 %v1351, %v1349
    %v2246 = vpack.c.b16 %v1354, %v1352
    %v2247 = vpack.c.b16 %v1355, %v1353
    %v2248 = vpack.c.b16 %v1358, %v1356
    %v2249 = vpack.c.b16 %v1359, %v1357
    %v2250 = vpack.c.b16 %v1362, %v1360
    %v2251 = vpack.c.b16 %v1363, %v1361
    %v2252 = vpack.c.b16 %v1366, %v1364
    %v2253 = vpack.c.b16 %v1367, %v1365
    %v2254 = vpack.c.b16 %v1370, %v1368
    %v2255 = vpack.c.b16 %v1371, %v1369
    %v2256 = vpack.c.b16 %v1374, %v1372
    %v2257 = vpack.c.b16 %v1375, %v1373
    %v2258 = vpack.c.b16 %v1378, %v1376
    %v2259 = vpack.c.b16 %v1379, %v1377
    %v2260 = vpack.c.b16 %v1382, %v1380
    %v2261 = vpack.c.b16 %v1383, %v1381
    %v2262 = vpack.c.b16 %v1386, %v1384
    %v2263 = vpack.c.b16 %v1387, %v1385
    %v2264 = vpack.c.b16 %v1390, %v1388
    %v2265 = vpack.c.b16 %v1391, %v1389
    %v2266 = vpack.c.b16 %v1394, %v1392
    %v2267 = vpack.c.b16 %v1395, %v1393
    %v2268 = vpack.c.b16 %v1398, %v1396
    %v2269 = vpack.c.b16 %v1399, %v1397
    %v2270 = vpack.c.b16 %v1402, %v1400
    %v2271 = vpack.c.b16 %v1403, %v1401
    %v2272 = vpack.c.b16 %v1406, %v1404
    %v2273 = vpack.c.b16 %v1407, %v1405
    %v2274 = vpack.c.b16 %v1410, %v1408
    %v2275 = vpack.c.b16 %v1411, %v1409
    %v2276 = vpack.c.b16 %v1414, %v1412
    %v2277 = vpack.c.b16 %v1415, %v1413
    %v2278 = vpack.c.b16 %v1418, %v1416
    %v2279 = vpack.c.b16 %v1419, %v1417
    %v2280 = vpack.c.b16 %v1422, %v1420
    %v2281 = vpack.c.b16 %v1423, %v1421
    %v2282 = vpack.c.b16 %v1426, %v1424
    %v2283 = vpack.c.b16 %v1427, %v1425
    %v2284 = vpack.c.b16 %v1430, %v1428
    %v2285 = vpack.c.b16 %v1431, %v1429
    %v2286 = vpack.c.b16 %v1434, %v1432
    %v2287 = vpack.c.b16 %v1435, %v1433
    %v2288 = vpack.c.b16 %v1438, %v1436
    %v2289 = vpack.c.b16 %v1439, %v1437
    %v2290 = vpack.c.b16 %v1442, %v1440
    %v2291 = vpack.c.b16 %v1443, %v1441
    %v2292 = vpack.c.b16 %v1446, %v1444
    %v2293 = vpack.c.b16 %v1447, %v1445
    %v2294 = vpack.c.b16 %v1450, %v1448
    %v2295 = vpack.c.b16 %v1451, %v1449
    %v2296 = vpack.c.b16 %v1454, %v1452
    %v2297 = vpack.c.b16 %v1455, %v1453
    %v2298 = vpack.c.b16 %v1458, %v1456
    %v2299 = vpack.c.b16 %v1459, %v1457
    %v2300 = vpack.c.b16 %v1462, %v1460
    %v2301 = vpack.c.b16 %v1463, %v1461
    %v2302 = vpack.c.b16 %v1466, %v1464
    %v2303 = vpack.c.b16 %v1467, %v1465
    %v2304 = vpack.c.b16 %v1470, %v1468
    %v2305 = vpack.c.b16 %v1471, %v1469
    %v2306 = vpack.c.b16 %v1474, %v1472
    %v2307 = vpack.c.b16 %v1475, %v1473
    %v2308 = vpack.c.b16 %v1478, %v1476
    %v2309 = vpack.c.b16 %v1479, %v1477
    %v2310 = vpack.c.b16 %v1482, %v1480
    %v2311 = vpack.c.b16 %v1483, %v1481
    %v2312 = vpack.c.b16 %v1486, %v1484
    %v2313 = vpack.c.b16 %v1487, %v1485
    %v2314 = vpack.c.b16 %v1490, %v1488
    %v2315 = vpack.c.b16 %v1491, %v1489
    %v2316 = vpack.c.b16 %v1494, %v1492
    %v2317 = vpack.c.b16 %v1495, %v1493
    %v2318 = vpack.c.b16 %v1498, %v1496
    %v2319 = vpack.c.b16 %v1499, %v1497
    %v2320 = vpack.c.b16 %v1502, %v1500
    %v2321 = vpack.c.b16 %v1503, %v1501
    %v2322 = vpack.c.b16 %v1506, %v1504
    %v2323 = vpack.c.b16 %v1507, %v1505
    %v2324 = vpack.c.b16 %v1510, %v1508
    %v2325 = vpack.c.b16 %v1511, %v1509
    %v2326 = vpack.c.b16 %v1514, %v1512
    %v2327 = vpack.c.b16 %v1515, %v1513
    %v2328 = vpack.c.b16 %v1518, %v1516
    %v2329 = vpack.c.b16 %v1519, %v1517
    %v2330 = vpack.c.b16 %v1522, %v1520
    %v2331 = vpack.c.b16 %v1523, %v1521
    %v2332 = vpack.c.b16 %v1526, %v1524
    %v2333 = vpack.c.b16 %v1527, %v1525
    %v2334 = vpack.c.b16 %v1530, %v1528
    %v2335 = vpack.c.b16 %v1531, %v1529
    %v2336 = vpack.c.b16 %v1534, %v1532
    %v2337 = vpack.c.b16 %v1535, %v1533
    %v2338 = vpack.c.b16 %v1538, %v1536
    %v2339 = vpack.c.b16 %v1539, %v1537
    %v2340 = vpack.c.b16 %v1542, %v1540
    %v2341 = vpack.c.b16 %v1543, %v1541
    %v2342 = vpack.c.b16 %v1546, %v1544
    %v2343 = vpack.c.b16 %v1547, %v1545
    %v2344 = vpack.c.b16 %v1550, %v1548
    %v2345 = vpack.c.b16 %v1551, %v1549
    %v2346 = vpack.c.b16 %v1554, %v1552
    %v2347 = vpack.c.b16 %v1555, %v1553
    %v2348 = vpack.c.b16 %v1558, %v1556
    %v2349 = vpack.c.b16 %v1559, %v1557
    %v2350 = vpack.c.b16 %v1562, %v1560
    %v2351 = vpack.c.b16 %v1563, %v1561
    %v2352 = vpack.c.b16 %v1566, %v1564
    %v2353 = vpack.c.b16 %v1567, %v1565
    %v2354 = vpack.c.b16 %v1570, %v1568
    %v2355 = vpack.c.b16 %v1571, %v1569
    %v2356 = vpack.c.b16 %v1574, %v1572
    %v2357 = vpack.c.b16 %v1575, %v1573
    %v2358 = vpack.c.b16 %v1578, %v1576
    %v2359 = vpack.c.b16 %v1579, %v1577
    %v2360 = vpack.c.b16 %v1582, %v1580
    %v2361 = vpack.c.b16 %v1583, %v1581
    %v2362 = vpack.c.b16 %v1586, %v1584
    %v2363 = vpack.c.b16 %v1587, %v1585
    %v2364 = vpack.c.b16 %v1590, %v1588
    %v2365 = vpack.c.b16 %v1591, %v1589
    %v2366 = vpack.c.b16 %v1594, %v1592
    %v2367 = vpack.c.b16 %v1595, %v1593
    %v2368 = vpack.c.b16 %v1598, %v1596
    %v2369 = vpack.c.b16 %v1599, %v1597
    %v2370 = vpack.c.b16 %v1602, %v1600
    %v2371 = vpack.c.b16 %v1603, %v1601
    %v2372 = vpack.c.b16 %v1606, %v1604
    %v2373 = vpack.c.b16 %v1607, %v1605
    %v2374 = vpack.c.b16 %v1610, %v1608
    %v2375 = vpack.c.b16 %v1611, %v1609
    %v2376 = vpack.c.b16 %v1614, %v1612
    %v2377 = vpack.c.b16 %v1615, %v1613
    %v2378 = vpack.c.b16 %v1618, %v1616
    %v2379 = vpack.c.b16 %v1619, %v1617
    %v2380 = vpack.c.b16 %v1622, %v1620
    %v2381 = vpack.c.b16 %v1623, %v1621
    %v2382 = vpack.c.b16 %v1626, %v1624
    %v2383 = vpack.c.b16 %v1627, %v1625
    %v2384 = vpack.c.b16 %v1630, %v1628
    %v2385 = vpack.c.b16 %v1631, %v1629
    %v2386 = vpack.c.b16 %v1634, %v1632
    %v2387 = vpack.c.b16 %v1635, %v1633
    %v2388 = vpack.c.b16 %v1638, %v1636
    %v2389 = vpack.c.b16 %v1639, %v1637
    %v2390 = vpack.c.b16 %v1642, %v1640
    %v2391 = vpack.c.b16 %v1643, %v1641
    %v2392 = vpack.c.b16 %v1646, %v1644
    %v2393 = vpack.c.b16 %v1647, %v1645
    %v2394 = vpack.c.b16 %v1650, %v1648
    %v2395 = vpack.c.b16 %v1651, %v1649
    %v2396 = vpack.c.b16 %v1654, %v1652
    %v2397 = vpack.c.b16 %v1655, %v1653
    %v2398 = vpack.c.b16 %v1658, %v1656
    %v2399 = vpack.c.b16 %v1659, %v1657
    %v2400 = vpack.c.b16 %v1662, %v1660
    %v2401 = vpack.c.b16 %v1663, %v1661
    %v2402 = vpack.c.b16 %v1666, %v1664
    %v2403 = vpack.c.b16 %v1667, %v1665
    %v2404 = vpack.c.b16 %v1670, %v1668
    %v2405 = vpack.c.b16 %v1671, %v1669
    %v2406 = vpack.c.b16 %v1674, %v1672
    %v2407 = vpack.c.b16 %v1675, %v1673
    %v2408 = vpack.c.b16 %v1678, %v1676
    %v2409 = vpack.c.b16 %v1679, %v1677
    %v2410 = vpack.c.b16 %v1682, %v1680
    %v2411 = vpack.c.b16 %v1683, %v1681
    %v2412 = vpack.c.b16 %v1686, %v1684
    %v2413 = vpack.c.b16 %v1687, %v1685
    %v2414 = vpack.c.b16 %v1690, %v1688
    %v2415 = vpack.c.b16 %v1691, %v1689
    %v2416 = vpack.c.b16 %v1694, %v1692
    %v2417 = vpack.c.b16 %v1695, %v1693
    %v2418 = vpack.c.b16 %v1698, %v1696
    %v2419 = vpack.c.b16 %v1699, %v1697
    %v2420 = vpack.c.b16 %v1702, %v1700
    %v2421 = vpack.c.b16 %v1703, %v1701
    %v2422 = vpack.c.b16 %v1706, %v1704
    %v2423 = vpack.c.b16 %v1707, %v1705
    %v2424 = vpack.c.b16 %v1710, %v1708
    %v2425 = vpack.c.b16 %v1711, %v1709
    %v2426 = vpack.c.b16 %v1714, %v1712
    %v2427 = vpack.c.b16 %v1715, %v1713
    %v2428 = vpack.c.b16 %v1718, %v1716
    %v2429 = vpack.c.b16 %v1719, %v1717
    %v2430 = vpack.c.b16 %v1722, %v1720
    %v2431 = vpack.c.b16 %v1723, %v1721
    %v2432 = vpack.c.b16 %v1726, %v1724
    %v2433 = vpack.c.b16 %v1727, %v1725
    %v2434 = vpack.c.b16 %v1730, %v1728
    %v2435 = vpack.c.b16 %v1731, %v1729
    %v2436 = vpack.c.b16 %v1734, %v1732
    %v2437 = vpack.c.b16 %v1735, %v1733
    %v2438 = vpack.c.b16 %v1738, %v1736
    %v2439 = vpack.c.b16 %v1739, %v1737
    %v2440 = vpack.c.b16 %v1742, %v1740
    %v2441 = vpack.c.b16 %v1743, %v1741
    %v2442 = vpack.c.b16 %v1746, %v1744
    %v2443 = vpack.c.b16 %v1747, %v1745
    %v2444 = vpack.c.b16 %v1750, %v1748
    %v2445 = vpack.c.b16 %v1751, %v1749
    %v2446 = vpack.c.b16 %v1754, %v1752
    %v2447 = vpack.c.b16 %v1755, %v1753
    %v2448 = vpack.c.b16 %v1758, %v1756
    %v2449 = vpack.c.b16 %v1759, %v1757
    %v2450 = vpack.c.b16 %v1762, %v1760
    %v2451 = vpack.c.b16 %v1763, %v1761
    %v2452 = vpack.c.b16 %v1766, %v1764
    %v2453 = vpack.c.b16 %v1767, %v1765
    %v2454 = vpack.c.b16 %v1770, %v1768
    %v2455 = vpack.c.b16 %v1771, %v1769
    %v2456 = vpack.c.b16 %v1774, %v1772
    %v2457 = vpack.c.b16 %v1775, %v1773
    %v2458 = vpack.c.b16 %v1778, %v1776
    %v2459 = vpack.c.b16 %v1779, %v1777
    %v2460 = vpack.c.b16 %v1782, %v1780
    %v2461 = vpack.c.b16 %v1783, %v1781
    %v2462 = vpack.c.b16 %v1786, %v1784
    %v2463 = vpack.c.b16 %v1787, %v1785
    %v2464 = vpack.c.b16 %v1790, %v1788
    %v2465 = vpack.c.b16 %v1791, %v1789
    %v2466 = vpack.c.b16 %v1794, %v1792
    %v2467 = vpack.c.b16 %v1795, %v1793
    %v2468 = vpack.c.b16 %v1798, %v1796
    %v2469 = vpack.c.b16 %v1799, %v1797
    %v2470 = vpack.c.b16 %v1802, %v1800
    %v2471 = vpack.c.b16 %v1803, %v1801
    %v2472 = vpack.c.b16 %v1806, %v1804
    %v2473 = vpack.c.b16 %v1807, %v1805
    %v2474 = vpack.c.b16 %v1810, %v1808
    %v2475 = vpack.c.b16 %v1811, %v1809
    %v2476 = vpack.c.b16 %v1814, %v1812
    %v2477 = vpack.c.b16 %v1815, %v1813
    %v2478 = vpack.c.b16 %v1818, %v1816
    %v2479 = vpack.c.b16 %v1819, %v1817
    %v2480 = vpack.c.b16 %v1822, %v1820
    %v2481 = vpack.c.b16 %v1823, %v1821
    %v2482 = vpack.c.b16 %v1826, %v1824
    %v2483 = vpack.c.b16 %v1827, %v1825
    %v2484 = vpack.c.b16 %v1830, %v1828
    %v2485 = vpack.c.b16 %v1831, %v1829
    %v2486 = vpack.c.b16 %v1834, %v1832
    %v2487 = vpack.c.b16 %v1835, %v1833
    %v2488 = vpack.c.b16 %v1838, %v1836
    %v2489 = vpack.c.b16 %v1839, %v1837
    %v2490 = vpack.c.b16 %v1842, %v1840
    %v2491 = vpack.c.b16 %v1843, %v1841
    %v2492 = vpack.c.b16 %v1846, %v1844
    %v2493 = vpack.c.b16 %v1847, %v1845
    %v2494 = vpack.c.b16 %v1850, %v1848
    %v2495 = vpack.c.b16 %v1851, %v1849
    %v2496 = vpack.c.b16 %v1854, %v1852
    %v2497 = vpack.c.b16 %v1855, %v1853
    %v2498 = vpack.c.b16 %v1858, %v1856
    %v2499 = vpack.c.b16 %v1859, %v1857
    %v2500 = vpack.c.b16 %v1862, %v1860
    %v2501 = vpack.c.b16 %v1863, %v1861
    %v2502 = vpack.c.b16 %v1866, %v1864
    %v2503 = vpack.c.b16 %v1867, %v1865
    %v2504 = vpack.c.b16 %v1870, %v1868
    %v2505 = vpack.c.b16 %v1871, %v1869
    %v2506 = vpack.c.b16 %v1874, %v1872
    %v2507 = vpack.c.b16 %v1875, %v1873
    %v2508 = vpack.c.b16 %v1878, %v1876
    %v2509 = vpack.c.b16 %v1879, %v1877
    %v2510 = vpack.c.b16 %v1882, %v1880
    %v2511 = vpack.c.b16 %v1883, %v1881
    %v2512 = vpack.c.b16 %v1886, %v1884
    %v2513 = vpack.c.b16 %v1887, %v1885
    %v2514 = vpack.c.b16 %v1890, %v1888
    %v2515 = vpack.c.b16 %v1891, %v1889
    %v2516 = vpack.c.b16 %v1894, %v1892
    %v2517 = vpack.c.b16 %v1895, %v1893
    %v2518 = vpack.c.b16 %v1898, %v1896
    %v2519 = vpack.c.b16 %v1899, %v1897
    %v2520 = vpack.c.b16 %v1902, %v1900
    %v2521 = vpack.c.b16 %v1903, %v1901
    %v2522 = vpack.c.b16 %v1906, %v1904
    %v2523 = vpack.c.b16 %v1907, %v1905
    %v2524 = vpack.c.b16 %v1910, %v1908
    %v2525 = vpack.c.b16 %v1911, %v1909
    %v2526 = vpack.c.b16 %v1914, %v1912
    %v2527 = vpack.c.b16 %v1915, %v1913
    %v2528 = vpack.c.b16 %v1918, %v1916
    %v2529 = vpack.c.b16 %v1919, %v1917
    %v2530 = vpack.c.b16 %v1922, %v1920
    %v2531 = vpack.c.b16 %v1923, %v1921
    %v2532 = vpack.c.b16 %v1926, %v1924
    %v2533 = vpack.c.b16 %v1927, %v1925
    %v2534 = vpack.c.b16 %v1930, %v1928
    %v2535 = vpack.c.b16 %v1931, %v1929
    %v2536 = vpack.c.b16 %v1934, %v1932
    %v2537 = vpack.c.b16 %v1935, %v1933
    %v2538 = vpack.c.b16 %v1938, %v1936
    %v2539 = vpack.c.b16 %v1939, %v1937
    %v2540 = vpack.c.b16 %v1942, %v1940
    %v2541 = vpack.c.b16 %v1943, %v1941
    %v2542 = vpack.c.b16 %v1946, %v1944
    %v2543 = vpack.c.b16 %v1947, %v1945
    %v2544 = vpack.c.b16 %v1950, %v1948
    %v2545 = vpack.c.b16 %v1951, %v1949
    %v2546 = vpack.c.b16 %v1954, %v1952
    %v2547 = vpack.c.b16 %v1955, %v1953
    %v2548 = vpack.c.b16 %v1958, %v1956
    %v2549 = vpack.c.b16 %v1959, %v1957
    %v2550 = vpack.c.b16 %v1962, %v1960
    %v2551 = vpack.c.b16 %v1963, %v1961
    %v2552 = vpack.c.b16 %v1966, %v1964
    %v2553 = vpack.c.b16 %v1967, %v1965
    %v2554 = vpack.c.b16 %v1970, %v1968
    %v2555 = vpack.c.b16 %v1971, %v1969
    %v2556 = vpack.c.b16 %v1974, %v1972
    %v2557 = vpack.c.b16 %v1975, %v1973
    %v2558 = vpack.c.b16 %v1978, %v1976
    %v2559 = vpack.c.b16 %v1979, %v1977
    %v2560 = vpack.c.b16 %v1982, %v1980
    %v2561 = vpack.c.b16 %v1983, %v1981
    %v2562 = vpack.c.b16 %v1986, %v1984
    %v2563 = vpack.c.b16 %v1987, %v1985
    %v2564 = vpack.c.b16 %v1990, %v1988
    %v2565 = vpack.c.b16 %v1991, %v1989
    %v2566 = vpack.c.b16 %v1994, %v1992
    %v2567 = vpack.c.b16 %v1995, %v1993
    %v2568 = vpack.c.b16 %v1998, %v1996
    %v2569 = vpack.c.b16 %v1999, %v1997
    %v2570 = vpack.c.b16 %v2002, %v2000
    %v2571 = vpack.c.b16 %v2003, %v2001
    %v2572 = vpack.c.b16 %v2006, %v2004
    %v2573 = vpack.c.b16 %v2007, %v2005
    %v2574 = vpack.c.b16 %v2010, %v2008
    %v2575 = vpack.c.b16 %v2011, %v2009
    %v2576 = vpack.c.b16 %v2014, %v2012
    %v2577 = vpack.c.b16 %v2015, %v2013
    %v2578 = vpack.c.b16 %v2018, %v2016
    %v2579 = vpack.c.b16 %v2019, %v2017
    %v2580 = vpack.c.b16 %v2022, %v2020
    %v2581 = vpack.c.b16 %v2023, %v2021
    %v2582 = vpack.c.b16 %v2026, %v2024
    %v2583 = vpack.c.b16 %v2027, %v2025
    %v2584 = vpack.c.b16 %v2030, %v2028
    %v2585 = vpack.c.b16 %v2031, %v2029
    %v2586 = vpack.c.b16 %v2034, %v2032
    %v2587 = vpack.c.b16 %v2035, %v2033
    %v2588 = vpack.c.b16 %v2038, %v2036
    %v2589 = vpack.c.b16 %v2039, %v2037
    %v2590 = vpack.c.b16 %v2042, %v2040
    %v2591 = vpack.c.b16 %v2043, %v2041
    %v2592 = vpack.c.b16 %v2046, %v2044
    %v2593 = vpack.c.b16 %v2047, %v2045
    %v2594 = vpack.c.b16 %v2050, %v2048
    %v2595 = vpack.c.b16 %v2051, %v2049
    %v2596 = vpack.c.b16 %v2054, %v2052
    %v2597 = vpack.c.b16 %v2055, %v2053
    %v2598 = vpack.c.b16 %v2058, %v2056
    %v2599 = vpack.c.b16 %v2059, %v2057
    %v2600 = vpack.c.b16 %v2062, %v2060
    %v2601 = vpack.c.b16 %v2063, %v2061
    %v2602 = vpack.c.b16 %v2066, %v2064
    %v2603 = vpack.c.b16 %v2067, %v2065
    %v2604 = vpack.c.b16 %v2070, %v2068
    %v2605 = vpack.c.b16 %v2071, %v2069
    %v2606 = vpack.c.b16 %v2074, %v2072
    %v2607 = vpack.c.b16 %v2075, %v2073
    %v2608 = vpack.c.b16 %v2078, %v2076
    %v2609 = vpack.c.b16 %v2079, %v2077
    %v2610 = vpack.c.b16 %v2082, %v2080
    %v2611 = vpack.c.b16 %v2083, %v2081
    %v2612 = vpack.c.b16 %v2086, %v2084
    %v2613 = vpack.c.b16 %v2087, %v2085
    %v2614 = vpack.c.b16 %v2090, %v2088
    %v2615 = vpack.c.b16 %v2091, %v2089
    %v2616 = vpack.c.b16 %v2094, %v2092
    %v2617 = vpack.c.b16 %v2095, %v2093
    %v2618 = vpack.c.b16 %v2098, %v2096
    %v2619 = vpack.c.b16 %v2099, %v2097
    %v2620 = vpack.c.b16 %v2102, %v2100
    %v2621 = vpack.c.b16 %v2103, %v2101
    %v2622 = vpack.c.b16 %v2106, %v2104
    %v2623 = vpack.c.b16 %v2107, %v2105
    %v2624 = vpack.c.b16 %v2110, %v2108
    %v2625 = vpack.c.b16 %v2111, %v2109
    %v2626 = vpack.c.b16 %v2114, %v2112
    %v2627 = vpack.c.b16 %v2115, %v2113
    %v2628 = vpack.c.b16 %v2118, %v2116
    %v2629 = vpack.c.b16 %v2119, %v2117
    %v2630 = vpack.c.b16 %v2122, %v2120
    %v2631 = vpack.c.b16 %v2123, %v2121
    %v2632 = vpack.c.b16 %v2126, %v2124
    %v2633 = vpack.c.b16 %v2127, %v2125
    %v2634 = vpack.c.b16 %v2130, %v2128
    %v2635 = vpack.c.b16 %v2131, %v2129
    %v2636 = vpack.c.b16 %v2134, %v2132
    %v2637 = vpack.c.b16 %v2135, %v2133
    %v2638 = vpack.c.b16 %v2138, %v2136
    %v2639 = vpack.c.b16 %v2139, %v2137
    %v2640 = vpack.c.b16 %v2142, %v2140
    %v2641 = vpack.c.b16 %v2143, %v2141
    %v2642 = vpack.c.b16 %v2146, %v2144
    %v2643 = vpack.c.b16 %v2147, %v2145
    %v2644 = vpack.c.b16 %v2150, %v2148
    %v2645 = vpack.c.b16 %v2151, %v2149
    %v2646 = vpack.c.b16 %v2154, %v2152
    %v2647 = vpack.c.b16 %v2155, %v2153
    %v2648 = vpack.c.b16 %v2158, %v2156
    %v2649 = vpack.c.b16 %v2159, %v2157
    %v2650 = vpack.c.b16 %v2162, %v2160
    %v2651 = vpack.c.b16 %v2163, %v2161
    %v2652 = vpack.c.b16 %v2166, %v2164
    %v2653 = vpack.c.b16 %v2167, %v2165
    %v2654 = vpack.c.b16 %v2170, %v2168
    %v2655 = vpack.c.b16 %v2171, %v2169
    %v2656 = vpack.c.b16 %v2174, %v2172
    %v2657 = vpack.c.b16 %v2175, %v2173
    %v2658 = vpack.c.b16 %v2178, %v2176
    %v2659 = vpack.c.b16 %v2179, %v2177
    %v2660 = vpack.c.b16 %v2182, %v2180
    %v2661 = vpack.c.b16 %v2183, %v2181
    %v2662 = vpack.c.b16 %v2186, %v2184
    %v2663 = vpack.c.b16 %v2187, %v2185
    %v2664 = vpack.c.b16 %v2190, %v2188
    %v2665 = vpack.c.b16 %v2191, %v2189
    %v2666 = vpack.c.b16 %v2194, %v2192
    %v2667 = vpack.c.b16 %v2195, %v2193
    %v2668 = vpack.c.b16 %v2198, %v2196
    %v2669 = vpack.c.b16 %v2199, %v2197
    %v2670 = vpack.c.b16 %v2202, %v2200
    %v2671 = vpack.c.b16 %v2203, %v2201
    %v2672 = vpack.c.b16 %v2206, %v2204
    %v2673 = vpack.c.b16 %v2207, %v2205
    %v2674 = vpack.c.b16 %v2210, %v2208
    %v2675 = vpack.c.b16 %v2211, %v2209
    %v2676 = vpack.c.b16 %v2214, %v2212
    %v2677 = vpack.c.b16 %v2215, %v2213
    %v2678 = vpack.c.b16 %v2218, %v2216
    %v2679 = vpack.c.b16 %v2219, %v2217
    %v2680 = vpack.c.b16 %v2222, %v2220
    %v2681 = vpack.c.b16 %v2223, %v2221
    %v2682 = vpack.c.b16 %v2226, %v2224
    %v2683 = vpack.c.b16 %v2227, %v2225
    %v2684 = vpack.c.b16 %v2230, %v2228
    %v2685 = vpack.c.b16 %v2231, %v2229
    %v2686 = vpack.c.b16 %v2234, %v2232
    %v2687 = vpack.c.b16 %v2235, %v2233
    %v2688 = vpack.c.b16 %v2238, %v2236
    %v2689 = vpack.c.b16 %v2239, %v2237
    %v2690 = vpack.c.b16 %v2242, %v2240
    %v2691 = vpack.c.b16 %v2243, %v2241
    %3140 = vmatprep.subr.bf16.mxu0 %v2245
    %3141 = vmatpush1.bf16.msra.mxu0 %v2244
    %3142 = vmatprep.subr.bf16.mxu0 %v2247
    %3143 = vmatpush1.bf16.msra.mxu0 %v2246
    %3144 = vmatprep.subr.bf16.mxu0 %v2249
    %3145 = vmatpush1.bf16.msra.mxu0 %v2248
    %3146 = vmatprep.subr.bf16.mxu0 %v2251
    %3147 = vmatpush1.bf16.msra.mxu0 %v2250
    %3148 = vmatprep.subr.bf16.mxu0 %v2253
    %3149 = vmatpush1.bf16.msra.mxu0 %v2252
    %3150 = vmatprep.subr.bf16.mxu0 %v2255
    %3151 = vmatpush1.bf16.msra.mxu0 %v2254
    %3152 = vmatprep.subr.bf16.mxu0 %v2257
    %3153 = vmatpush1.bf16.msra.mxu0 %v2256
    %3154 = vmatprep.subr.bf16.mxu0 %v2259
    %3155 = vmatpush1.bf16.msra.mxu0 %v2258
    %3156 = vmatprep.subr.bf16.mxu0 %v2261
    %3157 = vmatpush1.bf16.msra.mxu0 %v2260
    %3158 = vmatprep.subr.bf16.mxu0 %v2263
    %3159 = vmatpush1.bf16.msra.mxu0 %v2262
    %3160 = vmatprep.subr.bf16.mxu0 %v2265
    %3161 = vmatpush1.bf16.msra.mxu0 %v2264
    %3162 = vmatprep.subr.bf16.mxu0 %v2267
    %3163 = vmatpush1.bf16.msra.mxu0 %v2266
    %3164 = vmatprep.subr.bf16.mxu0 %v2269
    %3165 = vmatpush1.bf16.msra.mxu0 %v2268
    %3166 = vmatprep.subr.bf16.mxu0 %v2271
    %3167 = vmatpush1.bf16.msra.mxu0 %v2270
    %3168 = vmatprep.subr.bf16.mxu0 %v2273
    %3169 = vmatpush1.bf16.msra.mxu0 %v2272
    %3170 = vmatprep.subr.bf16.mxu0 %v2275
    %3171 = vmatpush1.bf16.msra.mxu0 %v2274
    %3172 = vmatprep.mubr.bf16.mxu0 %v845
    %3173 = vmatmul.mubr.bf16.gmra.mrb[0].mxu0 %v844
    %v3174 = vpop.f32.mrb[0].mxu0
    %v3175 = vadd.f32 0.0, %v3174
    %v3176 = vpop.f32.mrb[0].mxu0
    %v3177 = vadd.f32 0.0, %v3176
    %v3178 = vpop.f32.mrb[0].mxu0
    %v3179 = vadd.f32 0.0, %v3178
    %v3180 = vpop.f32.mrb[0].mxu0
    %v3181 = vadd.f32 0.0, %v3180
    %3182 = vdwg.mxu0
    %3183 = vmatprep.subr.bf16.mxu0 %v2277
    %3184 = vmatpush1.bf16.msra.mxu0 %v2276
    %3185 = vmatprep.subr.bf16.mxu0 %v2279
    %3186 = vmatpush1.bf16.msra.mxu0 %v2278
    %3187 = vmatprep.subr.bf16.mxu0 %v2281
    %3188 = vmatpush1.bf16.msra.mxu0 %v2280
    %3189 = vmatprep.subr.bf16.mxu0 %v2283
    %3190 = vmatpush1.bf16.msra.mxu0 %v2282
    %3191 = vmatprep.subr.bf16.mxu0 %v2285
    %3192 = vmatpush1.bf16.msra.mxu0 %v2284
    %3193 = vmatprep.subr.bf16.mxu0 %v2287
    %3194 = vmatpush1.bf16.msra.mxu0 %v2286
    %3195 = vmatprep.subr.bf16.mxu0 %v2289
    %3196 = vmatpush1.bf16.msra.mxu0 %v2288
    %3197 = vmatprep.subr.bf16.mxu0 %v2291
    %3198 = vmatpush1.bf16.msra.mxu0 %v2290
    %3199 = vmatprep.subr.bf16.mxu0 %v2293
    %3200 = vmatpush1.bf16.msra.mxu0 %v2292
    %3201 = vmatprep.subr.bf16.mxu0 %v2295
    %3202 = vmatpush1.bf16.msra.mxu0 %v2294
    %3203 = vmatprep.subr.bf16.mxu0 %v2297
    %3204 = vmatpush1.bf16.msra.mxu0 %v2296
    %3205 = vmatprep.subr.bf16.mxu0 %v2299
    %3206 = vmatpush1.bf16.msra.mxu0 %v2298
    %3207 = vmatprep.subr.bf16.mxu0 %v2301
    %3208 = vmatpush1.bf16.msra.mxu0 %v2300
    %3209 = vmatprep.subr.bf16.mxu0 %v2303
    %3210 = vmatpush1.bf16.msra.mxu0 %v2302
    %3211 = vmatprep.subr.bf16.mxu0 %v2305
    %3212 = vmatpush1.bf16.msra.mxu0 %v2304
    %3213 = vmatprep.subr.bf16.mxu0 %v2307
    %3214 = vmatpush1.bf16.msra.mxu0 %v2306
    %3215 = vmatprep.mubr.bf16.mxu0 %v847
    %3216 = vmatmul.mubr.bf16.gmra.mrb[0].mxu0 %v846
    %v3217 = vpop.f32.mrb[0].mxu0
    %v3218 = vadd.f32 %v3175, %v3217
    %v3219 = vpop.f32.mrb[0].mxu0
    %v3220 = vadd.f32 %v3177, %v3219
    %v3221 = vpop.f32.mrb[0].mxu0
    %v3222 = vadd.f32 %v3179, %v3221
    %v3223 = vpop.f32.mrb[0].mxu0
    %v3224 = vadd.f32 %v3181, %v3223
    %3225 = vdwg.mxu0
    %3226 = vmatprep.subr.bf16.mxu0 %v2309
    %3227 = vmatpush1.bf16.msra.mxu0 %v2308
    %3228 = vmatprep.subr.bf16.mxu0 %v2311
    %3229 = vmatpush1.bf16.msra.mxu0 %v2310
    %3230 = vmatprep.subr.bf16.mxu0 %v2313
    %3231 = vmatpush1.bf16.msra.mxu0 %v2312
    %3232 = vmatprep.subr.bf16.mxu0 %v2315
    %3233 = vmatpush1.bf16.msra.mxu0 %v2314
    %3234 = vmatprep.subr.bf16.mxu0 %v2317
    %3235 = vmatpush1.bf16.msra.mxu0 %v2316
    %3236 = vmatprep.subr.bf16.mxu0 %v2319
    %3237 = vmatpush1.bf16.msra.mxu0 %v2318
    %3238 = vmatprep.subr.bf16.mxu0 %v2321
    %3239 = vmatpush1.bf16.msra.mxu0 %v2320
    %3240 = vmatprep.subr.bf16.mxu0 %v2323
    %3241 = vmatpush1.bf16.msra.mxu0 %v2322
    %3242 = vmatprep.subr.bf16.mxu0 %v2325
    %3243 = vmatpush1.bf16.msra.mxu0 %v2324
    %3244 = vmatprep.subr.bf16.mxu0 %v2327
    %3245 = vmatpush1.bf16.msra.mxu0 %v2326
    %3246 = vmatprep.subr.bf16.mxu0 %v2329
    %3247 = vmatpush1.bf16.msra.mxu0 %v2328
    %3248 = vmatprep.subr.bf16.mxu0 %v2331
    %3249 = vmatpush1.bf16.msra.mxu0 %v2330
    %3250 = vmatprep.subr.bf16.mxu0 %v2333
    %3251 = vmatpush1.bf16.msra.mxu0 %v2332
    %3252 = vmatprep.subr.bf16.mxu0 %v2335
    %3253 = vmatpush1.bf16.msra.mxu0 %v2334
    %3254 = vmatprep.subr.bf16.mxu0 %v2337
    %3255 = vmatpush1.bf16.msra.mxu0 %v2336
    %3256 = vmatprep.subr.bf16.mxu0 %v2339
    %3257 = vmatpush1.bf16.msra.mxu0 %v2338
    %3258 = vmatprep.mubr.bf16.mxu0 %v849
    %3259 = vmatmul.mubr.bf16.gmra.mrb[0].mxu0 %v848
    %v3260 = vpop.f32.mrb[0].mxu0
    %v3261 = vadd.f32 %v3218, %v3260
    %v3262 = vpop.f32.mrb[0].mxu0
    %v3263 = vadd.f32 %v3220, %v3262
    %v3264 = vpop.f32.mrb[0].mxu0
    %v3265 = vadd.f32 %v3222, %v3264
    %v3266 = vpop.f32.mrb[0].mxu0
    %v3267 = vadd.f32 %v3224, %v3266
    %3268 = vdwg.mxu0
    %3269 = vmatprep.subr.bf16.mxu0 %v2341
    %3270 = vmatpush1.bf16.msra.mxu0 %v2340
    %3271 = vmatprep.subr.bf16.mxu0 %v2343
    %3272 = vmatpush1.bf16.msra.mxu0 %v2342
    %3273 = vmatprep.subr.bf16.mxu0 %v2345
    %3274 = vmatpush1.bf16.msra.mxu0 %v2344
    %3275 = vmatprep.subr.bf16.mxu0 %v2347
    %3276 = vmatpush1.bf16.msra.mxu0 %v2346
    %3277 = vmatprep.subr.bf16.mxu0 %v2349
    %3278 = vmatpush1.bf16.msra.mxu0 %v2348
    %3279 = vmatprep.subr.bf16.mxu0 %v2351
    %3280 = vmatpush1.bf16.msra.mxu0 %v2350
    %3281 = vmatprep.subr.bf16.mxu0 %v2353
    %3282 = vmatpush1.bf16.msra.mxu0 %v2352
    %3283 = vmatprep.subr.bf16.mxu0 %v2355
    %3284 = vmatpush1.bf16.msra.mxu0 %v2354
    %3285 = vmatprep.subr.bf16.mxu0 %v2357
    %3286 = vmatpush1.bf16.msra.mxu0 %v2356
    %3287 = vmatprep.subr.bf16.mxu0 %v2359
    %3288 = vmatpush1.bf16.msra.mxu0 %v2358
    %3289 = vmatprep.subr.bf16.mxu0 %v2361
    %3290 = vmatpush1.bf16.msra.mxu0 %v2360
    %3291 = vmatprep.subr.bf16.mxu0 %v2363
    %3292 = vmatpush1.bf16.msra.mxu0 %v2362
    %3293 = vmatprep.subr.bf16.mxu0 %v2365
    %3294 = vmatpush1.bf16.msra.mxu0 %v2364
    %3295 = vmatprep.subr.bf16.mxu0 %v2367
    %3296 = vmatpush1.bf16.msra.mxu0 %v2366
    %3297 = vmatprep.subr.bf16.mxu0 %v2369
    %3298 = vmatpush1.bf16.msra.mxu0 %v2368
    %3299 = vmatprep.subr.bf16.mxu0 %v2371
    %3300 = vmatpush1.bf16.msra.mxu0 %v2370
    %3301 = vmatprep.mubr.bf16.mxu0 %v851
    %3302 = vmatmul.mubr.bf16.gmra.mrb[0].mxu0 %v850
    %v3303 = vpop.f32.mrb[0].mxu0
    %v3304 = vadd.f32 %v3261, %v3303
    %v3305 = vpop.f32.mrb[0].mxu0
    %v3306 = vadd.f32 %v3263, %v3305
    %v3307 = vpop.f32.mrb[0].mxu0
    %v3308 = vadd.f32 %v3265, %v3307
    %v3309 = vpop.f32.mrb[0].mxu0
    %v3310 = vadd.f32 %v3267, %v3309
    %3311 = vdwg.mxu0
    %3312 = vmatprep.subr.bf16.mxu0 %v2373
    %3313 = vmatpush1.bf16.msra.mxu0 %v2372
    %3314 = vmatprep.subr.bf16.mxu0 %v2375
    %3315 = vmatpush1.bf16.msra.mxu0 %v2374
    %3316 = vmatprep.subr.bf16.mxu0 %v2377
    %3317 = vmatpush1.bf16.msra.mxu0 %v2376
    %3318 = vmatprep.subr.bf16.mxu0 %v2379
    %3319 = vmatpush1.bf16.msra.mxu0 %v2378
    %3320 = vmatprep.subr.bf16.mxu0 %v2381
    %3321 = vmatpush1.bf16.msra.mxu0 %v2380
    %3322 = vmatprep.subr.bf16.mxu0 %v2383
    %3323 = vmatpush1.bf16.msra.mxu0 %v2382
    %3324 = vmatprep.subr.bf16.mxu0 %v2385
    %3325 = vmatpush1.bf16.msra.mxu0 %v2384
    %3326 = vmatprep.subr.bf16.mxu0 %v2387
    %3327 = vmatpush1.bf16.msra.mxu0 %v2386
    %3328 = vmatprep.subr.bf16.mxu0 %v2389
    %3329 = vmatpush1.bf16.msra.mxu0 %v2388
    %3330 = vmatprep.subr.bf16.mxu0 %v2391
    %3331 = vmatpush1.bf16.msra.mxu0 %v2390
    %3332 = vmatprep.subr.bf16.mxu0 %v2393
    %3333 = vmatpush1.bf16.msra.mxu0 %v2392
    %3334 = vmatprep.subr.bf16.mxu0 %v2395
    %3335 = vmatpush1.bf16.msra.mxu0 %v2394
    %3336 = vmatprep.subr.bf16.mxu0 %v2397
    %3337 = vmatpush1.bf16.msra.mxu0 %v2396
    %3338 = vmatprep.subr.bf16.mxu0 %v2399
    %3339 = vmatpush1.bf16.msra.mxu0 %v2398
    %3340 = vmatprep.subr.bf16.mxu0 %v2401
    %3341 = vmatpush1.bf16.msra.mxu0 %v2400
    %3342 = vmatprep.subr.bf16.mxu0 %v2403
    %3343 = vmatpush1.bf16.msra.mxu0 %v2402
    %3344 = vmatprep.mubr.bf16.mxu0 %v853
    %3345 = vmatmul.mubr.bf16.gmra.mrb[0].mxu0 %v852
    %v3346 = vpop.f32.mrb[0].mxu0
    %v3347 = vadd.f32 %v3304, %v3346
    %v3348 = vpop.f32.mrb[0].mxu0
    %v3349 = vadd.f32 %v3306, %v3348
    %v3350 = vpop.f32.mrb[0].mxu0
    %v3351 = vadd.f32 %v3308, %v3350
    %v3352 = vpop.f32.mrb[0].mxu0
    %v3353 = vadd.f32 %v3310, %v3352
    %3354 = vdwg.mxu0
    %3355 = vmatprep.subr.bf16.mxu0 %v2405
    %3356 = vmatpush1.bf16.msra.mxu0 %v2404
    %3357 = vmatprep.subr.bf16.mxu0 %v2407
    %3358 = vmatpush1.bf16.msra.mxu0 %v2406
    %3359 = vmatprep.subr.bf16.mxu0 %v2409
    %3360 = vmatpush1.bf16.msra.mxu0 %v2408
    %3361 = vmatprep.subr.bf16.mxu0 %v2411
    %3362 = vmatpush1.bf16.msra.mxu0 %v2410
    %3363 = vmatprep.subr.bf16.mxu0 %v2413
    %3364 = vmatpush1.bf16.msra.mxu0 %v2412
    %3365 = vmatprep.subr.bf16.mxu0 %v2415
    %3366 = vmatpush1.bf16.msra.mxu0 %v2414
    %3367 = vmatprep.subr.bf16.mxu0 %v2417
    %3368 = vmatpush1.bf16.msra.mxu0 %v2416
    %3369 = vmatprep.subr.bf16.mxu0 %v2419
    %3370 = vmatpush1.bf16.msra.mxu0 %v2418
    %3371 = vmatprep.subr.bf16.mxu0 %v2421
    %3372 = vmatpush1.bf16.msra.mxu0 %v2420
    %3373 = vmatprep.subr.bf16.mxu0 %v2423
    %3374 = vmatpush1.bf16.msra.mxu0 %v2422
    %3375 = vmatprep.subr.bf16.mxu0 %v2425
    %3376 = vmatpush1.bf16.msra.mxu0 %v2424
    %3377 = vmatprep.subr.bf16.mxu0 %v2427
    %3378 = vmatpush1.bf16.msra.mxu0 %v2426
    %3379 = vmatprep.subr.bf16.mxu0 %v2429
    %3380 = vmatpush1.bf16.msra.mxu0 %v2428
    %3381 = vmatprep.subr.bf16.mxu0 %v2431
    %3382 = vmatpush1.bf16.msra.mxu0 %v2430
    %3383 = vmatprep.subr.bf16.mxu0 %v2433
    %3384 = vmatpush1.bf16.msra.mxu0 %v2432
    %3385 = vmatprep.subr.bf16.mxu0 %v2435
    %3386 = vmatpush1.bf16.msra.mxu0 %v2434
    %3387 = vmatprep.mubr.bf16.mxu0 %v855
    %3388 = vmatmul.mubr.bf16.gmra.mrb[0].mxu0 %v854
    %v3389 = vpop.f32.mrb[0].mxu0
    %v3390 = vadd.f32 %v3347, %v3389
    %v3391 = vpop.f32.mrb[0].mxu0
    %v3392 = vadd.f32 %v3349, %v3391
    %v3393 = vpop.f32.mrb[0].mxu0
    %v3394 = vadd.f32 %v3351, %v3393
    %v3395 = vpop.f32.mrb[0].mxu0
    %v3396 = vadd.f32 %v3353, %v3395
    %3397 = vdwg.mxu0
    %3398 = vmatprep.subr.bf16.mxu0 %v2437
    %3399 = vmatpush1.bf16.msra.mxu0 %v2436
    %3400 = vmatprep.subr.bf16.mxu0 %v2439
    %3401 = vmatpush1.bf16.msra.mxu0 %v2438
    %3402 = vmatprep.subr.bf16.mxu0 %v2441
    %3403 = vmatpush1.bf16.msra.mxu0 %v2440
    %3404 = vmatprep.subr.bf16.mxu0 %v2443
    %3405 = vmatpush1.bf16.msra.mxu0 %v2442
    %3406 = vmatprep.subr.bf16.mxu0 %v2445
    %3407 = vmatpush1.bf16.msra.mxu0 %v2444
    %3408 = vmatprep.subr.bf16.mxu0 %v2447
    %3409 = vmatpush1.bf16.msra.mxu0 %v2446
    %3410 = vmatprep.subr.bf16.mxu0 %v2449
    %3411 = vmatpush1.bf16.msra.mxu0 %v2448
    %3412 = vmatprep.subr.bf16.mxu0 %v2451
    %3413 = vmatpush1.bf16.msra.mxu0 %v2450
    %3414 = vmatprep.subr.bf16.mxu0 %v2453
    %3415 = vmatpush1.bf16.msra.mxu0 %v2452
    %3416 = vmatprep.subr.bf16.mxu0 %v2455
    %3417 = vmatpush1.bf16.msra.mxu0 %v2454
    %3418 = vmatprep.subr.bf16.mxu0 %v2457
    %3419 = vmatpush1.bf16.msra.mxu0 %v2456
    %3420 = vmatprep.subr.bf16.mxu0 %v2459
    %3421 = vmatpush1.bf16.msra.mxu0 %v2458
    %3422 = vmatprep.subr.bf16.mxu0 %v2461
    %3423 = vmatpush1.bf16.msra.mxu0 %v2460
    %3424 = vmatprep.subr.bf16.mxu0 %v2463
    %3425 = vmatpush1.bf16.msra.mxu0 %v2462
    %3426 = vmatprep.subr.bf16.mxu0 %v2465
    %3427 = vmatpush1.bf16.msra.mxu0 %v2464
    %3428 = vmatprep.subr.bf16.mxu0 %v2467
    %3429 = vmatpush1.bf16.msra.mxu0 %v2466
    %3430 = vmatprep.mubr.bf16.mxu0 %v857
    %3431 = vmatmul.mubr.bf16.gmra.mrb[0].mxu0 %v856
    %v3432 = vpop.f32.mrb[0].mxu0
    %v3433 = vadd.f32 %v3390, %v3432
    %v3434 = vpop.f32.mrb[0].mxu0
    %v3435 = vadd.f32 %v3392, %v3434
    %v3436 = vpop.f32.mrb[0].mxu0
    %v3437 = vadd.f32 %v3394, %v3436
    %v3438 = vpop.f32.mrb[0].mxu0
    %v3439 = vadd.f32 %v3396, %v3438
    %3440 = vdwg.mxu0
    %3441 = vmatprep.subr.bf16.mxu0 %v2469
    %3442 = vmatpush1.bf16.msra.mxu0 %v2468
    %3443 = vmatprep.subr.bf16.mxu0 %v2471
    %3444 = vmatpush1.bf16.msra.mxu0 %v2470
    %3445 = vmatprep.subr.bf16.mxu0 %v2473
    %3446 = vmatpush1.bf16.msra.mxu0 %v2472
    %3447 = vmatprep.subr.bf16.mxu0 %v2475
    %3448 = vmatpush1.bf16.msra.mxu0 %v2474
    %3449 = vmatprep.subr.bf16.mxu0 %v2477
    %3450 = vmatpush1.bf16.msra.mxu0 %v2476
    %3451 = vmatprep.subr.bf16.mxu0 %v2479
    %3452 = vmatpush1.bf16.msra.mxu0 %v2478
    %3453 = vmatprep.subr.bf16.mxu0 %v2481
    %3454 = vmatpush1.bf16.msra.mxu0 %v2480
    %3455 = vmatprep.subr.bf16.mxu0 %v2483
    %3456 = vmatpush1.bf16.msra.mxu0 %v2482
    %3457 = vmatprep.subr.bf16.mxu0 %v2485
    %3458 = vmatpush1.bf16.msra.mxu0 %v2484
    %3459 = vmatprep.subr.bf16.mxu0 %v2487
    %3460 = vmatpush1.bf16.msra.mxu0 %v2486
    %3461 = vmatprep.subr.bf16.mxu0 %v2489
    %3462 = vmatpush1.bf16.msra.mxu0 %v2488
    %3463 = vmatprep.subr.bf16.mxu0 %v2491
    %3464 = vmatpush1.bf16.msra.mxu0 %v2490
    %3465 = vmatprep.subr.bf16.mxu0 %v2493
    %3466 = vmatpush1.bf16.msra.mxu0 %v2492
    %3467 = vmatprep.subr.bf16.mxu0 %v2495
    %3468 = vmatpush1.bf16.msra.mxu0 %v2494
    %3469 = vmatprep.subr.bf16.mxu0 %v2497
    %3470 = vmatpush1.bf16.msra.mxu0 %v2496
    %3471 = vmatprep.subr.bf16.mxu0 %v2499
    %3472 = vmatpush1.bf16.msra.mxu0 %v2498
    %3473 = vmatprep.mubr.bf16.mxu0 %v859
    %3474 = vmatmul.mubr.bf16.gmra.mrb[0].mxu0 %v858
    %v3475 = vpop.f32.mrb[0].mxu0
    %v3476 = vadd.f32 %v3433, %v3475
    %v3477 = vpop.f32.mrb[0].mxu0
    %v3478 = vadd.f32 %v3435, %v3477
    %v3479 = vpop.f32.mrb[0].mxu0
    %v3480 = vadd.f32 %v3437, %v3479
    %v3481 = vpop.f32.mrb[0].mxu0
    %v3482 = vadd.f32 %v3439, %v3481
    %3483 = vdwg.mxu0
    %3484 = vmatprep.subr.bf16.mxu0 %v2501
    %3485 = vmatpush1.bf16.msra.mxu0 %v2500
    %3486 = vmatprep.subr.bf16.mxu0 %v2503
    %3487 = vmatpush1.bf16.msra.mxu0 %v2502
    %3488 = vmatprep.subr.bf16.mxu0 %v2505
    %3489 = vmatpush1.bf16.msra.mxu0 %v2504
    %3490 = vmatprep.subr.bf16.mxu0 %v2507
    %3491 = vmatpush1.bf16.msra.mxu0 %v2506
    %3492 = vmatprep.subr.bf16.mxu0 %v2509
    %3493 = vmatpush1.bf16.msra.mxu0 %v2508
    %3494 = vmatprep.subr.bf16.mxu0 %v2511
    %3495 = vmatpush1.bf16.msra.mxu0 %v2510
    %3496 = vmatprep.subr.bf16.mxu0 %v2513
    %3497 = vmatpush1.bf16.msra.mxu0 %v2512
    %3498 = vmatprep.subr.bf16.mxu0 %v2515
    %3499 = vmatpush1.bf16.msra.mxu0 %v2514
    %3500 = vmatprep.subr.bf16.mxu0 %v2517
    %3501 = vmatpush1.bf16.msra.mxu0 %v2516
    %3502 = vmatprep.subr.bf16.mxu0 %v2519
    %3503 = vmatpush1.bf16.msra.mxu0 %v2518
    %3504 = vmatprep.subr.bf16.mxu0 %v2521
    %3505 = vmatpush1.bf16.msra.mxu0 %v2520
    %3506 = vmatprep.subr.bf16.mxu0 %v2523
    %3507 = vmatpush1.bf16.msra.mxu0 %v2522
    %3508 = vmatprep.subr.bf16.mxu0 %v2525
    %3509 = vmatpush1.bf16.msra.mxu0 %v2524
    %3510 = vmatprep.subr.bf16.mxu0 %v2527
    %3511 = vmatpush1.bf16.msra.mxu0 %v2526
    %3512 = vmatprep.subr.bf16.mxu0 %v2529
    %3513 = vmatpush1.bf16.msra.mxu0 %v2528
    %3514 = vmatprep.subr.bf16.mxu0 %v2531
    %3515 = vmatpush1.bf16.msra.mxu0 %v2530
    %3516 = vmatprep.mubr.bf16.mxu0 %v861
    %3517 = vmatmul.mubr.bf16.gmra.mrb[0].mxu0 %v860
    %v3518 = vpop.f32.mrb[0].mxu0
    %v3519 = vadd.f32 %v3476, %v3518
    %v3520 = vpop.f32.mrb[0].mxu0
    %v3521 = vadd.f32 %v3478, %v3520
    %v3522 = vpop.f32.mrb[0].mxu0
    %v3523 = vadd.f32 %v3480, %v3522
    %v3524 = vpop.f32.mrb[0].mxu0
    %v3525 = vadd.f32 %v3482, %v3524
    %3526 = vdwg.mxu0
    %3527 = vmatprep.subr.bf16.mxu0 %v2533
    %3528 = vmatpush1.bf16.msra.mxu0 %v2532
    %3529 = vmatprep.subr.bf16.mxu0 %v2535
    %3530 = vmatpush1.bf16.msra.mxu0 %v2534
    %3531 = vmatprep.subr.bf16.mxu0 %v2537
    %3532 = vmatpush1.bf16.msra.mxu0 %v2536
    %3533 = vmatprep.subr.bf16.mxu0 %v2539
    %3534 = vmatpush1.bf16.msra.mxu0 %v2538
    %3535 = vmatprep.subr.bf16.mxu0 %v2541
    %3536 = vmatpush1.bf16.msra.mxu0 %v2540
    %3537 = vmatprep.subr.bf16.mxu0 %v2543
    %3538 = vmatpush1.bf16.msra.mxu0 %v2542
    %3539 = vmatprep.subr.bf16.mxu0 %v2545
    %3540 = vmatpush1.bf16.msra.mxu0 %v2544
    %3541 = vmatprep.subr.bf16.mxu0 %v2547
    %3542 = vmatpush1.bf16.msra.mxu0 %v2546
    %3543 = vmatprep.subr.bf16.mxu0 %v2549
    %3544 = vmatpush1.bf16.msra.mxu0 %v2548
    %3545 = vmatprep.subr.bf16.mxu0 %v2551
    %3546 = vmatpush1.bf16.msra.mxu0 %v2550
    %3547 = vmatprep.subr.bf16.mxu0 %v2553
    %3548 = vmatpush1.bf16.msra.mxu0 %v2552
    %3549 = vmatprep.subr.bf16.mxu0 %v2555
    %3550 = vmatpush1.bf16.msra.mxu0 %v2554
    %3551 = vmatprep.subr.bf16.mxu0 %v2557
    %3552 = vmatpush1.bf16.msra.mxu0 %v2556
    %3553 = vmatprep.subr.bf16.mxu0 %v2559
    %3554 = vmatpush1.bf16.msra.mxu0 %v2558
    %3555 = vmatprep.subr.bf16.mxu0 %v2561
    %3556 = vmatpush1.bf16.msra.mxu0 %v2560
    %3557 = vmatprep.subr.bf16.mxu0 %v2563
    %3558 = vmatpush1.bf16.msra.mxu0 %v2562
    %3559 = vmatprep.mubr.bf16.mxu0 %v863
    %3560 = vmatmul.mubr.bf16.gmra.mrb[0].mxu0 %v862
    %v3561 = vpop.f32.mrb[0].mxu0
    %v3562 = vadd.f32 %v3519, %v3561
    %v3563 = vpop.f32.mrb[0].mxu0
    %v3564 = vadd.f32 %v3521, %v3563
    %v3565 = vpop.f32.mrb[0].mxu0
    %v3566 = vadd.f32 %v3523, %v3565
    %v3567 = vpop.f32.mrb[0].mxu0
    %v3568 = vadd.f32 %v3525, %v3567
    %3569 = vdwg.mxu0
    %3570 = vmatprep.subr.bf16.mxu0 %v2565
    %3571 = vmatpush1.bf16.msra.mxu0 %v2564
    %3572 = vmatprep.subr.bf16.mxu0 %v2567
    %3573 = vmatpush1.bf16.msra.mxu0 %v2566
    %3574 = vmatprep.subr.bf16.mxu0 %v2569
    %3575 = vmatpush1.bf16.msra.mxu0 %v2568
    %3576 = vmatprep.subr.bf16.mxu0 %v2571
    %3577 = vmatpush1.bf16.msra.mxu0 %v2570
    %3578 = vmatprep.subr.bf16.mxu0 %v2573
    %3579 = vmatpush1.bf16.msra.mxu0 %v2572
    %3580 = vmatprep.subr.bf16.mxu0 %v2575
    %3581 = vmatpush1.bf16.msra.mxu0 %v2574
    %3582 = vmatprep.subr.bf16.mxu0 %v2577
    %3583 = vmatpush1.bf16.msra.mxu0 %v2576
    %3584 = vmatprep.subr.bf16.mxu0 %v2579
    %3585 = vmatpush1.bf16.msra.mxu0 %v2578
    %3586 = vmatprep.subr.bf16.mxu0 %v2581
    %3587 = vmatpush1.bf16.msra.mxu0 %v2580
    %3588 = vmatprep.subr.bf16.mxu0 %v2583
    %3589 = vmatpush1.bf16.msra.mxu0 %v2582
    %3590 = vmatprep.subr.bf16.mxu0 %v2585
    %3591 = vmatpush1.bf16.msra.mxu0 %v2584
    %3592 = vmatprep.subr.bf16.mxu0 %v2587
    %3593 = vmatpush1.bf16.msra.mxu0 %v2586
    %3594 = vmatprep.subr.bf16.mxu0 %v2589
    %3595 = vmatpush1.bf16.msra.mxu0 %v2588
    %3596 = vmatprep.subr.bf16.mxu0 %v2591
    %3597 = vmatpush1.bf16.msra.mxu0 %v2590
    %3598 = vmatprep.subr.bf16.mxu0 %v2593
    %3599 = vmatpush1.bf16.msra.mxu0 %v2592
    %3600 = vmatprep.subr.bf16.mxu0 %v2595
    %3601 = vmatpush1.bf16.msra.mxu0 %v2594
    %3602 = vmatprep.mubr.bf16.mxu0 %v865
    %3603 = vmatmul.mubr.bf16.gmra.mrb[0].mxu0 %v864
    %v3604 = vpop.f32.mrb[0].mxu0
    %v3605 = vadd.f32 %v3562, %v3604
    %v3606 = vpop.f32.mrb[0].mxu0
    %v3607 = vadd.f32 %v3564, %v3606
    %v3608 = vpop.f32.mrb[0].mxu0
    %v3609 = vadd.f32 %v3566, %v3608
    %v3610 = vpop.f32.mrb[0].mxu0
    %v3611 = vadd.f32 %v3568, %v3610
    %3612 = vdwg.mxu0
    %3613 = vmatprep.subr.bf16.mxu0 %v2597
    %3614 = vmatpush1.bf16.msra.mxu0 %v2596
    %3615 = vmatprep.subr.bf16.mxu0 %v2599
    %3616 = vmatpush1.bf16.msra.mxu0 %v2598
    %3617 = vmatprep.subr.bf16.mxu0 %v2601
    %3618 = vmatpush1.bf16.msra.mxu0 %v2600
    %3619 = vmatprep.subr.bf16.mxu0 %v2603
    %3620 = vmatpush1.bf16.msra.mxu0 %v2602
    %3621 = vmatprep.subr.bf16.mxu0 %v2605
    %3622 = vmatpush1.bf16.msra.mxu0 %v2604
    %3623 = vmatprep.subr.bf16.mxu0 %v2607
    %3624 = vmatpush1.bf16.msra.mxu0 %v2606
    %3625 = vmatprep.subr.bf16.mxu0 %v2609
    %3626 = vmatpush1.bf16.msra.mxu0 %v2608
    %3627 = vmatprep.subr.bf16.mxu0 %v2611
    %3628 = vmatpush1.bf16.msra.mxu0 %v2610
    %3629 = vmatprep.subr.bf16.mxu0 %v2613
    %3630 = vmatpush1.bf16.msra.mxu0 %v2612
    %3631 = vmatprep.subr.bf16.mxu0 %v2615
    %3632 = vmatpush1.bf16.msra.mxu0 %v2614
    %3633 = vmatprep.subr.bf16.mxu0 %v2617
    %3634 = vmatpush1.bf16.msra.mxu0 %v2616
    %3635 = vmatprep.subr.bf16.mxu0 %v2619
    %3636 = vmatpush1.bf16.msra.mxu0 %v2618
    %3637 = vmatprep.subr.bf16.mxu0 %v2621
    %3638 = vmatpush1.bf16.msra.mxu0 %v2620
    %3639 = vmatprep.subr.bf16.mxu0 %v2623
    %3640 = vmatpush1.bf16.msra.mxu0 %v2622
    %3641 = vmatprep.subr.bf16.mxu0 %v2625
    %3642 = vmatpush1.bf16.msra.mxu0 %v2624
    %3643 = vmatprep.subr.bf16.mxu0 %v2627
    %3644 = vmatpush1.bf16.msra.mxu0 %v2626
    %3645 = vmatprep.mubr.bf16.mxu0 %v867
    %3646 = vmatmul.mubr.bf16.gmra.mrb[0].mxu0 %v866
    %v3647 = vpop.f32.mrb[0].mxu0
    %v3648 = vadd.f32 %v3605, %v3647
    %v3649 = vpop.f32.mrb[0].mxu0
    %v3650 = vadd.f32 %v3607, %v3649
    %v3651 = vpop.f32.mrb[0].mxu0
    %v3652 = vadd.f32 %v3609, %v3651
    %v3653 = vpop.f32.mrb[0].mxu0
    %v3654 = vadd.f32 %v3611, %v3653
    %3655 = vdwg.mxu0
    %3656 = vmatprep.subr.bf16.mxu0 %v2629
    %3657 = vmatpush1.bf16.msra.mxu0 %v2628
    %3658 = vmatprep.subr.bf16.mxu0 %v2631
    %3659 = vmatpush1.bf16.msra.mxu0 %v2630
    %3660 = vmatprep.subr.bf16.mxu0 %v2633
    %3661 = vmatpush1.bf16.msra.mxu0 %v2632
    %3662 = vmatprep.subr.bf16.mxu0 %v2635
    %3663 = vmatpush1.bf16.msra.mxu0 %v2634
    %3664 = vmatprep.subr.bf16.mxu0 %v2637
    %3665 = vmatpush1.bf16.msra.mxu0 %v2636
    %3666 = vmatprep.subr.bf16.mxu0 %v2639
    %3667 = vmatpush1.bf16.msra.mxu0 %v2638
    %3668 = vmatprep.subr.bf16.mxu0 %v2641
    %3669 = vmatpush1.bf16.msra.mxu0 %v2640
    %3670 = vmatprep.subr.bf16.mxu0 %v2643
    %3671 = vmatpush1.bf16.msra.mxu0 %v2642
    %3672 = vmatprep.subr.bf16.mxu0 %v2645
    %3673 = vmatpush1.bf16.msra.mxu0 %v2644
    %3674 = vmatprep.subr.bf16.mxu0 %v2647
    %3675 = vmatpush1.bf16.msra.mxu0 %v2646
    %3676 = vmatprep.subr.bf16.mxu0 %v2649
    %3677 = vmatpush1.bf16.msra.mxu0 %v2648
    %3678 = vmatprep.subr.bf16.mxu0 %v2651
    %3679 = vmatpush1.bf16.msra.mxu0 %v2650
    %3680 = vmatprep.subr.bf16.mxu0 %v2653
    %3681 = vmatpush1.bf16.msra.mxu0 %v2652
    %3682 = vmatprep.subr.bf16.mxu0 %v2655
    %3683 = vmatpush1.bf16.msra.mxu0 %v2654
    %3684 = vmatprep.subr.bf16.mxu0 %v2657
    %3685 = vmatpush1.bf16.msra.mxu0 %v2656
    %3686 = vmatprep.subr.bf16.mxu0 %v2659
    %3687 = vmatpush1.bf16.msra.mxu0 %v2658
    %3688 = vmatprep.mubr.bf16.mxu0 %v869
    %3689 = vmatmul.mubr.bf16.gmra.mrb[0].mxu0 %v868
    %v3690 = vpop.f32.mrb[0].mxu0
    %v3691 = vadd.f32 %v3648, %v3690
    %v3692 = vpop.f32.mrb[0].mxu0
    %v3693 = vadd.f32 %v3650, %v3692
    %v3694 = vpop.f32.mrb[0].mxu0
    %v3695 = vadd.f32 %v3652, %v3694
    %v3696 = vpop.f32.mrb[0].mxu0
    %v3697 = vadd.f32 %v3654, %v3696
    %3698 = vdwg.mxu0
    %3699 = vmatprep.subr.bf16.mxu0 %v2661
    %3700 = vmatpush1.bf16.msra.mxu0 %v2660
    %3701 = vmatprep.subr.bf16.mxu0 %v2663
    %3702 = vmatpush1.bf16.msra.mxu0 %v2662
    %3703 = vmatprep.subr.bf16.mxu0 %v2665
    %3704 = vmatpush1.bf16.msra.mxu0 %v2664
    %3705 = vmatprep.subr.bf16.mxu0 %v2667
    %3706 = vmatpush1.bf16.msra.mxu0 %v2666
    %3707 = vmatprep.subr.bf16.mxu0 %v2669
    %3708 = vmatpush1.bf16.msra.mxu0 %v2668
    %3709 = vmatprep.subr.bf16.mxu0 %v2671
    %3710 = vmatpush1.bf16.msra.mxu0 %v2670
    %3711 = vmatprep.subr.bf16.mxu0 %v2673
    %3712 = vmatpush1.bf16.msra.mxu0 %v2672
    %3713 = vmatprep.subr.bf16.mxu0 %v2675
    %3714 = vmatpush1.bf16.msra.mxu0 %v2674
    %3715 = vmatprep.subr.bf16.mxu0 %v2677
    %3716 = vmatpush1.bf16.msra.mxu0 %v2676
    %3717 = vmatprep.subr.bf16.mxu0 %v2679
    %3718 = vmatpush1.bf16.msra.mxu0 %v2678
    %3719 = vmatprep.subr.bf16.mxu0 %v2681
    %3720 = vmatpush1.bf16.msra.mxu0 %v2680
    %3721 = vmatprep.subr.bf16.mxu0 %v2683
    %3722 = vmatpush1.bf16.msra.mxu0 %v2682
    %3723 = vmatprep.subr.bf16.mxu0 %v2685
    %3724 = vmatpush1.bf16.msra.mxu0 %v2684
    %3725 = vmatprep.subr.bf16.mxu0 %v2687
    %3726 = vmatpush1.bf16.msra.mxu0 %v2686
    %3727 = vmatprep.subr.bf16.mxu0 %v2689
    %3728 = vmatpush1.bf16.msra.mxu0 %v2688
    %3729 = vmatprep.subr.bf16.mxu0 %v2691
    %3730 = vmatpush1.bf16.msra.mxu0 %v2690
    %3731 = vmatprep.mubr.bf16.mxu0 %v871
    %3732 = vmatmul.mubr.bf16.gmra.mrb[0].mxu0 %v870
    %v3733 = vpop.f32.mrb[0].mxu0
    %v3734 = vadd.f32 %v3691, %v3733
    %v3735 = vpop.f32.mrb[0].mxu0
    %v3736 = vadd.f32 %v3693, %v3735
    %v3737 = vpop.f32.mrb[0].mxu0
    %v3738 = vadd.f32 %v3695, %v3737
    %v3739 = vpop.f32.mrb[0].mxu0
    %v3740 = vadd.f32 %v3697, %v3739
    %3741 = vdwg.mxu0
    %s3742 = sld [smem:[#allocation2]]
    %v3743 = vstv %s3742
    %v3744 = vmul.f32 %v3734, %v3743
    %v3745 = vmul.f32 %v3736, %v3743
    %v3746 = vmul.f32 %v3738, %v3743
    %v3747 = vmul.f32 %v3740, %v3743
    %s3748 = sld [smem:[#allocation2 + $0x1]]
    %v3749 = vstv %s3748
    %v3750 = vadd.f32 %v3744, %v3749
    %v3751 = vadd.f32 %v3745, %v3749
    %v3752 = vadd.f32 %v3746, %v3749
    %v3753 = vadd.f32 %v3747, %v3749
    %v3754 = vxor.u32 %v3750, 2147483648
    %v3755 = vxor.u32 %v3751, 2147483648
    %v3756 = vxor.u32 %v3752, 2147483648
    %v3757 = vxor.u32 %v3753, 2147483648
    %v3758 = vmul.f32 %v3754, 1.442695
    %v3759 = vpow.pop %v3758
    %v3760 = vmul.f32 %v3755, 1.442695
    %v3761 = vpow.pop %v3760
    %v3762 = vmul.f32 %v3756, 1.442695
    %v3763 = vpow.pop %v3762
    %v3764 = vmul.f32 %v3757, 1.442695
    %v3765 = vpow.pop %v3764
    %v3766 = vadd.f32 %v3759, 1.0
    %v3767 = vadd.f32 %v3761, 1.0
    %v3768 = vadd.f32 %v3763, 1.0
    %v3769 = vadd.f32 %v3765, 1.0
    %v3770 = vrcp.pop %v3766
    %v3771 = vmul.f32 1.0, %v3770
    %v3772 = vrcp.pop %v3767
    %v3773 = vmul.f32 1.0, %v3772
    %v3774 = vrcp.pop %v3768
    %v3775 = vmul.f32 1.0, %v3774
    %v3776 = vrcp.pop %v3769
    %v3777 = vmul.f32 1.0, %v3776
    %v3778 = vmul.f32 %v55, %v3771
    %v3779 = vmul.f32 %v56, %v3773
    %v3780 = vmul.f32 %v57, %v3775
    %v3781 = vmul.f32 %v58, %v3777
    %3782 = vst [vmem:[#allocation9] sm:$0xff] %v3778
    %3783 = vst [vmem:[#allocation9 + $0x8] sm:$0xff] %v3779
    %3784 = vst [vmem:[#allocation9 + $0x40] sm:$0xff] %v3780
    %3785 = vst [vmem:[#allocation9 + $0x48] sm:$0xff] %v3781
    %v3786 = vld [vmem:[%s59] sm:$0xff]
    %v3787 = vld [vmem:[%s59 + $0x8] sm:$0xff]
    %v3788 = vld [vmem:[%s59 + $0x40] sm:$0xff]
    %v3789 = vld [vmem:[%s59 + $0x48] sm:$0xff]
    %v3790 = vmul.f32 %v3786, %v3771
    %v3791 = vmul.f32 %v3787, %v3773
    %v3792 = vmul.f32 %v3788, %v3775
    %v3793 = vmul.f32 %v3789, %v3777
    %s3794 = scalar_lea.vmem [#allocation9], 16
    %3795 = vst [vmem:[%s3794] sm:$0xff] %v3790
    %3796 = vst [vmem:[%s3794 + $0x8] sm:$0xff] %v3791
    %3797 = vst [vmem:[%s3794 + $0x40] sm:$0xff] %v3792
    %3798 = vst [vmem:[%s3794 + $0x48] sm:$0xff] %v3793
    %v3799 = vld [vmem:[%s72] sm:$0xff]
    %v3800 = vld [vmem:[%s72 + $0x8] sm:$0xff]
    %v3801 = vld [vmem:[%s72 + $0x40] sm:$0xff]
    %v3802 = vld [vmem:[%s72 + $0x48] sm:$0xff]
    %v3803 = vmul.f32 %v3799, %v3771
    %v3804 = vmul.f32 %v3800, %v3773
    %v3805 = vmul.f32 %v3801, %v3775
    %v3806 = vmul.f32 %v3802, %v3777
    %s3807 = scalar_lea.vmem [#allocation9], 32
    %3808 = vst [vmem:[%s3807] sm:$0xff] %v3803
    %3809 = vst [vmem:[%s3807 + $0x8] sm:$0xff] %v3804
    %3810 = vst [vmem:[%s3807 + $0x40] sm:$0xff] %v3805
    %3811 = vst [vmem:[%s3807 + $0x48] sm:$0xff] %v3806
    %v3812 = vld [vmem:[%s85] sm:$0xff]
    %v3813 = vld [vmem:[%s85 + $0x8] sm:$0xff]
    %v3814 = vld [vmem:[%s85 + $0x40] sm:$0xff]
    %v3815 = vld [vmem:[%s85 + $0x48] sm:$0xff]
    %v3816 = vmul.f32 %v3812, %v3771
    %v3817 = vmul.f32 %v3813, %v3773
    %v3818 = vmul.f32 %v3814, %v3775
    %v3819 = vmul.f32 %v3815, %v3777
    %s3820 = scalar_lea.vmem [#allocation9], 48
    %3821 = vst [vmem:[%s3820] sm:$0xff] %v3816
    %3822 = vst [vmem:[%s3820 + $0x8] sm:$0xff] %v3817
    %3823 = vst [vmem:[%s3820 + $0x40] sm:$0xff] %v3818
    %3824 = vst [vmem:[%s3820 + $0x48] sm:$0xff] %v3819
    // Predicated region
    $region26: #{tpu_custom_call.1} parent=1 // pred_check
      _
    $region27: #{tpu_custom_call.1} parent=1 // pred_check_branch
      %3826 = sbr.rel (0) target = $region29
    $region28: #{tpu_custom_call.1} parent=1 // pred_region
      %s3828 = ssub.s32 2048, 2048
      %3829 = vsyncadd [#allocation4], %s3828
      %s3830 = sshll.u32 [#allocation9], 4
      %s3831 = int_to_ptr.vmem [resolvable:$true] %s3830
      %3836 = dma.vmem_to_hbm [thread:$0]  %s3831, 2048, %s3, [#allocation4], 256, 256, 16
    $region29: #{tpu_custom_call.1} parent=1 // pred_fallthru
      _
    // Predicated region
    $region30: #{tpu_custom_call.1} parent=1 // pred_check
      _
    $region31: #{tpu_custom_call.1} parent=1 // pred_check_branch
      %3838 = sbr.rel (0) target = $region33
    $region32: #{tpu_custom_call.1} parent=1 // pred_region
      %3839 = dma.done [#allocation4], 2048
    $region33: #{tpu_custom_call.1} parent=1 // pred_fallthru
      _
    %3840 = vsyncpa [#allocation3], 1
    %3841 = vsyncpa [#allocation8], 1
    %3842 = vsyncpa [#allocation4], 1
    %3843 = vsyncpa [#allocation5], 1

// kernel: tpu_custom_call.1
$region0: #{tpu_custom_call.1}
  #allocation0 [shape = 'u32[]', space=smem, size = 0x4, offset = 0x4, fixed_abs, tag = 'smem constant byte address 0x4 - core index']
  #allocation1 [shape = 'u32[144,128]{1,0:T(1,128)}', space=vmem, size = 0x12000, scoped, tag = 'internal scratch']
  %s0 = inlined_call_operand.hbm [shape: f32[2], index: 0, kind: input, shape index: {}]
  %s1 = inlined_call_operand.hbm [shape: bf16[3584,256], index: 1, kind: input, shape index: {}]
  %s2 = inlined_call_operand.hbm [shape: f32[2,4,8,256], index: 2, kind: input, shape index: {}]
  %s3 = inlined_call_operand.hbm [shape: f32[2,4,8,256], index: 3, kind: output, shape index: {}]
  %s4 = sld [smem:[#allocation0]]
  $region34: #{tpu_custom_call.1} parent=0
    _
  %s6 = ssub.s32 1, %s4
  %s7 = scalar_select 0, %s6, %s4
  $region1: #{tpu_custom_call.1} parent=0
    #allocation2 [shape = 'u8[512]{0}', space=smem, size = 0x200, scoped, tag = 'input window, operand 0, single buffered']
    #allocation3 [shape = 's32[1]{0}', space=sflag, size = 0x4, scoped, tag = 'scoped memory for tpu_custom_call.1']
    #allocation4 [shape = 's32[1]{0}', space=sflag, size = 0x4, scoped, tag = 'scoped memory for tpu_custom_call.1']
    #allocation5 [shape = 's32[1]{0}', space=sflag, size = 0x4, scoped, tag = 'scoped memory for tpu_custom_call.1']
    #allocation6 [shape = 'u8[1835008]{0}', space=vmem, size = 0x1c0000, scoped, tag = 'input window, operand 1, single buffered']
    #allocation7 [shape = 'u8[65536]{0}', space=vmem, size = 0x10000, scoped, tag = 'input window, operand 2, single buffered']
    #allocation8 [shape = 's32[1]{0}', space=sflag, size = 0x4, scoped, tag = 'scoped memory for tpu_custom_call.1']
    #allocation9 [shape = 'u8[65536]{0}', space=vmem, size = 0x10000, scoped, tag = 'output window, operand 0, single buffered']
    %8 = vsyncpa [#allocation5], 0
    %9 = vsyncpa [#allocation3], 0
    %10 = vsyncpa [#allocation8], 0
    %11 = vsyncpa [#allocation4], 0
    // Predicated region
    $region2: #{tpu_custom_call.1} parent=1 // pred_check
      _
    $region3: #{tpu_custom_call.1} parent=1 // pred_check_branch
      %13 = sbr.rel (0) target = $region5
    $region4: #{tpu_custom_call.1} parent=1 // pred_region
      %s15 = ssub.s32 16, 16
      %16 = vsyncadd [#allocation5], %s15
      %19 = dma.hbm_to_smem %s0, 16, [#allocation2], [#allocation5]
    $region5: #{tpu_custom_call.1} parent=1 // pred_fallthru
      _
    // Predicated region
    $region6: #{tpu_custom_call.1} parent=1 // pred_check
      _
    $region7: #{tpu_custom_call.1} parent=1 // pred_check_branch
      %21 = sbr.rel (0) target = $region9
    $region8: #{tpu_custom_call.1} parent=1 // pred_region
      %s23 = ssub.s32 57344, 57344
      %24 = vsyncadd [#allocation3], %s23
      %s25 = sshll.u32 [#allocation6], 4
      %s26 = int_to_ptr.vmem [resolvable:$true] %s25
      %31 = dma.hbm_to_vmem [thread:$0]  %s1, 57344, %s26, [#allocation3], 128, 128, 8
    $region9: #{tpu_custom_call.1} parent=1 // pred_fallthru
      _
    // Predicated region
    $region10: #{tpu_custom_call.1} parent=1 // pred_check
      _
    $region11: #{tpu_custom_call.1} parent=1 // pred_check_branch
      %33 = sbr.rel (0) target = $region13
    $region12: #{tpu_custom_call.1} parent=1 // pred_region
      %s35 = ssub.s32 2048, 2048
      %36 = vsyncadd [#allocation8], %s35
      %s37 = sshll.u32 [#allocation7], 4
      %s38 = int_to_ptr.vmem [resolvable:$true] %s37
      %43 = dma.hbm_to_vmem [thread:$0]  %s2, 2048, %s38, [#allocation8], 256, 256, 16
    $region13: #{tpu_custom_call.1} parent=1 // pred_fallthru
      _
    // Predicated region
    $region14: #{tpu_custom_call.1} parent=1 // pred_check
      _
    $region15: #{tpu_custom_call.1} parent=1 // pred_check_branch
      %45 = sbr.rel (0) target = $region17
    $region16: #{tpu_custom_call.1} parent=1 // pred_region
      %46 = dma.done [#allocation5], 16
    $region17: #{tpu_custom_call.1} parent=1 // pred_fallthru
      _
    // Predicated region
    $region18: #{tpu_custom_call.1} parent=1 // pred_check
      _
    $region19: #{tpu_custom_call.1} parent=1 // pred_check_branch
      %48 = sbr.rel (0) target = $region21
    $region20: #{tpu_custom_call.1} parent=1 // pred_region
      %49 = dma.done [#allocation3], 57344
    $region21: #{tpu_custom_call.1} parent=1 // pred_fallthru
      _
    // Predicated region
    $region22: #{tpu_custom_call.1} parent=1 // pred_check
      _
    $region23: #{tpu_custom_call.1} parent=1 // pred_check_branch
      %51 = sbr.rel (0) target = $region25
    $region24: #{tpu_custom_call.1} parent=1 // pred_region
      %52 = dma.done [#allocation8], 2048
    $region25: #{tpu_custom_call.1} parent=1 // pred_fallthru
      _
    %53 = sfence
    %v55 = vld [vmem:[#allocation7] sm:$0xff]
    %v56 = vld [vmem:[#allocation7 + $0x8] sm:$0xff]
    %v57 = vld [vmem:[#allocation7 + $0x40] sm:$0xff]
    %v58 = vld [vmem:[#allocation7 + $0x48] sm:$0xff]
    %s59 = scalar_lea.vmem [#allocation7], 16
    %v60 = vld [vmem:[%s59] sm:$0xff]
    %v61 = vld [vmem:[%s59 + $0x8] sm:$0xff]
    %v62 = vld [vmem:[%s59 + $0x40] sm:$0xff]
    %v63 = vld [vmem:[%s59 + $0x48] sm:$0xff]
    %v64 = vmax.f32 %v55, %v60
    %v65 = vmax.f32 %v56, %v61
    %v66 = vmax.f32 %v57, %v62
    %v67 = vmax.f32 %v58, %v63
    %v68 = vadd.f32 %v55, %v60
    %v69 = vadd.f32 %v56, %v61
    %v70 = vadd.f32 %v57, %v62
    %v71 = vadd.f32 %v58, %v63
    %s72 = scalar_lea.vmem [#allocation7], 32
    %v73 = vld [vmem:[%s72] sm:$0xff]
    %v74 = vld [vmem:[%s72 + $0x8] sm:$0xff]
    %v75 = vld [vmem:[%s72 + $0x40] sm:$0xff]
    %v76 = vld [vmem:[%s72 + $0x48] sm:$0xff]
    %v77 = vmax.f32 %v64, %v73
    %v78 = vmax.f32 %v65, %v74
    %v79 = vmax.f32 %v66, %v75
    %v80 = vmax.f32 %v67, %v76
    %v81 = vadd.f32 %v68, %v73
    %v82 = vadd.f32 %v69, %v74
    %v83 = vadd.f32 %v70, %v75
    %v84 = vadd.f32 %v71, %v76
    %s85 = scalar_lea.vmem [#allocation7], 48
    %v86 = vld [vmem:[%s85] sm:$0xff]
    %v87 = vld [vmem:[%s85 + $0x8] sm:$0xff]
    %v88 = vld [vmem:[%s85 + $0x40] sm:$0xff]
    %v89 = vld [vmem:[%s85 + $0x48] sm:$0xff]
    %v90 = vmax.f32 %v77, %v86
    %v91 = vmax.f32 %v78, %v87
    %v92 = vmax.f32 %v79, %v88
    %v93 = vmax.f32 %v80, %v89
    %v94 = vadd.f32 %v81, %v86
    %v95 = vadd.f32 %v82, %v87
    %v96 = vadd.f32 %v83, %v88
    %v97 = vadd.f32 %v84, %v89
    %v98 = vpack.c.bf16 %v90, %v90
    %v99 = vpack.c.bf16 %v91, %v91
    %v100 = vpack.c.bf16 %v92, %v92
    %v101 = vpack.c.bf16 %v93, %v93
    %v102 = vmul.f32 %v94, 0.25
    %v103 = vmul.f32 %v95, 0.25
    %v104 = vmul.f32 %v96, 0.25
    %v105 = vmul.f32 %v97, 0.25
    %v106 = vpack.c.bf16 %v102, %v102
    %v107 = vpack.c.bf16 %v103, %v103
    %v108 = vpack.c.bf16 %v104, %v104
    %v109 = vpack.c.bf16 %v105, %v105
    %v111 = vshrl.u32 %v98, 16
    %v113 = vrot.slane %v111, 6
    %v114 = vshll.u32 %v98, 16
    %v116 = vrot.slane %v114, 7
    %v117 = vor.u32 %v113, %v116
    %v119 = vshrl.u32 %v99, 16
    %v121 = vrot.slane %v119, 6
    %v122 = vshll.u32 %v99, 16
    %v124 = vrot.slane %v122, 7
    %v125 = vor.u32 %v121, %v124
    %v127 = vshrl.u32 %v100, 16
    %v129 = vrot.slane %v127, 6
    %v130 = vshll.u32 %v100, 16
    %v132 = vrot.slane %v130, 7
    %v133 = vor.u32 %v129, %v132
    %v135 = vshrl.u32 %v101, 16
    %v137 = vrot.slane %v135, 6
    %v138 = vshll.u32 %v101, 16
    %v140 = vrot.slane %v138, 7
    %v141 = vor.u32 %v137, %v140
    %vm146 = vcmask 1041408
    %vm147 = vsmask.f32 1280
    %vm148 = vmand %vm146, %vm147
    %v149 = vsel %vm148, 0, %v117
    %v150 = vsel %vm148, 0, %v125
    %v151 = vsel %vm148, 0, %v133
    %v152 = vsel %vm148, 0, %v141
    %vm153 = vcmask 1045504
    %vm154 = vsmask.f32 5376
    %vm155 = vmand %vm153, %vm154
    %v156 = vsel %vm155, %v149, 0
    %v157 = vsel %vm155, %v150, 0
    %v158 = vsel %vm155, %v151, 0
    %v159 = vsel %vm155, %v152, 0
    %v161 = vshrl.u32 %v106, 16
    %v163 = vrot.slane %v161, 6
    %v164 = vshll.u32 %v106, 16
    %v166 = vrot.slane %v164, 7
    %v167 = vor.u32 %v163, %v166
    %v169 = vshrl.u32 %v107, 16
    %v171 = vrot.slane %v169, 6
    %v172 = vshll.u32 %v107, 16
    %v174 = vrot.slane %v172, 7
    %v175 = vor.u32 %v171, %v174
    %v177 = vshrl.u32 %v108, 16
    %v179 = vrot.slane %v177, 6
    %v180 = vshll.u32 %v108, 16
    %v182 = vrot.slane %v180, 7
    %v183 = vor.u32 %v179, %v182
    %v185 = vshrl.u32 %v109, 16
    %v187 = vrot.slane %v185, 6
    %v188 = vshll.u32 %v109, 16
    %v190 = vrot.slane %v188, 7
    %v191 = vor.u32 %v187, %v190
    %v196 = vsel %vm148, 0, %v167
    %v197 = vsel %vm148, 0, %v175
    %v198 = vsel %vm148, 0, %v183
    %v199 = vsel %vm148, 0, %v191
    %v200 = vsel %vm155, %v196, 0
    %v201 = vsel %vm155, %v197, 0
    %v202 = vsel %vm155, %v198, 0
    %v203 = vsel %vm155, %v199, 0
    %v205 = vshrl.u32 %v156, 16
    %v207 = vshll.u32 %v156, 16
    %v209 = vrot.slane %v207, 1
    %v210 = vor.u32 %v205, %v209
    %v212 = vshrl.u32 %v157, 16
    %v214 = vshll.u32 %v157, 16
    %v216 = vrot.slane %v214, 1
    %v217 = vor.u32 %v212, %v216
    %v219 = vshrl.u32 %v158, 16
    %v221 = vshll.u32 %v158, 16
    %v223 = vrot.slane %v221, 1
    %v224 = vor.u32 %v219, %v223
    %v226 = vshrl.u32 %v159, 16
    %v228 = vshll.u32 %v159, 16
    %v230 = vrot.slane %v228, 1
    %v231 = vor.u32 %v226, %v230
    %v236 = vrot.slane %v156, 1
    %v237 = vrot.slane %v157, 1
    %v238 = vrot.slane %v158, 1
    %v239 = vrot.slane %v159, 1
    %v240 = vrot.slane %v205, 1
    %v241 = vrot.slane %v207, 2
    %v242 = vor.u32 %v240, %v241
    %v243 = vrot.slane %v212, 1
    %v244 = vrot.slane %v214, 2
    %v245 = vor.u32 %v243, %v244
    %v246 = vrot.slane %v219, 1
    %v247 = vrot.slane %v221, 2
    %v248 = vor.u32 %v246, %v247
    %v249 = vrot.slane %v226, 1
    %v250 = vrot.slane %v228, 2
    %v251 = vor.u32 %v249, %v250
    %v252 = vrot.slane %v156, 2
    %v253 = vrot.slane %v157, 2
    %v254 = vrot.slane %v158, 2
    %v255 = vrot.slane %v159, 2
    %v256 = vrot.slane %v205, 2
    %v257 = vrot.slane %v207, 3
    %v258 = vor.u32 %v256, %v257
    %v259 = vrot.slane %v212, 2
    %v260 = vrot.slane %v214, 3
    %v261 = vor.u32 %v259, %v260
    %v262 = vrot.slane %v219, 2
    %v263 = vrot.slane %v221, 3
    %v264 = vor.u32 %v262, %v263
    %v265 = vrot.slane %v226, 2
    %v266 = vrot.slane %v228, 3
    %v267 = vor.u32 %v265, %v266
    %v268 = vrot.slane %v156, 3
    %v269 = vrot.slane %v157, 3
    %v270 = vrot.slane %v158, 3
    %v271 = vrot.slane %v159, 3
    %v273 = vshrl.u32 %v200, 16
    %v275 = vshll.u32 %v200, 16
    %v277 = vrot.slane %v275, 1
    %v278 = vor.u32 %v273, %v277
    %v280 = vshrl.u32 %v201, 16
    %v282 = vshll.u32 %v201, 16
    %v284 = vrot.slane %v282, 1
    %v285 = vor.u32 %v280, %v284
    %v287 = vshrl.u32 %v202, 16
    %v289 = vshll.u32 %v202, 16
    %v291 = vrot.slane %v289, 1
    %v292 = vor.u32 %v287, %v291
    %v294 = vshrl.u32 %v203, 16
    %v296 = vshll.u32 %v203, 16
    %v298 = vrot.slane %v296, 1
    %v299 = vor.u32 %v294, %v298
    %v304 = vrot.slane %v200, 1
    %v305 = vrot.slane %v201, 1
    %v306 = vrot.slane %v202, 1
    %v307 = vrot.slane %v203, 1
    %v308 = vrot.slane %v273, 1
    %v309 = vrot.slane %v275, 2
    %v310 = vor.u32 %v308, %v309
    %v311 = vrot.slane %v280, 1
    %v312 = vrot.slane %v282, 2
    %v313 = vor.u32 %v311, %v312
    %v314 = vrot.slane %v287, 1
    %v315 = vrot.slane %v289, 2
    %v316 = vor.u32 %v314, %v315
    %v317 = vrot.slane %v294, 1
    %v318 = vrot.slane %v296, 2
    %v319 = vor.u32 %v317, %v318
    %v320 = vrot.slane %v200, 2
    %v321 = vrot.slane %v201, 2
    %v322 = vrot.slane %v202, 2
    %v323 = vrot.slane %v203, 2
    %v324 = vrot.slane %v273, 2
    %v325 = vrot.slane %v275, 3
    %v326 = vor.u32 %v324, %v325
    %v327 = vrot.slane %v280, 2
    %v328 = vrot.slane %v282, 3
    %v329 = vor.u32 %v327, %v328
    %v330 = vrot.slane %v287, 2
    %v331 = vrot.slane %v289, 3
    %v332 = vor.u32 %v330, %v331
    %v333 = vrot.slane %v294, 2
    %v334 = vrot.slane %v296, 3
    %v335 = vor.u32 %v333, %v334
    %v336 = vrot.slane %v200, 3
    %v337 = vrot.slane %v201, 3
    %v338 = vrot.slane %v202, 3
    %v339 = vrot.slane %v203, 3
    %v340 = vunpack.c.l.b16 %v156
    %v341 = vunpack.c.l.b16 %v157
    %v342 = vunpack.c.l.b16 %v210
    %v343 = vunpack.c.l.b16 %v217
    %v344 = vunpack.c.l.b16 %v236
    %v345 = vunpack.c.l.b16 %v237
    %v346 = vunpack.c.l.b16 %v242
    %v347 = vunpack.c.l.b16 %v245
    %v348 = vunpack.c.l.b16 %v252
    %v349 = vunpack.c.l.b16 %v253
    %v350 = vunpack.c.l.b16 %v258
    %v351 = vunpack.c.l.b16 %v261
    %v352 = vunpack.c.l.b16 %v268
    %v353 = vunpack.c.l.b16 %v269
    %v354 = vunpack.c.l.b16 %v200
    %v355 = vunpack.c.l.b16 %v201
    %v356 = vunpack.c.l.b16 %v278
    %v357 = vunpack.c.l.b16 %v285
    %v358 = vunpack.c.l.b16 %v304
    %v359 = vunpack.c.l.b16 %v305
    %v360 = vunpack.c.l.b16 %v310
    %v361 = vunpack.c.l.b16 %v313
    %v362 = vunpack.c.l.b16 %v320
    %v363 = vunpack.c.l.b16 %v321
    %v364 = vunpack.c.l.b16 %v326
    %v365 = vunpack.c.l.b16 %v329
    %v366 = vunpack.c.l.b16 %v336
    %v367 = vunpack.c.l.b16 %v337
    %v368 = vunpack.c.l.b16 %v158
    %v369 = vunpack.c.l.b16 %v159
    %v370 = vunpack.c.l.b16 %v224
    %v371 = vunpack.c.l.b16 %v231
    %v372 = vunpack.c.l.b16 %v238
    %v373 = vunpack.c.l.b16 %v239
    %v374 = vunpack.c.l.b16 %v248
    %v375 = vunpack.c.l.b16 %v251
    %v376 = vunpack.c.l.b16 %v254
    %v377 = vunpack.c.l.b16 %v255
    %v378 = vunpack.c.l.b16 %v264
    %v379 = vunpack.c.l.b16 %v267
    %v380 = vunpack.c.l.b16 %v270
    %v381 = vunpack.c.l.b16 %v271
    %v382 = vunpack.c.l.b16 %v202
    %v383 = vunpack.c.l.b16 %v203
    %v384 = vunpack.c.l.b16 %v292
    %v385 = vunpack.c.l.b16 %v299
    %v386 = vunpack.c.l.b16 %v306
    %v387 = vunpack.c.l.b16 %v307
    %v388 = vunpack.c.l.b16 %v316
    %v389 = vunpack.c.l.b16 %v319
    %v390 = vunpack.c.l.b16 %v322
    %v391 = vunpack.c.l.b16 %v323
    %v392 = vunpack.c.l.b16 %v332
    %v393 = vunpack.c.l.b16 %v335
    %v394 = vunpack.c.l.b16 %v338
    %v395 = vunpack.c.l.b16 %v339
    %v396 = vld [vmem:[#allocation6] sm:$0xff]
    %v397 = vld [vmem:[#allocation6 + $0x8] sm:$0xff]
    %v398 = vld [vmem:[#allocation6 + $0x10] sm:$0xff]
    %v399 = vld [vmem:[#allocation6 + $0x18] sm:$0xff]
    %v400 = vld [vmem:[#allocation6 + $0x20] sm:$0xff]
    %v401 = vld [vmem:[#allocation6 + $0x28] sm:$0xff]
    %v402 = vld [vmem:[#allocation6 + $0x30] sm:$0xff]
    %v403 = vld [vmem:[#allocation6 + $0x38] sm:$0xff]
    %v404 = vld [vmem:[#allocation6 + $0x40] sm:$0xff]
    %v405 = vld [vmem:[#allocation6 + $0x48] sm:$0xff]
    %v406 = vld [vmem:[#allocation6 + $0x50] sm:$0xff]
    %v407 = vld [vmem:[#allocation6 + $0x58] sm:$0xff]
    %v408 = vld [vmem:[#allocation6 + $0x60] sm:$0xff]
    %v409 = vld [vmem:[#allocation6 + $0x68] sm:$0xff]
    %v410 = vld [vmem:[#allocation6 + $0x70] sm:$0xff]
    %v411 = vld [vmem:[#allocation6 + $0x78] sm:$0xff]
    %v412 = vld [vmem:[#allocation6 + $0x80] sm:$0xff]
    %v413 = vld [vmem:[#allocation6 + $0x88] sm:$0xff]
    %v414 = vld [vmem:[#allocation6 + $0x90] sm:$0xff]
    %v415 = vld [vmem:[#allocation6 + $0x98] sm:$0xff]
    %v416 = vld [vmem:[#allocation6 + $0xa0] sm:$0xff]
    %v417 = vld [vmem:[#allocation6 + $0xa8] sm:$0xff]
    %v418 = vld [vmem:[#allocation6 + $0xb0] sm:$0xff]
    %v419 = vld [vmem:[#allocation6 + $0xb8] sm:$0xff]
    %v420 = vld [vmem:[#allocation6 + $0xc0] sm:$0xff]
    %v421 = vld [vmem:[#allocation6 + $0xc8] sm:$0xff]
    %v422 = vld [vmem:[#allocation6 + $0xd0] sm:$0xff]
    %v423 = vld [vmem:[#allocation6 + $0xd8] sm:$0xff]
    %v424 = vld [vmem:[#allocation6 + $0xe0] sm:$0xff]
    %v425 = vld [vmem:[#allocation6 + $0xe8] sm:$0xff]
    %v426 = vld [vmem:[#allocation6 + $0xf0] sm:$0xff]
    %v427 = vld [vmem:[#allocation6 + $0xf8] sm:$0xff]
    %v428 = vld [vmem:[#allocation6 + $0x100] sm:$0xff]
    %v429 = vld [vmem:[#allocation6 + $0x108] sm:$0xff]
    %v430 = vld [vmem:[#allocation6 + $0x110] sm:$0xff]
    %v431 = vld [vmem:[#allocation6 + $0x118] sm:$0xff]
    %v432 = vld [vmem:[#allocation6 + $0x120] sm:$0xff]
    %v433 = vld [vmem:[#allocation6 + $0x128] sm:$0xff]
    %v434 = vld [vmem:[#allocation6 + $0x130] sm:$0xff]
    %v435 = vld [vmem:[#allocation6 + $0x138] sm:$0xff]
    %v436 = vld [vmem:[#allocation6 + $0x140] sm:$0xff]
    %v437 = vld [vmem:[#allocation6 + $0x148] sm:$0xff]
    %v438 = vld [vmem:[#allocation6 + $0x150] sm:$0xff]
    %v439 = vld [vmem:[#allocation6 + $0x158] sm:$0xff]
    %v440 = vld [vmem:[#allocation6 + $0x160] sm:$0xff]
    %v441 = vld [vmem:[#allocation6 + $0x168] sm:$0xff]
    %v442 = vld [vmem:[#allocation6 + $0x170] sm:$0xff]
    %v443 = vld [vmem:[#allocation6 + $0x178] sm:$0xff]
    %v444 = vld [vmem:[#allocation6 + $0x180] sm:$0xff]
    %v445 = vld [vmem:[#allocation6 + $0x188] sm:$0xff]
    %v446 = vld [vmem:[#allocation6 + $0x190] sm:$0xff]
    %v447 = vld [vmem:[#allocation6 + $0x198] sm:$0xff]
    %v448 = vld [vmem:[#allocation6 + $0x1a0] sm:$0xff]
    %v449 = vld [vmem:[#allocation6 + $0x1a8] sm:$0xff]
    %v450 = vld [vmem:[#allocation6 + $0x1b0] sm:$0xff]
    %v451 = vld [vmem:[#allocation6 + $0x1b8] sm:$0xff]
    %v452 = vld [vmem:[#allocation6 + $0x1c0] sm:$0xff]
    %v453 = vld [vmem:[#allocation6 + $0x1c8] sm:$0xff]
    %v454 = vld [vmem:[#allocation6 + $0x1d0] sm:$0xff]
    %v455 = vld [vmem:[#allocation6 + $0x1d8] sm:$0xff]
    %v456 = vld [vmem:[#allocation6 + $0x1e0] sm:$0xff]
    %v457 = vld [vmem:[#allocation6 + $0x1e8] sm:$0xff]
    %v458 = vld [vmem:[#allocation6 + $0x1f0] sm:$0xff]
    %v459 = vld [vmem:[#allocation6 + $0x1f8] sm:$0xff]
    %v460 = vld [vmem:[#allocation6 + $0x200] sm:$0xff]
    %v461 = vld [vmem:[#allocation6 + $0x208] sm:$0xff]
    %v462 = vld [vmem:[#allocation6 + $0x210] sm:$0xff]
    %v463 = vld [vmem:[#allocation6 + $0x218] sm:$0xff]
    %v464 = vld [vmem:[#allocation6 + $0x220] sm:$0xff]
    %v465 = vld [vmem:[#allocation6 + $0x228] sm:$0xff]
    %v466 = vld [vmem:[#allocation6 + $0x230] sm:$0xff]
    %v467 = vld [vmem:[#allocation6 + $0x238] sm:$0xff]
    %v468 = vld [vmem:[#allocation6 + $0x240] sm:$0xff]
    %v469 = vld [vmem:[#allocation6 + $0x248] sm:$0xff]
    %v470 = vld [vmem:[#allocation6 + $0x250] sm:$0xff]
    %v471 = vld [vmem:[#allocation6 + $0x258] sm:$0xff]
    %v472 = vld [vmem:[#allocation6 + $0x260] sm:$0xff]
    %v473 = vld [vmem:[#allocation6 + $0x268] sm:$0xff]
    %v474 = vld [vmem:[#allocation6 + $0x270] sm:$0xff]
    %v475 = vld [vmem:[#allocation6 + $0x278] sm:$0xff]
    %v476 = vld [vmem:[#allocation6 + $0x280] sm:$0xff]
    %v477 = vld [vmem:[#allocation6 + $0x288] sm:$0xff]
    %v478 = vld [vmem:[#allocation6 + $0x290] sm:$0xff]
    %v479 = vld [vmem:[#allocation6 + $0x298] sm:$0xff]
    %v480 = vld [vmem:[#allocation6 + $0x2a0] sm:$0xff]
    %v481 = vld [vmem:[#allocation6 + $0x2a8] sm:$0xff]
    %v482 = vld [vmem:[#allocation6 + $0x2b0] sm:$0xff]
    %v483 = vld [vmem:[#allocation6 + $0x2b8] sm:$0xff]
    %v484 = vld [vmem:[#allocation6 + $0x2c0] sm:$0xff]
    %v485 = vld [vmem:[#allocation6 + $0x2c8] sm:$0xff]
    %v486 = vld [vmem:[#allocation6 + $0x2d0] sm:$0xff]
    %v487 = vld [vmem:[#allocation6 + $0x2d8] sm:$0xff]
    %v488 = vld [vmem:[#allocation6 + $0x2e0] sm:$0xff]
    %v489 = vld [vmem:[#allocation6 + $0x2e8] sm:$0xff]
    %v490 = vld [vmem:[#allocation6 + $0x2f0] sm:$0xff]
    %v491 = vld [vmem:[#allocation6 + $0x2f8] sm:$0xff]
    %v492 = vld [vmem:[#allocation6 + $0x300] sm:$0xff]
    %v493 = vld [vmem:[#allocation6 + $0x308] sm:$0xff]
    %v494 = vld [vmem:[#allocation6 + $0x310] sm:$0xff]
    %v495 = vld [vmem:[#allocation6 + $0x318] sm:$0xff]
    %v496 = vld [vmem:[#allocation6 + $0x320] sm:$0xff]
    %v497 = vld [vmem:[#allocation6 + $0x328] sm:$0xff]
    %v498 = vld [vmem:[#allocation6 + $0x330] sm:$0xff]
    %v499 = vld [vmem:[#allocation6 + $0x338] sm:$0xff]
    %v500 = vld [vmem:[#allocation6 + $0x340] sm:$0xff]
    %v501 = vld [vmem:[#allocation6 + $0x348] sm:$0xff]
    %v502 = vld [vmem:[#allocation6 + $0x350] sm:$0xff]
    %v503 = vld [vmem:[#allocation6 + $0x358] sm:$0xff]
    %v504 = vld [vmem:[#allocation6 + $0x360] sm:$0xff]
    %v505 = vld [vmem:[#allocation6 + $0x368] sm:$0xff]
    %v506 = vld [vmem:[#allocation6 + $0x370] sm:$0xff]
    %v507 = vld [vmem:[#allocation6 + $0x378] sm:$0xff]
    %v508 = vld [vmem:[#allocation6 + $0x380] sm:$0xff]
    %v509 = vld [vmem:[#allocation6 + $0x388] sm:$0xff]
    %v510 = vld [vmem:[#allocation6 + $0x390] sm:$0xff]
    %v511 = vld [vmem:[#allocation6 + $0x398] sm:$0xff]
    %v512 = vld [vmem:[#allocation6 + $0x3a0] sm:$0xff]
    %v513 = vld [vmem:[#allocation6 + $0x3a8] sm:$0xff]
    %v514 = vld [vmem:[#allocation6 + $0x3b0] sm:$0xff]
    %v515 = vld [vmem:[#allocation6 + $0x3b8] sm:$0xff]
    %v516 = vld [vmem:[#allocation6 + $0x3c0] sm:$0xff]
    %v517 = vld [vmem:[#allocation6 + $0x3c8] sm:$0xff]
    %v518 = vld [vmem:[#allocation6 + $0x3d0] sm:$0xff]
    %v519 = vld [vmem:[#allocation6 + $0x3d8] sm:$0xff]
    %v520 = vld [vmem:[#allocation6 + $0x3e0] sm:$0xff]
    %v521 = vld [vmem:[#allocation6 + $0x3e8] sm:$0xff]
    %v522 = vld [vmem:[#allocation6 + $0x3f0] sm:$0xff]
    %v523 = vld [vmem:[#allocation6 + $0x3f8] sm:$0xff]
    %v524 = vld [vmem:[#allocation6 + $0x400] sm:$0xff]
    %v525 = vld [vmem:[#allocation6 + $0x408] sm:$0xff]
    %v526 = vld [vmem:[#allocation6 + $0x410] sm:$0xff]
    %v527 = vld [vmem:[#allocation6 + $0x418] sm:$0xff]
    %v528 = vld [vmem:[#allocation6 + $0x420] sm:$0xff]
    %v529 = vld [vmem:[#allocation6 + $0x428] sm:$0xff]
    %v530 = vld [vmem:[#allocation6 + $0x430] sm:$0xff]
    %v531 = vld [vmem:[#allocation6 + $0x438] sm:$0xff]
    %v532 = vld [vmem:[#allocation6 + $0x440] sm:$0xff]
    %v533 = vld [vmem:[#allocation6 + $0x448] sm:$0xff]
    %v534 = vld [vmem:[#allocation6 + $0x450] sm:$0xff]
    %v535 = vld [vmem:[#allocation6 + $0x458] sm:$0xff]
    %v536 = vld [vmem:[#allocation6 + $0x460] sm:$0xff]
    %v537 = vld [vmem:[#allocation6 + $0x468] sm:$0xff]
    %v538 = vld [vmem:[#allocation6 + $0x470] sm:$0xff]
    %v539 = vld [vmem:[#allocation6 + $0x478] sm:$0xff]
    %v540 = vld [vmem:[#allocation6 + $0x480] sm:$0xff]
    %v541 = vld [vmem:[#allocation6 + $0x488] sm:$0xff]
    %v542 = vld [vmem:[#allocation6 + $0x490] sm:$0xff]
    %v543 = vld [vmem:[#allocation6 + $0x498] sm:$0xff]
    %v544 = vld [vmem:[#allocation6 + $0x4a0] sm:$0xff]
    %v545 = vld [vmem:[#allocation6 + $0x4a8] sm:$0xff]
    %v546 = vld [vmem:[#allocation6 + $0x4b0] sm:$0xff]
    %v547 = vld [vmem:[#allocation6 + $0x4b8] sm:$0xff]
    %v548 = vld [vmem:[#allocation6 + $0x4c0] sm:$0xff]
    %v549 = vld [vmem:[#allocation6 + $0x4c8] sm:$0xff]
    %v550 = vld [vmem:[#allocation6 + $0x4d0] sm:$0xff]
    %v551 = vld [vmem:[#allocation6 + $0x4d8] sm:$0xff]
    %v552 = vld [vmem:[#allocation6 + $0x4e0] sm:$0xff]
    %v553 = vld [vmem:[#allocation6 + $0x4e8] sm:$0xff]
    %v554 = vld [vmem:[#allocation6 + $0x4f0] sm:$0xff]
    %v555 = vld [vmem:[#allocation6 + $0x4f8] sm:$0xff]
    %v556 = vld [vmem:[#allocation6 + $0x500] sm:$0xff]
    %v557 = vld [vmem:[#allocation6 + $0x508] sm:$0xff]
    %v558 = vld [vmem:[#allocation6 + $0x510] sm:$0xff]
    %v559 = vld [vmem:[#allocation6 + $0x518] sm:$0xff]
    %v560 = vld [vmem:[#allocation6 + $0x520] sm:$0xff]
    %v561 = vld [vmem:[#allocation6 + $0x528] sm:$0xff]
    %v562 = vld [vmem:[#allocation6 + $0x530] sm:$0xff]
    %v563 = vld [vmem:[#allocation6 + $0x538] sm:$0xff]
    %v564 = vld [vmem:[#allocation6 + $0x540] sm:$0xff]
    %v565 = vld [vmem:[#allocation6 + $0x548] sm:$0xff]
    %v566 = vld [vmem:[#allocation6 + $0x550] sm:$0xff]
    %v567 = vld [vmem:[#allocation6 + $0x558] sm:$0xff]
    %v568 = vld [vmem:[#allocation6 + $0x560] sm:$0xff]
    %v569 = vld [vmem:[#allocation6 + $0x568] sm:$0xff]
    %v570 = vld [vmem:[#allocation6 + $0x570] sm:$0xff]
    %v571 = vld [vmem:[#allocation6 + $0x578] sm:$0xff]
    %v572 = vld [vmem:[#allocation6 + $0x580] sm:$0xff]
    %v573 = vld [vmem:[#allocation6 + $0x588] sm:$0xff]
    %v574 = vld [vmem:[#allocation6 + $0x590] sm:$0xff]
    %v575 = vld [vmem:[#allocation6 + $0x598] sm:$0xff]
    %v576 = vld [vmem:[#allocation6 + $0x5a0] sm:$0xff]
    %v577 = vld [vmem:[#allocation6 + $0x5a8] sm:$0xff]
    %v578 = vld [vmem:[#allocation6 + $0x5b0] sm:$0xff]
    %v579 = vld [vmem:[#allocation6 + $0x5b8] sm:$0xff]
    %v580 = vld [vmem:[#allocation6 + $0x5c0] sm:$0xff]
    %v581 = vld [vmem:[#allocation6 + $0x5c8] sm:$0xff]
    %v582 = vld [vmem:[#allocation6 + $0x5d0] sm:$0xff]
    %v583 = vld [vmem:[#allocation6 + $0x5d8] sm:$0xff]
    %v584 = vld [vmem:[#allocation6 + $0x5e0] sm:$0xff]
    %v585 = vld [vmem:[#allocation6 + $0x5e8] sm:$0xff]
    %v586 = vld [vmem:[#allocation6 + $0x5f0] sm:$0xff]
    %v587 = vld [vmem:[#allocation6 + $0x5f8] sm:$0xff]
    %v588 = vld [vmem:[#allocation6 + $0x600] sm:$0xff]
    %v589 = vld [vmem:[#allocation6 + $0x608] sm:$0xff]
    %v590 = vld [vmem:[#allocation6 + $0x610] sm:$0xff]
    %v591 = vld [vmem:[#allocation6 + $0x618] sm:$0xff]
    %v592 = vld [vmem:[#allocation6 + $0x620] sm:$0xff]
    %v593 = vld [vmem:[#allocation6 + $0x628] sm:$0xff]
    %v594 = vld [vmem:[#allocation6 + $0x630] sm:$0xff]
    %v595 = vld [vmem:[#allocation6 + $0x638] sm:$0xff]
    %v596 = vld [vmem:[#allocation6 + $0x640] sm:$0xff]
    %v597 = vld [vmem:[#allocation6 + $0x648] sm:$0xff]
    %v598 = vld [vmem:[#allocation6 + $0x650] sm:$0xff]
    %v599 = vld [vmem:[#allocation6 + $0x658] sm:$0xff]
    %v600 = vld [vmem:[#allocation6 + $0x660] sm:$0xff]
    %v601 = vld [vmem:[#allocation6 + $0x668] sm:$0xff]
    %v602 = vld [vmem:[#allocation6 + $0x670] sm:$0xff]
    %v603 = vld [vmem:[#allocation6 + $0x678] sm:$0xff]
    %v604 = vld [vmem:[#allocation6 + $0x680] sm:$0xff]
    %v605 = vld [vmem:[#allocation6 + $0x688] sm:$0xff]
    %v606 = vld [vmem:[#allocation6 + $0x690] sm:$0xff]
    %v607 = vld [vmem:[#allocation6 + $0x698] sm:$0xff]
    %v608 = vld [vmem:[#allocation6 + $0x6a0] sm:$0xff]
    %v609 = vld [vmem:[#allocation6 + $0x6a8] sm:$0xff]
    %v610 = vld [vmem:[#allocation6 + $0x6b0] sm:$0xff]
    %v611 = vld [vmem:[#allocation6 + $0x6b8] sm:$0xff]
    %v612 = vld [vmem:[#allocation6 + $0x6c0] sm:$0xff]
    %v613 = vld [vmem:[#allocation6 + $0x6c8] sm:$0xff]
    %v614 = vld [vmem:[#allocation6 + $0x6d0] sm:$0xff]
    %v615 = vld [vmem:[#allocation6 + $0x6d8] sm:$0xff]
    %v616 = vld [vmem:[#allocation6 + $0x6e0] sm:$0xff]
    %v617 = vld [vmem:[#allocation6 + $0x6e8] sm:$0xff]
    %v618 = vld [vmem:[#allocation6 + $0x6f0] sm:$0xff]
    %v619 = vld [vmem:[#allocation6 + $0x6f8] sm:$0xff]
    %v620 = vld [vmem:[#allocation6 + $0x700] sm:$0xff]
    %v621 = vld [vmem:[#allocation6 + $0x708] sm:$0xff]
    %v622 = vld [vmem:[#allocation6 + $0x710] sm:$0xff]
    %v623 = vld [vmem:[#allocation6 + $0x718] sm:$0xff]
    %v624 = vld [vmem:[#allocation6 + $0x720] sm:$0xff]
    %v625 = vld [vmem:[#allocation6 + $0x728] sm:$0xff]
    %v626 = vld [vmem:[#allocation6 + $0x730] sm:$0xff]
    %v627 = vld [vmem:[#allocation6 + $0x738] sm:$0xff]
    %v628 = vld [vmem:[#allocation6 + $0x740] sm:$0xff]
    %v629 = vld [vmem:[#allocation6 + $0x748] sm:$0xff]
    %v630 = vld [vmem:[#allocation6 + $0x750] sm:$0xff]
    %v631 = vld [vmem:[#allocation6 + $0x758] sm:$0xff]
    %v632 = vld [vmem:[#allocation6 + $0x760] sm:$0xff]
    %v633 = vld [vmem:[#allocation6 + $0x768] sm:$0xff]
    %v634 = vld [vmem:[#allocation6 + $0x770] sm:$0xff]
    %v635 = vld [vmem:[#allocation6 + $0x778] sm:$0xff]
    %v636 = vld [vmem:[#allocation6 + $0x780] sm:$0xff]
    %v637 = vld [vmem:[#allocation6 + $0x788] sm:$0xff]
    %v638 = vld [vmem:[#allocation6 + $0x790] sm:$0xff]
    %v639 = vld [vmem:[#allocation6 + $0x798] sm:$0xff]
    %v640 = vld [vmem:[#allocation6 + $0x7a0] sm:$0xff]
    %v641 = vld [vmem:[#allocation6 + $0x7a8] sm:$0xff]
    %v642 = vld [vmem:[#allocation6 + $0x7b0] sm:$0xff]
    %v643 = vld [vmem:[#allocation6 + $0x7b8] sm:$0xff]
    %v644 = vld [vmem:[#allocation6 + $0x7c0] sm:$0xff]
    %v645 = vld [vmem:[#allocation6 + $0x7c8] sm:$0xff]
    %v646 = vld [vmem:[#allocation6 + $0x7d0] sm:$0xff]
    %v647 = vld [vmem:[#allocation6 + $0x7d8] sm:$0xff]
    %v648 = vld [vmem:[#allocation6 + $0x7e0] sm:$0xff]
    %v649 = vld [vmem:[#allocation6 + $0x7e8] sm:$0xff]
    %v650 = vld [vmem:[#allocation6 + $0x7f0] sm:$0xff]
    %v651 = vld [vmem:[#allocation6 + $0x7f8] sm:$0xff]
    %v652 = vld [vmem:[#allocation6 + $0x800] sm:$0xff]
    %v653 = vld [vmem:[#allocation6 + $0x808] sm:$0xff]
    %v654 = vld [vmem:[#allocation6 + $0x810] sm:$0xff]
    %v655 = vld [vmem:[#allocation6 + $0x818] sm:$0xff]
    %v656 = vld [vmem:[#allocation6 + $0x820] sm:$0xff]
    %v657 = vld [vmem:[#allocation6 + $0x828] sm:$0xff]
    %v658 = vld [vmem:[#allocation6 + $0x830] sm:$0xff]
    %v659 = vld [vmem:[#allocation6 + $0x838] sm:$0xff]
    %v660 = vld [vmem:[#allocation6 + $0x840] sm:$0xff]
    %v661 = vld [vmem:[#allocation6 + $0x848] sm:$0xff]
    %v662 = vld [vmem:[#allocation6 + $0x850] sm:$0xff]
    %v663 = vld [vmem:[#allocation6 + $0x858] sm:$0xff]
    %v664 = vld [vmem:[#allocation6 + $0x860] sm:$0xff]
    %v665 = vld [vmem:[#allocation6 + $0x868] sm:$0xff]
    %v666 = vld [vmem:[#allocation6 + $0x870] sm:$0xff]
    %v667 = vld [vmem:[#allocation6 + $0x878] sm:$0xff]
    %v668 = vld [vmem:[#allocation6 + $0x880] sm:$0xff]
    %v669 = vld [vmem:[#allocation6 + $0x888] sm:$0xff]
    %v670 = vld [vmem:[#allocation6 + $0x890] sm:$0xff]
    %v671 = vld [vmem:[#allocation6 + $0x898] sm:$0xff]
    %v672 = vld [vmem:[#allocation6 + $0x8a0] sm:$0xff]
    %v673 = vld [vmem:[#allocation6 + $0x8a8] sm:$0xff]
    %v674 = vld [vmem:[#allocation6 + $0x8b0] sm:$0xff]
    %v675 = vld [vmem:[#allocation6 + $0x8b8] sm:$0xff]
    %v676 = vld [vmem:[#allocation6 + $0x8c0] sm:$0xff]
    %v677 = vld [vmem:[#allocation6 + $0x8c8] sm:$0xff]
    %v678 = vld [vmem:[#allocation6 + $0x8d0] sm:$0xff]
    %v679 = vld [vmem:[#allocation6 + $0x8d8] sm:$0xff]
    %v680 = vld [vmem:[#allocation6 + $0x8e0] sm:$0xff]
    %v681 = vld [vmem:[#allocation6 + $0x8e8] sm:$0xff]
    %v682 = vld [vmem:[#allocation6 + $0x8f0] sm:$0xff]
    %v683 = vld [vmem:[#allocation6 + $0x8f8] sm:$0xff]
    %v684 = vld [vmem:[#allocation6 + $0x900] sm:$0xff]
    %v685 = vld [vmem:[#allocation6 + $0x908] sm:$0xff]
    %v686 = vld [vmem:[#allocation6 + $0x910] sm:$0xff]
    %v687 = vld [vmem:[#allocation6 + $0x918] sm:$0xff]
    %v688 = vld [vmem:[#allocation6 + $0x920] sm:$0xff]
    %v689 = vld [vmem:[#allocation6 + $0x928] sm:$0xff]
    %v690 = vld [vmem:[#allocation6 + $0x930] sm:$0xff]
    %v691 = vld [vmem:[#allocation6 + $0x938] sm:$0xff]
    %v692 = vld [vmem:[#allocation6 + $0x940] sm:$0xff]
    %v693 = vld [vmem:[#allocation6 + $0x948] sm:$0xff]
    %v694 = vld [vmem:[#allocation6 + $0x950] sm:$0xff]
    %v695 = vld [vmem:[#allocation6 + $0x958] sm:$0xff]
    %v696 = vld [vmem:[#allocation6 + $0x960] sm:$0xff]
    %v697 = vld [vmem:[#allocation6 + $0x968] sm:$0xff]
    %v698 = vld [vmem:[#allocation6 + $0x970] sm:$0xff]
    %v699 = vld [vmem:[#allocation6 + $0x978] sm:$0xff]
    %v700 = vld [vmem:[#allocation6 + $0x980] sm:$0xff]
    %v701 = vld [vmem:[#allocation6 + $0x988] sm:$0xff]
    %v702 = vld [vmem:[#allocation6 + $0x990] sm:$0xff]
    %v703 = vld [vmem:[#allocation6 + $0x998] sm:$0xff]
    %v704 = vld [vmem:[#allocation6 + $0x9a0] sm:$0xff]
    %v705 = vld [vmem:[#allocation6 + $0x9a8] sm:$0xff]
    %v706 = vld [vmem:[#allocation6 + $0x9b0] sm:$0xff]
    %v707 = vld [vmem:[#allocation6 + $0x9b8] sm:$0xff]
    %v708 = vld [vmem:[#allocation6 + $0x9c0] sm:$0xff]
    %v709 = vld [vmem:[#allocation6 + $0x9c8] sm:$0xff]
    %v710 = vld [vmem:[#allocation6 + $0x9d0] sm:$0xff]
    %v711 = vld [vmem:[#allocation6 + $0x9d8] sm:$0xff]
    %v712 = vld [vmem:[#allocation6 + $0x9e0] sm:$0xff]
    %v713 = vld [vmem:[#allocation6 + $0x9e8] sm:$0xff]
    %v714 = vld [vmem:[#allocation6 + $0x9f0] sm:$0xff]
    %v715 = vld [vmem:[#allocation6 + $0x9f8] sm:$0xff]
    %v716 = vld [vmem:[#allocation6 + $0xa00] sm:$0xff]
    %v717 = vld [vmem:[#allocation6 + $0xa08] sm:$0xff]
    %v718 = vld [vmem:[#allocation6 + $0xa10] sm:$0xff]
    %v719 = vld [vmem:[#allocation6 + $0xa18] sm:$0xff]
    %v720 = vld [vmem:[#allocation6 + $0xa20] sm:$0xff]
    %v721 = vld [vmem:[#allocation6 + $0xa28] sm:$0xff]
    %v722 = vld [vmem:[#allocation6 + $0xa30] sm:$0xff]
    %v723 = vld [vmem:[#allocation6 + $0xa38] sm:$0xff]
    %v724 = vld [vmem:[#allocation6 + $0xa40] sm:$0xff]
    %v725 = vld [vmem:[#allocation6 + $0xa48] sm:$0xff]
    %v726 = vld [vmem:[#allocation6 + $0xa50] sm:$0xff]
    %v727 = vld [vmem:[#allocation6 + $0xa58] sm:$0xff]
    %v728 = vld [vmem:[#allocation6 + $0xa60] sm:$0xff]
    %v729 = vld [vmem:[#allocation6 + $0xa68] sm:$0xff]
    %v730 = vld [vmem:[#allocation6 + $0xa70] sm:$0xff]
    %v731 = vld [vmem:[#allocation6 + $0xa78] sm:$0xff]
    %v732 = vld [vmem:[#allocation6 + $0xa80] sm:$0xff]
    %v733 = vld [vmem:[#allocation6 + $0xa88] sm:$0xff]
    %v734 = vld [vmem:[#allocation6 + $0xa90] sm:$0xff]
    %v735 = vld [vmem:[#allocation6 + $0xa98] sm:$0xff]
    %v736 = vld [vmem:[#allocation6 + $0xaa0] sm:$0xff]
    %v737 = vld [vmem:[#allocation6 + $0xaa8] sm:$0xff]
    %v738 = vld [vmem:[#allocation6 + $0xab0] sm:$0xff]
    %v739 = vld [vmem:[#allocation6 + $0xab8] sm:$0xff]
    %v740 = vld [vmem:[#allocation6 + $0xac0] sm:$0xff]
    %v741 = vld [vmem:[#allocation6 + $0xac8] sm:$0xff]
    %v742 = vld [vmem:[#allocation6 + $0xad0] sm:$0xff]
    %v743 = vld [vmem:[#allocation6 + $0xad8] sm:$0xff]
    %v744 = vld [vmem:[#allocation6 + $0xae0] sm:$0xff]
    %v745 = vld [vmem:[#allocation6 + $0xae8] sm:$0xff]
    %v746 = vld [vmem:[#allocation6 + $0xaf0] sm:$0xff]
    %v747 = vld [vmem:[#allocation6 + $0xaf8] sm:$0xff]
    %v748 = vld [vmem:[#allocation6 + $0xb00] sm:$0xff]
    %v749 = vld [vmem:[#allocation6 + $0xb08] sm:$0xff]
    %v750 = vld [vmem:[#allocation6 + $0xb10] sm:$0xff]
    %v751 = vld [vmem:[#allocation6 + $0xb18] sm:$0xff]
    %v752 = vld [vmem:[#allocation6 + $0xb20] sm:$0xff]
    %v753 = vld [vmem:[#allocation6 + $0xb28] sm:$0xff]
    %v754 = vld [vmem:[#allocation6 + $0xb30] sm:$0xff]
    %v755 = vld [vmem:[#allocation6 + $0xb38] sm:$0xff]
    %v756 = vld [vmem:[#allocation6 + $0xb40] sm:$0xff]
    %v757 = vld [vmem:[#allocation6 + $0xb48] sm:$0xff]
    %v758 = vld [vmem:[#allocation6 + $0xb50] sm:$0xff]
    %v759 = vld [vmem:[#allocation6 + $0xb58] sm:$0xff]
    %v760 = vld [vmem:[#allocation6 + $0xb60] sm:$0xff]
    %v761 = vld [vmem:[#allocation6 + $0xb68] sm:$0xff]
    %v762 = vld [vmem:[#allocation6 + $0xb70] sm:$0xff]
    %v763 = vld [vmem:[#allocation6 + $0xb78] sm:$0xff]
    %v764 = vld [vmem:[#allocation6 + $0xb80] sm:$0xff]
    %v765 = vld [vmem:[#allocation6 + $0xb88] sm:$0xff]
    %v766 = vld [vmem:[#allocation6 + $0xb90] sm:$0xff]
    %v767 = vld [vmem:[#allocation6 + $0xb98] sm:$0xff]
    %v768 = vld [vmem:[#allocation6 + $0xba0] sm:$0xff]
    %v769 = vld [vmem:[#allocation6 + $0xba8] sm:$0xff]
    %v770 = vld [vmem:[#allocation6 + $0xbb0] sm:$0xff]
    %v771 = vld [vmem:[#allocation6 + $0xbb8] sm:$0xff]
    %v772 = vld [vmem:[#allocation6 + $0xbc0] sm:$0xff]
    %v773 = vld [vmem:[#allocation6 + $0xbc8] sm:$0xff]
    %v774 = vld [vmem:[#allocation6 + $0xbd0] sm:$0xff]
    %v775 = vld [vmem:[#allocation6 + $0xbd8] sm:$0xff]
    %v776 = vld [vmem:[#allocation6 + $0xbe0] sm:$0xff]
    %v777 = vld [vmem:[#allocation6 + $0xbe8] sm:$0xff]
    %v778 = vld [vmem:[#allocation6 + $0xbf0] sm:$0xff]
    %v779 = vld [vmem:[#allocation6 + $0xbf8] sm:$0xff]
    %v780 = vld [vmem:[#allocation6 + $0xc00] sm:$0xff]
    %v781 = vld [vmem:[#allocation6 + $0xc08] sm:$0xff]
    %v782 = vld [vmem:[#allocation6 + $0xc10] sm:$0xff]
    %v783 = vld [vmem:[#allocation6 + $0xc18] sm:$0xff]
    %v784 = vld [vmem:[#allocation6 + $0xc20] sm:$0xff]
    %v785 = vld [vmem:[#allocation6 + $0xc28] sm:$0xff]
    %v786 = vld [vmem:[#allocation6 + $0xc30] sm:$0xff]
    %v787 = vld [vmem:[#allocation6 + $0xc38] sm:$0xff]
    %v788 = vld [vmem:[#allocation6 + $0xc40] sm:$0xff]
    %v789 = vld [vmem:[#allocation6 + $0xc48] sm:$0xff]
    %v790 = vld [vmem:[#allocation6 + $0xc50] sm:$0xff]
    %v791 = vld [vmem:[#allocation6 + $0xc58] sm:$0xff]
    %v792 = vld [vmem:[#allocation6 + $0xc60] sm:$0xff]
    %v793 = vld [vmem:[#allocation6 + $0xc68] sm:$0xff]
    %v794 = vld [vmem:[#allocation6 + $0xc70] sm:$0xff]
    %v795 = vld [vmem:[#allocation6 + $0xc78] sm:$0xff]
    %v796 = vld [vmem:[#allocation6 + $0xc80] sm:$0xff]
    %v797 = vld [vmem:[#allocation6 + $0xc88] sm:$0xff]
    %v798 = vld [vmem:[#allocation6 + $0xc90] sm:$0xff]
    %v799 = vld [vmem:[#allocation6 + $0xc98] sm:$0xff]
    %v800 = vld [vmem:[#allocation6 + $0xca0] sm:$0xff]
    %v801 = vld [vmem:[#allocation6 + $0xca8] sm:$0xff]
    %v802 = vld [vmem:[#allocation6 + $0xcb0] sm:$0xff]
    %v803 = vld [vmem:[#allocation6 + $0xcb8] sm:$0xff]
    %v804 = vld [vmem:[#allocation6 + $0xcc0] sm:$0xff]
    %v805 = vld [vmem:[#allocation6 + $0xcc8] sm:$0xff]
    %v806 = vld [vmem:[#allocation6 + $0xcd0] sm:$0xff]
    %v807 = vld [vmem:[#allocation6 + $0xcd8] sm:$0xff]
    %v808 = vld [vmem:[#allocation6 + $0xce0] sm:$0xff]
    %v809 = vld [vmem:[#allocation6 + $0xce8] sm:$0xff]
    %v810 = vld [vmem:[#allocation6 + $0xcf0] sm:$0xff]
    %v811 = vld [vmem:[#allocation6 + $0xcf8] sm:$0xff]
    %v812 = vld [vmem:[#allocation6 + $0xd00] sm:$0xff]
    %v813 = vld [vmem:[#allocation6 + $0xd08] sm:$0xff]
    %v814 = vld [vmem:[#allocation6 + $0xd10] sm:$0xff]
    %v815 = vld [vmem:[#allocation6 + $0xd18] sm:$0xff]
    %v816 = vld [vmem:[#allocation6 + $0xd20] sm:$0xff]
    %v817 = vld [vmem:[#allocation6 + $0xd28] sm:$0xff]
    %v818 = vld [vmem:[#allocation6 + $0xd30] sm:$0xff]
    %v819 = vld [vmem:[#allocation6 + $0xd38] sm:$0xff]
    %v820 = vld [vmem:[#allocation6 + $0xd40] sm:$0xff]
    %v821 = vld [vmem:[#allocation6 + $0xd48] sm:$0xff]
    %v822 = vld [vmem:[#allocation6 + $0xd50] sm:$0xff]
    %v823 = vld [vmem:[#allocation6 + $0xd58] sm:$0xff]
    %v824 = vld [vmem:[#allocation6 + $0xd60] sm:$0xff]
    %v825 = vld [vmem:[#allocation6 + $0xd68] sm:$0xff]
    %v826 = vld [vmem:[#allocation6 + $0xd70] sm:$0xff]
    %v827 = vld [vmem:[#allocation6 + $0xd78] sm:$0xff]
    %v828 = vld [vmem:[#allocation6 + $0xd80] sm:$0xff]
    %v829 = vld [vmem:[#allocation6 + $0xd88] sm:$0xff]
    %v830 = vld [vmem:[#allocation6 + $0xd90] sm:$0xff]
    %v831 = vld [vmem:[#allocation6 + $0xd98] sm:$0xff]
    %v832 = vld [vmem:[#allocation6 + $0xda0] sm:$0xff]
    %v833 = vld [vmem:[#allocation6 + $0xda8] sm:$0xff]
    %v834 = vld [vmem:[#allocation6 + $0xdb0] sm:$0xff]
    %v835 = vld [vmem:[#allocation6 + $0xdb8] sm:$0xff]
    %v836 = vld [vmem:[#allocation6 + $0xdc0] sm:$0xff]
    %v837 = vld [vmem:[#allocation6 + $0xdc8] sm:$0xff]
    %v838 = vld [vmem:[#allocation6 + $0xdd0] sm:$0xff]
    %v839 = vld [vmem:[#allocation6 + $0xdd8] sm:$0xff]
    %v840 = vld [vmem:[#allocation6 + $0xde0] sm:$0xff]
    %v841 = vld [vmem:[#allocation6 + $0xde8] sm:$0xff]
    %v842 = vld [vmem:[#allocation6 + $0xdf0] sm:$0xff]
    %v843 = vld [vmem:[#allocation6 + $0xdf8] sm:$0xff]
    %v844 = vpack.c.b16 %v368, %v340
    %v845 = vpack.c.b16 %v369, %v341
    %v846 = vpack.c.b16 %v370, %v342
    %v847 = vpack.c.b16 %v371, %v343
    %v848 = vpack.c.b16 %v372, %v344
    %v849 = vpack.c.b16 %v373, %v345
    %v850 = vpack.c.b16 %v374, %v346
    %v851 = vpack.c.b16 %v375, %v347
    %v852 = vpack.c.b16 %v376, %v348
    %v853 = vpack.c.b16 %v377, %v349
    %v854 = vpack.c.b16 %v378, %v350
    %v855 = vpack.c.b16 %v379, %v351
    %v856 = vpack.c.b16 %v380, %v352
    %v857 = vpack.c.b16 %v381, %v353
    %v858 = vpack.c.b16 %v382, %v354
    %v859 = vpack.c.b16 %v383, %v355
    %v860 = vpack.c.b16 %v384, %v356
    %v861 = vpack.c.b16 %v385, %v357
    %v862 = vpack.c.b16 %v386, %v358
    %v863 = vpack.c.b16 %v387, %v359
    %v864 = vpack.c.b16 %v388, %v360
    %v865 = vpack.c.b16 %v389, %v361
    %v866 = vpack.c.b16 %v390, %v362
    %v867 = vpack.c.b16 %v391, %v363
    %v868 = vpack.c.b16 %v392, %v364
    %v869 = vpack.c.b16 %v393, %v365
    %v870 = vpack.c.b16 %v394, %v366
    %v871 = vpack.c.b16 %v395, %v367
    %v1348 = vunpack.c.l.b16 %v396
    %v1349 = vunpack.c.h.b16 %v396
    %v1350 = vunpack.c.l.b16 %v397
    %v1351 = vunpack.c.h.b16 %v397
    %v1352 = vunpack.c.l.b16 %v398
    %v1353 = vunpack.c.h.b16 %v398
    %v1354 = vunpack.c.l.b16 %v399
    %v1355 = vunpack.c.h.b16 %v399
    %v1356 = vunpack.c.l.b16 %v400
    %v1357 = vunpack.c.h.b16 %v400
    %v1358 = vunpack.c.l.b16 %v401
    %v1359 = vunpack.c.h.b16 %v401
    %v1360 = vunpack.c.l.b16 %v402
    %v1361 = vunpack.c.h.b16 %v402
    %v1362 = vunpack.c.l.b16 %v403
    %v1363 = vunpack.c.h.b16 %v403
    %v1364 = vunpack.c.l.b16 %v404
    %v1365 = vunpack.c.h.b16 %v404
    %v1366 = vunpack.c.l.b16 %v405
    %v1367 = vunpack.c.h.b16 %v405
    %v1368 = vunpack.c.l.b16 %v406
    %v1369 = vunpack.c.h.b16 %v406
    %v1370 = vunpack.c.l.b16 %v407
    %v1371 = vunpack.c.h.b16 %v407
    %v1372 = vunpack.c.l.b16 %v408
    %v1373 = vunpack.c.h.b16 %v408
    %v1374 = vunpack.c.l.b16 %v409
    %v1375 = vunpack.c.h.b16 %v409
    %v1376 = vunpack.c.l.b16 %v410
    %v1377 = vunpack.c.h.b16 %v410
    %v1378 = vunpack.c.l.b16 %v411
    %v1379 = vunpack.c.h.b16 %v411
    %v1380 = vunpack.c.l.b16 %v412
    %v1381 = vunpack.c.h.b16 %v412
    %v1382 = vunpack.c.l.b16 %v413
    %v1383 = vunpack.c.h.b16 %v413
    %v1384 = vunpack.c.l.b16 %v414
    %v1385 = vunpack.c.h.b16 %v414
    %v1386 = vunpack.c.l.b16 %v415
    %v1387 = vunpack.c.h.b16 %v415
    %v1388 = vunpack.c.l.b16 %v416
    %v1389 = vunpack.c.h.b16 %v416
    %v1390 = vunpack.c.l.b16 %v417
    %v1391 = vunpack.c.h.b16 %v417
    %v1392 = vunpack.c.l.b16 %v418
    %v1393 = vunpack.c.h.b16 %v418
    %v1394 = vunpack.c.l.b16 %v419
    %v1395 = vunpack.c.h.b16 %v419
    %v1396 = vunpack.c.l.b16 %v420
    %v1397 = vunpack.c.h.b16 %v420
    %v1398 = vunpack.c.l.b16 %v421
    %v1399 = vunpack.c.h.b16 %v421
    %v1400 = vunpack.c.l.b16 %v422
    %v1401 = vunpack.c.h.b16 %v422
    %v1402 = vunpack.c.l.b16 %v423
    %v1403 = vunpack.c.h.b16 %v423
    %v1404 = vunpack.c.l.b16 %v424
    %v1405 = vunpack.c.h.b16 %v424
    %v1406 = vunpack.c.l.b16 %v425
    %v1407 = vunpack.c.h.b16 %v425
    %v1408 = vunpack.c.l.b16 %v426
    %v1409 = vunpack.c.h.b16 %v426
    %v1410 = vunpack.c.l.b16 %v427
    %v1411 = vunpack.c.h.b16 %v427
    %v1412 = vunpack.c.l.b16 %v428
    %v1413 = vunpack.c.h.b16 %v428
    %v1414 = vunpack.c.l.b16 %v429
    %v1415 = vunpack.c.h.b16 %v429
    %v1416 = vunpack.c.l.b16 %v430
    %v1417 = vunpack.c.h.b16 %v430
    %v1418 = vunpack.c.l.b16 %v431
    %v1419 = vunpack.c.h.b16 %v431
    %v1420 = vunpack.c.l.b16 %v432
    %v1421 = vunpack.c.h.b16 %v432
    %v1422 = vunpack.c.l.b16 %v433
    %v1423 = vunpack.c.h.b16 %v433
    %v1424 = vunpack.c.l.b16 %v434
    %v1425 = vunpack.c.h.b16 %v434
    %v1426 = vunpack.c.l.b16 %v435
    %v1427 = vunpack.c.h.b16 %v435
    %v1428 = vunpack.c.l.b16 %v436
    %v1429 = vunpack.c.h.b16 %v436
    %v1430 = vunpack.c.l.b16 %v437
    %v1431 = vunpack.c.h.b16 %v437
    %v1432 = vunpack.c.l.b16 %v438
    %v1433 = vunpack.c.h.b16 %v438
    %v1434 = vunpack.c.l.b16 %v439
    %v1435 = vunpack.c.h.b16 %v439
    %v1436 = vunpack.c.l.b16 %v440
    %v1437 = vunpack.c.h.b16 %v440
    %v1438 = vunpack.c.l.b16 %v441
    %v1439 = vunpack.c.h.b16 %v441
    %v1440 = vunpack.c.l.b16 %v442
    %v1441 = vunpack.c.h.b16 %v442
    %v1442 = vunpack.c.l.b16 %v443
    %v1443 = vunpack.c.h.b16 %v443
    %v1444 = vunpack.c.l.b16 %v444
    %v1445 = vunpack.c.h.b16 %v444
    %v1446 = vunpack.c.l.b16 %v445
    %v1447 = vunpack.c.h.b16 %v445
    %v1448 = vunpack.c.l.b16 %v446
    %v1449 = vunpack.c.h.b16 %v446
    %v1450 = vunpack.c.l.b16 %v447
    %v1451 = vunpack.c.h.b16 %v447
    %v1452 = vunpack.c.l.b16 %v448
    %v1453 = vunpack.c.h.b16 %v448
    %v1454 = vunpack.c.l.b16 %v449
    %v1455 = vunpack.c.h.b16 %v449
    %v1456 = vunpack.c.l.b16 %v450
    %v1457 = vunpack.c.h.b16 %v450
    %v1458 = vunpack.c.l.b16 %v451
    %v1459 = vunpack.c.h.b16 %v451
    %v1460 = vunpack.c.l.b16 %v452
    %v1461 = vunpack.c.h.b16 %v452
    %v1462 = vunpack.c.l.b16 %v453
    %v1463 = vunpack.c.h.b16 %v453
    %v1464 = vunpack.c.l.b16 %v454
    %v1465 = vunpack.c.h.b16 %v454
    %v1466 = vunpack.c.l.b16 %v455
    %v1467 = vunpack.c.h.b16 %v455
    %v1468 = vunpack.c.l.b16 %v456
    %v1469 = vunpack.c.h.b16 %v456
    %v1470 = vunpack.c.l.b16 %v457
    %v1471 = vunpack.c.h.b16 %v457
    %v1472 = vunpack.c.l.b16 %v458
    %v1473 = vunpack.c.h.b16 %v458
    %v1474 = vunpack.c.l.b16 %v459
    %v1475 = vunpack.c.h.b16 %v459
    %v1476 = vunpack.c.l.b16 %v460
    %v1477 = vunpack.c.h.b16 %v460
    %v1478 = vunpack.c.l.b16 %v461
    %v1479 = vunpack.c.h.b16 %v461
    %v1480 = vunpack.c.l.b16 %v462
    %v1481 = vunpack.c.h.b16 %v462
    %v1482 = vunpack.c.l.b16 %v463
    %v1483 = vunpack.c.h.b16 %v463
    %v1484 = vunpack.c.l.b16 %v464
    %v1485 = vunpack.c.h.b16 %v464
    %v1486 = vunpack.c.l.b16 %v465
    %v1487 = vunpack.c.h.b16 %v465
    %v1488 = vunpack.c.l.b16 %v466
    %v1489 = vunpack.c.h.b16 %v466
    %v1490 = vunpack.c.l.b16 %v467
    %v1491 = vunpack.c.h.b16 %v467
    %v1492 = vunpack.c.l.b16 %v468
    %v1493 = vunpack.c.h.b16 %v468
    %v1494 = vunpack.c.l.b16 %v469
    %v1495 = vunpack.c.h.b16 %v469
    %v1496 = vunpack.c.l.b16 %v470
    %v1497 = vunpack.c.h.b16 %v470
    %v1498 = vunpack.c.l.b16 %v471
    %v1499 = vunpack.c.h.b16 %v471
    %v1500 = vunpack.c.l.b16 %v472
    %v1501 = vunpack.c.h.b16 %v472
    %v1502 = vunpack.c.l.b16 %v473
    %v1503 = vunpack.c.h.b16 %v473
    %v1504 = vunpack.c.l.b16 %v474
    %v1505 = vunpack.c.h.b16 %v474
    %v1506 = vunpack.c.l.b16 %v475
    %v1507 = vunpack.c.h.b16 %v475
    %v1508 = vunpack.c.l.b16 %v476
    %v1509 = vunpack.c.h.b16 %v476
    %v1510 = vunpack.c.l.b16 %v477
    %v1511 = vunpack.c.h.b16 %v477
    %v1512 = vunpack.c.l.b16 %v478
    %v1513 = vunpack.c.h.b16 %v478
    %v1514 = vunpack.c.l.b16 %v479
    %v1515 = vunpack.c.h.b16 %v479
    %v1516 = vunpack.c.l.b16 %v480
    %v1517 = vunpack.c.h.b16 %v480
    %v1518 = vunpack.c.l.b16 %v481
    %v1519 = vunpack.c.h.b16 %v481
    %v1520 = vunpack.c.l.b16 %v482
    %v1521 = vunpack.c.h.b16 %v482
    %v1522 = vunpack.c.l.b16 %v483
    %v1523 = vunpack.c.h.b16 %v483
    %v1524 = vunpack.c.l.b16 %v484
    %v1525 = vunpack.c.h.b16 %v484
    %v1526 = vunpack.c.l.b16 %v485
    %v1527 = vunpack.c.h.b16 %v485
    %v1528 = vunpack.c.l.b16 %v486
    %v1529 = vunpack.c.h.b16 %v486
    %v1530 = vunpack.c.l.b16 %v487
    %v1531 = vunpack.c.h.b16 %v487
    %v1532 = vunpack.c.l.b16 %v488
    %v1533 = vunpack.c.h.b16 %v488
    %v1534 = vunpack.c.l.b16 %v489
    %v1535 = vunpack.c.h.b16 %v489
    %v1536 = vunpack.c.l.b16 %v490
    %v1537 = vunpack.c.h.b16 %v490
    %v1538 = vunpack.c.l.b16 %v491
    %v1539 = vunpack.c.h.b16 %v491
    %v1540 = vunpack.c.l.b16 %v492
    %v1541 = vunpack.c.h.b16 %v492
    %v1542 = vunpack.c.l.b16 %v493
    %v1543 = vunpack.c.h.b16 %v493
    %v1544 = vunpack.c.l.b16 %v494
    %v1545 = vunpack.c.h.b16 %v494
    %v1546 = vunpack.c.l.b16 %v495
    %v1547 = vunpack.c.h.b16 %v495
    %v1548 = vunpack.c.l.b16 %v496
    %v1549 = vunpack.c.h.b16 %v496
    %v1550 = vunpack.c.l.b16 %v497
    %v1551 = vunpack.c.h.b16 %v497
    %v1552 = vunpack.c.l.b16 %v498
    %v1553 = vunpack.c.h.b16 %v498
    %v1554 = vunpack.c.l.b16 %v499
    %v1555 = vunpack.c.h.b16 %v499
    %v1556 = vunpack.c.l.b16 %v500
    %v1557 = vunpack.c.h.b16 %v500
    %v1558 = vunpack.c.l.b16 %v501
    %v1559 = vunpack.c.h.b16 %v501
    %v1560 = vunpack.c.l.b16 %v502
    %v1561 = vunpack.c.h.b16 %v502
    %v1562 = vunpack.c.l.b16 %v503
    %v1563 = vunpack.c.h.b16 %v503
    %v1564 = vunpack.c.l.b16 %v504
    %v1565 = vunpack.c.h.b16 %v504
    %v1566 = vunpack.c.l.b16 %v505
    %v1567 = vunpack.c.h.b16 %v505
    %v1568 = vunpack.c.l.b16 %v506
    %v1569 = vunpack.c.h.b16 %v506
    %v1570 = vunpack.c.l.b16 %v507
    %v1571 = vunpack.c.h.b16 %v507
    %v1572 = vunpack.c.l.b16 %v508
    %v1573 = vunpack.c.h.b16 %v508
    %v1574 = vunpack.c.l.b16 %v509
    %v1575 = vunpack.c.h.b16 %v509
    %v1576 = vunpack.c.l.b16 %v510
    %v1577 = vunpack.c.h.b16 %v510
    %v1578 = vunpack.c.l.b16 %v511
    %v1579 = vunpack.c.h.b16 %v511
    %v1580 = vunpack.c.l.b16 %v512
    %v1581 = vunpack.c.h.b16 %v512
    %v1582 = vunpack.c.l.b16 %v513
    %v1583 = vunpack.c.h.b16 %v513
    %v1584 = vunpack.c.l.b16 %v514
    %v1585 = vunpack.c.h.b16 %v514
    %v1586 = vunpack.c.l.b16 %v515
    %v1587 = vunpack.c.h.b16 %v515
    %v1588 = vunpack.c.l.b16 %v516
    %v1589 = vunpack.c.h.b16 %v516
    %v1590 = vunpack.c.l.b16 %v517
    %v1591 = vunpack.c.h.b16 %v517
    %v1592 = vunpack.c.l.b16 %v518
    %v1593 = vunpack.c.h.b16 %v518
    %v1594 = vunpack.c.l.b16 %v519
    %v1595 = vunpack.c.h.b16 %v519
    %v1596 = vunpack.c.l.b16 %v520
    %v1597 = vunpack.c.h.b16 %v520
    %v1598 = vunpack.c.l.b16 %v521
    %v1599 = vunpack.c.h.b16 %v521
    %v1600 = vunpack.c.l.b16 %v522
    %v1601 = vunpack.c.h.b16 %v522
    %v1602 = vunpack.c.l.b16 %v523
    %v1603 = vunpack.c.h.b16 %v523
    %v1604 = vunpack.c.l.b16 %v524
    %v1605 = vunpack.c.h.b16 %v524
    %v1606 = vunpack.c.l.b16 %v525
    %v1607 = vunpack.c.h.b16 %v525
    %v1608 = vunpack.c.l.b16 %v526
    %v1609 = vunpack.c.h.b16 %v526
    %v1610 = vunpack.c.l.b16 %v527
    %v1611 = vunpack.c.h.b16 %v527
    %v1612 = vunpack.c.l.b16 %v528
    %v1613 = vunpack.c.h.b16 %v528
    %v1614 = vunpack.c.l.b16 %v529
    %v1615 = vunpack.c.h.b16 %v529
    %v1616 = vunpack.c.l.b16 %v530
    %v1617 = vunpack.c.h.b16 %v530
    %v1618 = vunpack.c.l.b16 %v531
    %v1619 = vunpack.c.h.b16 %v531
    %v1620 = vunpack.c.l.b16 %v532
    %v1621 = vunpack.c.h.b16 %v532
    %v1622 = vunpack.c.l.b16 %v533
    %v1623 = vunpack.c.h.b16 %v533
    %v1624 = vunpack.c.l.b16 %v534
    %v1625 = vunpack.c.h.b16 %v534
    %v1626 = vunpack.c.l.b16 %v535
    %v1627 = vunpack.c.h.b16 %v535
    %v1628 = vunpack.c.l.b16 %v536
    %v1629 = vunpack.c.h.b16 %v536
    %v1630 = vunpack.c.l.b16 %v537
    %v1631 = vunpack.c.h.b16 %v537
    %v1632 = vunpack.c.l.b16 %v538
    %v1633 = vunpack.c.h.b16 %v538
    %v1634 = vunpack.c.l.b16 %v539
    %v1635 = vunpack.c.h.b16 %v539
    %v1636 = vunpack.c.l.b16 %v540
    %v1637 = vunpack.c.h.b16 %v540
    %v1638 = vunpack.c.l.b16 %v541
    %v1639 = vunpack.c.h.b16 %v541
    %v1640 = vunpack.c.l.b16 %v542
    %v1641 = vunpack.c.h.b16 %v542
    %v1642 = vunpack.c.l.b16 %v543
    %v1643 = vunpack.c.h.b16 %v543
    %v1644 = vunpack.c.l.b16 %v544
    %v1645 = vunpack.c.h.b16 %v544
    %v1646 = vunpack.c.l.b16 %v545
    %v1647 = vunpack.c.h.b16 %v545
    %v1648 = vunpack.c.l.b16 %v546
    %v1649 = vunpack.c.h.b16 %v546
    %v1650 = vunpack.c.l.b16 %v547
    %v1651 = vunpack.c.h.b16 %v547
    %v1652 = vunpack.c.l.b16 %v548
    %v1653 = vunpack.c.h.b16 %v548
    %v1654 = vunpack.c.l.b16 %v549
    %v1655 = vunpack.c.h.b16 %v549
    %v1656 = vunpack.c.l.b16 %v550
    %v1657 = vunpack.c.h.b16 %v550
    %v1658 = vunpack.c.l.b16 %v551
    %v1659 = vunpack.c.h.b16 %v551
    %v1660 = vunpack.c.l.b16 %v552
    %v1661 = vunpack.c.h.b16 %v552
    %v1662 = vunpack.c.l.b16 %v553
    %v1663 = vunpack.c.h.b16 %v553
    %v1664 = vunpack.c.l.b16 %v554
    %v1665 = vunpack.c.h.b16 %v554
    %v1666 = vunpack.c.l.b16 %v555
    %v1667 = vunpack.c.h.b16 %v555
    %v1668 = vunpack.c.l.b16 %v556
    %v1669 = vunpack.c.h.b16 %v556
    %v1670 = vunpack.c.l.b16 %v557
    %v1671 = vunpack.c.h.b16 %v557
    %v1672 = vunpack.c.l.b16 %v558
    %v1673 = vunpack.c.h.b16 %v558
    %v1674 = vunpack.c.l.b16 %v559
    %v1675 = vunpack.c.h.b16 %v559
    %v1676 = vunpack.c.l.b16 %v560
    %v1677 = vunpack.c.h.b16 %v560
    %v1678 = vunpack.c.l.b16 %v561
    %v1679 = vunpack.c.h.b16 %v561
    %v1680 = vunpack.c.l.b16 %v562
    %v1681 = vunpack.c.h.b16 %v562
    %v1682 = vunpack.c.l.b16 %v563
    %v1683 = vunpack.c.h.b16 %v563
    %v1684 = vunpack.c.l.b16 %v564
    %v1685 = vunpack.c.h.b16 %v564
    %v1686 = vunpack.c.l.b16 %v565
    %v1687 = vunpack.c.h.b16 %v565
    %v1688 = vunpack.c.l.b16 %v566
    %v1689 = vunpack.c.h.b16 %v566
    %v1690 = vunpack.c.l.b16 %v567
    %v1691 = vunpack.c.h.b16 %v567
    %v1692 = vunpack.c.l.b16 %v568
    %v1693 = vunpack.c.h.b16 %v568
    %v1694 = vunpack.c.l.b16 %v569
    %v1695 = vunpack.c.h.b16 %v569
    %v1696 = vunpack.c.l.b16 %v570
    %v1697 = vunpack.c.h.b16 %v570
    %v1698 = vunpack.c.l.b16 %v571
    %v1699 = vunpack.c.h.b16 %v571
    %v1700 = vunpack.c.l.b16 %v572
    %v1701 = vunpack.c.h.b16 %v572
    %v1702 = vunpack.c.l.b16 %v573
    %v1703 = vunpack.c.h.b16 %v573
    %v1704 = vunpack.c.l.b16 %v574
    %v1705 = vunpack.c.h.b16 %v574
    %v1706 = vunpack.c.l.b16 %v575
    %v1707 = vunpack.c.h.b16 %v575
    %v1708 = vunpack.c.l.b16 %v576
    %v1709 = vunpack.c.h.b16 %v576
    %v1710 = vunpack.c.l.b16 %v577
    %v1711 = vunpack.c.h.b16 %v577
    %v1712 = vunpack.c.l.b16 %v578
    %v1713 = vunpack.c.h.b16 %v578
    %v1714 = vunpack.c.l.b16 %v579
    %v1715 = vunpack.c.h.b16 %v579
    %v1716 = vunpack.c.l.b16 %v580
    %v1717 = vunpack.c.h.b16 %v580
    %v1718 = vunpack.c.l.b16 %v581
    %v1719 = vunpack.c.h.b16 %v581
    %v1720 = vunpack.c.l.b16 %v582
    %v1721 = vunpack.c.h.b16 %v582
    %v1722 = vunpack.c.l.b16 %v583
    %v1723 = vunpack.c.h.b16 %v583
    %v1724 = vunpack.c.l.b16 %v584
    %v1725 = vunpack.c.h.b16 %v584
    %v1726 = vunpack.c.l.b16 %v585
    %v1727 = vunpack.c.h.b16 %v585
    %v1728 = vunpack.c.l.b16 %v586
    %v1729 = vunpack.c.h.b16 %v586
    %v1730 = vunpack.c.l.b16 %v587
    %v1731 = vunpack.c.h.b16 %v587
    %v1732 = vunpack.c.l.b16 %v588
    %v1733 = vunpack.c.h.b16 %v588
    %v1734 = vunpack.c.l.b16 %v589
    %v1735 = vunpack.c.h.b16 %v589
    %v1736 = vunpack.c.l.b16 %v590
    %v1737 = vunpack.c.h.b16 %v590
    %v1738 = vunpack.c.l.b16 %v591
    %v1739 = vunpack.c.h.b16 %v591
    %v1740 = vunpack.c.l.b16 %v592
    %v1741 = vunpack.c.h.b16 %v592
    %v1742 = vunpack.c.l.b16 %v593
    %v1743 = vunpack.c.h.b16 %v593
    %v1744 = vunpack.c.l.b16 %v594
    %v1745 = vunpack.c.h.b16 %v594
    %v1746 = vunpack.c.l.b16 %v595
    %v1747 = vunpack.c.h.b16 %v595
    %v1748 = vunpack.c.l.b16 %v596
    %v1749 = vunpack.c.h.b16 %v596
    %v1750 = vunpack.c.l.b16 %v597
    %v1751 = vunpack.c.h.b16 %v597
    %v1752 = vunpack.c.l.b16 %v598
    %v1753 = vunpack.c.h.b16 %v598
    %v1754 = vunpack.c.l.b16 %v599
    %v1755 = vunpack.c.h.b16 %v599
    %v1756 = vunpack.c.l.b16 %v600
    %v1757 = vunpack.c.h.b16 %v600
    %v1758 = vunpack.c.l.b16 %v601
    %v1759 = vunpack.c.h.b16 %v601
    %v1760 = vunpack.c.l.b16 %v602
    %v1761 = vunpack.c.h.b16 %v602
    %v1762 = vunpack.c.l.b16 %v603
    %v1763 = vunpack.c.h.b16 %v603
    %v1764 = vunpack.c.l.b16 %v604
    %v1765 = vunpack.c.h.b16 %v604
    %v1766 = vunpack.c.l.b16 %v605
    %v1767 = vunpack.c.h.b16 %v605
    %v1768 = vunpack.c.l.b16 %v606
    %v1769 = vunpack.c.h.b16 %v606
    %v1770 = vunpack.c.l.b16 %v607
    %v1771 = vunpack.c.h.b16 %v607
    %v1772 = vunpack.c.l.b16 %v608
    %v1773 = vunpack.c.h.b16 %v608
    %v1774 = vunpack.c.l.b16 %v609
    %v1775 = vunpack.c.h.b16 %v609
    %v1776 = vunpack.c.l.b16 %v610
    %v1777 = vunpack.c.h.b16 %v610
    %v1778 = vunpack.c.l.b16 %v611
    %v1779 = vunpack.c.h.b16 %v611
    %v1780 = vunpack.c.l.b16 %v612
    %v1781 = vunpack.c.h.b16 %v612
    %v1782 = vunpack.c.l.b16 %v613
    %v1783 = vunpack.c.h.b16 %v613
    %v1784 = vunpack.c.l.b16 %v614
    %v1785 = vunpack.c.h.b16 %v614
    %v1786 = vunpack.c.l.b16 %v615
    %v1787 = vunpack.c.h.b16 %v615
    %v1788 = vunpack.c.l.b16 %v616
    %v1789 = vunpack.c.h.b16 %v616
    %v1790 = vunpack.c.l.b16 %v617
    %v1791 = vunpack.c.h.b16 %v617
    %v1792 = vunpack.c.l.b16 %v618
    %v1793 = vunpack.c.h.b16 %v618
    %v1794 = vunpack.c.l.b16 %v619
    %v1795 = vunpack.c.h.b16 %v619
    %v1796 = vunpack.c.l.b16 %v620
    %v1797 = vunpack.c.h.b16 %v620
    %v1798 = vunpack.c.l.b16 %v621
    %v1799 = vunpack.c.h.b16 %v621
    %v1800 = vunpack.c.l.b16 %v622
    %v1801 = vunpack.c.h.b16 %v622
    %v1802 = vunpack.c.l.b16 %v623
    %v1803 = vunpack.c.h.b16 %v623
    %v1804 = vunpack.c.l.b16 %v624
    %v1805 = vunpack.c.h.b16 %v624
    %v1806 = vunpack.c.l.b16 %v625
    %v1807 = vunpack.c.h.b16 %v625
    %v1808 = vunpack.c.l.b16 %v626
    %v1809 = vunpack.c.h.b16 %v626
    %v1810 = vunpack.c.l.b16 %v627
    %v1811 = vunpack.c.h.b16 %v627
    %v1812 = vunpack.c.l.b16 %v628
    %v1813 = vunpack.c.h.b16 %v628
    %v1814 = vunpack.c.l.b16 %v629
    %v1815 = vunpack.c.h.b16 %v629
    %v1816 = vunpack.c.l.b16 %v630
    %v1817 = vunpack.c.h.b16 %v630
    %v1818 = vunpack.c.l.b16 %v631
    %v1819 = vunpack.c.h.b16 %v631
    %v1820 = vunpack.c.l.b16 %v632
    %v1821 = vunpack.c.h.b16 %v632
    %v1822 = vunpack.c.l.b16 %v633
    %v1823 = vunpack.c.h.b16 %v633
    %v1824 = vunpack.c.l.b16 %v634
    %v1825 = vunpack.c.h.b16 %v634
    %v1826 = vunpack.c.l.b16 %v635
    %v1827 = vunpack.c.h.b16 %v635
    %v1828 = vunpack.c.l.b16 %v636
    %v1829 = vunpack.c.h.b16 %v636
    %v1830 = vunpack.c.l.b16 %v637
    %v1831 = vunpack.c.h.b16 %v637
    %v1832 = vunpack.c.l.b16 %v638
    %v1833 = vunpack.c.h.b16 %v638
    %v1834 = vunpack.c.l.b16 %v639
    %v1835 = vunpack.c.h.b16 %v639
    %v1836 = vunpack.c.l.b16 %v640
    %v1837 = vunpack.c.h.b16 %v640
    %v1838 = vunpack.c.l.b16 %v641
    %v1839 = vunpack.c.h.b16 %v641
    %v1840 = vunpack.c.l.b16 %v642
    %v1841 = vunpack.c.h.b16 %v642
    %v1842 = vunpack.c.l.b16 %v643
    %v1843 = vunpack.c.h.b16 %v643
    %v1844 = vunpack.c.l.b16 %v644
    %v1845 = vunpack.c.h.b16 %v644
    %v1846 = vunpack.c.l.b16 %v645
    %v1847 = vunpack.c.h.b16 %v645
    %v1848 = vunpack.c.l.b16 %v646
    %v1849 = vunpack.c.h.b16 %v646
    %v1850 = vunpack.c.l.b16 %v647
    %v1851 = vunpack.c.h.b16 %v647
    %v1852 = vunpack.c.l.b16 %v648
    %v1853 = vunpack.c.h.b16 %v648
    %v1854 = vunpack.c.l.b16 %v649
    %v1855 = vunpack.c.h.b16 %v649
    %v1856 = vunpack.c.l.b16 %v650
    %v1857 = vunpack.c.h.b16 %v650
    %v1858 = vunpack.c.l.b16 %v651
    %v1859 = vunpack.c.h.b16 %v651
    %v1860 = vunpack.c.l.b16 %v652
    %v1861 = vunpack.c.h.b16 %v652
    %v1862 = vunpack.c.l.b16 %v653
    %v1863 = vunpack.c.h.b16 %v653
    %v1864 = vunpack.c.l.b16 %v654
    %v1865 = vunpack.c.h.b16 %v654
    %v1866 = vunpack.c.l.b16 %v655
    %v1867 = vunpack.c.h.b16 %v655
    %v1868 = vunpack.c.l.b16 %v656
    %v1869 = vunpack.c.h.b16 %v656
    %v1870 = vunpack.c.l.b16 %v657
    %v1871 = vunpack.c.h.b16 %v657
    %v1872 = vunpack.c.l.b16 %v658
    %v1873 = vunpack.c.h.b16 %v658
    %v1874 = vunpack.c.l.b16 %v659
    %v1875 = vunpack.c.h.b16 %v659
    %v1876 = vunpack.c.l.b16 %v660
    %v1877 = vunpack.c.h.b16 %v660
    %v1878 = vunpack.c.l.b16 %v661
    %v1879 = vunpack.c.h.b16 %v661
    %v1880 = vunpack.c.l.b16 %v662
    %v1881 = vunpack.c.h.b16 %v662
    %v1882 = vunpack.c.l.b16 %v663
    %v1883 = vunpack.c.h.b16 %v663
    %v1884 = vunpack.c.l.b16 %v664
    %v1885 = vunpack.c.h.b16 %v664
    %v1886 = vunpack.c.l.b16 %v665
    %v1887 = vunpack.c.h.b16 %v665
    %v1888 = vunpack.c.l.b16 %v666
    %v1889 = vunpack.c.h.b16 %v666
    %v1890 = vunpack.c.l.b16 %v667
    %v1891 = vunpack.c.h.b16 %v667
    %v1892 = vunpack.c.l.b16 %v668
    %v1893 = vunpack.c.h.b16 %v668
    %v1894 = vunpack.c.l.b16 %v669
    %v1895 = vunpack.c.h.b16 %v669
    %v1896 = vunpack.c.l.b16 %v670
    %v1897 = vunpack.c.h.b16 %v670
    %v1898 = vunpack.c.l.b16 %v671
    %v1899 = vunpack.c.h.b16 %v671
    %v1900 = vunpack.c.l.b16 %v672
    %v1901 = vunpack.c.h.b16 %v672
    %v1902 = vunpack.c.l.b16 %v673
    %v1903 = vunpack.c.h.b16 %v673
    %v1904 = vunpack.c.l.b16 %v674
    %v1905 = vunpack.c.h.b16 %v674
    %v1906 = vunpack.c.l.b16 %v675
    %v1907 = vunpack.c.h.b16 %v675
    %v1908 = vunpack.c.l.b16 %v676
    %v1909 = vunpack.c.h.b16 %v676
    %v1910 = vunpack.c.l.b16 %v677
    %v1911 = vunpack.c.h.b16 %v677
    %v1912 = vunpack.c.l.b16 %v678
    %v1913 = vunpack.c.h.b16 %v678
    %v1914 = vunpack.c.l.b16 %v679
    %v1915 = vunpack.c.h.b16 %v679
    %v1916 = vunpack.c.l.b16 %v680
    %v1917 = vunpack.c.h.b16 %v680
    %v1918 = vunpack.c.l.b16 %v681
    %v1919 = vunpack.c.h.b16 %v681
    %v1920 = vunpack.c.l.b16 %v682
    %v1921 = vunpack.c.h.b16 %v682
    %v1922 = vunpack.c.l.b16 %v683
    %v1923 = vunpack.c.h.b16 %v683
    %v1924 = vunpack.c.l.b16 %v684
    %v1925 = vunpack.c.h.b16 %v684
    %v1926 = vunpack.c.l.b16 %v685
    %v1927 = vunpack.c.h.b16 %v685
    %v1928 = vunpack.c.l.b16 %v686
    %v1929 = vunpack.c.h.b16 %v686
    %v1930 = vunpack.c.l.b16 %v687
    %v1931 = vunpack.c.h.b16 %v687
    %v1932 = vunpack.c.l.b16 %v688
    %v1933 = vunpack.c.h.b16 %v688
    %v1934 = vunpack.c.l.b16 %v689
    %v1935 = vunpack.c.h.b16 %v689
    %v1936 = vunpack.c.l.b16 %v690
    %v1937 = vunpack.c.h.b16 %v690
    %v1938 = vunpack.c.l.b16 %v691
    %v1939 = vunpack.c.h.b16 %v691
    %v1940 = vunpack.c.l.b16 %v692
    %v1941 = vunpack.c.h.b16 %v692
    %v1942 = vunpack.c.l.b16 %v693
    %v1943 = vunpack.c.h.b16 %v693
    %v1944 = vunpack.c.l.b16 %v694
    %v1945 = vunpack.c.h.b16 %v694
    %v1946 = vunpack.c.l.b16 %v695
    %v1947 = vunpack.c.h.b16 %v695
    %v1948 = vunpack.c.l.b16 %v696
    %v1949 = vunpack.c.h.b16 %v696
    %v1950 = vunpack.c.l.b16 %v697
    %v1951 = vunpack.c.h.b16 %v697
    %v1952 = vunpack.c.l.b16 %v698
    %v1953 = vunpack.c.h.b16 %v698
    %v1954 = vunpack.c.l.b16 %v699
    %v1955 = vunpack.c.h.b16 %v699
    %v1956 = vunpack.c.l.b16 %v700
    %v1957 = vunpack.c.h.b16 %v700
    %v1958 = vunpack.c.l.b16 %v701
    %v1959 = vunpack.c.h.b16 %v701
    %v1960 = vunpack.c.l.b16 %v702
    %v1961 = vunpack.c.h.b16 %v702
    %v1962 = vunpack.c.l.b16 %v703
    %v1963 = vunpack.c.h.b16 %v703
    %v1964 = vunpack.c.l.b16 %v704
    %v1965 = vunpack.c.h.b16 %v704
    %v1966 = vunpack.c.l.b16 %v705
    %v1967 = vunpack.c.h.b16 %v705
    %v1968 = vunpack.c.l.b16 %v706
    %v1969 = vunpack.c.h.b16 %v706
    %v1970 = vunpack.c.l.b16 %v707
    %v1971 = vunpack.c.h.b16 %v707
    %v1972 = vunpack.c.l.b16 %v708
    %v1973 = vunpack.c.h.b16 %v708
    %v1974 = vunpack.c.l.b16 %v709
    %v1975 = vunpack.c.h.b16 %v709
    %v1976 = vunpack.c.l.b16 %v710
    %v1977 = vunpack.c.h.b16 %v710
    %v1978 = vunpack.c.l.b16 %v711
    %v1979 = vunpack.c.h.b16 %v711
    %v1980 = vunpack.c.l.b16 %v712
    %v1981 = vunpack.c.h.b16 %v712
    %v1982 = vunpack.c.l.b16 %v713
    %v1983 = vunpack.c.h.b16 %v713
    %v1984 = vunpack.c.l.b16 %v714
    %v1985 = vunpack.c.h.b16 %v714
    %v1986 = vunpack.c.l.b16 %v715
    %v1987 = vunpack.c.h.b16 %v715
    %v1988 = vunpack.c.l.b16 %v716
    %v1989 = vunpack.c.h.b16 %v716
    %v1990 = vunpack.c.l.b16 %v717
    %v1991 = vunpack.c.h.b16 %v717
    %v1992 = vunpack.c.l.b16 %v718
    %v1993 = vunpack.c.h.b16 %v718
    %v1994 = vunpack.c.l.b16 %v719
    %v1995 = vunpack.c.h.b16 %v719
    %v1996 = vunpack.c.l.b16 %v720
    %v1997 = vunpack.c.h.b16 %v720
    %v1998 = vunpack.c.l.b16 %v721
    %v1999 = vunpack.c.h.b16 %v721
    %v2000 = vunpack.c.l.b16 %v722
    %v2001 = vunpack.c.h.b16 %v722
    %v2002 = vunpack.c.l.b16 %v723
    %v2003 = vunpack.c.h.b16 %v723
    %v2004 = vunpack.c.l.b16 %v724
    %v2005 = vunpack.c.h.b16 %v724
    %v2006 = vunpack.c.l.b16 %v725
    %v2007 = vunpack.c.h.b16 %v725
    %v2008 = vunpack.c.l.b16 %v726
    %v2009 = vunpack.c.h.b16 %v726
    %v2010 = vunpack.c.l.b16 %v727
    %v2011 = vunpack.c.h.b16 %v727
    %v2012 = vunpack.c.l.b16 %v728
    %v2013 = vunpack.c.h.b16 %v728
    %v2014 = vunpack.c.l.b16 %v729
    %v2015 = vunpack.c.h.b16 %v729
    %v2016 = vunpack.c.l.b16 %v730
    %v2017 = vunpack.c.h.b16 %v730
    %v2018 = vunpack.c.l.b16 %v731
    %v2019 = vunpack.c.h.b16 %v731
    %v2020 = vunpack.c.l.b16 %v732
    %v2021 = vunpack.c.h.b16 %v732
    %v2022 = vunpack.c.l.b16 %v733
    %v2023 = vunpack.c.h.b16 %v733
    %v2024 = vunpack.c.l.b16 %v734
    %v2025 = vunpack.c.h.b16 %v734
    %v2026 = vunpack.c.l.b16 %v735
    %v2027 = vunpack.c.h.b16 %v735
    %v2028 = vunpack.c.l.b16 %v736
    %v2029 = vunpack.c.h.b16 %v736
    %v2030 = vunpack.c.l.b16 %v737
    %v2031 = vunpack.c.h.b16 %v737
    %v2032 = vunpack.c.l.b16 %v738
    %v2033 = vunpack.c.h.b16 %v738
    %v2034 = vunpack.c.l.b16 %v739
    %v2035 = vunpack.c.h.b16 %v739
    %v2036 = vunpack.c.l.b16 %v740
    %v2037 = vunpack.c.h.b16 %v740
    %v2038 = vunpack.c.l.b16 %v741
    %v2039 = vunpack.c.h.b16 %v741
    %v2040 = vunpack.c.l.b16 %v742
    %v2041 = vunpack.c.h.b16 %v742
    %v2042 = vunpack.c.l.b16 %v743
    %v2043 = vunpack.c.h.b16 %v743
    %v2044 = vunpack.c.l.b16 %v744
    %v2045 = vunpack.c.h.b16 %v744
    %v2046 = vunpack.c.l.b16 %v745
    %v2047 = vunpack.c.h.b16 %v745
    %v2048 = vunpack.c.l.b16 %v746
    %v2049 = vunpack.c.h.b16 %v746
    %v2050 = vunpack.c.l.b16 %v747
    %v2051 = vunpack.c.h.b16 %v747
    %v2052 = vunpack.c.l.b16 %v748
    %v2053 = vunpack.c.h.b16 %v748
    %v2054 = vunpack.c.l.b16 %v749
    %v2055 = vunpack.c.h.b16 %v749
    %v2056 = vunpack.c.l.b16 %v750
    %v2057 = vunpack.c.h.b16 %v750
    %v2058 = vunpack.c.l.b16 %v751
    %v2059 = vunpack.c.h.b16 %v751
    %v2060 = vunpack.c.l.b16 %v752
    %v2061 = vunpack.c.h.b16 %v752
    %v2062 = vunpack.c.l.b16 %v753
    %v2063 = vunpack.c.h.b16 %v753
    %v2064 = vunpack.c.l.b16 %v754
    %v2065 = vunpack.c.h.b16 %v754
    %v2066 = vunpack.c.l.b16 %v755
    %v2067 = vunpack.c.h.b16 %v755
    %v2068 = vunpack.c.l.b16 %v756
    %v2069 = vunpack.c.h.b16 %v756
    %v2070 = vunpack.c.l.b16 %v757
    %v2071 = vunpack.c.h.b16 %v757
    %v2072 = vunpack.c.l.b16 %v758
    %v2073 = vunpack.c.h.b16 %v758
    %v2074 = vunpack.c.l.b16 %v759
    %v2075 = vunpack.c.h.b16 %v759
    %v2076 = vunpack.c.l.b16 %v760
    %v2077 = vunpack.c.h.b16 %v760
    %v2078 = vunpack.c.l.b16 %v761
    %v2079 = vunpack.c.h.b16 %v761
    %v2080 = vunpack.c.l.b16 %v762
    %v2081 = vunpack.c.h.b16 %v762
    %v2082 = vunpack.c.l.b16 %v763
    %v2083 = vunpack.c.h.b16 %v763
    %v2084 = vunpack.c.l.b16 %v764
    %v2085 = vunpack.c.h.b16 %v764
    %v2086 = vunpack.c.l.b16 %v765
    %v2087 = vunpack.c.h.b16 %v765
    %v2088 = vunpack.c.l.b16 %v766
    %v2089 = vunpack.c.h.b16 %v766
    %v2090 = vunpack.c.l.b16 %v767
    %v2091 = vunpack.c.h.b16 %v767
    %v2092 = vunpack.c.l.b16 %v768
    %v2093 = vunpack.c.h.b16 %v768
    %v2094 = vunpack.c.l.b16 %v769
    %v2095 = vunpack.c.h.b16 %v769
    %v2096 = vunpack.c.l.b16 %v770
    %v2097 = vunpack.c.h.b16 %v770
    %v2098 = vunpack.c.l.b16 %v771
    %v2099 = vunpack.c.h.b16 %v771
    %v2100 = vunpack.c.l.b16 %v772
    %v2101 = vunpack.c.h.b16 %v772
    %v2102 = vunpack.c.l.b16 %v773
    %v2103 = vunpack.c.h.b16 %v773
    %v2104 = vunpack.c.l.b16 %v774
    %v2105 = vunpack.c.h.b16 %v774
    %v2106 = vunpack.c.l.b16 %v775
    %v2107 = vunpack.c.h.b16 %v775
    %v2108 = vunpack.c.l.b16 %v776
    %v2109 = vunpack.c.h.b16 %v776
    %v2110 = vunpack.c.l.b16 %v777
    %v2111 = vunpack.c.h.b16 %v777
    %v2112 = vunpack.c.l.b16 %v778
    %v2113 = vunpack.c.h.b16 %v778
    %v2114 = vunpack.c.l.b16 %v779
    %v2115 = vunpack.c.h.b16 %v779
    %v2116 = vunpack.c.l.b16 %v780
    %v2117 = vunpack.c.h.b16 %v780
    %v2118 = vunpack.c.l.b16 %v781
    %v2119 = vunpack.c.h.b16 %v781
    %v2120 = vunpack.c.l.b16 %v782
    %v2121 = vunpack.c.h.b16 %v782
    %v2122 = vunpack.c.l.b16 %v783
    %v2123 = vunpack.c.h.b16 %v783
    %v2124 = vunpack.c.l.b16 %v784
    %v2125 = vunpack.c.h.b16 %v784
    %v2126 = vunpack.c.l.b16 %v785
    %v2127 = vunpack.c.h.b16 %v785
    %v2128 = vunpack.c.l.b16 %v786
    %v2129 = vunpack.c.h.b16 %v786
    %v2130 = vunpack.c.l.b16 %v787
    %v2131 = vunpack.c.h.b16 %v787
    %v2132 = vunpack.c.l.b16 %v788
    %v2133 = vunpack.c.h.b16 %v788
    %v2134 = vunpack.c.l.b16 %v789
    %v2135 = vunpack.c.h.b16 %v789
    %v2136 = vunpack.c.l.b16 %v790
    %v2137 = vunpack.c.h.b16 %v790
    %v2138 = vunpack.c.l.b16 %v791
    %v2139 = vunpack.c.h.b16 %v791
    %v2140 = vunpack.c.l.b16 %v792
    %v2141 = vunpack.c.h.b16 %v792
    %v2142 = vunpack.c.l.b16 %v793
    %v2143 = vunpack.c.h.b16 %v793
    %v2144 = vunpack.c.l.b16 %v794
    %v2145 = vunpack.c.h.b16 %v794
    %v2146 = vunpack.c.l.b16 %v795
    %v2147 = vunpack.c.h.b16 %v795
    %v2148 = vunpack.c.l.b16 %v796
    %v2149 = vunpack.c.h.b16 %v796
    %v2150 = vunpack.c.l.b16 %v797
    %v2151 = vunpack.c.h.b16 %v797
    %v2152 = vunpack.c.l.b16 %v798
    %v2153 = vunpack.c.h.b16 %v798
    %v2154 = vunpack.c.l.b16 %v799
    %v2155 = vunpack.c.h.b16 %v799
    %v2156 = vunpack.c.l.b16 %v800
    %v2157 = vunpack.c.h.b16 %v800
    %v2158 = vunpack.c.l.b16 %v801
    %v2159 = vunpack.c.h.b16 %v801
    %v2160 = vunpack.c.l.b16 %v802
    %v2161 = vunpack.c.h.b16 %v802
    %v2162 = vunpack.c.l.b16 %v803
    %v2163 = vunpack.c.h.b16 %v803
    %v2164 = vunpack.c.l.b16 %v804
    %v2165 = vunpack.c.h.b16 %v804
    %v2166 = vunpack.c.l.b16 %v805
    %v2167 = vunpack.c.h.b16 %v805
    %v2168 = vunpack.c.l.b16 %v806
    %v2169 = vunpack.c.h.b16 %v806
    %v2170 = vunpack.c.l.b16 %v807
    %v2171 = vunpack.c.h.b16 %v807
    %v2172 = vunpack.c.l.b16 %v808
    %v2173 = vunpack.c.h.b16 %v808
    %v2174 = vunpack.c.l.b16 %v809
    %v2175 = vunpack.c.h.b16 %v809
    %v2176 = vunpack.c.l.b16 %v810
    %v2177 = vunpack.c.h.b16 %v810
    %v2178 = vunpack.c.l.b16 %v811
    %v2179 = vunpack.c.h.b16 %v811
    %v2180 = vunpack.c.l.b16 %v812
    %v2181 = vunpack.c.h.b16 %v812
    %v2182 = vunpack.c.l.b16 %v813
    %v2183 = vunpack.c.h.b16 %v813
    %v2184 = vunpack.c.l.b16 %v814
    %v2185 = vunpack.c.h.b16 %v814
    %v2186 = vunpack.c.l.b16 %v815
    %v2187 = vunpack.c.h.b16 %v815
    %v2188 = vunpack.c.l.b16 %v816
    %v2189 = vunpack.c.h.b16 %v816
    %v2190 = vunpack.c.l.b16 %v817
    %v2191 = vunpack.c.h.b16 %v817
    %v2192 = vunpack.c.l.b16 %v818
    %v2193 = vunpack.c.h.b16 %v818
    %v2194 = vunpack.c.l.b16 %v819
    %v2195 = vunpack.c.h.b16 %v819
    %v2196 = vunpack.c.l.b16 %v820
    %v2197 = vunpack.c.h.b16 %v820
    %v2198 = vunpack.c.l.b16 %v821
    %v2199 = vunpack.c.h.b16 %v821
    %v2200 = vunpack.c.l.b16 %v822
    %v2201 = vunpack.c.h.b16 %v822
    %v2202 = vunpack.c.l.b16 %v823
    %v2203 = vunpack.c.h.b16 %v823
    %v2204 = vunpack.c.l.b16 %v824
    %v2205 = vunpack.c.h.b16 %v824
    %v2206 = vunpack.c.l.b16 %v825
    %v2207 = vunpack.c.h.b16 %v825
    %v2208 = vunpack.c.l.b16 %v826
    %v2209 = vunpack.c.h.b16 %v826
    %v2210 = vunpack.c.l.b16 %v827
    %v2211 = vunpack.c.h.b16 %v827
    %v2212 = vunpack.c.l.b16 %v828
    %v2213 = vunpack.c.h.b16 %v828
    %v2214 = vunpack.c.l.b16 %v829
    %v2215 = vunpack.c.h.b16 %v829
    %v2216 = vunpack.c.l.b16 %v830
    %v2217 = vunpack.c.h.b16 %v830
    %v2218 = vunpack.c.l.b16 %v831
    %v2219 = vunpack.c.h.b16 %v831
    %v2220 = vunpack.c.l.b16 %v832
    %v2221 = vunpack.c.h.b16 %v832
    %v2222 = vunpack.c.l.b16 %v833
    %v2223 = vunpack.c.h.b16 %v833
    %v2224 = vunpack.c.l.b16 %v834
    %v2225 = vunpack.c.h.b16 %v834
    %v2226 = vunpack.c.l.b16 %v835
    %v2227 = vunpack.c.h.b16 %v835
    %v2228 = vunpack.c.l.b16 %v836
    %v2229 = vunpack.c.h.b16 %v836
    %v2230 = vunpack.c.l.b16 %v837
    %v2231 = vunpack.c.h.b16 %v837
    %v2232 = vunpack.c.l.b16 %v838
    %v2233 = vunpack.c.h.b16 %v838
    %v2234 = vunpack.c.l.b16 %v839
    %v2235 = vunpack.c.h.b16 %v839
    %v2236 = vunpack.c.l.b16 %v840
    %v2237 = vunpack.c.h.b16 %v840
    %v2238 = vunpack.c.l.b16 %v841
    %v2239 = vunpack.c.h.b16 %v841
    %v2240 = vunpack.c.l.b16 %v842
    %v2241 = vunpack.c.h.b16 %v842
    %v2242 = vunpack.c.l.b16 %v843
    %v2243 = vunpack.c.h.b16 %v843
    %v2244 = vpack.c.b16 %v1350, %v1348
    %v2245 = vpack.c.b16 %v1351, %v1349
    %v2246 = vpack.c.b16 %v1354, %v1352
    %v2247 = vpack.c.b16 %v1355, %v1353
    %v2248 = vpack.c.b16 %v1358, %v1356
    %v2249 = vpack.c.b16 %v1359, %v1357
    %v2250 = vpack.c.b16 %v1362, %v1360
    %v2251 = vpack.c.b16 %v1363, %v1361
    %v2252 = vpack.c.b16 %v1366, %v1364
    %v2253 = vpack.c.b16 %v1367, %v1365
    %v2254 = vpack.c.b16 %v1370, %v1368
    %v2255 = vpack.c.b16 %v1371, %v1369
    %v2256 = vpack.c.b16 %v1374, %v1372
    %v2257 = vpack.c.b16 %v1375, %v1373
    %v2258 = vpack.c.b16 %v1378, %v1376
    %v2259 = vpack.c.b16 %v1379, %v1377
    %v2260 = vpack.c.b16 %v1382, %v1380
    %v2261 = vpack.c.b16 %v1383, %v1381
    %v2262 = vpack.c.b16 %v1386, %v1384
    %v2263 = vpack.c.b16 %v1387, %v1385
    %v2264 = vpack.c.b16 %v1390, %v1388
    %v2265 = vpack.c.b16 %v1391, %v1389
    %v2266 = vpack.c.b16 %v1394, %v1392
    %v2267 = vpack.c.b16 %v1395, %v1393
    %v2268 = vpack.c.b16 %v1398, %v1396
    %v2269 = vpack.c.b16 %v1399, %v1397
    %v2270 = vpack.c.b16 %v1402, %v1400
    %v2271 = vpack.c.b16 %v1403, %v1401
    %v2272 = vpack.c.b16 %v1406, %v1404
    %v2273 = vpack.c.b16 %v1407, %v1405
    %v2274 = vpack.c.b16 %v1410, %v1408
    %v2275 = vpack.c.b16 %v1411, %v1409
    %v2276 = vpack.c.b16 %v1414, %v1412
    %v2277 = vpack.c.b16 %v1415, %v1413
    %v2278 = vpack.c.b16 %v1418, %v1416
    %v2279 = vpack.c.b16 %v1419, %v1417
    %v2280 = vpack.c.b16 %v1422, %v1420
    %v2281 = vpack.c.b16 %v1423, %v1421
    %v2282 = vpack.c.b16 %v1426, %v1424
    %v2283 = vpack.c.b16 %v1427, %v1425
    %v2284 = vpack.c.b16 %v1430, %v1428
    %v2285 = vpack.c.b16 %v1431, %v1429
    %v2286 = vpack.c.b16 %v1434, %v1432
    %v2287 = vpack.c.b16 %v1435, %v1433
    %v2288 = vpack.c.b16 %v1438, %v1436
    %v2289 = vpack.c.b16 %v1439, %v1437
    %v2290 = vpack.c.b16 %v1442, %v1440
    %v2291 = vpack.c.b16 %v1443, %v1441
    %v2292 = vpack.c.b16 %v1446, %v1444
    %v2293 = vpack.c.b16 %v1447, %v1445
    %v2294 = vpack.c.b16 %v1450, %v1448
    %v2295 = vpack.c.b16 %v1451, %v1449
    %v2296 = vpack.c.b16 %v1454, %v1452
    %v2297 = vpack.c.b16 %v1455, %v1453
    %v2298 = vpack.c.b16 %v1458, %v1456
    %v2299 = vpack.c.b16 %v1459, %v1457
    %v2300 = vpack.c.b16 %v1462, %v1460
    %v2301 = vpack.c.b16 %v1463, %v1461
    %v2302 = vpack.c.b16 %v1466, %v1464
    %v2303 = vpack.c.b16 %v1467, %v1465
    %v2304 = vpack.c.b16 %v1470, %v1468
    %v2305 = vpack.c.b16 %v1471, %v1469
    %v2306 = vpack.c.b16 %v1474, %v1472
    %v2307 = vpack.c.b16 %v1475, %v1473
    %v2308 = vpack.c.b16 %v1478, %v1476
    %v2309 = vpack.c.b16 %v1479, %v1477
    %v2310 = vpack.c.b16 %v1482, %v1480
    %v2311 = vpack.c.b16 %v1483, %v1481
    %v2312 = vpack.c.b16 %v1486, %v1484
    %v2313 = vpack.c.b16 %v1487, %v1485
    %v2314 = vpack.c.b16 %v1490, %v1488
    %v2315 = vpack.c.b16 %v1491, %v1489
    %v2316 = vpack.c.b16 %v1494, %v1492
    %v2317 = vpack.c.b16 %v1495, %v1493
    %v2318 = vpack.c.b16 %v1498, %v1496
    %v2319 = vpack.c.b16 %v1499, %v1497
    %v2320 = vpack.c.b16 %v1502, %v1500
    %v2321 = vpack.c.b16 %v1503, %v1501
    %v2322 = vpack.c.b16 %v1506, %v1504
    %v2323 = vpack.c.b16 %v1507, %v1505
    %v2324 = vpack.c.b16 %v1510, %v1508
    %v2325 = vpack.c.b16 %v1511, %v1509
    %v2326 = vpack.c.b16 %v1514, %v1512
    %v2327 = vpack.c.b16 %v1515, %v1513
    %v2328 = vpack.c.b16 %v1518, %v1516
    %v2329 = vpack.c.b16 %v1519, %v1517
    %v2330 = vpack.c.b16 %v1522, %v1520
    %v2331 = vpack.c.b16 %v1523, %v1521
    %v2332 = vpack.c.b16 %v1526, %v1524
    %v2333 = vpack.c.b16 %v1527, %v1525
    %v2334 = vpack.c.b16 %v1530, %v1528
    %v2335 = vpack.c.b16 %v1531, %v1529
    %v2336 = vpack.c.b16 %v1534, %v1532
    %v2337 = vpack.c.b16 %v1535, %v1533
    %v2338 = vpack.c.b16 %v1538, %v1536
    %v2339 = vpack.c.b16 %v1539, %v1537
    %v2340 = vpack.c.b16 %v1542, %v1540
    %v2341 = vpack.c.b16 %v1543, %v1541
    %v2342 = vpack.c.b16 %v1546, %v1544
    %v2343 = vpack.c.b16 %v1547, %v1545
    %v2344 = vpack.c.b16 %v1550, %v1548
    %v2345 = vpack.c.b16 %v1551, %v1549
    %v2346 = vpack.c.b16 %v1554, %v1552
    %v2347 = vpack.c.b16 %v1555, %v1553
    %v2348 = vpack.c.b16 %v1558, %v1556
    %v2349 = vpack.c.b16 %v1559, %v1557
    %v2350 = vpack.c.b16 %v1562, %v1560
    %v2351 = vpack.c.b16 %v1563, %v1561
    %v2352 = vpack.c.b16 %v1566, %v1564
    %v2353 = vpack.c.b16 %v1567, %v1565
    %v2354 = vpack.c.b16 %v1570, %v1568
    %v2355 = vpack.c.b16 %v1571, %v1569
    %v2356 = vpack.c.b16 %v1574, %v1572
    %v2357 = vpack.c.b16 %v1575, %v1573
    %v2358 = vpack.c.b16 %v1578, %v1576
    %v2359 = vpack.c.b16 %v1579, %v1577
    %v2360 = vpack.c.b16 %v1582, %v1580
    %v2361 = vpack.c.b16 %v1583, %v1581
    %v2362 = vpack.c.b16 %v1586, %v1584
    %v2363 = vpack.c.b16 %v1587, %v1585
    %v2364 = vpack.c.b16 %v1590, %v1588
    %v2365 = vpack.c.b16 %v1591, %v1589
    %v2366 = vpack.c.b16 %v1594, %v1592
    %v2367 = vpack.c.b16 %v1595, %v1593
    %v2368 = vpack.c.b16 %v1598, %v1596
    %v2369 = vpack.c.b16 %v1599, %v1597
    %v2370 = vpack.c.b16 %v1602, %v1600
    %v2371 = vpack.c.b16 %v1603, %v1601
    %v2372 = vpack.c.b16 %v1606, %v1604
    %v2373 = vpack.c.b16 %v1607, %v1605
    %v2374 = vpack.c.b16 %v1610, %v1608
    %v2375 = vpack.c.b16 %v1611, %v1609
    %v2376 = vpack.c.b16 %v1614, %v1612
    %v2377 = vpack.c.b16 %v1615, %v1613
    %v2378 = vpack.c.b16 %v1618, %v1616
    %v2379 = vpack.c.b16 %v1619, %v1617
    %v2380 = vpack.c.b16 %v1622, %v1620
    %v2381 = vpack.c.b16 %v1623, %v1621
    %v2382 = vpack.c.b16 %v1626, %v1624
    %v2383 = vpack.c.b16 %v1627, %v1625
    %v2384 = vpack.c.b16 %v1630, %v1628
    %v2385 = vpack.c.b16 %v1631, %v1629
    %v2386 = vpack.c.b16 %v1634, %v1632
    %v2387 = vpack.c.b16 %v1635, %v1633
    %v2388 = vpack.c.b16 %v1638, %v1636
    %v2389 = vpack.c.b16 %v1639, %v1637
    %v2390 = vpack.c.b16 %v1642, %v1640
    %v2391 = vpack.c.b16 %v1643, %v1641
    %v2392 = vpack.c.b16 %v1646, %v1644
    %v2393 = vpack.c.b16 %v1647, %v1645
    %v2394 = vpack.c.b16 %v1650, %v1648
    %v2395 = vpack.c.b16 %v1651, %v1649
    %v2396 = vpack.c.b16 %v1654, %v1652
    %v2397 = vpack.c.b16 %v1655, %v1653
    %v2398 = vpack.c.b16 %v1658, %v1656
    %v2399 = vpack.c.b16 %v1659, %v1657
    %v2400 = vpack.c.b16 %v1662, %v1660
    %v2401 = vpack.c.b16 %v1663, %v1661
    %v2402 = vpack.c.b16 %v1666, %v1664
    %v2403 = vpack.c.b16 %v1667, %v1665
    %v2404 = vpack.c.b16 %v1670, %v1668
    %v2405 = vpack.c.b16 %v1671, %v1669
    %v2406 = vpack.c.b16 %v1674, %v1672
    %v2407 = vpack.c.b16 %v1675, %v1673
    %v2408 = vpack.c.b16 %v1678, %v1676
    %v2409 = vpack.c.b16 %v1679, %v1677
    %v2410 = vpack.c.b16 %v1682, %v1680
    %v2411 = vpack.c.b16 %v1683, %v1681
    %v2412 = vpack.c.b16 %v1686, %v1684
    %v2413 = vpack.c.b16 %v1687, %v1685
    %v2414 = vpack.c.b16 %v1690, %v1688
    %v2415 = vpack.c.b16 %v1691, %v1689
    %v2416 = vpack.c.b16 %v1694, %v1692
    %v2417 = vpack.c.b16 %v1695, %v1693
    %v2418 = vpack.c.b16 %v1698, %v1696
    %v2419 = vpack.c.b16 %v1699, %v1697
    %v2420 = vpack.c.b16 %v1702, %v1700
    %v2421 = vpack.c.b16 %v1703, %v1701
    %v2422 = vpack.c.b16 %v1706, %v1704
    %v2423 = vpack.c.b16 %v1707, %v1705
    %v2424 = vpack.c.b16 %v1710, %v1708
    %v2425 = vpack.c.b16 %v1711, %v1709
    %v2426 = vpack.c.b16 %v1714, %v1712
    %v2427 = vpack.c.b16 %v1715, %v1713
    %v2428 = vpack.c.b16 %v1718, %v1716
    %v2429 = vpack.c.b16 %v1719, %v1717
    %v2430 = vpack.c.b16 %v1722, %v1720
    %v2431 = vpack.c.b16 %v1723, %v1721
    %v2432 = vpack.c.b16 %v1726, %v1724
    %v2433 = vpack.c.b16 %v1727, %v1725
    %v2434 = vpack.c.b16 %v1730, %v1728
    %v2435 = vpack.c.b16 %v1731, %v1729
    %v2436 = vpack.c.b16 %v1734, %v1732
    %v2437 = vpack.c.b16 %v1735, %v1733
    %v2438 = vpack.c.b16 %v1738, %v1736
    %v2439 = vpack.c.b16 %v1739, %v1737
    %v2440 = vpack.c.b16 %v1742, %v1740
    %v2441 = vpack.c.b16 %v1743, %v1741
    %v2442 = vpack.c.b16 %v1746, %v1744
    %v2443 = vpack.c.b16 %v1747, %v1745
    %v2444 = vpack.c.b16 %v1750, %v1748
    %v2445 = vpack.c.b16 %v1751, %v1749
    %v2446 = vpack.c.b16 %v1754, %v1752
    %v2447 = vpack.c.b16 %v1755, %v1753
    %v2448 = vpack.c.b16 %v1758, %v1756
    %v2449 = vpack.c.b16 %v1759, %v1757
    %v2450 = vpack.c.b16 %v1762, %v1760
    %v2451 = vpack.c.b16 %v1763, %v1761
    %v2452 = vpack.c.b16 %v1766, %v1764
    %v2453 = vpack.c.b16 %v1767, %v1765
    %v2454 = vpack.c.b16 %v1770, %v1768
    %v2455 = vpack.c.b16 %v1771, %v1769
    %v2456 = vpack.c.b16 %v1774, %v1772
    %v2457 = vpack.c.b16 %v1775, %v1773
    %v2458 = vpack.c.b16 %v1778, %v1776
    %v2459 = vpack.c.b16 %v1779, %v1777
    %v2460 = vpack.c.b16 %v1782, %v1780
    %v2461 = vpack.c.b16 %v1783, %v1781
    %v2462 = vpack.c.b16 %v1786, %v1784
    %v2463 = vpack.c.b16 %v1787, %v1785
    %v2464 = vpack.c.b16 %v1790, %v1788
    %v2465 = vpack.c.b16 %v1791, %v1789
    %v2466 = vpack.c.b16 %v1794, %v1792
    %v2467 = vpack.c.b16 %v1795, %v1793
    %v2468 = vpack.c.b16 %v1798, %v1796
    %v2469 = vpack.c.b16 %v1799, %v1797
    %v2470 = vpack.c.b16 %v1802, %v1800
    %v2471 = vpack.c.b16 %v1803, %v1801
    %v2472 = vpack.c.b16 %v1806, %v1804
    %v2473 = vpack.c.b16 %v1807, %v1805
    %v2474 = vpack.c.b16 %v1810, %v1808
    %v2475 = vpack.c.b16 %v1811, %v1809
    %v2476 = vpack.c.b16 %v1814, %v1812
    %v2477 = vpack.c.b16 %v1815, %v1813
    %v2478 = vpack.c.b16 %v1818, %v1816
    %v2479 = vpack.c.b16 %v1819, %v1817
    %v2480 = vpack.c.b16 %v1822, %v1820
    %v2481 = vpack.c.b16 %v1823, %v1821
    %v2482 = vpack.c.b16 %v1826, %v1824
    %v2483 = vpack.c.b16 %v1827, %v1825
    %v2484 = vpack.c.b16 %v1830, %v1828
    %v2485 = vpack.c.b16 %v1831, %v1829
    %v2486 = vpack.c.b16 %v1834, %v1832
    %v2487 = vpack.c.b16 %v1835, %v1833
    %v2488 = vpack.c.b16 %v1838, %v1836
    %v2489 = vpack.c.b16 %v1839, %v1837
    %v2490 = vpack.c.b16 %v1842, %v1840
    %v2491 = vpack.c.b16 %v1843, %v1841
    %v2492 = vpack.c.b16 %v1846, %v1844
    %v2493 = vpack.c.b16 %v1847, %v1845
    %v2494 = vpack.c.b16 %v1850, %v1848
    %v2495 = vpack.c.b16 %v1851, %v1849
    %v2496 = vpack.c.b16 %v1854, %v1852
    %v2497 = vpack.c.b16 %v1855, %v1853
    %v2498 = vpack.c.b16 %v1858, %v1856
    %v2499 = vpack.c.b16 %v1859, %v1857
    %v2500 = vpack.c.b16 %v1862, %v1860
    %v2501 = vpack.c.b16 %v1863, %v1861
    %v2502 = vpack.c.b16 %v1866, %v1864
    %v2503 = vpack.c.b16 %v1867, %v1865
    %v2504 = vpack.c.b16 %v1870, %v1868
    %v2505 = vpack.c.b16 %v1871, %v1869
    %v2506 = vpack.c.b16 %v1874, %v1872
    %v2507 = vpack.c.b16 %v1875, %v1873
    %v2508 = vpack.c.b16 %v1878, %v1876
    %v2509 = vpack.c.b16 %v1879, %v1877
    %v2510 = vpack.c.b16 %v1882, %v1880
    %v2511 = vpack.c.b16 %v1883, %v1881
    %v2512 = vpack.c.b16 %v1886, %v1884
    %v2513 = vpack.c.b16 %v1887, %v1885
    %v2514 = vpack.c.b16 %v1890, %v1888
    %v2515 = vpack.c.b16 %v1891, %v1889
    %v2516 = vpack.c.b16 %v1894, %v1892
    %v2517 = vpack.c.b16 %v1895, %v1893
    %v2518 = vpack.c.b16 %v1898, %v1896
    %v2519 = vpack.c.b16 %v1899, %v1897
    %v2520 = vpack.c.b16 %v1902, %v1900
    %v2521 = vpack.c.b16 %v1903, %v1901
    %v2522 = vpack.c.b16 %v1906, %v1904
    %v2523 = vpack.c.b16 %v1907, %v1905
    %v2524 = vpack.c.b16 %v1910, %v1908
    %v2525 = vpack.c.b16 %v1911, %v1909
    %v2526 = vpack.c.b16 %v1914, %v1912
    %v2527 = vpack.c.b16 %v1915, %v1913
    %v2528 = vpack.c.b16 %v1918, %v1916
    %v2529 = vpack.c.b16 %v1919, %v1917
    %v2530 = vpack.c.b16 %v1922, %v1920
    %v2531 = vpack.c.b16 %v1923, %v1921
    %v2532 = vpack.c.b16 %v1926, %v1924
    %v2533 = vpack.c.b16 %v1927, %v1925
    %v2534 = vpack.c.b16 %v1930, %v1928
    %v2535 = vpack.c.b16 %v1931, %v1929
    %v2536 = vpack.c.b16 %v1934, %v1932
    %v2537 = vpack.c.b16 %v1935, %v1933
    %v2538 = vpack.c.b16 %v1938, %v1936
    %v2539 = vpack.c.b16 %v1939, %v1937
    %v2540 = vpack.c.b16 %v1942, %v1940
    %v2541 = vpack.c.b16 %v1943, %v1941
    %v2542 = vpack.c.b16 %v1946, %v1944
    %v2543 = vpack.c.b16 %v1947, %v1945
    %v2544 = vpack.c.b16 %v1950, %v1948
    %v2545 = vpack.c.b16 %v1951, %v1949
    %v2546 = vpack.c.b16 %v1954, %v1952
    %v2547 = vpack.c.b16 %v1955, %v1953
    %v2548 = vpack.c.b16 %v1958, %v1956
    %v2549 = vpack.c.b16 %v1959, %v1957
    %v2550 = vpack.c.b16 %v1962, %v1960
    %v2551 = vpack.c.b16 %v1963, %v1961
    %v2552 = vpack.c.b16 %v1966, %v1964
    %v2553 = vpack.c.b16 %v1967, %v1965
    %v2554 = vpack.c.b16 %v1970, %v1968
    %v2555 = vpack.c.b16 %v1971, %v1969
    %v2556 = vpack.c.b16 %v1974, %v1972
    %v2557 = vpack.c.b16 %v1975, %v1973
    %v2558 = vpack.c.b16 %v1978, %v1976
    %v2559 = vpack.c.b16 %v1979, %v1977
    %v2560 = vpack.c.b16 %v1982, %v1980
    %v2561 = vpack.c.b16 %v1983, %v1981
    %v2562 = vpack.c.b16 %v1986, %v1984
    %v2563 = vpack.c.b16 %v1987, %v1985
    %v2564 = vpack.c.b16 %v1990, %v1988
    %v2565 = vpack.c.b16 %v1991, %v1989
    %v2566 = vpack.c.b16 %v1994, %v1992
    %v2567 = vpack.c.b16 %v1995, %v1993
    %v2568 = vpack.c.b16 %v1998, %v1996
    %v2569 = vpack.c.b16 %v1999, %v1997
    %v2570 = vpack.c.b16 %v2002, %v2000
    %v2571 = vpack.c.b16 %v2003, %v2001
    %v2572 = vpack.c.b16 %v2006, %v2004
    %v2573 = vpack.c.b16 %v2007, %v2005
    %v2574 = vpack.c.b16 %v2010, %v2008
    %v2575 = vpack.c.b16 %v2011, %v2009
    %v2576 = vpack.c.b16 %v2014, %v2012
    %v2577 = vpack.c.b16 %v2015, %v2013
    %v2578 = vpack.c.b16 %v2018, %v2016
    %v2579 = vpack.c.b16 %v2019, %v2017
    %v2580 = vpack.c.b16 %v2022, %v2020
    %v2581 = vpack.c.b16 %v2023, %v2021
    %v2582 = vpack.c.b16 %v2026, %v2024
    %v2583 = vpack.c.b16 %v2027, %v2025
    %v2584 = vpack.c.b16 %v2030, %v2028
    %v2585 = vpack.c.b16 %v2031, %v2029
    %v2586 = vpack.c.b16 %v2034, %v2032
    %v2587 = vpack.c.b16 %v2035, %v2033
    %v2588 = vpack.c.b16 %v2038, %v2036
    %v2589 = vpack.c.b16 %v2039, %v2037
    %v2590 = vpack.c.b16 %v2042, %v2040
    %v2591 = vpack.c.b16 %v2043, %v2041
    %v2592 = vpack.c.b16 %v2046, %v2044
    %v2593 = vpack.c.b16 %v2047, %v2045
    %v2594 = vpack.c.b16 %v2050, %v2048
    %v2595 = vpack.c.b16 %v2051, %v2049
    %v2596 = vpack.c.b16 %v2054, %v2052
    %v2597 = vpack.c.b16 %v2055, %v2053
    %v2598 = vpack.c.b16 %v2058, %v2056
    %v2599 = vpack.c.b16 %v2059, %v2057
    %v2600 = vpack.c.b16 %v2062, %v2060
    %v2601 = vpack.c.b16 %v2063, %v2061
    %v2602 = vpack.c.b16 %v2066, %v2064
    %v2603 = vpack.c.b16 %v2067, %v2065
    %v2604 = vpack.c.b16 %v2070, %v2068
    %v2605 = vpack.c.b16 %v2071, %v2069
    %v2606 = vpack.c.b16 %v2074, %v2072
    %v2607 = vpack.c.b16 %v2075, %v2073
    %v2608 = vpack.c.b16 %v2078, %v2076
    %v2609 = vpack.c.b16 %v2079, %v2077
    %v2610 = vpack.c.b16 %v2082, %v2080
    %v2611 = vpack.c.b16 %v2083, %v2081
    %v2612 = vpack.c.b16 %v2086, %v2084
    %v2613 = vpack.c.b16 %v2087, %v2085
    %v2614 = vpack.c.b16 %v2090, %v2088
    %v2615 = vpack.c.b16 %v2091, %v2089
    %v2616 = vpack.c.b16 %v2094, %v2092
    %v2617 = vpack.c.b16 %v2095, %v2093
    %v2618 = vpack.c.b16 %v2098, %v2096
    %v2619 = vpack.c.b16 %v2099, %v2097
    %v2620 = vpack.c.b16 %v2102, %v2100
    %v2621 = vpack.c.b16 %v2103, %v2101
    %v2622 = vpack.c.b16 %v2106, %v2104
    %v2623 = vpack.c.b16 %v2107, %v2105
    %v2624 = vpack.c.b16 %v2110, %v2108
    %v2625 = vpack.c.b16 %v2111, %v2109
    %v2626 = vpack.c.b16 %v2114, %v2112
    %v2627 = vpack.c.b16 %v2115, %v2113
    %v2628 = vpack.c.b16 %v2118, %v2116
    %v2629 = vpack.c.b16 %v2119, %v2117
    %v2630 = vpack.c.b16 %v2122, %v2120
    %v2631 = vpack.c.b16 %v2123, %v2121
    %v2632 = vpack.c.b16 %v2126, %v2124
    %v2633 = vpack.c.b16 %v2127, %v2125
    %v2634 = vpack.c.b16 %v2130, %v2128
    %v2635 = vpack.c.b16 %v2131, %v2129
    %v2636 = vpack.c.b16 %v2134, %v2132
    %v2637 = vpack.c.b16 %v2135, %v2133
    %v2638 = vpack.c.b16 %v2138, %v2136
    %v2639 = vpack.c.b16 %v2139, %v2137
    %v2640 = vpack.c.b16 %v2142, %v2140
    %v2641 = vpack.c.b16 %v2143, %v2141
    %v2642 = vpack.c.b16 %v2146, %v2144
    %v2643 = vpack.c.b16 %v2147, %v2145
    %v2644 = vpack.c.b16 %v2150, %v2148
    %v2645 = vpack.c.b16 %v2151, %v2149
    %v2646 = vpack.c.b16 %v2154, %v2152
    %v2647 = vpack.c.b16 %v2155, %v2153
    %v2648 = vpack.c.b16 %v2158, %v2156
    %v2649 = vpack.c.b16 %v2159, %v2157
    %v2650 = vpack.c.b16 %v2162, %v2160
    %v2651 = vpack.c.b16 %v2163, %v2161
    %v2652 = vpack.c.b16 %v2166, %v2164
    %v2653 = vpack.c.b16 %v2167, %v2165
    %v2654 = vpack.c.b16 %v2170, %v2168
    %v2655 = vpack.c.b16 %v2171, %v2169
    %v2656 = vpack.c.b16 %v2174, %v2172
    %v2657 = vpack.c.b16 %v2175, %v2173
    %v2658 = vpack.c.b16 %v2178, %v2176
    %v2659 = vpack.c.b16 %v2179, %v2177
    %v2660 = vpack.c.b16 %v2182, %v2180
    %v2661 = vpack.c.b16 %v2183, %v2181
    %v2662 = vpack.c.b16 %v2186, %v2184
    %v2663 = vpack.c.b16 %v2187, %v2185
    %v2664 = vpack.c.b16 %v2190, %v2188
    %v2665 = vpack.c.b16 %v2191, %v2189
    %v2666 = vpack.c.b16 %v2194, %v2192
    %v2667 = vpack.c.b16 %v2195, %v2193
    %v2668 = vpack.c.b16 %v2198, %v2196
    %v2669 = vpack.c.b16 %v2199, %v2197
    %v2670 = vpack.c.b16 %v2202, %v2200
    %v2671 = vpack.c.b16 %v2203, %v2201
    %v2672 = vpack.c.b16 %v2206, %v2204
    %v2673 = vpack.c.b16 %v2207, %v2205
    %v2674 = vpack.c.b16 %v2210, %v2208
    %v2675 = vpack.c.b16 %v2211, %v2209
    %v2676 = vpack.c.b16 %v2214, %v2212
    %v2677 = vpack.c.b16 %v2215, %v2213
    %v2678 = vpack.c.b16 %v2218, %v2216
    %v2679 = vpack.c.b16 %v2219, %v2217
    %v2680 = vpack.c.b16 %v2222, %v2220
    %v2681 = vpack.c.b16 %v2223, %v2221
    %v2682 = vpack.c.b16 %v2226, %v2224
    %v2683 = vpack.c.b16 %v2227, %v2225
    %v2684 = vpack.c.b16 %v2230, %v2228
    %v2685 = vpack.c.b16 %v2231, %v2229
    %v2686 = vpack.c.b16 %v2234, %v2232
    %v2687 = vpack.c.b16 %v2235, %v2233
    %v2688 = vpack.c.b16 %v2238, %v2236
    %v2689 = vpack.c.b16 %v2239, %v2237
    %v2690 = vpack.c.b16 %v2242, %v2240
    %v2691 = vpack.c.b16 %v2243, %v2241
    %3140 = vmatprep.subr.bf16.mxu0 %v2245
    %3141 = vmatpush1.bf16.msra.mxu0 %v2244
    %3142 = vmatprep.subr.bf16.mxu0 %v2247
    %3143 = vmatpush1.bf16.msra.mxu0 %v2246
    %3144 = vmatprep.subr.bf16.mxu0 %v2249
    %3145 = vmatpush1.bf16.msra.mxu0 %v2248
    %3146 = vmatprep.subr.bf16.mxu0 %v2251
    %3147 = vmatpush1.bf16.msra.mxu0 %v2250
    %3148 = vmatprep.subr.bf16.mxu0 %v2253
    %3149 = vmatpush1.bf16.msra.mxu0 %v2252
    %3150 = vmatprep.subr.bf16.mxu0 %v2255
    %3151 = vmatpush1.bf16.msra.mxu0 %v2254
    %3152 = vmatprep.subr.bf16.mxu0 %v2257
    %3153 = vmatpush1.bf16.msra.mxu0 %v2256
    %3154 = vmatprep.subr.bf16.mxu0 %v2259
    %3155 = vmatpush1.bf16.msra.mxu0 %v2258
    %3156 = vmatprep.subr.bf16.mxu0 %v2261
    %3157 = vmatpush1.bf16.msra.mxu0 %v2260
    %3158 = vmatprep.subr.bf16.mxu0 %v2263
    %3159 = vmatpush1.bf16.msra.mxu0 %v2262
    %3160 = vmatprep.subr.bf16.mxu0 %v2265
    %3161 = vmatpush1.bf16.msra.mxu0 %v2264
    %3162 = vmatprep.subr.bf16.mxu0 %v2267
    %3163 = vmatpush1.bf16.msra.mxu0 %v2266
    %3164 = vmatprep.subr.bf16.mxu0 %v2269
    %3165 = vmatpush1.bf16.msra.mxu0 %v2268
    %3166 = vmatprep.subr.bf16.mxu0 %v2271
    %3167 = vmatpush1.bf16.msra.mxu0 %v2270
    %3168 = vmatprep.subr.bf16.mxu0 %v2273
    %3169 = vmatpush1.bf16.msra.mxu0 %v2272
    %3170 = vmatprep.subr.bf16.mxu0 %v2275
    %3171 = vmatpush1.bf16.msra.mxu0 %v2274
    %3172 = vmatprep.mubr.bf16.mxu0 %v845
    %3173 = vmatmul.mubr.bf16.gmra.mrb[0].mxu0 %v844
    %v3174 = vpop.f32.mrb[0].mxu0
    %v3175 = vadd.f32 0.0, %v3174
    %v3176 = vpop.f32.mrb[0].mxu0
    %v3177 = vadd.f32 0.0, %v3176
    %v3178 = vpop.f32.mrb[0].mxu0
    %v3179 = vadd.f32 0.0, %v3178
    %v3180 = vpop.f32.mrb[0].mxu0
    %v3181 = vadd.f32 0.0, %v3180
    %3182 = vdwg.mxu0
    %3183 = vmatprep.subr.bf16.mxu0 %v2277
    %3184 = vmatpush1.bf16.msra.mxu0 %v2276
    %3185 = vmatprep.subr.bf16.mxu0 %v2279
    %3186 = vmatpush1.bf16.msra.mxu0 %v2278
    %3187 = vmatprep.subr.bf16.mxu0 %v2281
    %3188 = vmatpush1.bf16.msra.mxu0 %v2280
    %3189 = vmatprep.subr.bf16.mxu0 %v2283
    %3190 = vmatpush1.bf16.msra.mxu0 %v2282
    %3191 = vmatprep.subr.bf16.mxu0 %v2285
    %3192 = vmatpush1.bf16.msra.mxu0 %v2284
    %3193 = vmatprep.subr.bf16.mxu0 %v2287
    %3194 = vmatpush1.bf16.msra.mxu0 %v2286
    %3195 = vmatprep.subr.bf16.mxu0 %v2289
    %3196 = vmatpush1.bf16.msra.mxu0 %v2288
    %3197 = vmatprep.subr.bf16.mxu0 %v2291
    %3198 = vmatpush1.bf16.msra.mxu0 %v2290
    %3199 = vmatprep.subr.bf16.mxu0 %v2293
    %3200 = vmatpush1.bf16.msra.mxu0 %v2292
    %3201 = vmatprep.subr.bf16.mxu0 %v2295
    %3202 = vmatpush1.bf16.msra.mxu0 %v2294
    %3203 = vmatprep.subr.bf16.mxu0 %v2297
    %3204 = vmatpush1.bf16.msra.mxu0 %v2296
    %3205 = vmatprep.subr.bf16.mxu0 %v2299
    %3206 = vmatpush1.bf16.msra.mxu0 %v2298
    %3207 = vmatprep.subr.bf16.mxu0 %v2301
    %3208 = vmatpush1.bf16.msra.mxu0 %v2300
    %3209 = vmatprep.subr.bf16.mxu0 %v2303
    %3210 = vmatpush1.bf16.msra.mxu0 %v2302
    %3211 = vmatprep.subr.bf16.mxu0 %v2305
    %3212 = vmatpush1.bf16.msra.mxu0 %v2304
    %3213 = vmatprep.subr.bf16.mxu0 %v2307
    %3214 = vmatpush1.bf16.msra.mxu0 %v2306
    %3215 = vmatprep.mubr.bf16.mxu0 %v847
    %3216 = vmatmul.mubr.bf16.gmra.mrb[0].mxu0 %v846
    %v3217 = vpop.f32.mrb[0].mxu0
    %v3218 = vadd.f32 %v3175, %v3217
    %v3219 = vpop.f32.mrb[0].mxu0
    %v3220 = vadd.f32 %v3177, %v3219
    %v3221 = vpop.f32.mrb[0].mxu0
    %v3222 = vadd.f32 %v3179, %v3221
    %v3223 = vpop.f32.mrb[0].mxu0
    %v3224 = vadd.f32 %v3181, %v3223
    %3225 = vdwg.mxu0
    %3226 = vmatprep.subr.bf16.mxu0 %v2309
    %3227 = vmatpush1.bf16.msra.mxu0 %v2308
    %3228 = vmatprep.subr.bf16.mxu0 %v2311
    %3229 = vmatpush1.bf16.msra.mxu0 %v2310
    %3230 = vmatprep.subr.bf16.mxu0 %v2313
    %3231 = vmatpush1.bf16.msra.mxu0 %v2312
    %3232 = vmatprep.subr.bf16.mxu0 %v2315
    %3233 = vmatpush1.bf16.msra.mxu0 %v2314
    %3234 = vmatprep.subr.bf16.mxu0 %v2317
    %3235 = vmatpush1.bf16.msra.mxu0 %v2316
    %3236 = vmatprep.subr.bf16.mxu0 %v2319
    %3237 = vmatpush1.bf16.msra.mxu0 %v2318
    %3238 = vmatprep.subr.bf16.mxu0 %v2321
    %3239 = vmatpush1.bf16.msra.mxu0 %v2320
    %3240 = vmatprep.subr.bf16.mxu0 %v2323
    %3241 = vmatpush1.bf16.msra.mxu0 %v2322
    %3242 = vmatprep.subr.bf16.mxu0 %v2325
    %3243 = vmatpush1.bf16.msra.mxu0 %v2324
    %3244 = vmatprep.subr.bf16.mxu0 %v2327
    %3245 = vmatpush1.bf16.msra.mxu0 %v2326
    %3246 = vmatprep.subr.bf16.mxu0 %v2329
    %3247 = vmatpush1.bf16.msra.mxu0 %v2328
    %3248 = vmatprep.subr.bf16.mxu0 %v2331
    %3249 = vmatpush1.bf16.msra.mxu0 %v2330
    %3250 = vmatprep.subr.bf16.mxu0 %v2333
    %3251 = vmatpush1.bf16.msra.mxu0 %v2332
    %3252 = vmatprep.subr.bf16.mxu0 %v2335
    %3253 = vmatpush1.bf16.msra.mxu0 %v2334
    %3254 = vmatprep.subr.bf16.mxu0 %v2337
    %3255 = vmatpush1.bf16.msra.mxu0 %v2336
    %3256 = vmatprep.subr.bf16.mxu0 %v2339
    %3257 = vmatpush1.bf16.msra.mxu0 %v2338
    %3258 = vmatprep.mubr.bf16.mxu0 %v849
    %3259 = vmatmul.mubr.bf16.gmra.mrb[0].mxu0 %v848
    %v3260 = vpop.f32.mrb[0].mxu0
    %v3261 = vadd.f32 %v3218, %v3260
    %v3262 = vpop.f32.mrb[0].mxu0
    %v3263 = vadd.f32 %v3220, %v3262
    %v3264 = vpop.f32.mrb[0].mxu0
    %v3265 = vadd.f32 %v3222, %v3264
    %v3266 = vpop.f32.mrb[0].mxu0
    %v3267 = vadd.f32 %v3224, %v3266
    %3268 = vdwg.mxu0
    %3269 = vmatprep.subr.bf16.mxu0 %v2341
    %3270 = vmatpush1.bf16.msra.mxu0 %v2340
    %3271 = vmatprep.subr.bf16.mxu0 %v2343
    %3272 = vmatpush1.bf16.msra.mxu0 %v2342
    %3273 = vmatprep.subr.bf16.mxu0 %v2345
    %3274 = vmatpush1.bf16.msra.mxu0 %v2344
    %3275 = vmatprep.subr.bf16.mxu0 %v2347
    %3276 = vmatpush1.bf16.msra.mxu0 %v2346
    %3277 = vmatprep.subr.bf16.mxu0 %v2349
    %3278 = vmatpush1.bf16.msra.mxu0 %v2348
    %3279 = vmatprep.subr.bf16.mxu0 %v2351
    %3280 = vmatpush1.bf16.msra.mxu0 %v2350
    %3281 = vmatprep.subr.bf16.mxu0 %v2353
    %3282 = vmatpush1.bf16.msra.mxu0 %v2352
    %3283 = vmatprep.subr.bf16.mxu0 %v2355
    %3284 = vmatpush1.bf16.msra.mxu0 %v2354
    %3285 = vmatprep.subr.bf16.mxu0 %v2357
    %3286 = vmatpush1.bf16.msra.mxu0 %v2356
    %3287 = vmatprep.subr.bf16.mxu0 %v2359
    %3288 = vmatpush1.bf16.msra.mxu0 %v2358
    %3289 = vmatprep.subr.bf16.mxu0 %v2361
    %3290 = vmatpush1.bf16.msra.mxu0 %v2360
    %3291 = vmatprep.subr.bf16.mxu0 %v2363
    %3292 = vmatpush1.bf16.msra.mxu0 %v2362
    %3293 = vmatprep.subr.bf16.mxu0 %v2365
    %3294 = vmatpush1.bf16.msra.mxu0 %v2364
    %3295 = vmatprep.subr.bf16.mxu0 %v2367
    %3296 = vmatpush1.bf16.msra.mxu0 %v2366
    %3297 = vmatprep.subr.bf16.mxu0 %v2369
    %3298 = vmatpush1.bf16.msra.mxu0 %v2368
    %3299 = vmatprep.subr.bf16.mxu0 %v2371
    %3300 = vmatpush1.bf16.msra.mxu0 %v2370
    %3301 = vmatprep.mubr.bf16.mxu0 %v851
    %3302 = vmatmul.mubr.bf16.gmra.mrb[0].mxu0 %v850
    %v3303 = vpop.f32.mrb[0].mxu0
    %v3304 = vadd.f32 %v3261, %v3303
    %v3305 = vpop.f32.mrb[0].mxu0
    %v3306 = vadd.f32 %v3263, %v3305
    %v3307 = vpop.f32.mrb[0].mxu0
    %v3308 = vadd.f32 %v3265, %v3307
    %v3309 = vpop.f32.mrb[0].mxu0
    %v3310 = vadd.f32 %v3267, %v3309
    %3311 = vdwg.mxu0
    %3312 = vmatprep.subr.bf16.mxu0 %v2373
    %3313 = vmatpush1.bf16.msra.mxu0 %v2372
    %3314 = vmatprep.subr.bf16.mxu0 %v2375
    %3315 = vmatpush1.bf16.msra.mxu0 %v2374
    %3316 = vmatprep.subr.bf16.mxu0 %v2377
    %3317 = vmatpush1.bf16.msra.mxu0 %v2376
    %3318 = vmatprep.subr.bf16.mxu0 %v2379
    %3319 = vmatpush1.bf16.msra.mxu0 %v2378
    %3320 = vmatprep.subr.bf16.mxu0 %v2381
    %3321 = vmatpush1.bf16.msra.mxu0 %v2380
    %3322 = vmatprep.subr.bf16.mxu0 %v2383
    %3323 = vmatpush1.bf16.msra.mxu0 %v2382
    %3324 = vmatprep.subr.bf16.mxu0 %v2385
    %3325 = vmatpush1.bf16.msra.mxu0 %v2384
    %3326 = vmatprep.subr.bf16.mxu0 %v2387
    %3327 = vmatpush1.bf16.msra.mxu0 %v2386
    %3328 = vmatprep.subr.bf16.mxu0 %v2389
    %3329 = vmatpush1.bf16.msra.mxu0 %v2388
    %3330 = vmatprep.subr.bf16.mxu0 %v2391
    %3331 = vmatpush1.bf16.msra.mxu0 %v2390
    %3332 = vmatprep.subr.bf16.mxu0 %v2393
    %3333 = vmatpush1.bf16.msra.mxu0 %v2392
    %3334 = vmatprep.subr.bf16.mxu0 %v2395
    %3335 = vmatpush1.bf16.msra.mxu0 %v2394
    %3336 = vmatprep.subr.bf16.mxu0 %v2397
    %3337 = vmatpush1.bf16.msra.mxu0 %v2396
    %3338 = vmatprep.subr.bf16.mxu0 %v2399
    %3339 = vmatpush1.bf16.msra.mxu0 %v2398
    %3340 = vmatprep.subr.bf16.mxu0 %v2401
    %3341 = vmatpush1.bf16.msra.mxu0 %v2400
    %3342 = vmatprep.subr.bf16.mxu0 %v2403
    %3343 = vmatpush1.bf16.msra.mxu0 %v2402
    %3344 = vmatprep.mubr.bf16.mxu0 %v853
    %3345 = vmatmul.mubr.bf16.gmra.mrb[0].mxu0 %v852
    %v3346 = vpop.f32.mrb[0].mxu0
    %v3347 = vadd.f32 %v3304, %v3346
    %v3348 = vpop.f32.mrb[0].mxu0
    %v3349 = vadd.f32 %v3306, %v3348
    %v3350 = vpop.f32.mrb[0].mxu0
    %v3351 = vadd.f32 %v3308, %v3350
    %v3352 = vpop.f32.mrb[0].mxu0
    %v3353 = vadd.f32 %v3310, %v3352
    %3354 = vdwg.mxu0
    %3355 = vmatprep.subr.bf16.mxu0 %v2405
    %3356 = vmatpush1.bf16.msra.mxu0 %v2404
    %3357 = vmatprep.subr.bf16.mxu0 %v2407
    %3358 = vmatpush1.bf16.msra.mxu0 %v2406
    %3359 = vmatprep.subr.bf16.mxu0 %v2409
    %3360 = vmatpush1.bf16.msra.mxu0 %v2408
    %3361 = vmatprep.subr.bf16.mxu0 %v2411
    %3362 = vmatpush1.bf16.msra.mxu0 %v2410
    %3363 = vmatprep.subr.bf16.mxu0 %v2413
    %3364 = vmatpush1.bf16.msra.mxu0 %v2412
    %3365 = vmatprep.subr.bf16.mxu0 %v2415
    %3366 = vmatpush1.bf16.msra.mxu0 %v2414
    %3367 = vmatprep.subr.bf16.mxu0 %v2417
    %3368 = vmatpush1.bf16.msra.mxu0 %v2416
    %3369 = vmatprep.subr.bf16.mxu0 %v2419
    %3370 = vmatpush1.bf16.msra.mxu0 %v2418
    %3371 = vmatprep.subr.bf16.mxu0 %v2421
    %3372 = vmatpush1.bf16.msra.mxu0 %v2420
    %3373 = vmatprep.subr.bf16.mxu0 %v2423
    %3374 = vmatpush1.bf16.msra.mxu0 %v2422
    %3375 = vmatprep.subr.bf16.mxu0 %v2425
    %3376 = vmatpush1.bf16.msra.mxu0 %v2424
    %3377 = vmatprep.subr.bf16.mxu0 %v2427
    %3378 = vmatpush1.bf16.msra.mxu0 %v2426
    %3379 = vmatprep.subr.bf16.mxu0 %v2429
    %3380 = vmatpush1.bf16.msra.mxu0 %v2428
    %3381 = vmatprep.subr.bf16.mxu0 %v2431
    %3382 = vmatpush1.bf16.msra.mxu0 %v2430
    %3383 = vmatprep.subr.bf16.mxu0 %v2433
    %3384 = vmatpush1.bf16.msra.mxu0 %v2432
    %3385 = vmatprep.subr.bf16.mxu0 %v2435
    %3386 = vmatpush1.bf16.msra.mxu0 %v2434
    %3387 = vmatprep.mubr.bf16.mxu0 %v855
    %3388 = vmatmul.mubr.bf16.gmra.mrb[0].mxu0 %v854
    %v3389 = vpop.f32.mrb[0].mxu0
    %v3390 = vadd.f32 %v3347, %v3389
    %v3391 = vpop.f32.mrb[0].mxu0
    %v3392 = vadd.f32 %v3349, %v3391
    %v3393 = vpop.f32.mrb[0].mxu0
    %v3394 = vadd.f32 %v3351, %v3393
    %v3395 = vpop.f32.mrb[0].mxu0
    %v3396 = vadd.f32 %v3353, %v3395
    %3397 = vdwg.mxu0
    %3398 = vmatprep.subr.bf16.mxu0 %v2437
    %3399 = vmatpush1.bf16.msra.mxu0 %v2436
    %3400 = vmatprep.subr.bf16.mxu0 %v2439
    %3401 = vmatpush1.bf16.msra.mxu0 %v2438
    %3402 = vmatprep.subr.bf16.mxu0 %v2441
    %3403 = vmatpush1.bf16.msra.mxu0 %v2440
    %3404 = vmatprep.subr.bf16.mxu0 %v2443
    %3405 = vmatpush1.bf16.msra.mxu0 %v2442
    %3406 = vmatprep.subr.bf16.mxu0 %v2445
    %3407 = vmatpush1.bf16.msra.mxu0 %v2444
    %3408 = vmatprep.subr.bf16.mxu0 %v2447
    %3409 = vmatpush1.bf16.msra.mxu0 %v2446
    %3410 = vmatprep.subr.bf16.mxu0 %v2449
    %3411 = vmatpush1.bf16.msra.mxu0 %v2448
    %3412 = vmatprep.subr.bf16.mxu0 %v2451
    %3413 = vmatpush1.bf16.msra.mxu0 %v2450
    %3414 = vmatprep.subr.bf16.mxu0 %v2453
    %3415 = vmatpush1.bf16.msra.mxu0 %v2452
    %3416 = vmatprep.subr.bf16.mxu0 %v2455
    %3417 = vmatpush1.bf16.msra.mxu0 %v2454
    %3418 = vmatprep.subr.bf16.mxu0 %v2457
    %3419 = vmatpush1.bf16.msra.mxu0 %v2456
    %3420 = vmatprep.subr.bf16.mxu0 %v2459
    %3421 = vmatpush1.bf16.msra.mxu0 %v2458
    %3422 = vmatprep.subr.bf16.mxu0 %v2461
    %3423 = vmatpush1.bf16.msra.mxu0 %v2460
    %3424 = vmatprep.subr.bf16.mxu0 %v2463
    %3425 = vmatpush1.bf16.msra.mxu0 %v2462
    %3426 = vmatprep.subr.bf16.mxu0 %v2465
    %3427 = vmatpush1.bf16.msra.mxu0 %v2464
    %3428 = vmatprep.subr.bf16.mxu0 %v2467
    %3429 = vmatpush1.bf16.msra.mxu0 %v2466
    %3430 = vmatprep.mubr.bf16.mxu0 %v857
    %3431 = vmatmul.mubr.bf16.gmra.mrb[0].mxu0 %v856
    %v3432 = vpop.f32.mrb[0].mxu0
    %v3433 = vadd.f32 %v3390, %v3432
    %v3434 = vpop.f32.mrb[0].mxu0
    %v3435 = vadd.f32 %v3392, %v3434
    %v3436 = vpop.f32.mrb[0].mxu0
    %v3437 = vadd.f32 %v3394, %v3436
    %v3438 = vpop.f32.mrb[0].mxu0
    %v3439 = vadd.f32 %v3396, %v3438
    %3440 = vdwg.mxu0
    %3441 = vmatprep.subr.bf16.mxu0 %v2469
    %3442 = vmatpush1.bf16.msra.mxu0 %v2468
    %3443 = vmatprep.subr.bf16.mxu0 %v2471
    %3444 = vmatpush1.bf16.msra.mxu0 %v2470
    %3445 = vmatprep.subr.bf16.mxu0 %v2473
    %3446 = vmatpush1.bf16.msra.mxu0 %v2472
    %3447 = vmatprep.subr.bf16.mxu0 %v2475
    %3448 = vmatpush1.bf16.msra.mxu0 %v2474
    %3449 = vmatprep.subr.bf16.mxu0 %v2477
    %3450 = vmatpush1.bf16.msra.mxu0 %v2476
    %3451 = vmatprep.subr.bf16.mxu0 %v2479
    %3452 = vmatpush1.bf16.msra.mxu0 %v2478
    %3453 = vmatprep.subr.bf16.mxu0 %v2481
    %3454 = vmatpush1.bf16.msra.mxu0 %v2480
    %3455 = vmatprep.subr.bf16.mxu0 %v2483
    %3456 = vmatpush1.bf16.msra.mxu0 %v2482
    %3457 = vmatprep.subr.bf16.mxu0 %v2485
    %3458 = vmatpush1.bf16.msra.mxu0 %v2484
    %3459 = vmatprep.subr.bf16.mxu0 %v2487
    %3460 = vmatpush1.bf16.msra.mxu0 %v2486
    %3461 = vmatprep.subr.bf16.mxu0 %v2489
    %3462 = vmatpush1.bf16.msra.mxu0 %v2488
    %3463 = vmatprep.subr.bf16.mxu0 %v2491
    %3464 = vmatpush1.bf16.msra.mxu0 %v2490
    %3465 = vmatprep.subr.bf16.mxu0 %v2493
    %3466 = vmatpush1.bf16.msra.mxu0 %v2492
    %3467 = vmatprep.subr.bf16.mxu0 %v2495
    %3468 = vmatpush1.bf16.msra.mxu0 %v2494
    %3469 = vmatprep.subr.bf16.mxu0 %v2497
    %3470 = vmatpush1.bf16.msra.mxu0 %v2496
    %3471 = vmatprep.subr.bf16.mxu0 %v2499
    %3472 = vmatpush1.bf16.msra.mxu0 %v2498
    %3473 = vmatprep.mubr.bf16.mxu0 %v859
    %3474 = vmatmul.mubr.bf16.gmra.mrb[0].mxu0 %v858
    %v3475 = vpop.f32.mrb[0].mxu0
    %v3476 = vadd.f32 %v3433, %v3475
    %v3477 = vpop.f32.mrb[0].mxu0
    %v3478 = vadd.f32 %v3435, %v3477
    %v3479 = vpop.f32.mrb[0].mxu0
    %v3480 = vadd.f32 %v3437, %v3479
    %v3481 = vpop.f32.mrb[0].mxu0
    %v3482 = vadd.f32 %v3439, %v3481
    %3483 = vdwg.mxu0
    %3484 = vmatprep.subr.bf16.mxu0 %v2501
    %3485 = vmatpush1.bf16.msra.mxu0 %v2500
    %3486 = vmatprep.subr.bf16.mxu0 %v2503
    %3487 = vmatpush1.bf16.msra.mxu0 %v2502
    %3488 = vmatprep.subr.bf16.mxu0 %v2505
    %3489 = vmatpush1.bf16.msra.mxu0 %v2504
    %3490 = vmatprep.subr.bf16.mxu0 %v2507
    %3491 = vmatpush1.bf16.msra.mxu0 %v2506
    %3492 = vmatprep.subr.bf16.mxu0 %v2509
    %3493 = vmatpush1.bf16.msra.mxu0 %v2508
    %3494 = vmatprep.subr.bf16.mxu0 %v2511
    %3495 = vmatpush1.bf16.msra.mxu0 %v2510
    %3496 = vmatprep.subr.bf16.mxu0 %v2513
    %3497 = vmatpush1.bf16.msra.mxu0 %v2512
    %3498 = vmatprep.subr.bf16.mxu0 %v2515
    %3499 = vmatpush1.bf16.msra.mxu0 %v2514
    %3500 = vmatprep.subr.bf16.mxu0 %v2517
    %3501 = vmatpush1.bf16.msra.mxu0 %v2516
    %3502 = vmatprep.subr.bf16.mxu0 %v2519
    %3503 = vmatpush1.bf16.msra.mxu0 %v2518
    %3504 = vmatprep.subr.bf16.mxu0 %v2521
    %3505 = vmatpush1.bf16.msra.mxu0 %v2520
    %3506 = vmatprep.subr.bf16.mxu0 %v2523
    %3507 = vmatpush1.bf16.msra.mxu0 %v2522
    %3508 = vmatprep.subr.bf16.mxu0 %v2525
    %3509 = vmatpush1.bf16.msra.mxu0 %v2524
    %3510 = vmatprep.subr.bf16.mxu0 %v2527
    %3511 = vmatpush1.bf16.msra.mxu0 %v2526
    %3512 = vmatprep.subr.bf16.mxu0 %v2529
    %3513 = vmatpush1.bf16.msra.mxu0 %v2528
    %3514 = vmatprep.subr.bf16.mxu0 %v2531
    %3515 = vmatpush1.bf16.msra.mxu0 %v2530
    %3516 = vmatprep.mubr.bf16.mxu0 %v861
    %3517 = vmatmul.mubr.bf16.gmra.mrb[0].mxu0 %v860
    %v3518 = vpop.f32.mrb[0].mxu0
    %v3519 = vadd.f32 %v3476, %v3518
    %v3520 = vpop.f32.mrb[0].mxu0
    %v3521 = vadd.f32 %v3478, %v3520
    %v3522 = vpop.f32.mrb[0].mxu0
    %v3523 = vadd.f32 %v3480, %v3522
    %v3524 = vpop.f32.mrb[0].mxu0
    %v3525 = vadd.f32 %v3482, %v3524
    %3526 = vdwg.mxu0
    %3527 = vmatprep.subr.bf16.mxu0 %v2533
    %3528 = vmatpush1.bf16.msra.mxu0 %v2532
    %3529 = vmatprep.subr.bf16.mxu0 %v2535
    %3530 = vmatpush1.bf16.msra.mxu0 %v2534
    %3531 = vmatprep.subr.bf16.mxu0 %v2537
    %3532 = vmatpush1.bf16.msra.mxu0 %v2536
    %3533 = vmatprep.subr.bf16.mxu0 %v2539
    %3534 = vmatpush1.bf16.msra.mxu0 %v2538
    %3535 = vmatprep.subr.bf16.mxu0 %v2541
    %3536 = vmatpush1.bf16.msra.mxu0 %v2540
    %3537 = vmatprep.subr.bf16.mxu0 %v2543
    %3538 = vmatpush1.bf16.msra.mxu0 %v2542
    %3539 = vmatprep.subr.bf16.mxu0 %v2545
    %3540 = vmatpush1.bf16.msra.mxu0 %v2544
    %3541 = vmatprep.subr.bf16.mxu0 %v2547
    %3542 = vmatpush1.bf16.msra.mxu0 %v2546
    %3543 = vmatprep.subr.bf16.mxu0 %v2549
    %3544 = vmatpush1.bf16.msra.mxu0 %v2548
    %3545 = vmatprep.subr.bf16.mxu0 %v2551
    %3546 = vmatpush1.bf16.msra.mxu0 %v2550
    %3547 = vmatprep.subr.bf16.mxu0 %v2553
    %3548 = vmatpush1.bf16.msra.mxu0 %v2552
    %3549 = vmatprep.subr.bf16.mxu0 %v2555
    %3550 = vmatpush1.bf16.msra.mxu0 %v2554
    %3551 = vmatprep.subr.bf16.mxu0 %v2557
    %3552 = vmatpush1.bf16.msra.mxu0 %v2556
    %3553 = vmatprep.subr.bf16.mxu0 %v2559
    %3554 = vmatpush1.bf16.msra.mxu0 %v2558
    %3555 = vmatprep.subr.bf16.mxu0 %v2561
    %3556 = vmatpush1.bf16.msra.mxu0 %v2560
    %3557 = vmatprep.subr.bf16.mxu0 %v2563
    %3558 = vmatpush1.bf16.msra.mxu0 %v2562
    %3559 = vmatprep.mubr.bf16.mxu0 %v863
    %3560 = vmatmul.mubr.bf16.gmra.mrb[0].mxu0 %v862
    %v3561 = vpop.f32.mrb[0].mxu0
    %v3562 = vadd.f32 %v3519, %v3561
    %v3563 = vpop.f32.mrb[0].mxu0
    %v3564 = vadd.f32 %v3521, %v3563
    %v3565 = vpop.f32.mrb[0].mxu0
    %v3566 = vadd.f32 %v3523, %v3565
    %v3567 = vpop.f32.mrb[0].mxu0
    %v3568 = vadd.f32 %v3525, %v3567
    %3569 = vdwg.mxu0
    %3570 = vmatprep.subr.bf16.mxu0 %v2565
    %3571 = vmatpush1.bf16.msra.mxu0 %v2564
    %3572 = vmatprep.subr.bf16.mxu0 %v2567
    %3573 = vmatpush1.bf16.msra.mxu0 %v2566
    %3574 = vmatprep.subr.bf16.mxu0 %v2569
    %3575 = vmatpush1.bf16.msra.mxu0 %v2568
    %3576 = vmatprep.subr.bf16.mxu0 %v2571
    %3577 = vmatpush1.bf16.msra.mxu0 %v2570
    %3578 = vmatprep.subr.bf16.mxu0 %v2573
    %3579 = vmatpush1.bf16.msra.mxu0 %v2572
    %3580 = vmatprep.subr.bf16.mxu0 %v2575
    %3581 = vmatpush1.bf16.msra.mxu0 %v2574
    %3582 = vmatprep.subr.bf16.mxu0 %v2577
    %3583 = vmatpush1.bf16.msra.mxu0 %v2576
    %3584 = vmatprep.subr.bf16.mxu0 %v2579
    %3585 = vmatpush1.bf16.msra.mxu0 %v2578
    %3586 = vmatprep.subr.bf16.mxu0 %v2581
    %3587 = vmatpush1.bf16.msra.mxu0 %v2580
    %3588 = vmatprep.subr.bf16.mxu0 %v2583
    %3589 = vmatpush1.bf16.msra.mxu0 %v2582
    %3590 = vmatprep.subr.bf16.mxu0 %v2585
    %3591 = vmatpush1.bf16.msra.mxu0 %v2584
    %3592 = vmatprep.subr.bf16.mxu0 %v2587
    %3593 = vmatpush1.bf16.msra.mxu0 %v2586
    %3594 = vmatprep.subr.bf16.mxu0 %v2589
    %3595 = vmatpush1.bf16.msra.mxu0 %v2588
    %3596 = vmatprep.subr.bf16.mxu0 %v2591
    %3597 = vmatpush1.bf16.msra.mxu0 %v2590
    %3598 = vmatprep.subr.bf16.mxu0 %v2593
    %3599 = vmatpush1.bf16.msra.mxu0 %v2592
    %3600 = vmatprep.subr.bf16.mxu0 %v2595
    %3601 = vmatpush1.bf16.msra.mxu0 %v2594
    %3602 = vmatprep.mubr.bf16.mxu0 %v865
    %3603 = vmatmul.mubr.bf16.gmra.mrb[0].mxu0 %v864
    %v3604 = vpop.f32.mrb[0].mxu0
    %v3605 = vadd.f32 %v3562, %v3604
    %v3606 = vpop.f32.mrb[0].mxu0
    %v3607 = vadd.f32 %v3564, %v3606
    %v3608 = vpop.f32.mrb[0].mxu0
    %v3609 = vadd.f32 %v3566, %v3608
    %v3610 = vpop.f32.mrb[0].mxu0
    %v3611 = vadd.f32 %v3568, %v3610
    %3612 = vdwg.mxu0
    %3613 = vmatprep.subr.bf16.mxu0 %v2597
    %3614 = vmatpush1.bf16.msra.mxu0 %v2596
    %3615 = vmatprep.subr.bf16.mxu0 %v2599
    %3616 = vmatpush1.bf16.msra.mxu0 %v2598
    %3617 = vmatprep.subr.bf16.mxu0 %v2601
    %3618 = vmatpush1.bf16.msra.mxu0 %v2600
    %3619 = vmatprep.subr.bf16.mxu0 %v2603
    %3620 = vmatpush1.bf16.msra.mxu0 %v2602
    %3621 = vmatprep.subr.bf16.mxu0 %v2605
    %3622 = vmatpush1.bf16.msra.mxu0 %v2604
    %3623 = vmatprep.subr.bf16.mxu0 %v2607
    %3624 = vmatpush1.bf16.msra.mxu0 %v2606
    %3625 = vmatprep.subr.bf16.mxu0 %v2609
    %3626 = vmatpush1.bf16.msra.mxu0 %v2608
    %3627 = vmatprep.subr.bf16.mxu0 %v2611
    %3628 = vmatpush1.bf16.msra.mxu0 %v2610
    %3629 = vmatprep.subr.bf16.mxu0 %v2613
    %3630 = vmatpush1.bf16.msra.mxu0 %v2612
    %3631 = vmatprep.subr.bf16.mxu0 %v2615
    %3632 = vmatpush1.bf16.msra.mxu0 %v2614
    %3633 = vmatprep.subr.bf16.mxu0 %v2617
    %3634 = vmatpush1.bf16.msra.mxu0 %v2616
    %3635 = vmatprep.subr.bf16.mxu0 %v2619
    %3636 = vmatpush1.bf16.msra.mxu0 %v2618
    %3637 = vmatprep.subr.bf16.mxu0 %v2621
    %3638 = vmatpush1.bf16.msra.mxu0 %v2620
    %3639 = vmatprep.subr.bf16.mxu0 %v2623
    %3640 = vmatpush1.bf16.msra.mxu0 %v2622
    %3641 = vmatprep.subr.bf16.mxu0 %v2625
    %3642 = vmatpush1.bf16.msra.mxu0 %v2624
    %3643 = vmatprep.subr.bf16.mxu0 %v2627
    %3644 = vmatpush1.bf16.msra.mxu0 %v2626
    %3645 = vmatprep.mubr.bf16.mxu0 %v867
    %3646 = vmatmul.mubr.bf16.gmra.mrb[0].mxu0 %v866
    %v3647 = vpop.f32.mrb[0].mxu0
    %v3648 = vadd.f32 %v3605, %v3647
    %v3649 = vpop.f32.mrb[0].mxu0
    %v3650 = vadd.f32 %v3607, %v3649
    %v3651 = vpop.f32.mrb[0].mxu0
    %v3652 = vadd.f32 %v3609, %v3651
    %v3653 = vpop.f32.mrb[0].mxu0
    %v3654 = vadd.f32 %v3611, %v3653
    %3655 = vdwg.mxu0
    %3656 = vmatprep.subr.bf16.mxu0 %v2629
    %3657 = vmatpush1.bf16.msra.mxu0 %v2628
    %3658 = vmatprep.subr.bf16.mxu0 %v2631
    %3659 = vmatpush1.bf16.msra.mxu0 %v2630
    %3660 = vmatprep.subr.bf16.mxu0 %v2633
    %3661 = vmatpush1.bf16.msra.mxu0 %v2632
    %3662 = vmatprep.subr.bf16.mxu0 %v2635
    %3663 = vmatpush1.bf16.msra.mxu0 %v2634
    %3664 = vmatprep.subr.bf16.mxu0 %v2637
    %3665 = vmatpush1.bf16.msra.mxu0 %v2636
    %3666 = vmatprep.subr.bf16.mxu0 %v2639
    %3667 = vmatpush1.bf16.msra.mxu0 %v2638
    %3668 = vmatprep.subr.bf16.mxu0 %v2641
    %3669 = vmatpush1.bf16.msra.mxu0 %v2640
    %3670 = vmatprep.subr.bf16.mxu0 %v2643
    %3671 = vmatpush1.bf16.msra.mxu0 %v2642
    %3672 = vmatprep.subr.bf16.mxu0 %v2645
    %3673 = vmatpush1.bf16.msra.mxu0 %v2644
    %3674 = vmatprep.subr.bf16.mxu0 %v2647
    %3675 = vmatpush1.bf16.msra.mxu0 %v2646
    %3676 = vmatprep.subr.bf16.mxu0 %v2649
    %3677 = vmatpush1.bf16.msra.mxu0 %v2648
    %3678 = vmatprep.subr.bf16.mxu0 %v2651
    %3679 = vmatpush1.bf16.msra.mxu0 %v2650
    %3680 = vmatprep.subr.bf16.mxu0 %v2653
    %3681 = vmatpush1.bf16.msra.mxu0 %v2652
    %3682 = vmatprep.subr.bf16.mxu0 %v2655
    %3683 = vmatpush1.bf16.msra.mxu0 %v2654
    %3684 = vmatprep.subr.bf16.mxu0 %v2657
    %3685 = vmatpush1.bf16.msra.mxu0 %v2656
    %3686 = vmatprep.subr.bf16.mxu0 %v2659
    %3687 = vmatpush1.bf16.msra.mxu0 %v2658
    %3688 = vmatprep.mubr.bf16.mxu0 %v869
    %3689 = vmatmul.mubr.bf16.gmra.mrb[0].mxu0 %v868
    %v3690 = vpop.f32.mrb[0].mxu0
    %v3691 = vadd.f32 %v3648, %v3690
    %v3692 = vpop.f32.mrb[0].mxu0
    %v3693 = vadd.f32 %v3650, %v3692
    %v3694 = vpop.f32.mrb[0].mxu0
    %v3695 = vadd.f32 %v3652, %v3694
    %v3696 = vpop.f32.mrb[0].mxu0
    %v3697 = vadd.f32 %v3654, %v3696
    %3698 = vdwg.mxu0
    %3699 = vmatprep.subr.bf16.mxu0 %v2661
    %3700 = vmatpush1.bf16.msra.mxu0 %v2660
    %3701 = vmatprep.subr.bf16.mxu0 %v2663
    %3702 = vmatpush1.bf16.msra.mxu0 %v2662
    %3703 = vmatprep.subr.bf16.mxu0 %v2665
    %3704 = vmatpush1.bf16.msra.mxu0 %v2664
    %3705 = vmatprep.subr.bf16.mxu0 %v2667
    %3706 = vmatpush1.bf16.msra.mxu0 %v2666
    %3707 = vmatprep.subr.bf16.mxu0 %v2669
    %3708 = vmatpush1.bf16.msra.mxu0 %v2668
    %3709 = vmatprep.subr.bf16.mxu0 %v2671
    %3710 = vmatpush1.bf16.msra.mxu0 %v2670
    %3711 = vmatprep.subr.bf16.mxu0 %v2673
    %3712 = vmatpush1.bf16.msra.mxu0 %v2672
    %3713 = vmatprep.subr.bf16.mxu0 %v2675
    %3714 = vmatpush1.bf16.msra.mxu0 %v2674
    %3715 = vmatprep.subr.bf16.mxu0 %v2677
    %3716 = vmatpush1.bf16.msra.mxu0 %v2676
    %3717 = vmatprep.subr.bf16.mxu0 %v2679
    %3718 = vmatpush1.bf16.msra.mxu0 %v2678
    %3719 = vmatprep.subr.bf16.mxu0 %v2681
    %3720 = vmatpush1.bf16.msra.mxu0 %v2680
    %3721 = vmatprep.subr.bf16.mxu0 %v2683
    %3722 = vmatpush1.bf16.msra.mxu0 %v2682
    %3723 = vmatprep.subr.bf16.mxu0 %v2685
    %3724 = vmatpush1.bf16.msra.mxu0 %v2684
    %3725 = vmatprep.subr.bf16.mxu0 %v2687
    %3726 = vmatpush1.bf16.msra.mxu0 %v2686
    %3727 = vmatprep.subr.bf16.mxu0 %v2689
    %3728 = vmatpush1.bf16.msra.mxu0 %v2688
    %3729 = vmatprep.subr.bf16.mxu0 %v2691
    %3730 = vmatpush1.bf16.msra.mxu0 %v2690
    %3731 = vmatprep.mubr.bf16.mxu0 %v871
    %3732 = vmatmul.mubr.bf16.gmra.mrb[0].mxu0 %v870
    %v3733 = vpop.f32.mrb[0].mxu0
    %v3734 = vadd.f32 %v3691, %v3733
    %v3735 = vpop.f32.mrb[0].mxu0
    %v3736 = vadd.f32 %v3693, %v3735
    %v3737 = vpop.f32.mrb[0].mxu0
    %v3738 = vadd.f32 %v3695, %v3737
    %v3739 = vpop.f32.mrb[0].mxu0
    %v3740 = vadd.f32 %v3697, %v3739
    %3741 = vdwg.mxu0
    %s3742 = sld [smem:[#allocation2]]
    %v3743 = vstv %s3742
    %v3744 = vmul.f32 %v3734, %v3743
    %v3745 = vmul.f32 %v3736, %v3743
    %v3746 = vmul.f32 %v3738, %v3743
    %v3747 = vmul.f32 %v3740, %v3743
    %s3748 = sld [smem:[#allocation2 + $0x1]]
    %v3749 = vstv %s3748
    %v3750 = vadd.f32 %v3744, %v3749
    %v3751 = vadd.f32 %v3745, %v3749
    %v3752 = vadd.f32 %v3746, %v3749
    %v3753 = vadd.f32 %v3747, %v3749
    %v3754 = vxor.u32 %v3750, 2147483648
    %v3755 = vxor.u32 %v3751, 2147483648
    %v3756 = vxor.u32 %v3752, 2147483648
    %v3757 = vxor.u32 %v3753, 2147483648
    %v3758 = vmul.f32 %v3754, 1.442695
    %v3759 = vpow.pop %v3758
    %v3760 = vmul.f32 %v3755, 1.442695
    %v3761 = vpow.pop %v3760
    %v3762 = vmul.f32 %v3756, 1.442695
    %v3763 = vpow.pop %v3762
    %v3764 = vmul.f32 %v3757, 1.442695
    %v3765 = vpow.pop %v3764
    %v3766 = vadd.f32 %v3759, 1.0
    %v3767 = vadd.f32 %v3761, 1.0
    %v3768 = vadd.f32 %v3763, 1.0
    %v3769 = vadd.f32 %v3765, 1.0
    %v3770 = vrcp.pop %v3766
    %v3771 = vmul.f32 1.0, %v3770
    %v3772 = vrcp.pop %v3767
    %v3773 = vmul.f32 1.0, %v3772
    %v3774 = vrcp.pop %v3768
    %v3775 = vmul.f32 1.0, %v3774
    %v3776 = vrcp.pop %v3769
    %v3777 = vmul.f32 1.0, %v3776
    %v3778 = vmul.f32 %v55, %v3771
    %v3779 = vmul.f32 %v56, %v3773
    %v3780 = vmul.f32 %v57, %v3775
    %v3781 = vmul.f32 %v58, %v3777
    %3782 = vst [vmem:[#allocation9] sm:$0xff] %v3778
    %3783 = vst [vmem:[#allocation9 + $0x8] sm:$0xff] %v3779
    %3784 = vst [vmem:[#allocation9 + $0x40] sm:$0xff] %v3780
    %3785 = vst [vmem:[#allocation9 + $0x48] sm:$0xff] %v3781
    %v3786 = vld [vmem:[%s59] sm:$0xff]
    %v3787 = vld [vmem:[%s59 + $0x8] sm:$0xff]
    %v3788 = vld [vmem:[%s59 + $0x40] sm:$0xff]
    %v3789 = vld [vmem:[%s59 + $0x48] sm:$0xff]
    %v3790 = vmul.f32 %v3786, %v3771
    %v3791 = vmul.f32 %v3787, %v3773
    %v3792 = vmul.f32 %v3788, %v3775
    %v3793 = vmul.f32 %v3789, %v3777
    %s3794 = scalar_lea.vmem [#allocation9], 16
    %3795 = vst [vmem:[%s3794] sm:$0xff] %v3790
    %3796 = vst [vmem:[%s3794 + $0x8] sm:$0xff] %v3791
    %3797 = vst [vmem:[%s3794 + $0x40] sm:$0xff] %v3792
    %3798 = vst [vmem:[%s3794 + $0x48] sm:$0xff] %v3793
    %v3799 = vld [vmem:[%s72] sm:$0xff]
    %v3800 = vld [vmem:[%s72 + $0x8] sm:$0xff]
    %v3801 = vld [vmem:[%s72 + $0x40] sm:$0xff]
    %v3802 = vld [vmem:[%s72 + $0x48] sm:$0xff]
    %v3803 = vmul.f32 %v3799, %v3771
    %v3804 = vmul.f32 %v3800, %v3773
    %v3805 = vmul.f32 %v3801, %v3775
    %v3806 = vmul.f32 %v3802, %v3777
    %s3807 = scalar_lea.vmem [#allocation9], 32
    %3808 = vst [vmem:[%s3807] sm:$0xff] %v3803
    %3809 = vst [vmem:[%s3807 + $0x8] sm:$0xff] %v3804
    %3810 = vst [vmem:[%s3807 + $0x40] sm:$0xff] %v3805
    %3811 = vst [vmem:[%s3807 + $0x48] sm:$0xff] %v3806
    %v3812 = vld [vmem:[%s85] sm:$0xff]
    %v3813 = vld [vmem:[%s85 + $0x8] sm:$0xff]
    %v3814 = vld [vmem:[%s85 + $0x40] sm:$0xff]
    %v3815 = vld [vmem:[%s85 + $0x48] sm:$0xff]
    %v3816 = vmul.f32 %v3812, %v3771
    %v3817 = vmul.f32 %v3813, %v3773
    %v3818 = vmul.f32 %v3814, %v3775
    %v3819 = vmul.f32 %v3815, %v3777
    %s3820 = scalar_lea.vmem [#allocation9], 48
    %3821 = vst [vmem:[%s3820] sm:$0xff] %v3816
    %3822 = vst [vmem:[%s3820 + $0x8] sm:$0xff] %v3817
    %3823 = vst [vmem:[%s3820 + $0x40] sm:$0xff] %v3818
    %3824 = vst [vmem:[%s3820 + $0x48] sm:$0xff] %v3819
    // Predicated region
    $region26: #{tpu_custom_call.1} parent=1 // pred_check
      _
    $region27: #{tpu_custom_call.1} parent=1 // pred_check_branch
      %3826 = sbr.rel (0) target = $region29
    $region28: #{tpu_custom_call.1} parent=1 // pred_region
      %s3828 = ssub.s32 2048, 2048
      %3829 = vsyncadd [#allocation4], %s3828
      %s3830 = sshll.u32 [#allocation9], 4
      %s3831 = int_to_ptr.vmem [resolvable:$true] %s3830
      %3836 = dma.vmem_to_hbm [thread:$0]  %s3831, 2048, %s3, [#allocation4], 256, 256, 16
    $region29: #{tpu_custom_call.1} parent=1 // pred_fallthru
      _
    // Predicated region
    $region30: #{tpu_custom_call.1} parent=1 // pred_check
      _
    $region31: #{tpu_custom_call.1} parent=1 // pred_check_branch
      %3838 = sbr.rel (0) target = $region33
    $region32: #{tpu_custom_call.1} parent=1 // pred_region
      %3839 = dma.done [#allocation4], 2048
    $region33: #{tpu_custom_call.1} parent=1 // pred_fallthru
      _
    %3840 = vsyncpa [#allocation3], 1
    %3841 = vsyncpa [#allocation8], 1
    %3842 = vsyncpa [#allocation4], 1
    %3843 = vsyncpa [#allocation5], 1

</llo_original>
